<compile_context>
chip_gen: v6e
topology: v6e:2x2x1
jax: 0.10.0
libtpu: 0.0.40
codegen_flags: <defaults>
</compile_context>

<pallas_src>
import jax
import jax.numpy as jnp
from jax.experimental import pallas as pl
from jax.experimental.pallas import tpu as pltpu


def mlp_head_kernel(x_ref, w1_ref, b1_ref, w2_ref, b2_ref, w3_ref, b3_ref, o_ref):
    # Layer 1: relu(X) in f32, cast to bf16 only for the MXU feed; f32 accumulation.
    xk = jnp.maximum(x_ref[...], 0.0).astype(jnp.bfloat16)
    h = jnp.dot(xk, w1_ref[...], preferred_element_type=jnp.float32) + b1_ref[...]
    # Layer 2 (512 -> 64), f32 on the MXU.
    h = jnp.maximum(h, 0.0)
    h = jnp.dot(h, w2_ref[...], preferred_element_type=jnp.float32) + b2_ref[...]
    # Layer 3 (64 -> 1) as VPU multiply + lane reduction (avoids a 1-lane MXU result).
    h = jnp.maximum(h, 0.0)
    y = jnp.sum(h * w3_ref[...], axis=-1, keepdims=True) + b3_ref[...]
    o_ref[...] = jax.nn.sigmoid(y)          # self.softmax = Sigmoid


def mlp_head(X, w1, b1, w2, b2, w3, b3):
    """X: [B, 5376] -> [B, 1] float32 sigmoid outputs (matches SuperModel head)."""
    B, F = X.shape
    H1 = w1.shape[1]
    H2 = w2.shape[1]
    H3 = w3.shape[1]
    assert H3 == 1, "linear5 is 64 -> 1 in SuperModel"

    # X is only ~105 KiB f32: keep it f32 (relu + bf16 cast happen in-kernel).
    Xf = X.astype(jnp.float32)
    # w1 is the dominant HBM stream: bf16 halves its bytes (f32 accumulation keeps accuracy).
    w1b = w1.astype(jnp.bfloat16)
    b1r = b1.reshape(1, H1).astype(jnp.float32)
    w2f = w2.astype(jnp.float32)
    b2r = b2.reshape(1, H2).astype(jnp.float32)
    w3r = w3.reshape(1, H2).astype(jnp.float32)      # (H2, 1) -> (1, H2) row
    b3r = b3.reshape(1, H3).astype(jnp.float32)

    flops = 2 * B * (F * H1 + H1 * H2 + H2 * H3)
    bytes_accessed = (Xf.size * 4 + w1b.size * 2 + b1r.size * 4 + w2f.size * 4
                      + b2r.size * 4 + w3r.size * 4 + b3r.size * 4 + B * H3 * 4)
    cost = pl.CostEstimate(flops=flops, transcendentals=B * H3,
                           bytes_accessed=bytes_accessed)

    # Gridless call: whole arrays land in VMEM once (single-buffered), total
    # ~5.4 MiB -- well inside the scoped-VMEM default on every TPU generation.
    vmem_spec = pl.BlockSpec(memory_space=pltpu.MemorySpace.VMEM)
    return pl.pallas_call(
        mlp_head_kernel,
        out_shape=jax.ShapeDtypeStruct((B, H3), jnp.float32),
        in_specs=[vmem_spec] * 7,
        out_specs=vmem_spec,
        cost_estimate=cost,
    )(Xf, w1b, b1r, w2f, b2r, w3r, b3r)


def mlp_head_ref(X, w1, b1, w2, b2, w3, b3):
    """Pure-JAX f32 reference of the SuperModel head (for validation)."""
    h = jnp.maximum(X, 0.0) @ w1 + b1
    h = jnp.maximum(h, 0.0) @ w2 + b2
    h = jnp.maximum(h, 0.0) @ w3 + b3
    return jax.nn.sigmoid(h)


if __name__ == "__main__":
    key = jax.random.PRNGKey(0)
    ks = jax.random.split(key, 12)

    # Batch must be 5: the forward concatenates 5 copies of the style vector on
    # dim 0 and then cats with the per-image CXR features along dim 1.
    B, C, H, W = 5, 3, 16, 16
    x = jax.random.normal(ks[0], (B, C, H, W), jnp.float32)

    D_CXR, D_STYLE = 4096, 1280       # 4096 + 1280 = 5376 = linear1 in_features

    # TODO(synk): get_resnet(50, 2, 0.0625) and ConvEncoder() are external modules
    # loaded from a checkpoint; replaced with deterministic avg-pool + linear
    # projection stand-ins (plain-JAX glue).
    w_img = jax.random.normal(ks[1], (C, D_CXR), jnp.float32) * 0.5
    w_sty = jax.random.normal(ks[2], (C, D_STYLE), jnp.float32) * 0.5

    # MLP-head parameters (deterministic init, shapes from the module __init__).
    w1 = jax.random.normal(ks[3], (5376, 512), jnp.float32) * 0.02
    b1 = jax.random.normal(ks[4], (512,), jnp.float32) * 0.01
    w2 = jax.random.normal(ks[5], (512, 64), jnp.float32) * 0.05
    b2 = jax.random.normal(ks[6], (64,), jnp.float32) * 0.01
    w3 = jax.random.normal(ks[7], (64, 1), jnp.float32) * 0.1
    b3 = jax.random.normal(ks[8], (1,), jnp.float32) * 0.01

    # ---- encoder stage (glue) ----
    # image_encoder(x): per-image feature vector  -> [5, 4096]
    enc_cxr = jnp.mean(x, axis=(2, 3)) @ w_img
    # style_encoder(x): single global style vector -> [1280]
    style_vec = jnp.mean(x, axis=(0, 2, 3)) @ w_sty
    # unsqueeze(0) then cat 5 copies along dim 0   -> [5, 1280]
    enc_sty = jnp.tile(style_vec[None, :], (5, 1))
    # X = cat((encoded_CXR, encoded_style), dim=1) -> [5, 5376]
    X = jnp.concatenate([enc_cxr, enc_sty], axis=1).astype(jnp.float32)

    # ---- Pallas hot path: ReLU/Linear/Linear/Linear/Sigmoid ----
    y_pred = mlp_head(X, w1, b1, w2, b2, w3, b3)
    y_pred = jax.block_until_ready(y_pred)

    # Validate against the f32 reference (bf16 weight streaming, f32 accumulation).
    y_ref = mlp_head_ref(X, w1, b1.reshape(1, -1), w2, b2.reshape(1, -1),
                         w3, b3.reshape(1, -1))
    y_ref = jax.block_until_ready(y_ref)

    assert y_pred.shape == (B, 1)
    assert bool(jnp.all((y_pred >= 0.0) & (y_pred <= 1.0)))
    assert bool(jnp.allclose(y_pred, y_ref, atol=5e-3)), (y_pred, y_ref)
    print("KERNEL_OK")
</pallas_src>

<mosaic_0001>
module attributes {stable_mosaic.version = 11 : i64} {
  func.func @mlp_head_kernel(%arg0: memref<5x5376xf32, #tpu.memory_space<vmem>>, %arg1: memref<5376x512xbf16, #tpu.memory_space<vmem>>, %arg2: memref<1x512xf32, #tpu.memory_space<vmem>>, %arg3: memref<512x64xf32, #tpu.memory_space<vmem>>, %arg4: memref<1x64xf32, #tpu.memory_space<vmem>>, %arg5: memref<1x64xf32, #tpu.memory_space<vmem>>, %arg6: memref<1x1xf32, #tpu.memory_space<vmem>>, %arg7: memref<5x1xf32, #tpu.memory_space<vmem>>) attributes {dimension_semantics = [], scalar_prefetch = 0 : i64, scratch_operands = 0 : i64, tpu.core_type = #tpu.core_type<tc>} {
    %c0 = arith.constant 0 : index
    %c0_0 = arith.constant 0 : index
    %0 = vector.load %arg0[%c0, %c0_0] : memref<5x5376xf32, #tpu.memory_space<vmem>>, vector<5x5376xf32>
    %cst = arith.constant 0.000000e+00 : f32
    %1 = vector.broadcast %cst : f32 to vector<5x5376xf32>
    %2 = arith.maximumf %0, %1 : vector<5x5376xf32>
    %3 = arith.truncf %2 : vector<5x5376xf32> to vector<5x5376xbf16>
    %c0_1 = arith.constant 0 : index
    %c0_2 = arith.constant 0 : index
    %4 = vector.load %arg1[%c0_1, %c0_2] : memref<5376x512xbf16, #tpu.memory_space<vmem>>, vector<5376x512xbf16>
    %cst_3 = arith.constant dense<0.000000e+00> : vector<5x512xf32>
    %5 = tpu.matmul %3, %4, %cst_3 {dimension_numbers = #tpu.dot_dimension_numbers<[1], [0], [0], [1], [0, 0, 1, 1], [], []>} : vector<5x5376xbf16>, vector<5376x512xbf16>, vector<5x512xf32> -> vector<5x512xf32>
    %c0_4 = arith.constant 0 : index
    %c0_5 = arith.constant 0 : index
    %6 = vector.load %arg2[%c0_4, %c0_5] : memref<1x512xf32, #tpu.memory_space<vmem>>, vector<1x512xf32>
    %7 = vector.broadcast %6 : vector<1x512xf32> to vector<5x512xf32>
    %8 = arith.addf %5, %7 : vector<5x512xf32>
    %cst_6 = arith.constant 0.000000e+00 : f32
    %9 = vector.broadcast %cst_6 : f32 to vector<5x512xf32>
    %10 = arith.maximumf %8, %9 : vector<5x512xf32>
    %c0_7 = arith.constant 0 : index
    %c0_8 = arith.constant 0 : index
    %11 = vector.load %arg3[%c0_7, %c0_8] : memref<512x64xf32, #tpu.memory_space<vmem>>, vector<512x64xf32>
    %cst_9 = arith.constant dense<0.000000e+00> : vector<5x64xf32>
    %12 = tpu.matmul %10, %11, %cst_9 {dimension_numbers = #tpu.dot_dimension_numbers<[1], [0], [0], [1], [0, 0, 1, 1], [], []>} : vector<5x512xf32>, vector<512x64xf32>, vector<5x64xf32> -> vector<5x64xf32>
    %c0_10 = arith.constant 0 : index
    %c0_11 = arith.constant 0 : index
    %13 = vector.load %arg4[%c0_10, %c0_11] : memref<1x64xf32, #tpu.memory_space<vmem>>, vector<1x64xf32>
    %14 = vector.broadcast %13 : vector<1x64xf32> to vector<5x64xf32>
    %15 = arith.addf %12, %14 : vector<5x64xf32>
    %cst_12 = arith.constant 0.000000e+00 : f32
    %16 = vector.broadcast %cst_12 : f32 to vector<5x64xf32>
    %17 = arith.maximumf %15, %16 : vector<5x64xf32>
    %c0_13 = arith.constant 0 : index
    %c0_14 = arith.constant 0 : index
    %18 = vector.load %arg5[%c0_13, %c0_14] : memref<1x64xf32, #tpu.memory_space<vmem>>, vector<1x64xf32>
    %19 = vector.broadcast %18 : vector<1x64xf32> to vector<5x64xf32>
    %20 = arith.mulf %17, %19 : vector<5x64xf32>
    %cst_15 = arith.constant dense<0.000000e+00> : vector<5xf32>
    %21 = vector.multi_reduction <add>, %20, %cst_15 [1] : vector<5x64xf32> to vector<5xf32>
    %22 = vector.shape_cast %21 : vector<5xf32> to vector<5x1xf32>
    %c0_16 = arith.constant 0 : index
    %c0_17 = arith.constant 0 : index
    %23 = vector.load %arg6[%c0_16, %c0_17] : memref<1x1xf32, #tpu.memory_space<vmem>>, vector<1x1xf32>
    %24 = vector.broadcast %23 : vector<1x1xf32> to vector<5x1xf32>
    %25 = arith.addf %22, %24 : vector<5x1xf32>
    %26 = arith.negf %25 : vector<5x1xf32>
    %27 = math.exp %26 : vector<5x1xf32>
    %cst_18 = arith.constant 1.000000e+00 : f32
    %28 = vector.broadcast %cst_18 : f32 to vector<5x1xf32>
    %29 = arith.addf %28, %27 : vector<5x1xf32>
    %30 = arith.divf %28, %29 : vector<5x1xf32>
    %c0_19 = arith.constant 0 : index
    %c0_20 = arith.constant 0 : index
    %31 = vector.load %arg7[%c0_19, %c0_20] : memref<5x1xf32, #tpu.memory_space<vmem>>, vector<5x1xf32>
    tpu.vector_store %arg7[%c0_19, %c0_20], %30 {strides = array<i32>} : memref<5x1xf32, #tpu.memory_space<vmem>>, vector<5x1xf32>,
    return
  }
}

</mosaic_0001>

<llo_original>
// kernel: tpu_custom_call.1
$region0: #{tpu_custom_call.1}
  #allocation0 [shape = 'u32[]', space=smem, size = 0x4, offset = 0x4, fixed_abs, tag = 'smem constant byte address 0x4 - core index']
  #allocation1 [shape = 'u32[144,128]{1,0:T(1,128)}', space=vmem, size = 0x12000, scoped, tag = 'internal scratch']
  #allocation2 [shape = 'f32[1,1]{1,0:T(1,128)S(1)}', space=vmem, size = 0x200, scoped, tag = 'scoped memory for tpu_custom_call.1']
  %s0 = inlined_call_operand.hbm [shape: f32[5,5376], index: 0, kind: input, shape index: {}]
  %s1 = inlined_call_operand.hbm [shape: bf16[5376,512], index: 1, kind: input, shape index: {}]
  %s2 = inlined_call_operand.hbm [shape: f32[1,512], index: 2, kind: input, shape index: {}]
  %s3 = inlined_call_operand.vmem [shape: f32[512,64], index: 3, kind: input, shape index: {}]
  %s4 = inlined_call_operand.hbm [shape: f32[1,64], index: 4, kind: input, shape index: {}]
  %s5 = inlined_call_operand.hbm [shape: f32[1,64], index: 5, kind: input, shape index: {}]
  %s6 = inlined_call_operand.<no memory space> [shape: f32[1,1], index: 6, kind: input, shape index: {}]
  %s7 = inlined_call_operand.vmem [shape: f32[5,1], index: 7, kind: output, shape index: {}]
  %s8 = sld [smem:[#allocation0]]
  $region58: #{tpu_custom_call.1} parent=0
    _
  %s10 = ssub.s32 1, %s8
  %s11 = scalar_select 0, %s10, %s8
  %v12 = vstv %s6
  %13 = vst [vmem:[#allocation2] sm:$0x1] %v12
  $region1: #{tpu_custom_call.1} parent=0
    #allocation3 [shape = 'u8[172032]{0}', space=vmem, size = 0x2a000, scoped, tag = 'input window, operand 0, single buffered']
    #allocation4 [shape = 's32[1]{0}', space=sflag, size = 0x4, scoped, tag = 'scoped memory for tpu_custom_call.1']
    #allocation5 [shape = 'u8[5505024]{0}', space=vmem, size = 0x540000, scoped, tag = 'input window, operand 1, single buffered']
    #allocation6 [shape = 's32[1]{0}', space=sflag, size = 0x4, scoped, tag = 'scoped memory for tpu_custom_call.1']
    #allocation7 [shape = 'u8[2048]{0}', space=vmem, size = 0x800, scoped, tag = 'input window, operand 2, single buffered']
    #allocation8 [shape = 'u8[512]{0}', space=vmem, size = 0x400, scoped, tag = 'input window, operand 4, single buffered']
    #allocation9 [shape = 's32[1]{0}', space=sflag, size = 0x4, scoped, tag = 'scoped memory for tpu_custom_call.1']
    #allocation10 [shape = 'u8[512]{0}', space=vmem, size = 0x400, scoped, tag = 'input window, operand 5, single buffered']
    %14 = vsyncpa [#allocation4], 0
    %15 = vsyncpa [#allocation6], 0
    %16 = vsyncpa [#allocation9], 0
    // Predicated region
    $region2: #{tpu_custom_call.1} parent=1 // pred_check
      _
    $region3: #{tpu_custom_call.1} parent=1 // pred_check_branch
      %18 = sbr.rel (0) target = $region5
    $region4: #{tpu_custom_call.1} parent=1 // pred_region
      %s20 = ssub.s32 5376, 5376
      %21 = vsyncadd [#allocation4], %s20
      %s23 = sshll.u32 [#allocation3], 4
      %s24 = int_to_ptr.vmem [resolvable:$true] %s23
      %26 = dma.hbm_to_vmem [thread:$0]  %s0, 5376, %s24, [#allocation4]
    $region5: #{tpu_custom_call.1} parent=1 // pred_fallthru
      _
    // Predicated region
    $region6: #{tpu_custom_call.1} parent=1 // pred_check
      _
    $region7: #{tpu_custom_call.1} parent=1 // pred_check_branch
      %28 = sbr.rel (0) target = $region9
    $region8: #{tpu_custom_call.1} parent=1 // pred_region
      %s30 = ssub.s32 172032, 172032
      %31 = vsyncadd [#allocation6], %s30
      %s32 = sshll.u32 [#allocation5], 4
      %s33 = int_to_ptr.vmem [resolvable:$true] %s32
      %38 = dma.hbm_to_vmem [thread:$0]  %s1, 172032, %s33, [#allocation6], 256, 256, 16
    $region9: #{tpu_custom_call.1} parent=1 // pred_fallthru
      _
    // Predicated region
    $region10: #{tpu_custom_call.1} parent=1 // pred_check
      _
    $region11: #{tpu_custom_call.1} parent=1 // pred_check_branch
      %40 = sbr.rel (0) target = $region13
    $region12: #{tpu_custom_call.1} parent=1 // pred_region
      %s42 = ssub.s32 64, 64
      %43 = vsyncadd [#allocation6], %s42
      %s45 = sshll.u32 [#allocation7], 4
      %s46 = int_to_ptr.vmem [resolvable:$true] %s45
      %48 = dma.hbm_to_vmem [thread:$0]  %s2, 64, %s46, [#allocation6]
    $region13: #{tpu_custom_call.1} parent=1 // pred_fallthru
      _
    // Predicated region
    $region14: #{tpu_custom_call.1} parent=1 // pred_check
      _
    $region15: #{tpu_custom_call.1} parent=1 // pred_check_branch
      %50 = sbr.rel (0) target = $region17
    $region16: #{tpu_custom_call.1} parent=1 // pred_region
      _
    $region17: #{tpu_custom_call.1} parent=1 // pred_fallthru
      _
    // Predicated region
    $region18: #{tpu_custom_call.1} parent=1 // pred_check
      _
    $region19: #{tpu_custom_call.1} parent=1 // pred_check_branch
      %52 = sbr.rel (0) target = $region21
    $region20: #{tpu_custom_call.1} parent=1 // pred_region
      %s54 = ssub.s32 16, 16
      %55 = vsyncadd [#allocation9], %s54
      %s57 = sshll.u32 [#allocation8], 4
      %s58 = int_to_ptr.vmem [resolvable:$true] %s57
      %60 = dma.hbm_to_vmem [thread:$0]  %s4, 16, %s58, [#allocation9]
    $region21: #{tpu_custom_call.1} parent=1 // pred_fallthru
      _
    // Predicated region
    $region22: #{tpu_custom_call.1} parent=1 // pred_check
      _
    $region23: #{tpu_custom_call.1} parent=1 // pred_check_branch
      %62 = sbr.rel (0) target = $region25
    $region24: #{tpu_custom_call.1} parent=1 // pred_region
      %s64 = ssub.s32 16, 16
      %65 = vsyncadd [#allocation9], %s64
      %s67 = sshll.u32 [#allocation10], 4
      %s68 = int_to_ptr.vmem [resolvable:$true] %s67
      %70 = dma.hbm_to_vmem [thread:$0]  %s5, 16, %s68, [#allocation9]
    $region25: #{tpu_custom_call.1} parent=1 // pred_fallthru
      _
    // Predicated region
    $region26: #{tpu_custom_call.1} parent=1 // pred_check
      _
    $region27: #{tpu_custom_call.1} parent=1 // pred_check_branch
      %72 = sbr.rel (0) target = $region29
    $region28: #{tpu_custom_call.1} parent=1 // pred_region
      _
    $region29: #{tpu_custom_call.1} parent=1 // pred_fallthru
      _
    // Predicated region
    $region30: #{tpu_custom_call.1} parent=1 // pred_check
      _
    $region31: #{tpu_custom_call.1} parent=1 // pred_check_branch
      %74 = sbr.rel (0) target = $region33
    $region32: #{tpu_custom_call.1} parent=1 // pred_region
      %75 = dma.done [#allocation4], 5376
    $region33: #{tpu_custom_call.1} parent=1 // pred_fallthru
      _
    // Predicated region
    $region34: #{tpu_custom_call.1} parent=1 // pred_check
      _
    $region35: #{tpu_custom_call.1} parent=1 // pred_check_branch
      %77 = sbr.rel (0) target = $region37
    $region36: #{tpu_custom_call.1} parent=1 // pred_region
      %78 = dma.done [#allocation6], 172032
    $region37: #{tpu_custom_call.1} parent=1 // pred_fallthru
      _
    // Predicated region
    $region38: #{tpu_custom_call.1} parent=1 // pred_check
      _
    $region39: #{tpu_custom_call.1} parent=1 // pred_check_branch
      %80 = sbr.rel (0) target = $region41
    $region40: #{tpu_custom_call.1} parent=1 // pred_region
      %81 = dma.done [#allocation6], 64
    $region41: #{tpu_custom_call.1} parent=1 // pred_fallthru
      _
    // Predicated region
    $region42: #{tpu_custom_call.1} parent=1 // pred_check
      _
    $region43: #{tpu_custom_call.1} parent=1 // pred_check_branch
      %83 = sbr.rel (0) target = $region45
    $region44: #{tpu_custom_call.1} parent=1 // pred_region
      %84 = dma.done [#allocation9], 16
    $region45: #{tpu_custom_call.1} parent=1 // pred_fallthru
      _
    // Predicated region
    $region46: #{tpu_custom_call.1} parent=1 // pred_check
      _
    $region47: #{tpu_custom_call.1} parent=1 // pred_check_branch
      %86 = sbr.rel (0) target = $region49
    $region48: #{tpu_custom_call.1} parent=1 // pred_region
      %87 = dma.done [#allocation9], 16
    $region49: #{tpu_custom_call.1} parent=1 // pred_fallthru
      _
    %v88 = vld [vmem:[#allocation3] sm:$0x1f]
    %v89 = vld [vmem:[#allocation3 + $0x8] sm:$0x1f]
    %v90 = vld [vmem:[#allocation3 + $0x10] sm:$0x1f]
    %v91 = vld [vmem:[#allocation3 + $0x18] sm:$0x1f]
    %v92 = vld [vmem:[#allocation3 + $0x20] sm:$0x1f]
    %v93 = vld [vmem:[#allocation3 + $0x28] sm:$0x1f]
    %v94 = vld [vmem:[#allocation3 + $0x30] sm:$0x1f]
    %v95 = vld [vmem:[#allocation3 + $0x38] sm:$0x1f]
    %v96 = vld [vmem:[#allocation3 + $0x40] sm:$0x1f]
    %v97 = vld [vmem:[#allocation3 + $0x48] sm:$0x1f]
    %v98 = vld [vmem:[#allocation3 + $0x50] sm:$0x1f]
    %v99 = vld [vmem:[#allocation3 + $0x58] sm:$0x1f]
    %v100 = vld [vmem:[#allocation3 + $0x60] sm:$0x1f]
    %v101 = vld [vmem:[#allocation3 + $0x68] sm:$0x1f]
    %v102 = vld [vmem:[#allocation3 + $0x70] sm:$0x1f]
    %v103 = vld [vmem:[#allocation3 + $0x78] sm:$0x1f]
    %v104 = vld [vmem:[#allocation3 + $0x80] sm:$0x1f]
    %v105 = vld [vmem:[#allocation3 + $0x88] sm:$0x1f]
    %v106 = vld [vmem:[#allocation3 + $0x90] sm:$0x1f]
    %v107 = vld [vmem:[#allocation3 + $0x98] sm:$0x1f]
    %v108 = vld [vmem:[#allocation3 + $0xa0] sm:$0x1f]
    %v109 = vld [vmem:[#allocation3 + $0xa8] sm:$0x1f]
    %v110 = vld [vmem:[#allocation3 + $0xb0] sm:$0x1f]
    %v111 = vld [vmem:[#allocation3 + $0xb8] sm:$0x1f]
    %v112 = vld [vmem:[#allocation3 + $0xc0] sm:$0x1f]
    %v113 = vld [vmem:[#allocation3 + $0xc8] sm:$0x1f]
    %v114 = vld [vmem:[#allocation3 + $0xd0] sm:$0x1f]
    %v115 = vld [vmem:[#allocation3 + $0xd8] sm:$0x1f]
    %v116 = vld [vmem:[#allocation3 + $0xe0] sm:$0x1f]
    %v117 = vld [vmem:[#allocation3 + $0xe8] sm:$0x1f]
    %v118 = vld [vmem:[#allocation3 + $0xf0] sm:$0x1f]
    %v119 = vld [vmem:[#allocation3 + $0xf8] sm:$0x1f]
    %v120 = vld [vmem:[#allocation3 + $0x100] sm:$0x1f]
    %v121 = vld [vmem:[#allocation3 + $0x108] sm:$0x1f]
    %v122 = vld [vmem:[#allocation3 + $0x110] sm:$0x1f]
    %v123 = vld [vmem:[#allocation3 + $0x118] sm:$0x1f]
    %v124 = vld [vmem:[#allocation3 + $0x120] sm:$0x1f]
    %v125 = vld [vmem:[#allocation3 + $0x128] sm:$0x1f]
    %v126 = vld [vmem:[#allocation3 + $0x130] sm:$0x1f]
    %v127 = vld [vmem:[#allocation3 + $0x138] sm:$0x1f]
    %v128 = vld [vmem:[#allocation3 + $0x140] sm:$0x1f]
    %v129 = vld [vmem:[#allocation3 + $0x148] sm:$0x1f]
    %v130 = vmax.f32 %v88, 0.0
    %v131 = vmax.f32 %v89, 0.0
    %v132 = vmax.f32 %v90, 0.0
    %v133 = vmax.f32 %v91, 0.0
    %v134 = vmax.f32 %v92, 0.0
    %v135 = vmax.f32 %v93, 0.0
    %v136 = vmax.f32 %v94, 0.0
    %v137 = vmax.f32 %v95, 0.0
    %v138 = vmax.f32 %v96, 0.0
    %v139 = vmax.f32 %v97, 0.0
    %v140 = vmax.f32 %v98, 0.0
    %v141 = vmax.f32 %v99, 0.0
    %v142 = vmax.f32 %v100, 0.0
    %v143 = vmax.f32 %v101, 0.0
    %v144 = vmax.f32 %v102, 0.0
    %v145 = vmax.f32 %v103, 0.0
    %v146 = vmax.f32 %v104, 0.0
    %v147 = vmax.f32 %v105, 0.0
    %v148 = vmax.f32 %v106, 0.0
    %v149 = vmax.f32 %v107, 0.0
    %v150 = vmax.f32 %v108, 0.0
    %v151 = vmax.f32 %v109, 0.0
    %v152 = vmax.f32 %v110, 0.0
    %v153 = vmax.f32 %v111, 0.0
    %v154 = vmax.f32 %v112, 0.0
    %v155 = vmax.f32 %v113, 0.0
    %v156 = vmax.f32 %v114, 0.0
    %v157 = vmax.f32 %v115, 0.0
    %v158 = vmax.f32 %v116, 0.0
    %v159 = vmax.f32 %v117, 0.0
    %v160 = vmax.f32 %v118, 0.0
    %v161 = vmax.f32 %v119, 0.0
    %v162 = vmax.f32 %v120, 0.0
    %v163 = vmax.f32 %v121, 0.0
    %v164 = vmax.f32 %v122, 0.0
    %v165 = vmax.f32 %v123, 0.0
    %v166 = vmax.f32 %v124, 0.0
    %v167 = vmax.f32 %v125, 0.0
    %v168 = vmax.f32 %v126, 0.0
    %v169 = vmax.f32 %v127, 0.0
    %v170 = vmax.f32 %v128, 0.0
    %v171 = vmax.f32 %v129, 0.0
    %v172 = vpack.c.bf16 %v130, %v130
    %v173 = vpack.c.bf16 %v131, %v131
    %v174 = vpack.c.bf16 %v132, %v132
    %v175 = vpack.c.bf16 %v133, %v133
    %v176 = vpack.c.bf16 %v134, %v134
    %v177 = vpack.c.bf16 %v135, %v135
    %v178 = vpack.c.bf16 %v136, %v136
    %v179 = vpack.c.bf16 %v137, %v137
    %v180 = vpack.c.bf16 %v138, %v138
    %v181 = vpack.c.bf16 %v139, %v139
    %v182 = vpack.c.bf16 %v140, %v140
    %v183 = vpack.c.bf16 %v141, %v141
    %v184 = vpack.c.bf16 %v142, %v142
    %v185 = vpack.c.bf16 %v143, %v143
    %v186 = vpack.c.bf16 %v144, %v144
    %v187 = vpack.c.bf16 %v145, %v145
    %v188 = vpack.c.bf16 %v146, %v146
    %v189 = vpack.c.bf16 %v147, %v147
    %v190 = vpack.c.bf16 %v148, %v148
    %v191 = vpack.c.bf16 %v149, %v149
    %v192 = vpack.c.bf16 %v150, %v150
    %v193 = vpack.c.bf16 %v151, %v151
    %v194 = vpack.c.bf16 %v152, %v152
    %v195 = vpack.c.bf16 %v153, %v153
    %v196 = vpack.c.bf16 %v154, %v154
    %v197 = vpack.c.bf16 %v155, %v155
    %v198 = vpack.c.bf16 %v156, %v156
    %v199 = vpack.c.bf16 %v157, %v157
    %v200 = vpack.c.bf16 %v158, %v158
    %v201 = vpack.c.bf16 %v159, %v159
    %v202 = vpack.c.bf16 %v160, %v160
    %v203 = vpack.c.bf16 %v161, %v161
    %v204 = vpack.c.bf16 %v162, %v162
    %v205 = vpack.c.bf16 %v163, %v163
    %v206 = vpack.c.bf16 %v164, %v164
    %v207 = vpack.c.bf16 %v165, %v165
    %v208 = vpack.c.bf16 %v166, %v166
    %v209 = vpack.c.bf16 %v167, %v167
    %v210 = vpack.c.bf16 %v168, %v168
    %v211 = vpack.c.bf16 %v169, %v169
    %v212 = vpack.c.bf16 %v170, %v170
    %v213 = vpack.c.bf16 %v171, %v171
    %v214 = vld [vmem:[#allocation5] sm:$0xff]
    %v215 = vld [vmem:[#allocation5 + $0x8] sm:$0xff]
    %v216 = vld [vmem:[#allocation5 + $0x10] sm:$0xff]
    %v217 = vld [vmem:[#allocation5 + $0x18] sm:$0xff]
    %v218 = vld [vmem:[#allocation5 + $0x20] sm:$0xff]
    %v219 = vld [vmem:[#allocation5 + $0x28] sm:$0xff]
    %v220 = vld [vmem:[#allocation5 + $0x30] sm:$0xff]
    %v221 = vld [vmem:[#allocation5 + $0x38] sm:$0xff]
    %v222 = vld [vmem:[#allocation5 + $0x40] sm:$0xff]
    %v223 = vld [vmem:[#allocation5 + $0x48] sm:$0xff]
    %v224 = vld [vmem:[#allocation5 + $0x50] sm:$0xff]
    %v225 = vld [vmem:[#allocation5 + $0x58] sm:$0xff]
    %v226 = vld [vmem:[#allocation5 + $0x60] sm:$0xff]
    %v227 = vld [vmem:[#allocation5 + $0x68] sm:$0xff]
    %v228 = vld [vmem:[#allocation5 + $0x70] sm:$0xff]
    %v229 = vld [vmem:[#allocation5 + $0x78] sm:$0xff]
    %v230 = vld [vmem:[#allocation5 + $0x80] sm:$0xff]
    %v231 = vld [vmem:[#allocation5 + $0x88] sm:$0xff]
    %v232 = vld [vmem:[#allocation5 + $0x90] sm:$0xff]
    %v233 = vld [vmem:[#allocation5 + $0x98] sm:$0xff]
    %v234 = vld [vmem:[#allocation5 + $0xa0] sm:$0xff]
    %v235 = vld [vmem:[#allocation5 + $0xa8] sm:$0xff]
    %v236 = vld [vmem:[#allocation5 + $0xb0] sm:$0xff]
    %v237 = vld [vmem:[#allocation5 + $0xb8] sm:$0xff]
    %v238 = vld [vmem:[#allocation5 + $0xc0] sm:$0xff]
    %v239 = vld [vmem:[#allocation5 + $0xc8] sm:$0xff]
    %v240 = vld [vmem:[#allocation5 + $0xd0] sm:$0xff]
    %v241 = vld [vmem:[#allocation5 + $0xd8] sm:$0xff]
    %v242 = vld [vmem:[#allocation5 + $0xe0] sm:$0xff]
    %v243 = vld [vmem:[#allocation5 + $0xe8] sm:$0xff]
    %v244 = vld [vmem:[#allocation5 + $0xf0] sm:$0xff]
    %v245 = vld [vmem:[#allocation5 + $0xf8] sm:$0xff]
    %v246 = vld [vmem:[#allocation5 + $0x100] sm:$0xff]
    %v247 = vld [vmem:[#allocation5 + $0x108] sm:$0xff]
    %v248 = vld [vmem:[#allocation5 + $0x110] sm:$0xff]
    %v249 = vld [vmem:[#allocation5 + $0x118] sm:$0xff]
    %v250 = vld [vmem:[#allocation5 + $0x120] sm:$0xff]
    %v251 = vld [vmem:[#allocation5 + $0x128] sm:$0xff]
    %v252 = vld [vmem:[#allocation5 + $0x130] sm:$0xff]
    %v253 = vld [vmem:[#allocation5 + $0x138] sm:$0xff]
    %v254 = vld [vmem:[#allocation5 + $0x140] sm:$0xff]
    %v255 = vld [vmem:[#allocation5 + $0x148] sm:$0xff]
    %v256 = vld [vmem:[#allocation5 + $0x150] sm:$0xff]
    %v257 = vld [vmem:[#allocation5 + $0x158] sm:$0xff]
    %v258 = vld [vmem:[#allocation5 + $0x160] sm:$0xff]
    %v259 = vld [vmem:[#allocation5 + $0x168] sm:$0xff]
    %v260 = vld [vmem:[#allocation5 + $0x170] sm:$0xff]
    %v261 = vld [vmem:[#allocation5 + $0x178] sm:$0xff]
    %v262 = vld [vmem:[#allocation5 + $0x180] sm:$0xff]
    %v263 = vld [vmem:[#allocation5 + $0x188] sm:$0xff]
    %v264 = vld [vmem:[#allocation5 + $0x190] sm:$0xff]
    %v265 = vld [vmem:[#allocation5 + $0x198] sm:$0xff]
    %v266 = vld [vmem:[#allocation5 + $0x1a0] sm:$0xff]
    %v267 = vld [vmem:[#allocation5 + $0x1a8] sm:$0xff]
    %v268 = vld [vmem:[#allocation5 + $0x1b0] sm:$0xff]
    %v269 = vld [vmem:[#allocation5 + $0x1b8] sm:$0xff]
    %v270 = vld [vmem:[#allocation5 + $0x1c0] sm:$0xff]
    %v271 = vld [vmem:[#allocation5 + $0x1c8] sm:$0xff]
    %v272 = vld [vmem:[#allocation5 + $0x1d0] sm:$0xff]
    %v273 = vld [vmem:[#allocation5 + $0x1d8] sm:$0xff]
    %v274 = vld [vmem:[#allocation5 + $0x1e0] sm:$0xff]
    %v275 = vld [vmem:[#allocation5 + $0x1e8] sm:$0xff]
    %v276 = vld [vmem:[#allocation5 + $0x1f0] sm:$0xff]
    %v277 = vld [vmem:[#allocation5 + $0x1f8] sm:$0xff]
    %v278 = vld [vmem:[#allocation5 + $0x200] sm:$0xff]
    %v279 = vld [vmem:[#allocation5 + $0x208] sm:$0xff]
    %v280 = vld [vmem:[#allocation5 + $0x210] sm:$0xff]
    %v281 = vld [vmem:[#allocation5 + $0x218] sm:$0xff]
    %v282 = vld [vmem:[#allocation5 + $0x220] sm:$0xff]
    %v283 = vld [vmem:[#allocation5 + $0x228] sm:$0xff]
    %v284 = vld [vmem:[#allocation5 + $0x230] sm:$0xff]
    %v285 = vld [vmem:[#allocation5 + $0x238] sm:$0xff]
    %v286 = vld [vmem:[#allocation5 + $0x240] sm:$0xff]
    %v287 = vld [vmem:[#allocation5 + $0x248] sm:$0xff]
    %v288 = vld [vmem:[#allocation5 + $0x250] sm:$0xff]
    %v289 = vld [vmem:[#allocation5 + $0x258] sm:$0xff]
    %v290 = vld [vmem:[#allocation5 + $0x260] sm:$0xff]
    %v291 = vld [vmem:[#allocation5 + $0x268] sm:$0xff]
    %v292 = vld [vmem:[#allocation5 + $0x270] sm:$0xff]
    %v293 = vld [vmem:[#allocation5 + $0x278] sm:$0xff]
    %v294 = vld [vmem:[#allocation5 + $0x280] sm:$0xff]
    %v295 = vld [vmem:[#allocation5 + $0x288] sm:$0xff]
    %v296 = vld [vmem:[#allocation5 + $0x290] sm:$0xff]
    %v297 = vld [vmem:[#allocation5 + $0x298] sm:$0xff]
    %v298 = vld [vmem:[#allocation5 + $0x2a0] sm:$0xff]
    %v299 = vld [vmem:[#allocation5 + $0x2a8] sm:$0xff]
    %v300 = vld [vmem:[#allocation5 + $0x2b0] sm:$0xff]
    %v301 = vld [vmem:[#allocation5 + $0x2b8] sm:$0xff]
    %v302 = vld [vmem:[#allocation5 + $0x2c0] sm:$0xff]
    %v303 = vld [vmem:[#allocation5 + $0x2c8] sm:$0xff]
    %v304 = vld [vmem:[#allocation5 + $0x2d0] sm:$0xff]
    %v305 = vld [vmem:[#allocation5 + $0x2d8] sm:$0xff]
    %v306 = vld [vmem:[#allocation5 + $0x2e0] sm:$0xff]
    %v307 = vld [vmem:[#allocation5 + $0x2e8] sm:$0xff]
    %v308 = vld [vmem:[#allocation5 + $0x2f0] sm:$0xff]
    %v309 = vld [vmem:[#allocation5 + $0x2f8] sm:$0xff]
    %v310 = vld [vmem:[#allocation5 + $0x300] sm:$0xff]
    %v311 = vld [vmem:[#allocation5 + $0x308] sm:$0xff]
    %v312 = vld [vmem:[#allocation5 + $0x310] sm:$0xff]
    %v313 = vld [vmem:[#allocation5 + $0x318] sm:$0xff]
    %v314 = vld [vmem:[#allocation5 + $0x320] sm:$0xff]
    %v315 = vld [vmem:[#allocation5 + $0x328] sm:$0xff]
    %v316 = vld [vmem:[#allocation5 + $0x330] sm:$0xff]
    %v317 = vld [vmem:[#allocation5 + $0x338] sm:$0xff]
    %v318 = vld [vmem:[#allocation5 + $0x340] sm:$0xff]
    %v319 = vld [vmem:[#allocation5 + $0x348] sm:$0xff]
    %v320 = vld [vmem:[#allocation5 + $0x350] sm:$0xff]
    %v321 = vld [vmem:[#allocation5 + $0x358] sm:$0xff]
    %v322 = vld [vmem:[#allocation5 + $0x360] sm:$0xff]
    %v323 = vld [vmem:[#allocation5 + $0x368] sm:$0xff]
    %v324 = vld [vmem:[#allocation5 + $0x370] sm:$0xff]
    %v325 = vld [vmem:[#allocation5 + $0x378] sm:$0xff]
    %v326 = vld [vmem:[#allocation5 + $0x380] sm:$0xff]
    %v327 = vld [vmem:[#allocation5 + $0x388] sm:$0xff]
    %v328 = vld [vmem:[#allocation5 + $0x390] sm:$0xff]
    %v329 = vld [vmem:[#allocation5 + $0x398] sm:$0xff]
    %v330 = vld [vmem:[#allocation5 + $0x3a0] sm:$0xff]
    %v331 = vld [vmem:[#allocation5 + $0x3a8] sm:$0xff]
    %v332 = vld [vmem:[#allocation5 + $0x3b0] sm:$0xff]
    %v333 = vld [vmem:[#allocation5 + $0x3b8] sm:$0xff]
    %v334 = vld [vmem:[#allocation5 + $0x3c0] sm:$0xff]
    %v335 = vld [vmem:[#allocation5 + $0x3c8] sm:$0xff]
    %v336 = vld [vmem:[#allocation5 + $0x3d0] sm:$0xff]
    %v337 = vld [vmem:[#allocation5 + $0x3d8] sm:$0xff]
    %v338 = vld [vmem:[#allocation5 + $0x3e0] sm:$0xff]
    %v339 = vld [vmem:[#allocation5 + $0x3e8] sm:$0xff]
    %v340 = vld [vmem:[#allocation5 + $0x3f0] sm:$0xff]
    %v341 = vld [vmem:[#allocation5 + $0x3f8] sm:$0xff]
    %v342 = vld [vmem:[#allocation5 + $0x400] sm:$0xff]
    %v343 = vld [vmem:[#allocation5 + $0x408] sm:$0xff]
    %v344 = vld [vmem:[#allocation5 + $0x410] sm:$0xff]
    %v345 = vld [vmem:[#allocation5 + $0x418] sm:$0xff]
    %v346 = vld [vmem:[#allocation5 + $0x420] sm:$0xff]
    %v347 = vld [vmem:[#allocation5 + $0x428] sm:$0xff]
    %v348 = vld [vmem:[#allocation5 + $0x430] sm:$0xff]
    %v349 = vld [vmem:[#allocation5 + $0x438] sm:$0xff]
    %v350 = vld [vmem:[#allocation5 + $0x440] sm:$0xff]
    %v351 = vld [vmem:[#allocation5 + $0x448] sm:$0xff]
    %v352 = vld [vmem:[#allocation5 + $0x450] sm:$0xff]
    %v353 = vld [vmem:[#allocation5 + $0x458] sm:$0xff]
    %v354 = vld [vmem:[#allocation5 + $0x460] sm:$0xff]
    %v355 = vld [vmem:[#allocation5 + $0x468] sm:$0xff]
    %v356 = vld [vmem:[#allocation5 + $0x470] sm:$0xff]
    %v357 = vld [vmem:[#allocation5 + $0x478] sm:$0xff]
    %v358 = vld [vmem:[#allocation5 + $0x480] sm:$0xff]
    %v359 = vld [vmem:[#allocation5 + $0x488] sm:$0xff]
    %v360 = vld [vmem:[#allocation5 + $0x490] sm:$0xff]
    %v361 = vld [vmem:[#allocation5 + $0x498] sm:$0xff]
    %v362 = vld [vmem:[#allocation5 + $0x4a0] sm:$0xff]
    %v363 = vld [vmem:[#allocation5 + $0x4a8] sm:$0xff]
    %v364 = vld [vmem:[#allocation5 + $0x4b0] sm:$0xff]
    %v365 = vld [vmem:[#allocation5 + $0x4b8] sm:$0xff]
    %v366 = vld [vmem:[#allocation5 + $0x4c0] sm:$0xff]
    %v367 = vld [vmem:[#allocation5 + $0x4c8] sm:$0xff]
    %v368 = vld [vmem:[#allocation5 + $0x4d0] sm:$0xff]
    %v369 = vld [vmem:[#allocation5 + $0x4d8] sm:$0xff]
    %v370 = vld [vmem:[#allocation5 + $0x4e0] sm:$0xff]
    %v371 = vld [vmem:[#allocation5 + $0x4e8] sm:$0xff]
    %v372 = vld [vmem:[#allocation5 + $0x4f0] sm:$0xff]
    %v373 = vld [vmem:[#allocation5 + $0x4f8] sm:$0xff]
    %v374 = vld [vmem:[#allocation5 + $0x500] sm:$0xff]
    %v375 = vld [vmem:[#allocation5 + $0x508] sm:$0xff]
    %v376 = vld [vmem:[#allocation5 + $0x510] sm:$0xff]
    %v377 = vld [vmem:[#allocation5 + $0x518] sm:$0xff]
    %v378 = vld [vmem:[#allocation5 + $0x520] sm:$0xff]
    %v379 = vld [vmem:[#allocation5 + $0x528] sm:$0xff]
    %v380 = vld [vmem:[#allocation5 + $0x530] sm:$0xff]
    %v381 = vld [vmem:[#allocation5 + $0x538] sm:$0xff]
    %v382 = vld [vmem:[#allocation5 + $0x540] sm:$0xff]
    %v383 = vld [vmem:[#allocation5 + $0x548] sm:$0xff]
    %v384 = vld [vmem:[#allocation5 + $0x550] sm:$0xff]
    %v385 = vld [vmem:[#allocation5 + $0x558] sm:$0xff]
    %v386 = vld [vmem:[#allocation5 + $0x560] sm:$0xff]
    %v387 = vld [vmem:[#allocation5 + $0x568] sm:$0xff]
    %v388 = vld [vmem:[#allocation5 + $0x570] sm:$0xff]
    %v389 = vld [vmem:[#allocation5 + $0x578] sm:$0xff]
    %v390 = vld [vmem:[#allocation5 + $0x580] sm:$0xff]
    %v391 = vld [vmem:[#allocation5 + $0x588] sm:$0xff]
    %v392 = vld [vmem:[#allocation5 + $0x590] sm:$0xff]
    %v393 = vld [vmem:[#allocation5 + $0x598] sm:$0xff]
    %v394 = vld [vmem:[#allocation5 + $0x5a0] sm:$0xff]
    %v395 = vld [vmem:[#allocation5 + $0x5a8] sm:$0xff]
    %v396 = vld [vmem:[#allocation5 + $0x5b0] sm:$0xff]
    %v397 = vld [vmem:[#allocation5 + $0x5b8] sm:$0xff]
    %v398 = vld [vmem:[#allocation5 + $0x5c0] sm:$0xff]
    %v399 = vld [vmem:[#allocation5 + $0x5c8] sm:$0xff]
    %v400 = vld [vmem:[#allocation5 + $0x5d0] sm:$0xff]
    %v401 = vld [vmem:[#allocation5 + $0x5d8] sm:$0xff]
    %v402 = vld [vmem:[#allocation5 + $0x5e0] sm:$0xff]
    %v403 = vld [vmem:[#allocation5 + $0x5e8] sm:$0xff]
    %v404 = vld [vmem:[#allocation5 + $0x5f0] sm:$0xff]
    %v405 = vld [vmem:[#allocation5 + $0x5f8] sm:$0xff]
    %v406 = vld [vmem:[#allocation5 + $0x600] sm:$0xff]
    %v407 = vld [vmem:[#allocation5 + $0x608] sm:$0xff]
    %v408 = vld [vmem:[#allocation5 + $0x610] sm:$0xff]
    %v409 = vld [vmem:[#allocation5 + $0x618] sm:$0xff]
    %v410 = vld [vmem:[#allocation5 + $0x620] sm:$0xff]
    %v411 = vld [vmem:[#allocation5 + $0x628] sm:$0xff]
    %v412 = vld [vmem:[#allocation5 + $0x630] sm:$0xff]
    %v413 = vld [vmem:[#allocation5 + $0x638] sm:$0xff]
    %v414 = vld [vmem:[#allocation5 + $0x640] sm:$0xff]
    %v415 = vld [vmem:[#allocation5 + $0x648] sm:$0xff]
    %v416 = vld [vmem:[#allocation5 + $0x650] sm:$0xff]
    %v417 = vld [vmem:[#allocation5 + $0x658] sm:$0xff]
    %v418 = vld [vmem:[#allocation5 + $0x660] sm:$0xff]
    %v419 = vld [vmem:[#allocation5 + $0x668] sm:$0xff]
    %v420 = vld [vmem:[#allocation5 + $0x670] sm:$0xff]
    %v421 = vld [vmem:[#allocation5 + $0x678] sm:$0xff]
    %v422 = vld [vmem:[#allocation5 + $0x680] sm:$0xff]
    %v423 = vld [vmem:[#allocation5 + $0x688] sm:$0xff]
    %v424 = vld [vmem:[#allocation5 + $0x690] sm:$0xff]
    %v425 = vld [vmem:[#allocation5 + $0x698] sm:$0xff]
    %v426 = vld [vmem:[#allocation5 + $0x6a0] sm:$0xff]
    %v427 = vld [vmem:[#allocation5 + $0x6a8] sm:$0xff]
    %v428 = vld [vmem:[#allocation5 + $0x6b0] sm:$0xff]
    %v429 = vld [vmem:[#allocation5 + $0x6b8] sm:$0xff]
    %v430 = vld [vmem:[#allocation5 + $0x6c0] sm:$0xff]
    %v431 = vld [vmem:[#allocation5 + $0x6c8] sm:$0xff]
    %v432 = vld [vmem:[#allocation5 + $0x6d0] sm:$0xff]
    %v433 = vld [vmem:[#allocation5 + $0x6d8] sm:$0xff]
    %v434 = vld [vmem:[#allocation5 + $0x6e0] sm:$0xff]
    %v435 = vld [vmem:[#allocation5 + $0x6e8] sm:$0xff]
    %v436 = vld [vmem:[#allocation5 + $0x6f0] sm:$0xff]
    %v437 = vld [vmem:[#allocation5 + $0x6f8] sm:$0xff]
    %v438 = vld [vmem:[#allocation5 + $0x700] sm:$0xff]
    %v439 = vld [vmem:[#allocation5 + $0x708] sm:$0xff]
    %v440 = vld [vmem:[#allocation5 + $0x710] sm:$0xff]
    %v441 = vld [vmem:[#allocation5 + $0x718] sm:$0xff]
    %v442 = vld [vmem:[#allocation5 + $0x720] sm:$0xff]
    %v443 = vld [vmem:[#allocation5 + $0x728] sm:$0xff]
    %v444 = vld [vmem:[#allocation5 + $0x730] sm:$0xff]
    %v445 = vld [vmem:[#allocation5 + $0x738] sm:$0xff]
    %v446 = vld [vmem:[#allocation5 + $0x740] sm:$0xff]
    %v447 = vld [vmem:[#allocation5 + $0x748] sm:$0xff]
    %v448 = vld [vmem:[#allocation5 + $0x750] sm:$0xff]
    %v449 = vld [vmem:[#allocation5 + $0x758] sm:$0xff]
    %v450 = vld [vmem:[#allocation5 + $0x760] sm:$0xff]
    %v451 = vld [vmem:[#allocation5 + $0x768] sm:$0xff]
    %v452 = vld [vmem:[#allocation5 + $0x770] sm:$0xff]
    %v453 = vld [vmem:[#allocation5 + $0x778] sm:$0xff]
    %v454 = vld [vmem:[#allocation5 + $0x780] sm:$0xff]
    %v455 = vld [vmem:[#allocation5 + $0x788] sm:$0xff]
    %v456 = vld [vmem:[#allocation5 + $0x790] sm:$0xff]
    %v457 = vld [vmem:[#allocation5 + $0x798] sm:$0xff]
    %v458 = vld [vmem:[#allocation5 + $0x7a0] sm:$0xff]
    %v459 = vld [vmem:[#allocation5 + $0x7a8] sm:$0xff]
    %v460 = vld [vmem:[#allocation5 + $0x7b0] sm:$0xff]
    %v461 = vld [vmem:[#allocation5 + $0x7b8] sm:$0xff]
    %v462 = vld [vmem:[#allocation5 + $0x7c0] sm:$0xff]
    %v463 = vld [vmem:[#allocation5 + $0x7c8] sm:$0xff]
    %v464 = vld [vmem:[#allocation5 + $0x7d0] sm:$0xff]
    %v465 = vld [vmem:[#allocation5 + $0x7d8] sm:$0xff]
    %v466 = vld [vmem:[#allocation5 + $0x7e0] sm:$0xff]
    %v467 = vld [vmem:[#allocation5 + $0x7e8] sm:$0xff]
    %v468 = vld [vmem:[#allocation5 + $0x7f0] sm:$0xff]
    %v469 = vld [vmem:[#allocation5 + $0x7f8] sm:$0xff]
    %v470 = vld [vmem:[#allocation5 + $0x800] sm:$0xff]
    %v471 = vld [vmem:[#allocation5 + $0x808] sm:$0xff]
    %v472 = vld [vmem:[#allocation5 + $0x810] sm:$0xff]
    %v473 = vld [vmem:[#allocation5 + $0x818] sm:$0xff]
    %v474 = vld [vmem:[#allocation5 + $0x820] sm:$0xff]
    %v475 = vld [vmem:[#allocation5 + $0x828] sm:$0xff]
    %v476 = vld [vmem:[#allocation5 + $0x830] sm:$0xff]
    %v477 = vld [vmem:[#allocation5 + $0x838] sm:$0xff]
    %v478 = vld [vmem:[#allocation5 + $0x840] sm:$0xff]
    %v479 = vld [vmem:[#allocation5 + $0x848] sm:$0xff]
    %v480 = vld [vmem:[#allocation5 + $0x850] sm:$0xff]
    %v481 = vld [vmem:[#allocation5 + $0x858] sm:$0xff]
    %v482 = vld [vmem:[#allocation5 + $0x860] sm:$0xff]
    %v483 = vld [vmem:[#allocation5 + $0x868] sm:$0xff]
    %v484 = vld [vmem:[#allocation5 + $0x870] sm:$0xff]
    %v485 = vld [vmem:[#allocation5 + $0x878] sm:$0xff]
    %v486 = vld [vmem:[#allocation5 + $0x880] sm:$0xff]
    %v487 = vld [vmem:[#allocation5 + $0x888] sm:$0xff]
    %v488 = vld [vmem:[#allocation5 + $0x890] sm:$0xff]
    %v489 = vld [vmem:[#allocation5 + $0x898] sm:$0xff]
    %v490 = vld [vmem:[#allocation5 + $0x8a0] sm:$0xff]
    %v491 = vld [vmem:[#allocation5 + $0x8a8] sm:$0xff]
    %v492 = vld [vmem:[#allocation5 + $0x8b0] sm:$0xff]
    %v493 = vld [vmem:[#allocation5 + $0x8b8] sm:$0xff]
    %v494 = vld [vmem:[#allocation5 + $0x8c0] sm:$0xff]
    %v495 = vld [vmem:[#allocation5 + $0x8c8] sm:$0xff]
    %v496 = vld [vmem:[#allocation5 + $0x8d0] sm:$0xff]
    %v497 = vld [vmem:[#allocation5 + $0x8d8] sm:$0xff]
    %v498 = vld [vmem:[#allocation5 + $0x8e0] sm:$0xff]
    %v499 = vld [vmem:[#allocation5 + $0x8e8] sm:$0xff]
    %v500 = vld [vmem:[#allocation5 + $0x8f0] sm:$0xff]
    %v501 = vld [vmem:[#allocation5 + $0x8f8] sm:$0xff]
    %v502 = vld [vmem:[#allocation5 + $0x900] sm:$0xff]
    %v503 = vld [vmem:[#allocation5 + $0x908] sm:$0xff]
    %v504 = vld [vmem:[#allocation5 + $0x910] sm:$0xff]
    %v505 = vld [vmem:[#allocation5 + $0x918] sm:$0xff]
    %v506 = vld [vmem:[#allocation5 + $0x920] sm:$0xff]
    %v507 = vld [vmem:[#allocation5 + $0x928] sm:$0xff]
    %v508 = vld [vmem:[#allocation5 + $0x930] sm:$0xff]
    %v509 = vld [vmem:[#allocation5 + $0x938] sm:$0xff]
    %v510 = vld [vmem:[#allocation5 + $0x940] sm:$0xff]
    %v511 = vld [vmem:[#allocation5 + $0x948] sm:$0xff]
    %v512 = vld [vmem:[#allocation5 + $0x950] sm:$0xff]
    %v513 = vld [vmem:[#allocation5 + $0x958] sm:$0xff]
    %v514 = vld [vmem:[#allocation5 + $0x960] sm:$0xff]
    %v515 = vld [vmem:[#allocation5 + $0x968] sm:$0xff]
    %v516 = vld [vmem:[#allocation5 + $0x970] sm:$0xff]
    %v517 = vld [vmem:[#allocation5 + $0x978] sm:$0xff]
    %v518 = vld [vmem:[#allocation5 + $0x980] sm:$0xff]
    %v519 = vld [vmem:[#allocation5 + $0x988] sm:$0xff]
    %v520 = vld [vmem:[#allocation5 + $0x990] sm:$0xff]
    %v521 = vld [vmem:[#allocation5 + $0x998] sm:$0xff]
    %v522 = vld [vmem:[#allocation5 + $0x9a0] sm:$0xff]
    %v523 = vld [vmem:[#allocation5 + $0x9a8] sm:$0xff]
    %v524 = vld [vmem:[#allocation5 + $0x9b0] sm:$0xff]
    %v525 = vld [vmem:[#allocation5 + $0x9b8] sm:$0xff]
    %v526 = vld [vmem:[#allocation5 + $0x9c0] sm:$0xff]
    %v527 = vld [vmem:[#allocation5 + $0x9c8] sm:$0xff]
    %v528 = vld [vmem:[#allocation5 + $0x9d0] sm:$0xff]
    %v529 = vld [vmem:[#allocation5 + $0x9d8] sm:$0xff]
    %v530 = vld [vmem:[#allocation5 + $0x9e0] sm:$0xff]
    %v531 = vld [vmem:[#allocation5 + $0x9e8] sm:$0xff]
    %v532 = vld [vmem:[#allocation5 + $0x9f0] sm:$0xff]
    %v533 = vld [vmem:[#allocation5 + $0x9f8] sm:$0xff]
    %v534 = vld [vmem:[#allocation5 + $0xa00] sm:$0xff]
    %v535 = vld [vmem:[#allocation5 + $0xa08] sm:$0xff]
    %v536 = vld [vmem:[#allocation5 + $0xa10] sm:$0xff]
    %v537 = vld [vmem:[#allocation5 + $0xa18] sm:$0xff]
    %v538 = vld [vmem:[#allocation5 + $0xa20] sm:$0xff]
    %v539 = vld [vmem:[#allocation5 + $0xa28] sm:$0xff]
    %v540 = vld [vmem:[#allocation5 + $0xa30] sm:$0xff]
    %v541 = vld [vmem:[#allocation5 + $0xa38] sm:$0xff]
    %v542 = vld [vmem:[#allocation5 + $0xa40] sm:$0xff]
    %v543 = vld [vmem:[#allocation5 + $0xa48] sm:$0xff]
    %v544 = vld [vmem:[#allocation5 + $0xa50] sm:$0xff]
    %v545 = vld [vmem:[#allocation5 + $0xa58] sm:$0xff]
    %v546 = vld [vmem:[#allocation5 + $0xa60] sm:$0xff]
    %v547 = vld [vmem:[#allocation5 + $0xa68] sm:$0xff]
    %v548 = vld [vmem:[#allocation5 + $0xa70] sm:$0xff]
    %v549 = vld [vmem:[#allocation5 + $0xa78] sm:$0xff]
    %v550 = vld [vmem:[#allocation5 + $0xa80] sm:$0xff]
    %v551 = vld [vmem:[#allocation5 + $0xa88] sm:$0xff]
    %v552 = vld [vmem:[#allocation5 + $0xa90] sm:$0xff]
    %v553 = vld [vmem:[#allocation5 + $0xa98] sm:$0xff]
    %v554 = vld [vmem:[#allocation5 + $0xaa0] sm:$0xff]
    %v555 = vld [vmem:[#allocation5 + $0xaa8] sm:$0xff]
    %v556 = vld [vmem:[#allocation5 + $0xab0] sm:$0xff]
    %v557 = vld [vmem:[#allocation5 + $0xab8] sm:$0xff]
    %v558 = vld [vmem:[#allocation5 + $0xac0] sm:$0xff]
    %v559 = vld [vmem:[#allocation5 + $0xac8] sm:$0xff]
    %v560 = vld [vmem:[#allocation5 + $0xad0] sm:$0xff]
    %v561 = vld [vmem:[#allocation5 + $0xad8] sm:$0xff]
    %v562 = vld [vmem:[#allocation5 + $0xae0] sm:$0xff]
    %v563 = vld [vmem:[#allocation5 + $0xae8] sm:$0xff]
    %v564 = vld [vmem:[#allocation5 + $0xaf0] sm:$0xff]
    %v565 = vld [vmem:[#allocation5 + $0xaf8] sm:$0xff]
    %v566 = vld [vmem:[#allocation5 + $0xb00] sm:$0xff]
    %v567 = vld [vmem:[#allocation5 + $0xb08] sm:$0xff]
    %v568 = vld [vmem:[#allocation5 + $0xb10] sm:$0xff]
    %v569 = vld [vmem:[#allocation5 + $0xb18] sm:$0xff]
    %v570 = vld [vmem:[#allocation5 + $0xb20] sm:$0xff]
    %v571 = vld [vmem:[#allocation5 + $0xb28] sm:$0xff]
    %v572 = vld [vmem:[#allocation5 + $0xb30] sm:$0xff]
    %v573 = vld [vmem:[#allocation5 + $0xb38] sm:$0xff]
    %v574 = vld [vmem:[#allocation5 + $0xb40] sm:$0xff]
    %v575 = vld [vmem:[#allocation5 + $0xb48] sm:$0xff]
    %v576 = vld [vmem:[#allocation5 + $0xb50] sm:$0xff]
    %v577 = vld [vmem:[#allocation5 + $0xb58] sm:$0xff]
    %v578 = vld [vmem:[#allocation5 + $0xb60] sm:$0xff]
    %v579 = vld [vmem:[#allocation5 + $0xb68] sm:$0xff]
    %v580 = vld [vmem:[#allocation5 + $0xb70] sm:$0xff]
    %v581 = vld [vmem:[#allocation5 + $0xb78] sm:$0xff]
    %v582 = vld [vmem:[#allocation5 + $0xb80] sm:$0xff]
    %v583 = vld [vmem:[#allocation5 + $0xb88] sm:$0xff]
    %v584 = vld [vmem:[#allocation5 + $0xb90] sm:$0xff]
    %v585 = vld [vmem:[#allocation5 + $0xb98] sm:$0xff]
    %v586 = vld [vmem:[#allocation5 + $0xba0] sm:$0xff]
    %v587 = vld [vmem:[#allocation5 + $0xba8] sm:$0xff]
    %v588 = vld [vmem:[#allocation5 + $0xbb0] sm:$0xff]
    %v589 = vld [vmem:[#allocation5 + $0xbb8] sm:$0xff]
    %v590 = vld [vmem:[#allocation5 + $0xbc0] sm:$0xff]
    %v591 = vld [vmem:[#allocation5 + $0xbc8] sm:$0xff]
    %v592 = vld [vmem:[#allocation5 + $0xbd0] sm:$0xff]
    %v593 = vld [vmem:[#allocation5 + $0xbd8] sm:$0xff]
    %v594 = vld [vmem:[#allocation5 + $0xbe0] sm:$0xff]
    %v595 = vld [vmem:[#allocation5 + $0xbe8] sm:$0xff]
    %v596 = vld [vmem:[#allocation5 + $0xbf0] sm:$0xff]
    %v597 = vld [vmem:[#allocation5 + $0xbf8] sm:$0xff]
    %v598 = vld [vmem:[#allocation5 + $0xc00] sm:$0xff]
    %v599 = vld [vmem:[#allocation5 + $0xc08] sm:$0xff]
    %v600 = vld [vmem:[#allocation5 + $0xc10] sm:$0xff]
    %v601 = vld [vmem:[#allocation5 + $0xc18] sm:$0xff]
    %v602 = vld [vmem:[#allocation5 + $0xc20] sm:$0xff]
    %v603 = vld [vmem:[#allocation5 + $0xc28] sm:$0xff]
    %v604 = vld [vmem:[#allocation5 + $0xc30] sm:$0xff]
    %v605 = vld [vmem:[#allocation5 + $0xc38] sm:$0xff]
    %v606 = vld [vmem:[#allocation5 + $0xc40] sm:$0xff]
    %v607 = vld [vmem:[#allocation5 + $0xc48] sm:$0xff]
    %v608 = vld [vmem:[#allocation5 + $0xc50] sm:$0xff]
    %v609 = vld [vmem:[#allocation5 + $0xc58] sm:$0xff]
    %v610 = vld [vmem:[#allocation5 + $0xc60] sm:$0xff]
    %v611 = vld [vmem:[#allocation5 + $0xc68] sm:$0xff]
    %v612 = vld [vmem:[#allocation5 + $0xc70] sm:$0xff]
    %v613 = vld [vmem:[#allocation5 + $0xc78] sm:$0xff]
    %v614 = vld [vmem:[#allocation5 + $0xc80] sm:$0xff]
    %v615 = vld [vmem:[#allocation5 + $0xc88] sm:$0xff]
    %v616 = vld [vmem:[#allocation5 + $0xc90] sm:$0xff]
    %v617 = vld [vmem:[#allocation5 + $0xc98] sm:$0xff]
    %v618 = vld [vmem:[#allocation5 + $0xca0] sm:$0xff]
    %v619 = vld [vmem:[#allocation5 + $0xca8] sm:$0xff]
    %v620 = vld [vmem:[#allocation5 + $0xcb0] sm:$0xff]
    %v621 = vld [vmem:[#allocation5 + $0xcb8] sm:$0xff]
    %v622 = vld [vmem:[#allocation5 + $0xcc0] sm:$0xff]
    %v623 = vld [vmem:[#allocation5 + $0xcc8] sm:$0xff]
    %v624 = vld [vmem:[#allocation5 + $0xcd0] sm:$0xff]
    %v625 = vld [vmem:[#allocation5 + $0xcd8] sm:$0xff]
    %v626 = vld [vmem:[#allocation5 + $0xce0] sm:$0xff]
    %v627 = vld [vmem:[#allocation5 + $0xce8] sm:$0xff]
    %v628 = vld [vmem:[#allocation5 + $0xcf0] sm:$0xff]
    %v629 = vld [vmem:[#allocation5 + $0xcf8] sm:$0xff]
    %v630 = vld [vmem:[#allocation5 + $0xd00] sm:$0xff]
    %v631 = vld [vmem:[#allocation5 + $0xd08] sm:$0xff]
    %v632 = vld [vmem:[#allocation5 + $0xd10] sm:$0xff]
    %v633 = vld [vmem:[#allocation5 + $0xd18] sm:$0xff]
    %v634 = vld [vmem:[#allocation5 + $0xd20] sm:$0xff]
    %v635 = vld [vmem:[#allocation5 + $0xd28] sm:$0xff]
    %v636 = vld [vmem:[#allocation5 + $0xd30] sm:$0xff]
    %v637 = vld [vmem:[#allocation5 + $0xd38] sm:$0xff]
    %v638 = vld [vmem:[#allocation5 + $0xd40] sm:$0xff]
    %v639 = vld [vmem:[#allocation5 + $0xd48] sm:$0xff]
    %v640 = vld [vmem:[#allocation5 + $0xd50] sm:$0xff]
    %v641 = vld [vmem:[#allocation5 + $0xd58] sm:$0xff]
    %v642 = vld [vmem:[#allocation5 + $0xd60] sm:$0xff]
    %v643 = vld [vmem:[#allocation5 + $0xd68] sm:$0xff]
    %v644 = vld [vmem:[#allocation5 + $0xd70] sm:$0xff]
    %v645 = vld [vmem:[#allocation5 + $0xd78] sm:$0xff]
    %v646 = vld [vmem:[#allocation5 + $0xd80] sm:$0xff]
    %v647 = vld [vmem:[#allocation5 + $0xd88] sm:$0xff]
    %v648 = vld [vmem:[#allocation5 + $0xd90] sm:$0xff]
    %v649 = vld [vmem:[#allocation5 + $0xd98] sm:$0xff]
    %v650 = vld [vmem:[#allocation5 + $0xda0] sm:$0xff]
    %v651 = vld [vmem:[#allocation5 + $0xda8] sm:$0xff]
    %v652 = vld [vmem:[#allocation5 + $0xdb0] sm:$0xff]
    %v653 = vld [vmem:[#allocation5 + $0xdb8] sm:$0xff]
    %v654 = vld [vmem:[#allocation5 + $0xdc0] sm:$0xff]
    %v655 = vld [vmem:[#allocation5 + $0xdc8] sm:$0xff]
    %v656 = vld [vmem:[#allocation5 + $0xdd0] sm:$0xff]
    %v657 = vld [vmem:[#allocation5 + $0xdd8] sm:$0xff]
    %v658 = vld [vmem:[#allocation5 + $0xde0] sm:$0xff]
    %v659 = vld [vmem:[#allocation5 + $0xde8] sm:$0xff]
    %v660 = vld [vmem:[#allocation5 + $0xdf0] sm:$0xff]
    %v661 = vld [vmem:[#allocation5 + $0xdf8] sm:$0xff]
    %v662 = vld [vmem:[#allocation5 + $0xe00] sm:$0xff]
    %v663 = vld [vmem:[#allocation5 + $0xe08] sm:$0xff]
    %v664 = vld [vmem:[#allocation5 + $0xe10] sm:$0xff]
    %v665 = vld [vmem:[#allocation5 + $0xe18] sm:$0xff]
    %v666 = vld [vmem:[#allocation5 + $0xe20] sm:$0xff]
    %v667 = vld [vmem:[#allocation5 + $0xe28] sm:$0xff]
    %v668 = vld [vmem:[#allocation5 + $0xe30] sm:$0xff]
    %v669 = vld [vmem:[#allocation5 + $0xe38] sm:$0xff]
    %v670 = vld [vmem:[#allocation5 + $0xe40] sm:$0xff]
    %v671 = vld [vmem:[#allocation5 + $0xe48] sm:$0xff]
    %v672 = vld [vmem:[#allocation5 + $0xe50] sm:$0xff]
    %v673 = vld [vmem:[#allocation5 + $0xe58] sm:$0xff]
    %v674 = vld [vmem:[#allocation5 + $0xe60] sm:$0xff]
    %v675 = vld [vmem:[#allocation5 + $0xe68] sm:$0xff]
    %v676 = vld [vmem:[#allocation5 + $0xe70] sm:$0xff]
    %v677 = vld [vmem:[#allocation5 + $0xe78] sm:$0xff]
    %v678 = vld [vmem:[#allocation5 + $0xe80] sm:$0xff]
    %v679 = vld [vmem:[#allocation5 + $0xe88] sm:$0xff]
    %v680 = vld [vmem:[#allocation5 + $0xe90] sm:$0xff]
    %v681 = vld [vmem:[#allocation5 + $0xe98] sm:$0xff]
    %v682 = vld [vmem:[#allocation5 + $0xea0] sm:$0xff]
    %v683 = vld [vmem:[#allocation5 + $0xea8] sm:$0xff]
    %v684 = vld [vmem:[#allocation5 + $0xeb0] sm:$0xff]
    %v685 = vld [vmem:[#allocation5 + $0xeb8] sm:$0xff]
    %v686 = vld [vmem:[#allocation5 + $0xec0] sm:$0xff]
    %v687 = vld [vmem:[#allocation5 + $0xec8] sm:$0xff]
    %v688 = vld [vmem:[#allocation5 + $0xed0] sm:$0xff]
    %v689 = vld [vmem:[#allocation5 + $0xed8] sm:$0xff]
    %v690 = vld [vmem:[#allocation5 + $0xee0] sm:$0xff]
    %v691 = vld [vmem:[#allocation5 + $0xee8] sm:$0xff]
    %v692 = vld [vmem:[#allocation5 + $0xef0] sm:$0xff]
    %v693 = vld [vmem:[#allocation5 + $0xef8] sm:$0xff]
    %v694 = vld [vmem:[#allocation5 + $0xf00] sm:$0xff]
    %v695 = vld [vmem:[#allocation5 + $0xf08] sm:$0xff]
    %v696 = vld [vmem:[#allocation5 + $0xf10] sm:$0xff]
    %v697 = vld [vmem:[#allocation5 + $0xf18] sm:$0xff]
    %v698 = vld [vmem:[#allocation5 + $0xf20] sm:$0xff]
    %v699 = vld [vmem:[#allocation5 + $0xf28] sm:$0xff]
    %v700 = vld [vmem:[#allocation5 + $0xf30] sm:$0xff]
    %v701 = vld [vmem:[#allocation5 + $0xf38] sm:$0xff]
    %v702 = vld [vmem:[#allocation5 + $0xf40] sm:$0xff]
    %v703 = vld [vmem:[#allocation5 + $0xf48] sm:$0xff]
    %v704 = vld [vmem:[#allocation5 + $0xf50] sm:$0xff]
    %v705 = vld [vmem:[#allocation5 + $0xf58] sm:$0xff]
    %v706 = vld [vmem:[#allocation5 + $0xf60] sm:$0xff]
    %v707 = vld [vmem:[#allocation5 + $0xf68] sm:$0xff]
    %v708 = vld [vmem:[#allocation5 + $0xf70] sm:$0xff]
    %v709 = vld [vmem:[#allocation5 + $0xf78] sm:$0xff]
    %v710 = vld [vmem:[#allocation5 + $0xf80] sm:$0xff]
    %v711 = vld [vmem:[#allocation5 + $0xf88] sm:$0xff]
    %v712 = vld [vmem:[#allocation5 + $0xf90] sm:$0xff]
    %v713 = vld [vmem:[#allocation5 + $0xf98] sm:$0xff]
    %v714 = vld [vmem:[#allocation5 + $0xfa0] sm:$0xff]
    %v715 = vld [vmem:[#allocation5 + $0xfa8] sm:$0xff]
    %v716 = vld [vmem:[#allocation5 + $0xfb0] sm:$0xff]
    %v717 = vld [vmem:[#allocation5 + $0xfb8] sm:$0xff]
    %v718 = vld [vmem:[#allocation5 + $0xfc0] sm:$0xff]
    %v719 = vld [vmem:[#allocation5 + $0xfc8] sm:$0xff]
    %v720 = vld [vmem:[#allocation5 + $0xfd0] sm:$0xff]
    %v721 = vld [vmem:[#allocation5 + $0xfd8] sm:$0xff]
    %v722 = vld [vmem:[#allocation5 + $0xfe0] sm:$0xff]
    %v723 = vld [vmem:[#allocation5 + $0xfe8] sm:$0xff]
    %v724 = vld [vmem:[#allocation5 + $0xff0] sm:$0xff]
    %v725 = vld [vmem:[#allocation5 + $0xff8] sm:$0xff]
    %v726 = vld [vmem:[#allocation5 + $0x1000] sm:$0xff]
    %v727 = vld [vmem:[#allocation5 + $0x1008] sm:$0xff]
    %v728 = vld [vmem:[#allocation5 + $0x1010] sm:$0xff]
    %v729 = vld [vmem:[#allocation5 + $0x1018] sm:$0xff]
    %v730 = vld [vmem:[#allocation5 + $0x1020] sm:$0xff]
    %v731 = vld [vmem:[#allocation5 + $0x1028] sm:$0xff]
    %v732 = vld [vmem:[#allocation5 + $0x1030] sm:$0xff]
    %v733 = vld [vmem:[#allocation5 + $0x1038] sm:$0xff]
    %v734 = vld [vmem:[#allocation5 + $0x1040] sm:$0xff]
    %v735 = vld [vmem:[#allocation5 + $0x1048] sm:$0xff]
    %v736 = vld [vmem:[#allocation5 + $0x1050] sm:$0xff]
    %v737 = vld [vmem:[#allocation5 + $0x1058] sm:$0xff]
    %v738 = vld [vmem:[#allocation5 + $0x1060] sm:$0xff]
    %v739 = vld [vmem:[#allocation5 + $0x1068] sm:$0xff]
    %v740 = vld [vmem:[#allocation5 + $0x1070] sm:$0xff]
    %v741 = vld [vmem:[#allocation5 + $0x1078] sm:$0xff]
    %v742 = vld [vmem:[#allocation5 + $0x1080] sm:$0xff]
    %v743 = vld [vmem:[#allocation5 + $0x1088] sm:$0xff]
    %v744 = vld [vmem:[#allocation5 + $0x1090] sm:$0xff]
    %v745 = vld [vmem:[#allocation5 + $0x1098] sm:$0xff]
    %v746 = vld [vmem:[#allocation5 + $0x10a0] sm:$0xff]
    %v747 = vld [vmem:[#allocation5 + $0x10a8] sm:$0xff]
    %v748 = vld [vmem:[#allocation5 + $0x10b0] sm:$0xff]
    %v749 = vld [vmem:[#allocation5 + $0x10b8] sm:$0xff]
    %v750 = vld [vmem:[#allocation5 + $0x10c0] sm:$0xff]
    %v751 = vld [vmem:[#allocation5 + $0x10c8] sm:$0xff]
    %v752 = vld [vmem:[#allocation5 + $0x10d0] sm:$0xff]
    %v753 = vld [vmem:[#allocation5 + $0x10d8] sm:$0xff]
    %v754 = vld [vmem:[#allocation5 + $0x10e0] sm:$0xff]
    %v755 = vld [vmem:[#allocation5 + $0x10e8] sm:$0xff]
    %v756 = vld [vmem:[#allocation5 + $0x10f0] sm:$0xff]
    %v757 = vld [vmem:[#allocation5 + $0x10f8] sm:$0xff]
    %v758 = vld [vmem:[#allocation5 + $0x1100] sm:$0xff]
    %v759 = vld [vmem:[#allocation5 + $0x1108] sm:$0xff]
    %v760 = vld [vmem:[#allocation5 + $0x1110] sm:$0xff]
    %v761 = vld [vmem:[#allocation5 + $0x1118] sm:$0xff]
    %v762 = vld [vmem:[#allocation5 + $0x1120] sm:$0xff]
    %v763 = vld [vmem:[#allocation5 + $0x1128] sm:$0xff]
    %v764 = vld [vmem:[#allocation5 + $0x1130] sm:$0xff]
    %v765 = vld [vmem:[#allocation5 + $0x1138] sm:$0xff]
    %v766 = vld [vmem:[#allocation5 + $0x1140] sm:$0xff]
    %v767 = vld [vmem:[#allocation5 + $0x1148] sm:$0xff]
    %v768 = vld [vmem:[#allocation5 + $0x1150] sm:$0xff]
    %v769 = vld [vmem:[#allocation5 + $0x1158] sm:$0xff]
    %v770 = vld [vmem:[#allocation5 + $0x1160] sm:$0xff]
    %v771 = vld [vmem:[#allocation5 + $0x1168] sm:$0xff]
    %v772 = vld [vmem:[#allocation5 + $0x1170] sm:$0xff]
    %v773 = vld [vmem:[#allocation5 + $0x1178] sm:$0xff]
    %v774 = vld [vmem:[#allocation5 + $0x1180] sm:$0xff]
    %v775 = vld [vmem:[#allocation5 + $0x1188] sm:$0xff]
    %v776 = vld [vmem:[#allocation5 + $0x1190] sm:$0xff]
    %v777 = vld [vmem:[#allocation5 + $0x1198] sm:$0xff]
    %v778 = vld [vmem:[#allocation5 + $0x11a0] sm:$0xff]
    %v779 = vld [vmem:[#allocation5 + $0x11a8] sm:$0xff]
    %v780 = vld [vmem:[#allocation5 + $0x11b0] sm:$0xff]
    %v781 = vld [vmem:[#allocation5 + $0x11b8] sm:$0xff]
    %v782 = vld [vmem:[#allocation5 + $0x11c0] sm:$0xff]
    %v783 = vld [vmem:[#allocation5 + $0x11c8] sm:$0xff]
    %v784 = vld [vmem:[#allocation5 + $0x11d0] sm:$0xff]
    %v785 = vld [vmem:[#allocation5 + $0x11d8] sm:$0xff]
    %v786 = vld [vmem:[#allocation5 + $0x11e0] sm:$0xff]
    %v787 = vld [vmem:[#allocation5 + $0x11e8] sm:$0xff]
    %v788 = vld [vmem:[#allocation5 + $0x11f0] sm:$0xff]
    %v789 = vld [vmem:[#allocation5 + $0x11f8] sm:$0xff]
    %v790 = vld [vmem:[#allocation5 + $0x1200] sm:$0xff]
    %v791 = vld [vmem:[#allocation5 + $0x1208] sm:$0xff]
    %v792 = vld [vmem:[#allocation5 + $0x1210] sm:$0xff]
    %v793 = vld [vmem:[#allocation5 + $0x1218] sm:$0xff]
    %v794 = vld [vmem:[#allocation5 + $0x1220] sm:$0xff]
    %v795 = vld [vmem:[#allocation5 + $0x1228] sm:$0xff]
    %v796 = vld [vmem:[#allocation5 + $0x1230] sm:$0xff]
    %v797 = vld [vmem:[#allocation5 + $0x1238] sm:$0xff]
    %v798 = vld [vmem:[#allocation5 + $0x1240] sm:$0xff]
    %v799 = vld [vmem:[#allocation5 + $0x1248] sm:$0xff]
    %v800 = vld [vmem:[#allocation5 + $0x1250] sm:$0xff]
    %v801 = vld [vmem:[#allocation5 + $0x1258] sm:$0xff]
    %v802 = vld [vmem:[#allocation5 + $0x1260] sm:$0xff]
    %v803 = vld [vmem:[#allocation5 + $0x1268] sm:$0xff]
    %v804 = vld [vmem:[#allocation5 + $0x1270] sm:$0xff]
    %v805 = vld [vmem:[#allocation5 + $0x1278] sm:$0xff]
    %v806 = vld [vmem:[#allocation5 + $0x1280] sm:$0xff]
    %v807 = vld [vmem:[#allocation5 + $0x1288] sm:$0xff]
    %v808 = vld [vmem:[#allocation5 + $0x1290] sm:$0xff]
    %v809 = vld [vmem:[#allocation5 + $0x1298] sm:$0xff]
    %v810 = vld [vmem:[#allocation5 + $0x12a0] sm:$0xff]
    %v811 = vld [vmem:[#allocation5 + $0x12a8] sm:$0xff]
    %v812 = vld [vmem:[#allocation5 + $0x12b0] sm:$0xff]
    %v813 = vld [vmem:[#allocation5 + $0x12b8] sm:$0xff]
    %v814 = vld [vmem:[#allocation5 + $0x12c0] sm:$0xff]
    %v815 = vld [vmem:[#allocation5 + $0x12c8] sm:$0xff]
    %v816 = vld [vmem:[#allocation5 + $0x12d0] sm:$0xff]
    %v817 = vld [vmem:[#allocation5 + $0x12d8] sm:$0xff]
    %v818 = vld [vmem:[#allocation5 + $0x12e0] sm:$0xff]
    %v819 = vld [vmem:[#allocation5 + $0x12e8] sm:$0xff]
    %v820 = vld [vmem:[#allocation5 + $0x12f0] sm:$0xff]
    %v821 = vld [vmem:[#allocation5 + $0x12f8] sm:$0xff]
    %v822 = vld [vmem:[#allocation5 + $0x1300] sm:$0xff]
    %v823 = vld [vmem:[#allocation5 + $0x1308] sm:$0xff]
    %v824 = vld [vmem:[#allocation5 + $0x1310] sm:$0xff]
    %v825 = vld [vmem:[#allocation5 + $0x1318] sm:$0xff]
    %v826 = vld [vmem:[#allocation5 + $0x1320] sm:$0xff]
    %v827 = vld [vmem:[#allocation5 + $0x1328] sm:$0xff]
    %v828 = vld [vmem:[#allocation5 + $0x1330] sm:$0xff]
    %v829 = vld [vmem:[#allocation5 + $0x1338] sm:$0xff]
    %v830 = vld [vmem:[#allocation5 + $0x1340] sm:$0xff]
    %v831 = vld [vmem:[#allocation5 + $0x1348] sm:$0xff]
    %v832 = vld [vmem:[#allocation5 + $0x1350] sm:$0xff]
    %v833 = vld [vmem:[#allocation5 + $0x1358] sm:$0xff]
    %v834 = vld [vmem:[#allocation5 + $0x1360] sm:$0xff]
    %v835 = vld [vmem:[#allocation5 + $0x1368] sm:$0xff]
    %v836 = vld [vmem:[#allocation5 + $0x1370] sm:$0xff]
    %v837 = vld [vmem:[#allocation5 + $0x1378] sm:$0xff]
    %v838 = vld [vmem:[#allocation5 + $0x1380] sm:$0xff]
    %v839 = vld [vmem:[#allocation5 + $0x1388] sm:$0xff]
    %v840 = vld [vmem:[#allocation5 + $0x1390] sm:$0xff]
    %v841 = vld [vmem:[#allocation5 + $0x1398] sm:$0xff]
    %v842 = vld [vmem:[#allocation5 + $0x13a0] sm:$0xff]
    %v843 = vld [vmem:[#allocation5 + $0x13a8] sm:$0xff]
    %v844 = vld [vmem:[#allocation5 + $0x13b0] sm:$0xff]
    %v845 = vld [vmem:[#allocation5 + $0x13b8] sm:$0xff]
    %v846 = vld [vmem:[#allocation5 + $0x13c0] sm:$0xff]
    %v847 = vld [vmem:[#allocation5 + $0x13c8] sm:$0xff]
    %v848 = vld [vmem:[#allocation5 + $0x13d0] sm:$0xff]
    %v849 = vld [vmem:[#allocation5 + $0x13d8] sm:$0xff]
    %v850 = vld [vmem:[#allocation5 + $0x13e0] sm:$0xff]
    %v851 = vld [vmem:[#allocation5 + $0x13e8] sm:$0xff]
    %v852 = vld [vmem:[#allocation5 + $0x13f0] sm:$0xff]
    %v853 = vld [vmem:[#allocation5 + $0x13f8] sm:$0xff]
    %v854 = vld [vmem:[#allocation5 + $0x1400] sm:$0xff]
    %v855 = vld [vmem:[#allocation5 + $0x1408] sm:$0xff]
    %v856 = vld [vmem:[#allocation5 + $0x1410] sm:$0xff]
    %v857 = vld [vmem:[#allocation5 + $0x1418] sm:$0xff]
    %v858 = vld [vmem:[#allocation5 + $0x1420] sm:$0xff]
    %v859 = vld [vmem:[#allocation5 + $0x1428] sm:$0xff]
    %v860 = vld [vmem:[#allocation5 + $0x1430] sm:$0xff]
    %v861 = vld [vmem:[#allocation5 + $0x1438] sm:$0xff]
    %v862 = vld [vmem:[#allocation5 + $0x1440] sm:$0xff]
    %v863 = vld [vmem:[#allocation5 + $0x1448] sm:$0xff]
    %v864 = vld [vmem:[#allocation5 + $0x1450] sm:$0xff]
    %v865 = vld [vmem:[#allocation5 + $0x1458] sm:$0xff]
    %v866 = vld [vmem:[#allocation5 + $0x1460] sm:$0xff]
    %v867 = vld [vmem:[#allocation5 + $0x1468] sm:$0xff]
    %v868 = vld [vmem:[#allocation5 + $0x1470] sm:$0xff]
    %v869 = vld [vmem:[#allocation5 + $0x1478] sm:$0xff]
    %v870 = vld [vmem:[#allocation5 + $0x1480] sm:$0xff]
    %v871 = vld [vmem:[#allocation5 + $0x1488] sm:$0xff]
    %v872 = vld [vmem:[#allocation5 + $0x1490] sm:$0xff]
    %v873 = vld [vmem:[#allocation5 + $0x1498] sm:$0xff]
    %v874 = vld [vmem:[#allocation5 + $0x14a0] sm:$0xff]
    %v875 = vld [vmem:[#allocation5 + $0x14a8] sm:$0xff]
    %v876 = vld [vmem:[#allocation5 + $0x14b0] sm:$0xff]
    %v877 = vld [vmem:[#allocation5 + $0x14b8] sm:$0xff]
    %v878 = vld [vmem:[#allocation5 + $0x14c0] sm:$0xff]
    %v879 = vld [vmem:[#allocation5 + $0x14c8] sm:$0xff]
    %v880 = vld [vmem:[#allocation5 + $0x14d0] sm:$0xff]
    %v881 = vld [vmem:[#allocation5 + $0x14d8] sm:$0xff]
    %v882 = vld [vmem:[#allocation5 + $0x14e0] sm:$0xff]
    %v883 = vld [vmem:[#allocation5 + $0x14e8] sm:$0xff]
    %v884 = vld [vmem:[#allocation5 + $0x14f0] sm:$0xff]
    %v885 = vld [vmem:[#allocation5 + $0x14f8] sm:$0xff]
    %v886 = vld [vmem:[#allocation5 + $0x1500] sm:$0xff]
    %v887 = vld [vmem:[#allocation5 + $0x1508] sm:$0xff]
    %v888 = vld [vmem:[#allocation5 + $0x1510] sm:$0xff]
    %v889 = vld [vmem:[#allocation5 + $0x1518] sm:$0xff]
    %v890 = vld [vmem:[#allocation5 + $0x1520] sm:$0xff]
    %v891 = vld [vmem:[#allocation5 + $0x1528] sm:$0xff]
    %v892 = vld [vmem:[#allocation5 + $0x1530] sm:$0xff]
    %v893 = vld [vmem:[#allocation5 + $0x1538] sm:$0xff]
    %v894 = vld [vmem:[#allocation5 + $0x1540] sm:$0xff]
    %v895 = vld [vmem:[#allocation5 + $0x1548] sm:$0xff]
    %v896 = vld [vmem:[#allocation5 + $0x1550] sm:$0xff]
    %v897 = vld [vmem:[#allocation5 + $0x1558] sm:$0xff]
    %v898 = vld [vmem:[#allocation5 + $0x1560] sm:$0xff]
    %v899 = vld [vmem:[#allocation5 + $0x1568] sm:$0xff]
    %v900 = vld [vmem:[#allocation5 + $0x1570] sm:$0xff]
    %v901 = vld [vmem:[#allocation5 + $0x1578] sm:$0xff]
    %v902 = vld [vmem:[#allocation5 + $0x1580] sm:$0xff]
    %v903 = vld [vmem:[#allocation5 + $0x1588] sm:$0xff]
    %v904 = vld [vmem:[#allocation5 + $0x1590] sm:$0xff]
    %v905 = vld [vmem:[#allocation5 + $0x1598] sm:$0xff]
    %v906 = vld [vmem:[#allocation5 + $0x15a0] sm:$0xff]
    %v907 = vld [vmem:[#allocation5 + $0x15a8] sm:$0xff]
    %v908 = vld [vmem:[#allocation5 + $0x15b0] sm:$0xff]
    %v909 = vld [vmem:[#allocation5 + $0x15b8] sm:$0xff]
    %v910 = vld [vmem:[#allocation5 + $0x15c0] sm:$0xff]
    %v911 = vld [vmem:[#allocation5 + $0x15c8] sm:$0xff]
    %v912 = vld [vmem:[#allocation5 + $0x15d0] sm:$0xff]
    %v913 = vld [vmem:[#allocation5 + $0x15d8] sm:$0xff]
    %v914 = vld [vmem:[#allocation5 + $0x15e0] sm:$0xff]
    %v915 = vld [vmem:[#allocation5 + $0x15e8] sm:$0xff]
    %v916 = vld [vmem:[#allocation5 + $0x15f0] sm:$0xff]
    %v917 = vld [vmem:[#allocation5 + $0x15f8] sm:$0xff]
    %v918 = vld [vmem:[#allocation5 + $0x1600] sm:$0xff]
    %v919 = vld [vmem:[#allocation5 + $0x1608] sm:$0xff]
    %v920 = vld [vmem:[#allocation5 + $0x1610] sm:$0xff]
    %v921 = vld [vmem:[#allocation5 + $0x1618] sm:$0xff]
    %v922 = vld [vmem:[#allocation5 + $0x1620] sm:$0xff]
    %v923 = vld [vmem:[#allocation5 + $0x1628] sm:$0xff]
    %v924 = vld [vmem:[#allocation5 + $0x1630] sm:$0xff]
    %v925 = vld [vmem:[#allocation5 + $0x1638] sm:$0xff]
    %v926 = vld [vmem:[#allocation5 + $0x1640] sm:$0xff]
    %v927 = vld [vmem:[#allocation5 + $0x1648] sm:$0xff]
    %v928 = vld [vmem:[#allocation5 + $0x1650] sm:$0xff]
    %v929 = vld [vmem:[#allocation5 + $0x1658] sm:$0xff]
    %v930 = vld [vmem:[#allocation5 + $0x1660] sm:$0xff]
    %v931 = vld [vmem:[#allocation5 + $0x1668] sm:$0xff]
    %v932 = vld [vmem:[#allocation5 + $0x1670] sm:$0xff]
    %v933 = vld [vmem:[#allocation5 + $0x1678] sm:$0xff]
    %v934 = vld [vmem:[#allocation5 + $0x1680] sm:$0xff]
    %v935 = vld [vmem:[#allocation5 + $0x1688] sm:$0xff]
    %v936 = vld [vmem:[#allocation5 + $0x1690] sm:$0xff]
    %v937 = vld [vmem:[#allocation5 + $0x1698] sm:$0xff]
    %v938 = vld [vmem:[#allocation5 + $0x16a0] sm:$0xff]
    %v939 = vld [vmem:[#allocation5 + $0x16a8] sm:$0xff]
    %v940 = vld [vmem:[#allocation5 + $0x16b0] sm:$0xff]
    %v941 = vld [vmem:[#allocation5 + $0x16b8] sm:$0xff]
    %v942 = vld [vmem:[#allocation5 + $0x16c0] sm:$0xff]
    %v943 = vld [vmem:[#allocation5 + $0x16c8] sm:$0xff]
    %v944 = vld [vmem:[#allocation5 + $0x16d0] sm:$0xff]
    %v945 = vld [vmem:[#allocation5 + $0x16d8] sm:$0xff]
    %v946 = vld [vmem:[#allocation5 + $0x16e0] sm:$0xff]
    %v947 = vld [vmem:[#allocation5 + $0x16e8] sm:$0xff]
    %v948 = vld [vmem:[#allocation5 + $0x16f0] sm:$0xff]
    %v949 = vld [vmem:[#allocation5 + $0x16f8] sm:$0xff]
    %v950 = vld [vmem:[#allocation5 + $0x1700] sm:$0xff]
    %v951 = vld [vmem:[#allocation5 + $0x1708] sm:$0xff]
    %v952 = vld [vmem:[#allocation5 + $0x1710] sm:$0xff]
    %v953 = vld [vmem:[#allocation5 + $0x1718] sm:$0xff]
    %v954 = vld [vmem:[#allocation5 + $0x1720] sm:$0xff]
    %v955 = vld [vmem:[#allocation5 + $0x1728] sm:$0xff]
    %v956 = vld [vmem:[#allocation5 + $0x1730] sm:$0xff]
    %v957 = vld [vmem:[#allocation5 + $0x1738] sm:$0xff]
    %v958 = vld [vmem:[#allocation5 + $0x1740] sm:$0xff]
    %v959 = vld [vmem:[#allocation5 + $0x1748] sm:$0xff]
    %v960 = vld [vmem:[#allocation5 + $0x1750] sm:$0xff]
    %v961 = vld [vmem:[#allocation5 + $0x1758] sm:$0xff]
    %v962 = vld [vmem:[#allocation5 + $0x1760] sm:$0xff]
    %v963 = vld [vmem:[#allocation5 + $0x1768] sm:$0xff]
    %v964 = vld [vmem:[#allocation5 + $0x1770] sm:$0xff]
    %v965 = vld [vmem:[#allocation5 + $0x1778] sm:$0xff]
    %v966 = vld [vmem:[#allocation5 + $0x1780] sm:$0xff]
    %v967 = vld [vmem:[#allocation5 + $0x1788] sm:$0xff]
    %v968 = vld [vmem:[#allocation5 + $0x1790] sm:$0xff]
    %v969 = vld [vmem:[#allocation5 + $0x1798] sm:$0xff]
    %v970 = vld [vmem:[#allocation5 + $0x17a0] sm:$0xff]
    %v971 = vld [vmem:[#allocation5 + $0x17a8] sm:$0xff]
    %v972 = vld [vmem:[#allocation5 + $0x17b0] sm:$0xff]
    %v973 = vld [vmem:[#allocation5 + $0x17b8] sm:$0xff]
    %v974 = vld [vmem:[#allocation5 + $0x17c0] sm:$0xff]
    %v975 = vld [vmem:[#allocation5 + $0x17c8] sm:$0xff]
    %v976 = vld [vmem:[#allocation5 + $0x17d0] sm:$0xff]
    %v977 = vld [vmem:[#allocation5 + $0x17d8] sm:$0xff]
    %v978 = vld [vmem:[#allocation5 + $0x17e0] sm:$0xff]
    %v979 = vld [vmem:[#allocation5 + $0x17e8] sm:$0xff]
    %v980 = vld [vmem:[#allocation5 + $0x17f0] sm:$0xff]
    %v981 = vld [vmem:[#allocation5 + $0x17f8] sm:$0xff]
    %v982 = vld [vmem:[#allocation5 + $0x1800] sm:$0xff]
    %v983 = vld [vmem:[#allocation5 + $0x1808] sm:$0xff]
    %v984 = vld [vmem:[#allocation5 + $0x1810] sm:$0xff]
    %v985 = vld [vmem:[#allocation5 + $0x1818] sm:$0xff]
    %v986 = vld [vmem:[#allocation5 + $0x1820] sm:$0xff]
    %v987 = vld [vmem:[#allocation5 + $0x1828] sm:$0xff]
    %v988 = vld [vmem:[#allocation5 + $0x1830] sm:$0xff]
    %v989 = vld [vmem:[#allocation5 + $0x1838] sm:$0xff]
    %v990 = vld [vmem:[#allocation5 + $0x1840] sm:$0xff]
    %v991 = vld [vmem:[#allocation5 + $0x1848] sm:$0xff]
    %v992 = vld [vmem:[#allocation5 + $0x1850] sm:$0xff]
    %v993 = vld [vmem:[#allocation5 + $0x1858] sm:$0xff]
    %v994 = vld [vmem:[#allocation5 + $0x1860] sm:$0xff]
    %v995 = vld [vmem:[#allocation5 + $0x1868] sm:$0xff]
    %v996 = vld [vmem:[#allocation5 + $0x1870] sm:$0xff]
    %v997 = vld [vmem:[#allocation5 + $0x1878] sm:$0xff]
    %v998 = vld [vmem:[#allocation5 + $0x1880] sm:$0xff]
    %v999 = vld [vmem:[#allocation5 + $0x1888] sm:$0xff]
    %v1000 = vld [vmem:[#allocation5 + $0x1890] sm:$0xff]
    %v1001 = vld [vmem:[#allocation5 + $0x1898] sm:$0xff]
    %v1002 = vld [vmem:[#allocation5 + $0x18a0] sm:$0xff]
    %v1003 = vld [vmem:[#allocation5 + $0x18a8] sm:$0xff]
    %v1004 = vld [vmem:[#allocation5 + $0x18b0] sm:$0xff]
    %v1005 = vld [vmem:[#allocation5 + $0x18b8] sm:$0xff]
    %v1006 = vld [vmem:[#allocation5 + $0x18c0] sm:$0xff]
    %v1007 = vld [vmem:[#allocation5 + $0x18c8] sm:$0xff]
    %v1008 = vld [vmem:[#allocation5 + $0x18d0] sm:$0xff]
    %v1009 = vld [vmem:[#allocation5 + $0x18d8] sm:$0xff]
    %v1010 = vld [vmem:[#allocation5 + $0x18e0] sm:$0xff]
    %v1011 = vld [vmem:[#allocation5 + $0x18e8] sm:$0xff]
    %v1012 = vld [vmem:[#allocation5 + $0x18f0] sm:$0xff]
    %v1013 = vld [vmem:[#allocation5 + $0x18f8] sm:$0xff]
    %v1014 = vld [vmem:[#allocation5 + $0x1900] sm:$0xff]
    %v1015 = vld [vmem:[#allocation5 + $0x1908] sm:$0xff]
    %v1016 = vld [vmem:[#allocation5 + $0x1910] sm:$0xff]
    %v1017 = vld [vmem:[#allocation5 + $0x1918] sm:$0xff]
    %v1018 = vld [vmem:[#allocation5 + $0x1920] sm:$0xff]
    %v1019 = vld [vmem:[#allocation5 + $0x1928] sm:$0xff]
    %v1020 = vld [vmem:[#allocation5 + $0x1930] sm:$0xff]
    %v1021 = vld [vmem:[#allocation5 + $0x1938] sm:$0xff]
    %v1022 = vld [vmem:[#allocation5 + $0x1940] sm:$0xff]
    %v1023 = vld [vmem:[#allocation5 + $0x1948] sm:$0xff]
    %v1024 = vld [vmem:[#allocation5 + $0x1950] sm:$0xff]
    %v1025 = vld [vmem:[#allocation5 + $0x1958] sm:$0xff]
    %v1026 = vld [vmem:[#allocation5 + $0x1960] sm:$0xff]
    %v1027 = vld [vmem:[#allocation5 + $0x1968] sm:$0xff]
    %v1028 = vld [vmem:[#allocation5 + $0x1970] sm:$0xff]
    %v1029 = vld [vmem:[#allocation5 + $0x1978] sm:$0xff]
    %v1030 = vld [vmem:[#allocation5 + $0x1980] sm:$0xff]
    %v1031 = vld [vmem:[#allocation5 + $0x1988] sm:$0xff]
    %v1032 = vld [vmem:[#allocation5 + $0x1990] sm:$0xff]
    %v1033 = vld [vmem:[#allocation5 + $0x1998] sm:$0xff]
    %v1034 = vld [vmem:[#allocation5 + $0x19a0] sm:$0xff]
    %v1035 = vld [vmem:[#allocation5 + $0x19a8] sm:$0xff]
    %v1036 = vld [vmem:[#allocation5 + $0x19b0] sm:$0xff]
    %v1037 = vld [vmem:[#allocation5 + $0x19b8] sm:$0xff]
    %v1038 = vld [vmem:[#allocation5 + $0x19c0] sm:$0xff]
    %v1039 = vld [vmem:[#allocation5 + $0x19c8] sm:$0xff]
    %v1040 = vld [vmem:[#allocation5 + $0x19d0] sm:$0xff]
    %v1041 = vld [vmem:[#allocation5 + $0x19d8] sm:$0xff]
    %v1042 = vld [vmem:[#allocation5 + $0x19e0] sm:$0xff]
    %v1043 = vld [vmem:[#allocation5 + $0x19e8] sm:$0xff]
    %v1044 = vld [vmem:[#allocation5 + $0x19f0] sm:$0xff]
    %v1045 = vld [vmem:[#allocation5 + $0x19f8] sm:$0xff]
    %v1046 = vld [vmem:[#allocation5 + $0x1a00] sm:$0xff]
    %v1047 = vld [vmem:[#allocation5 + $0x1a08] sm:$0xff]
    %v1048 = vld [vmem:[#allocation5 + $0x1a10] sm:$0xff]
    %v1049 = vld [vmem:[#allocation5 + $0x1a18] sm:$0xff]
    %v1050 = vld [vmem:[#allocation5 + $0x1a20] sm:$0xff]
    %v1051 = vld [vmem:[#allocation5 + $0x1a28] sm:$0xff]
    %v1052 = vld [vmem:[#allocation5 + $0x1a30] sm:$0xff]
    %v1053 = vld [vmem:[#allocation5 + $0x1a38] sm:$0xff]
    %v1054 = vld [vmem:[#allocation5 + $0x1a40] sm:$0xff]
    %v1055 = vld [vmem:[#allocation5 + $0x1a48] sm:$0xff]
    %v1056 = vld [vmem:[#allocation5 + $0x1a50] sm:$0xff]
    %v1057 = vld [vmem:[#allocation5 + $0x1a58] sm:$0xff]
    %v1058 = vld [vmem:[#allocation5 + $0x1a60] sm:$0xff]
    %v1059 = vld [vmem:[#allocation5 + $0x1a68] sm:$0xff]
    %v1060 = vld [vmem:[#allocation5 + $0x1a70] sm:$0xff]
    %v1061 = vld [vmem:[#allocation5 + $0x1a78] sm:$0xff]
    %v1062 = vld [vmem:[#allocation5 + $0x1a80] sm:$0xff]
    %v1063 = vld [vmem:[#allocation5 + $0x1a88] sm:$0xff]
    %v1064 = vld [vmem:[#allocation5 + $0x1a90] sm:$0xff]
    %v1065 = vld [vmem:[#allocation5 + $0x1a98] sm:$0xff]
    %v1066 = vld [vmem:[#allocation5 + $0x1aa0] sm:$0xff]
    %v1067 = vld [vmem:[#allocation5 + $0x1aa8] sm:$0xff]
    %v1068 = vld [vmem:[#allocation5 + $0x1ab0] sm:$0xff]
    %v1069 = vld [vmem:[#allocation5 + $0x1ab8] sm:$0xff]
    %v1070 = vld [vmem:[#allocation5 + $0x1ac0] sm:$0xff]
    %v1071 = vld [vmem:[#allocation5 + $0x1ac8] sm:$0xff]
    %v1072 = vld [vmem:[#allocation5 + $0x1ad0] sm:$0xff]
    %v1073 = vld [vmem:[#allocation5 + $0x1ad8] sm:$0xff]
    %v1074 = vld [vmem:[#allocation5 + $0x1ae0] sm:$0xff]
    %v1075 = vld [vmem:[#allocation5 + $0x1ae8] sm:$0xff]
    %v1076 = vld [vmem:[#allocation5 + $0x1af0] sm:$0xff]
    %v1077 = vld [vmem:[#allocation5 + $0x1af8] sm:$0xff]
    %v1078 = vld [vmem:[#allocation5 + $0x1b00] sm:$0xff]
    %v1079 = vld [vmem:[#allocation5 + $0x1b08] sm:$0xff]
    %v1080 = vld [vmem:[#allocation5 + $0x1b10] sm:$0xff]
    %v1081 = vld [vmem:[#allocation5 + $0x1b18] sm:$0xff]
    %v1082 = vld [vmem:[#allocation5 + $0x1b20] sm:$0xff]
    %v1083 = vld [vmem:[#allocation5 + $0x1b28] sm:$0xff]
    %v1084 = vld [vmem:[#allocation5 + $0x1b30] sm:$0xff]
    %v1085 = vld [vmem:[#allocation5 + $0x1b38] sm:$0xff]
    %v1086 = vld [vmem:[#allocation5 + $0x1b40] sm:$0xff]
    %v1087 = vld [vmem:[#allocation5 + $0x1b48] sm:$0xff]
    %v1088 = vld [vmem:[#allocation5 + $0x1b50] sm:$0xff]
    %v1089 = vld [vmem:[#allocation5 + $0x1b58] sm:$0xff]
    %v1090 = vld [vmem:[#allocation5 + $0x1b60] sm:$0xff]
    %v1091 = vld [vmem:[#allocation5 + $0x1b68] sm:$0xff]
    %v1092 = vld [vmem:[#allocation5 + $0x1b70] sm:$0xff]
    %v1093 = vld [vmem:[#allocation5 + $0x1b78] sm:$0xff]
    %v1094 = vld [vmem:[#allocation5 + $0x1b80] sm:$0xff]
    %v1095 = vld [vmem:[#allocation5 + $0x1b88] sm:$0xff]
    %v1096 = vld [vmem:[#allocation5 + $0x1b90] sm:$0xff]
    %v1097 = vld [vmem:[#allocation5 + $0x1b98] sm:$0xff]
    %v1098 = vld [vmem:[#allocation5 + $0x1ba0] sm:$0xff]
    %v1099 = vld [vmem:[#allocation5 + $0x1ba8] sm:$0xff]
    %v1100 = vld [vmem:[#allocation5 + $0x1bb0] sm:$0xff]
    %v1101 = vld [vmem:[#allocation5 + $0x1bb8] sm:$0xff]
    %v1102 = vld [vmem:[#allocation5 + $0x1bc0] sm:$0xff]
    %v1103 = vld [vmem:[#allocation5 + $0x1bc8] sm:$0xff]
    %v1104 = vld [vmem:[#allocation5 + $0x1bd0] sm:$0xff]
    %v1105 = vld [vmem:[#allocation5 + $0x1bd8] sm:$0xff]
    %v1106 = vld [vmem:[#allocation5 + $0x1be0] sm:$0xff]
    %v1107 = vld [vmem:[#allocation5 + $0x1be8] sm:$0xff]
    %v1108 = vld [vmem:[#allocation5 + $0x1bf0] sm:$0xff]
    %v1109 = vld [vmem:[#allocation5 + $0x1bf8] sm:$0xff]
    %v1110 = vld [vmem:[#allocation5 + $0x1c00] sm:$0xff]
    %v1111 = vld [vmem:[#allocation5 + $0x1c08] sm:$0xff]
    %v1112 = vld [vmem:[#allocation5 + $0x1c10] sm:$0xff]
    %v1113 = vld [vmem:[#allocation5 + $0x1c18] sm:$0xff]
    %v1114 = vld [vmem:[#allocation5 + $0x1c20] sm:$0xff]
    %v1115 = vld [vmem:[#allocation5 + $0x1c28] sm:$0xff]
    %v1116 = vld [vmem:[#allocation5 + $0x1c30] sm:$0xff]
    %v1117 = vld [vmem:[#allocation5 + $0x1c38] sm:$0xff]
    %v1118 = vld [vmem:[#allocation5 + $0x1c40] sm:$0xff]
    %v1119 = vld [vmem:[#allocation5 + $0x1c48] sm:$0xff]
    %v1120 = vld [vmem:[#allocation5 + $0x1c50] sm:$0xff]
    %v1121 = vld [vmem:[#allocation5 + $0x1c58] sm:$0xff]
    %v1122 = vld [vmem:[#allocation5 + $0x1c60] sm:$0xff]
    %v1123 = vld [vmem:[#allocation5 + $0x1c68] sm:$0xff]
    %v1124 = vld [vmem:[#allocation5 + $0x1c70] sm:$0xff]
    %v1125 = vld [vmem:[#allocation5 + $0x1c78] sm:$0xff]
    %v1126 = vld [vmem:[#allocation5 + $0x1c80] sm:$0xff]
    %v1127 = vld [vmem:[#allocation5 + $0x1c88] sm:$0xff]
    %v1128 = vld [vmem:[#allocation5 + $0x1c90] sm:$0xff]
    %v1129 = vld [vmem:[#allocation5 + $0x1c98] sm:$0xff]
    %v1130 = vld [vmem:[#allocation5 + $0x1ca0] sm:$0xff]
    %v1131 = vld [vmem:[#allocation5 + $0x1ca8] sm:$0xff]
    %v1132 = vld [vmem:[#allocation5 + $0x1cb0] sm:$0xff]
    %v1133 = vld [vmem:[#allocation5 + $0x1cb8] sm:$0xff]
    %v1134 = vld [vmem:[#allocation5 + $0x1cc0] sm:$0xff]
    %v1135 = vld [vmem:[#allocation5 + $0x1cc8] sm:$0xff]
    %v1136 = vld [vmem:[#allocation5 + $0x1cd0] sm:$0xff]
    %v1137 = vld [vmem:[#allocation5 + $0x1cd8] sm:$0xff]
    %v1138 = vld [vmem:[#allocation5 + $0x1ce0] sm:$0xff]
    %v1139 = vld [vmem:[#allocation5 + $0x1ce8] sm:$0xff]
    %v1140 = vld [vmem:[#allocation5 + $0x1cf0] sm:$0xff]
    %v1141 = vld [vmem:[#allocation5 + $0x1cf8] sm:$0xff]
    %v1142 = vld [vmem:[#allocation5 + $0x1d00] sm:$0xff]
    %v1143 = vld [vmem:[#allocation5 + $0x1d08] sm:$0xff]
    %v1144 = vld [vmem:[#allocation5 + $0x1d10] sm:$0xff]
    %v1145 = vld [vmem:[#allocation5 + $0x1d18] sm:$0xff]
    %v1146 = vld [vmem:[#allocation5 + $0x1d20] sm:$0xff]
    %v1147 = vld [vmem:[#allocation5 + $0x1d28] sm:$0xff]
    %v1148 = vld [vmem:[#allocation5 + $0x1d30] sm:$0xff]
    %v1149 = vld [vmem:[#allocation5 + $0x1d38] sm:$0xff]
    %v1150 = vld [vmem:[#allocation5 + $0x1d40] sm:$0xff]
    %v1151 = vld [vmem:[#allocation5 + $0x1d48] sm:$0xff]
    %v1152 = vld [vmem:[#allocation5 + $0x1d50] sm:$0xff]
    %v1153 = vld [vmem:[#allocation5 + $0x1d58] sm:$0xff]
    %v1154 = vld [vmem:[#allocation5 + $0x1d60] sm:$0xff]
    %v1155 = vld [vmem:[#allocation5 + $0x1d68] sm:$0xff]
    %v1156 = vld [vmem:[#allocation5 + $0x1d70] sm:$0xff]
    %v1157 = vld [vmem:[#allocation5 + $0x1d78] sm:$0xff]
    %v1158 = vld [vmem:[#allocation5 + $0x1d80] sm:$0xff]
    %v1159 = vld [vmem:[#allocation5 + $0x1d88] sm:$0xff]
    %v1160 = vld [vmem:[#allocation5 + $0x1d90] sm:$0xff]
    %v1161 = vld [vmem:[#allocation5 + $0x1d98] sm:$0xff]
    %v1162 = vld [vmem:[#allocation5 + $0x1da0] sm:$0xff]
    %v1163 = vld [vmem:[#allocation5 + $0x1da8] sm:$0xff]
    %v1164 = vld [vmem:[#allocation5 + $0x1db0] sm:$0xff]
    %v1165 = vld [vmem:[#allocation5 + $0x1db8] sm:$0xff]
    %v1166 = vld [vmem:[#allocation5 + $0x1dc0] sm:$0xff]
    %v1167 = vld [vmem:[#allocation5 + $0x1dc8] sm:$0xff]
    %v1168 = vld [vmem:[#allocation5 + $0x1dd0] sm:$0xff]
    %v1169 = vld [vmem:[#allocation5 + $0x1dd8] sm:$0xff]
    %v1170 = vld [vmem:[#allocation5 + $0x1de0] sm:$0xff]
    %v1171 = vld [vmem:[#allocation5 + $0x1de8] sm:$0xff]
    %v1172 = vld [vmem:[#allocation5 + $0x1df0] sm:$0xff]
    %v1173 = vld [vmem:[#allocation5 + $0x1df8] sm:$0xff]
    %v1174 = vld [vmem:[#allocation5 + $0x1e00] sm:$0xff]
    %v1175 = vld [vmem:[#allocation5 + $0x1e08] sm:$0xff]
    %v1176 = vld [vmem:[#allocation5 + $0x1e10] sm:$0xff]
    %v1177 = vld [vmem:[#allocation5 + $0x1e18] sm:$0xff]
    %v1178 = vld [vmem:[#allocation5 + $0x1e20] sm:$0xff]
    %v1179 = vld [vmem:[#allocation5 + $0x1e28] sm:$0xff]
    %v1180 = vld [vmem:[#allocation5 + $0x1e30] sm:$0xff]
    %v1181 = vld [vmem:[#allocation5 + $0x1e38] sm:$0xff]
    %v1182 = vld [vmem:[#allocation5 + $0x1e40] sm:$0xff]
    %v1183 = vld [vmem:[#allocation5 + $0x1e48] sm:$0xff]
    %v1184 = vld [vmem:[#allocation5 + $0x1e50] sm:$0xff]
    %v1185 = vld [vmem:[#allocation5 + $0x1e58] sm:$0xff]
    %v1186 = vld [vmem:[#allocation5 + $0x1e60] sm:$0xff]
    %v1187 = vld [vmem:[#allocation5 + $0x1e68] sm:$0xff]
    %v1188 = vld [vmem:[#allocation5 + $0x1e70] sm:$0xff]
    %v1189 = vld [vmem:[#allocation5 + $0x1e78] sm:$0xff]
    %v1190 = vld [vmem:[#allocation5 + $0x1e80] sm:$0xff]
    %v1191 = vld [vmem:[#allocation5 + $0x1e88] sm:$0xff]
    %v1192 = vld [vmem:[#allocation5 + $0x1e90] sm:$0xff]
    %v1193 = vld [vmem:[#allocation5 + $0x1e98] sm:$0xff]
    %v1194 = vld [vmem:[#allocation5 + $0x1ea0] sm:$0xff]
    %v1195 = vld [vmem:[#allocation5 + $0x1ea8] sm:$0xff]
    %v1196 = vld [vmem:[#allocation5 + $0x1eb0] sm:$0xff]
    %v1197 = vld [vmem:[#allocation5 + $0x1eb8] sm:$0xff]
    %v1198 = vld [vmem:[#allocation5 + $0x1ec0] sm:$0xff]
    %v1199 = vld [vmem:[#allocation5 + $0x1ec8] sm:$0xff]
    %v1200 = vld [vmem:[#allocation5 + $0x1ed0] sm:$0xff]
    %v1201 = vld [vmem:[#allocation5 + $0x1ed8] sm:$0xff]
    %v1202 = vld [vmem:[#allocation5 + $0x1ee0] sm:$0xff]
    %v1203 = vld [vmem:[#allocation5 + $0x1ee8] sm:$0xff]
    %v1204 = vld [vmem:[#allocation5 + $0x1ef0] sm:$0xff]
    %v1205 = vld [vmem:[#allocation5 + $0x1ef8] sm:$0xff]
    %v1206 = vld [vmem:[#allocation5 + $0x1f00] sm:$0xff]
    %v1207 = vld [vmem:[#allocation5 + $0x1f08] sm:$0xff]
    %v1208 = vld [vmem:[#allocation5 + $0x1f10] sm:$0xff]
    %v1209 = vld [vmem:[#allocation5 + $0x1f18] sm:$0xff]
    %v1210 = vld [vmem:[#allocation5 + $0x1f20] sm:$0xff]
    %v1211 = vld [vmem:[#allocation5 + $0x1f28] sm:$0xff]
    %v1212 = vld [vmem:[#allocation5 + $0x1f30] sm:$0xff]
    %v1213 = vld [vmem:[#allocation5 + $0x1f38] sm:$0xff]
    %v1214 = vld [vmem:[#allocation5 + $0x1f40] sm:$0xff]
    %v1215 = vld [vmem:[#allocation5 + $0x1f48] sm:$0xff]
    %v1216 = vld [vmem:[#allocation5 + $0x1f50] sm:$0xff]
    %v1217 = vld [vmem:[#allocation5 + $0x1f58] sm:$0xff]
    %v1218 = vld [vmem:[#allocation5 + $0x1f60] sm:$0xff]
    %v1219 = vld [vmem:[#allocation5 + $0x1f68] sm:$0xff]
    %v1220 = vld [vmem:[#allocation5 + $0x1f70] sm:$0xff]
    %v1221 = vld [vmem:[#allocation5 + $0x1f78] sm:$0xff]
    %v1222 = vld [vmem:[#allocation5 + $0x1f80] sm:$0xff]
    %v1223 = vld [vmem:[#allocation5 + $0x1f88] sm:$0xff]
    %v1224 = vld [vmem:[#allocation5 + $0x1f90] sm:$0xff]
    %v1225 = vld [vmem:[#allocation5 + $0x1f98] sm:$0xff]
    %v1226 = vld [vmem:[#allocation5 + $0x1fa0] sm:$0xff]
    %v1227 = vld [vmem:[#allocation5 + $0x1fa8] sm:$0xff]
    %v1228 = vld [vmem:[#allocation5 + $0x1fb0] sm:$0xff]
    %v1229 = vld [vmem:[#allocation5 + $0x1fb8] sm:$0xff]
    %v1230 = vld [vmem:[#allocation5 + $0x1fc0] sm:$0xff]
    %v1231 = vld [vmem:[#allocation5 + $0x1fc8] sm:$0xff]
    %v1232 = vld [vmem:[#allocation5 + $0x1fd0] sm:$0xff]
    %v1233 = vld [vmem:[#allocation5 + $0x1fd8] sm:$0xff]
    %v1234 = vld [vmem:[#allocation5 + $0x1fe0] sm:$0xff]
    %v1235 = vld [vmem:[#allocation5 + $0x1fe8] sm:$0xff]
    %v1236 = vld [vmem:[#allocation5 + $0x1ff0] sm:$0xff]
    %v1237 = vld [vmem:[#allocation5 + $0x1ff8] sm:$0xff]
    %v1238 = vld [vmem:[#allocation5 + $0x2000] sm:$0xff]
    %v1239 = vld [vmem:[#allocation5 + $0x2008] sm:$0xff]
    %v1240 = vld [vmem:[#allocation5 + $0x2010] sm:$0xff]
    %v1241 = vld [vmem:[#allocation5 + $0x2018] sm:$0xff]
    %v1242 = vld [vmem:[#allocation5 + $0x2020] sm:$0xff]
    %v1243 = vld [vmem:[#allocation5 + $0x2028] sm:$0xff]
    %v1244 = vld [vmem:[#allocation5 + $0x2030] sm:$0xff]
    %v1245 = vld [vmem:[#allocation5 + $0x2038] sm:$0xff]
    %v1246 = vld [vmem:[#allocation5 + $0x2040] sm:$0xff]
    %v1247 = vld [vmem:[#allocation5 + $0x2048] sm:$0xff]
    %v1248 = vld [vmem:[#allocation5 + $0x2050] sm:$0xff]
    %v1249 = vld [vmem:[#allocation5 + $0x2058] sm:$0xff]
    %v1250 = vld [vmem:[#allocation5 + $0x2060] sm:$0xff]
    %v1251 = vld [vmem:[#allocation5 + $0x2068] sm:$0xff]
    %v1252 = vld [vmem:[#allocation5 + $0x2070] sm:$0xff]
    %v1253 = vld [vmem:[#allocation5 + $0x2078] sm:$0xff]
    %v1254 = vld [vmem:[#allocation5 + $0x2080] sm:$0xff]
    %v1255 = vld [vmem:[#allocation5 + $0x2088] sm:$0xff]
    %v1256 = vld [vmem:[#allocation5 + $0x2090] sm:$0xff]
    %v1257 = vld [vmem:[#allocation5 + $0x2098] sm:$0xff]
    %v1258 = vld [vmem:[#allocation5 + $0x20a0] sm:$0xff]
    %v1259 = vld [vmem:[#allocation5 + $0x20a8] sm:$0xff]
    %v1260 = vld [vmem:[#allocation5 + $0x20b0] sm:$0xff]
    %v1261 = vld [vmem:[#allocation5 + $0x20b8] sm:$0xff]
    %v1262 = vld [vmem:[#allocation5 + $0x20c0] sm:$0xff]
    %v1263 = vld [vmem:[#allocation5 + $0x20c8] sm:$0xff]
    %v1264 = vld [vmem:[#allocation5 + $0x20d0] sm:$0xff]
    %v1265 = vld [vmem:[#allocation5 + $0x20d8] sm:$0xff]
    %v1266 = vld [vmem:[#allocation5 + $0x20e0] sm:$0xff]
    %v1267 = vld [vmem:[#allocation5 + $0x20e8] sm:$0xff]
    %v1268 = vld [vmem:[#allocation5 + $0x20f0] sm:$0xff]
    %v1269 = vld [vmem:[#allocation5 + $0x20f8] sm:$0xff]
    %v1270 = vld [vmem:[#allocation5 + $0x2100] sm:$0xff]
    %v1271 = vld [vmem:[#allocation5 + $0x2108] sm:$0xff]
    %v1272 = vld [vmem:[#allocation5 + $0x2110] sm:$0xff]
    %v1273 = vld [vmem:[#allocation5 + $0x2118] sm:$0xff]
    %v1274 = vld [vmem:[#allocation5 + $0x2120] sm:$0xff]
    %v1275 = vld [vmem:[#allocation5 + $0x2128] sm:$0xff]
    %v1276 = vld [vmem:[#allocation5 + $0x2130] sm:$0xff]
    %v1277 = vld [vmem:[#allocation5 + $0x2138] sm:$0xff]
    %v1278 = vld [vmem:[#allocation5 + $0x2140] sm:$0xff]
    %v1279 = vld [vmem:[#allocation5 + $0x2148] sm:$0xff]
    %v1280 = vld [vmem:[#allocation5 + $0x2150] sm:$0xff]
    %v1281 = vld [vmem:[#allocation5 + $0x2158] sm:$0xff]
    %v1282 = vld [vmem:[#allocation5 + $0x2160] sm:$0xff]
    %v1283 = vld [vmem:[#allocation5 + $0x2168] sm:$0xff]
    %v1284 = vld [vmem:[#allocation5 + $0x2170] sm:$0xff]
    %v1285 = vld [vmem:[#allocation5 + $0x2178] sm:$0xff]
    %v1286 = vld [vmem:[#allocation5 + $0x2180] sm:$0xff]
    %v1287 = vld [vmem:[#allocation5 + $0x2188] sm:$0xff]
    %v1288 = vld [vmem:[#allocation5 + $0x2190] sm:$0xff]
    %v1289 = vld [vmem:[#allocation5 + $0x2198] sm:$0xff]
    %v1290 = vld [vmem:[#allocation5 + $0x21a0] sm:$0xff]
    %v1291 = vld [vmem:[#allocation5 + $0x21a8] sm:$0xff]
    %v1292 = vld [vmem:[#allocation5 + $0x21b0] sm:$0xff]
    %v1293 = vld [vmem:[#allocation5 + $0x21b8] sm:$0xff]
    %v1294 = vld [vmem:[#allocation5 + $0x21c0] sm:$0xff]
    %v1295 = vld [vmem:[#allocation5 + $0x21c8] sm:$0xff]
    %v1296 = vld [vmem:[#allocation5 + $0x21d0] sm:$0xff]
    %v1297 = vld [vmem:[#allocation5 + $0x21d8] sm:$0xff]
    %v1298 = vld [vmem:[#allocation5 + $0x21e0] sm:$0xff]
    %v1299 = vld [vmem:[#allocation5 + $0x21e8] sm:$0xff]
    %v1300 = vld [vmem:[#allocation5 + $0x21f0] sm:$0xff]
    %v1301 = vld [vmem:[#allocation5 + $0x21f8] sm:$0xff]
    %v1302 = vld [vmem:[#allocation5 + $0x2200] sm:$0xff]
    %v1303 = vld [vmem:[#allocation5 + $0x2208] sm:$0xff]
    %v1304 = vld [vmem:[#allocation5 + $0x2210] sm:$0xff]
    %v1305 = vld [vmem:[#allocation5 + $0x2218] sm:$0xff]
    %v1306 = vld [vmem:[#allocation5 + $0x2220] sm:$0xff]
    %v1307 = vld [vmem:[#allocation5 + $0x2228] sm:$0xff]
    %v1308 = vld [vmem:[#allocation5 + $0x2230] sm:$0xff]
    %v1309 = vld [vmem:[#allocation5 + $0x2238] sm:$0xff]
    %v1310 = vld [vmem:[#allocation5 + $0x2240] sm:$0xff]
    %v1311 = vld [vmem:[#allocation5 + $0x2248] sm:$0xff]
    %v1312 = vld [vmem:[#allocation5 + $0x2250] sm:$0xff]
    %v1313 = vld [vmem:[#allocation5 + $0x2258] sm:$0xff]
    %v1314 = vld [vmem:[#allocation5 + $0x2260] sm:$0xff]
    %v1315 = vld [vmem:[#allocation5 + $0x2268] sm:$0xff]
    %v1316 = vld [vmem:[#allocation5 + $0x2270] sm:$0xff]
    %v1317 = vld [vmem:[#allocation5 + $0x2278] sm:$0xff]
    %v1318 = vld [vmem:[#allocation5 + $0x2280] sm:$0xff]
    %v1319 = vld [vmem:[#allocation5 + $0x2288] sm:$0xff]
    %v1320 = vld [vmem:[#allocation5 + $0x2290] sm:$0xff]
    %v1321 = vld [vmem:[#allocation5 + $0x2298] sm:$0xff]
    %v1322 = vld [vmem:[#allocation5 + $0x22a0] sm:$0xff]
    %v1323 = vld [vmem:[#allocation5 + $0x22a8] sm:$0xff]
    %v1324 = vld [vmem:[#allocation5 + $0x22b0] sm:$0xff]
    %v1325 = vld [vmem:[#allocation5 + $0x22b8] sm:$0xff]
    %v1326 = vld [vmem:[#allocation5 + $0x22c0] sm:$0xff]
    %v1327 = vld [vmem:[#allocation5 + $0x22c8] sm:$0xff]
    %v1328 = vld [vmem:[#allocation5 + $0x22d0] sm:$0xff]
    %v1329 = vld [vmem:[#allocation5 + $0x22d8] sm:$0xff]
    %v1330 = vld [vmem:[#allocation5 + $0x22e0] sm:$0xff]
    %v1331 = vld [vmem:[#allocation5 + $0x22e8] sm:$0xff]
    %v1332 = vld [vmem:[#allocation5 + $0x22f0] sm:$0xff]
    %v1333 = vld [vmem:[#allocation5 + $0x22f8] sm:$0xff]
    %v1334 = vld [vmem:[#allocation5 + $0x2300] sm:$0xff]
    %v1335 = vld [vmem:[#allocation5 + $0x2308] sm:$0xff]
    %v1336 = vld [vmem:[#allocation5 + $0x2310] sm:$0xff]
    %v1337 = vld [vmem:[#allocation5 + $0x2318] sm:$0xff]
    %v1338 = vld [vmem:[#allocation5 + $0x2320] sm:$0xff]
    %v1339 = vld [vmem:[#allocation5 + $0x2328] sm:$0xff]
    %v1340 = vld [vmem:[#allocation5 + $0x2330] sm:$0xff]
    %v1341 = vld [vmem:[#allocation5 + $0x2338] sm:$0xff]
    %v1342 = vld [vmem:[#allocation5 + $0x2340] sm:$0xff]
    %v1343 = vld [vmem:[#allocation5 + $0x2348] sm:$0xff]
    %v1344 = vld [vmem:[#allocation5 + $0x2350] sm:$0xff]
    %v1345 = vld [vmem:[#allocation5 + $0x2358] sm:$0xff]
    %v1346 = vld [vmem:[#allocation5 + $0x2360] sm:$0xff]
    %v1347 = vld [vmem:[#allocation5 + $0x2368] sm:$0xff]
    %v1348 = vld [vmem:[#allocation5 + $0x2370] sm:$0xff]
    %v1349 = vld [vmem:[#allocation5 + $0x2378] sm:$0xff]
    %v1350 = vld [vmem:[#allocation5 + $0x2380] sm:$0xff]
    %v1351 = vld [vmem:[#allocation5 + $0x2388] sm:$0xff]
    %v1352 = vld [vmem:[#allocation5 + $0x2390] sm:$0xff]
    %v1353 = vld [vmem:[#allocation5 + $0x2398] sm:$0xff]
    %v1354 = vld [vmem:[#allocation5 + $0x23a0] sm:$0xff]
    %v1355 = vld [vmem:[#allocation5 + $0x23a8] sm:$0xff]
    %v1356 = vld [vmem:[#allocation5 + $0x23b0] sm:$0xff]
    %v1357 = vld [vmem:[#allocation5 + $0x23b8] sm:$0xff]
    %v1358 = vld [vmem:[#allocation5 + $0x23c0] sm:$0xff]
    %v1359 = vld [vmem:[#allocation5 + $0x23c8] sm:$0xff]
    %v1360 = vld [vmem:[#allocation5 + $0x23d0] sm:$0xff]
    %v1361 = vld [vmem:[#allocation5 + $0x23d8] sm:$0xff]
    %v1362 = vld [vmem:[#allocation5 + $0x23e0] sm:$0xff]
    %v1363 = vld [vmem:[#allocation5 + $0x23e8] sm:$0xff]
    %v1364 = vld [vmem:[#allocation5 + $0x23f0] sm:$0xff]
    %v1365 = vld [vmem:[#allocation5 + $0x23f8] sm:$0xff]
    %v1366 = vld [vmem:[#allocation5 + $0x2400] sm:$0xff]
    %v1367 = vld [vmem:[#allocation5 + $0x2408] sm:$0xff]
    %v1368 = vld [vmem:[#allocation5 + $0x2410] sm:$0xff]
    %v1369 = vld [vmem:[#allocation5 + $0x2418] sm:$0xff]
    %v1370 = vld [vmem:[#allocation5 + $0x2420] sm:$0xff]
    %v1371 = vld [vmem:[#allocation5 + $0x2428] sm:$0xff]
    %v1372 = vld [vmem:[#allocation5 + $0x2430] sm:$0xff]
    %v1373 = vld [vmem:[#allocation5 + $0x2438] sm:$0xff]
    %v1374 = vld [vmem:[#allocation5 + $0x2440] sm:$0xff]
    %v1375 = vld [vmem:[#allocation5 + $0x2448] sm:$0xff]
    %v1376 = vld [vmem:[#allocation5 + $0x2450] sm:$0xff]
    %v1377 = vld [vmem:[#allocation5 + $0x2458] sm:$0xff]
    %v1378 = vld [vmem:[#allocation5 + $0x2460] sm:$0xff]
    %v1379 = vld [vmem:[#allocation5 + $0x2468] sm:$0xff]
    %v1380 = vld [vmem:[#allocation5 + $0x2470] sm:$0xff]
    %v1381 = vld [vmem:[#allocation5 + $0x2478] sm:$0xff]
    %v1382 = vld [vmem:[#allocation5 + $0x2480] sm:$0xff]
    %v1383 = vld [vmem:[#allocation5 + $0x2488] sm:$0xff]
    %v1384 = vld [vmem:[#allocation5 + $0x2490] sm:$0xff]
    %v1385 = vld [vmem:[#allocation5 + $0x2498] sm:$0xff]
    %v1386 = vld [vmem:[#allocation5 + $0x24a0] sm:$0xff]
    %v1387 = vld [vmem:[#allocation5 + $0x24a8] sm:$0xff]
    %v1388 = vld [vmem:[#allocation5 + $0x24b0] sm:$0xff]
    %v1389 = vld [vmem:[#allocation5 + $0x24b8] sm:$0xff]
    %v1390 = vld [vmem:[#allocation5 + $0x24c0] sm:$0xff]
    %v1391 = vld [vmem:[#allocation5 + $0x24c8] sm:$0xff]
    %v1392 = vld [vmem:[#allocation5 + $0x24d0] sm:$0xff]
    %v1393 = vld [vmem:[#allocation5 + $0x24d8] sm:$0xff]
    %v1394 = vld [vmem:[#allocation5 + $0x24e0] sm:$0xff]
    %v1395 = vld [vmem:[#allocation5 + $0x24e8] sm:$0xff]
    %v1396 = vld [vmem:[#allocation5 + $0x24f0] sm:$0xff]
    %v1397 = vld [vmem:[#allocation5 + $0x24f8] sm:$0xff]
    %v1398 = vld [vmem:[#allocation5 + $0x2500] sm:$0xff]
    %v1399 = vld [vmem:[#allocation5 + $0x2508] sm:$0xff]
    %v1400 = vld [vmem:[#allocation5 + $0x2510] sm:$0xff]
    %v1401 = vld [vmem:[#allocation5 + $0x2518] sm:$0xff]
    %v1402 = vld [vmem:[#allocation5 + $0x2520] sm:$0xff]
    %v1403 = vld [vmem:[#allocation5 + $0x2528] sm:$0xff]
    %v1404 = vld [vmem:[#allocation5 + $0x2530] sm:$0xff]
    %v1405 = vld [vmem:[#allocation5 + $0x2538] sm:$0xff]
    %v1406 = vld [vmem:[#allocation5 + $0x2540] sm:$0xff]
    %v1407 = vld [vmem:[#allocation5 + $0x2548] sm:$0xff]
    %v1408 = vld [vmem:[#allocation5 + $0x2550] sm:$0xff]
    %v1409 = vld [vmem:[#allocation5 + $0x2558] sm:$0xff]
    %v1410 = vld [vmem:[#allocation5 + $0x2560] sm:$0xff]
    %v1411 = vld [vmem:[#allocation5 + $0x2568] sm:$0xff]
    %v1412 = vld [vmem:[#allocation5 + $0x2570] sm:$0xff]
    %v1413 = vld [vmem:[#allocation5 + $0x2578] sm:$0xff]
    %v1414 = vld [vmem:[#allocation5 + $0x2580] sm:$0xff]
    %v1415 = vld [vmem:[#allocation5 + $0x2588] sm:$0xff]
    %v1416 = vld [vmem:[#allocation5 + $0x2590] sm:$0xff]
    %v1417 = vld [vmem:[#allocation5 + $0x2598] sm:$0xff]
    %v1418 = vld [vmem:[#allocation5 + $0x25a0] sm:$0xff]
    %v1419 = vld [vmem:[#allocation5 + $0x25a8] sm:$0xff]
    %v1420 = vld [vmem:[#allocation5 + $0x25b0] sm:$0xff]
    %v1421 = vld [vmem:[#allocation5 + $0x25b8] sm:$0xff]
    %v1422 = vld [vmem:[#allocation5 + $0x25c0] sm:$0xff]
    %v1423 = vld [vmem:[#allocation5 + $0x25c8] sm:$0xff]
    %v1424 = vld [vmem:[#allocation5 + $0x25d0] sm:$0xff]
    %v1425 = vld [vmem:[#allocation5 + $0x25d8] sm:$0xff]
    %v1426 = vld [vmem:[#allocation5 + $0x25e0] sm:$0xff]
    %v1427 = vld [vmem:[#allocation5 + $0x25e8] sm:$0xff]
    %v1428 = vld [vmem:[#allocation5 + $0x25f0] sm:$0xff]
    %v1429 = vld [vmem:[#allocation5 + $0x25f8] sm:$0xff]
    %v1430 = vld [vmem:[#allocation5 + $0x2600] sm:$0xff]
    %v1431 = vld [vmem:[#allocation5 + $0x2608] sm:$0xff]
    %v1432 = vld [vmem:[#allocation5 + $0x2610] sm:$0xff]
    %v1433 = vld [vmem:[#allocation5 + $0x2618] sm:$0xff]
    %v1434 = vld [vmem:[#allocation5 + $0x2620] sm:$0xff]
    %v1435 = vld [vmem:[#allocation5 + $0x2628] sm:$0xff]
    %v1436 = vld [vmem:[#allocation5 + $0x2630] sm:$0xff]
    %v1437 = vld [vmem:[#allocation5 + $0x2638] sm:$0xff]
    %v1438 = vld [vmem:[#allocation5 + $0x2640] sm:$0xff]
    %v1439 = vld [vmem:[#allocation5 + $0x2648] sm:$0xff]
    %v1440 = vld [vmem:[#allocation5 + $0x2650] sm:$0xff]
    %v1441 = vld [vmem:[#allocation5 + $0x2658] sm:$0xff]
    %v1442 = vld [vmem:[#allocation5 + $0x2660] sm:$0xff]
    %v1443 = vld [vmem:[#allocation5 + $0x2668] sm:$0xff]
    %v1444 = vld [vmem:[#allocation5 + $0x2670] sm:$0xff]
    %v1445 = vld [vmem:[#allocation5 + $0x2678] sm:$0xff]
    %v1446 = vld [vmem:[#allocation5 + $0x2680] sm:$0xff]
    %v1447 = vld [vmem:[#allocation5 + $0x2688] sm:$0xff]
    %v1448 = vld [vmem:[#allocation5 + $0x2690] sm:$0xff]
    %v1449 = vld [vmem:[#allocation5 + $0x2698] sm:$0xff]
    %v1450 = vld [vmem:[#allocation5 + $0x26a0] sm:$0xff]
    %v1451 = vld [vmem:[#allocation5 + $0x26a8] sm:$0xff]
    %v1452 = vld [vmem:[#allocation5 + $0x26b0] sm:$0xff]
    %v1453 = vld [vmem:[#allocation5 + $0x26b8] sm:$0xff]
    %v1454 = vld [vmem:[#allocation5 + $0x26c0] sm:$0xff]
    %v1455 = vld [vmem:[#allocation5 + $0x26c8] sm:$0xff]
    %v1456 = vld [vmem:[#allocation5 + $0x26d0] sm:$0xff]
    %v1457 = vld [vmem:[#allocation5 + $0x26d8] sm:$0xff]
    %v1458 = vld [vmem:[#allocation5 + $0x26e0] sm:$0xff]
    %v1459 = vld [vmem:[#allocation5 + $0x26e8] sm:$0xff]
    %v1460 = vld [vmem:[#allocation5 + $0x26f0] sm:$0xff]
    %v1461 = vld [vmem:[#allocation5 + $0x26f8] sm:$0xff]
    %v1462 = vld [vmem:[#allocation5 + $0x2700] sm:$0xff]
    %v1463 = vld [vmem:[#allocation5 + $0x2708] sm:$0xff]
    %v1464 = vld [vmem:[#allocation5 + $0x2710] sm:$0xff]
    %v1465 = vld [vmem:[#allocation5 + $0x2718] sm:$0xff]
    %v1466 = vld [vmem:[#allocation5 + $0x2720] sm:$0xff]
    %v1467 = vld [vmem:[#allocation5 + $0x2728] sm:$0xff]
    %v1468 = vld [vmem:[#allocation5 + $0x2730] sm:$0xff]
    %v1469 = vld [vmem:[#allocation5 + $0x2738] sm:$0xff]
    %v1470 = vld [vmem:[#allocation5 + $0x2740] sm:$0xff]
    %v1471 = vld [vmem:[#allocation5 + $0x2748] sm:$0xff]
    %v1472 = vld [vmem:[#allocation5 + $0x2750] sm:$0xff]
    %v1473 = vld [vmem:[#allocation5 + $0x2758] sm:$0xff]
    %v1474 = vld [vmem:[#allocation5 + $0x2760] sm:$0xff]
    %v1475 = vld [vmem:[#allocation5 + $0x2768] sm:$0xff]
    %v1476 = vld [vmem:[#allocation5 + $0x2770] sm:$0xff]
    %v1477 = vld [vmem:[#allocation5 + $0x2778] sm:$0xff]
    %v1478 = vld [vmem:[#allocation5 + $0x2780] sm:$0xff]
    %v1479 = vld [vmem:[#allocation5 + $0x2788] sm:$0xff]
    %v1480 = vld [vmem:[#allocation5 + $0x2790] sm:$0xff]
    %v1481 = vld [vmem:[#allocation5 + $0x2798] sm:$0xff]
    %v1482 = vld [vmem:[#allocation5 + $0x27a0] sm:$0xff]
    %v1483 = vld [vmem:[#allocation5 + $0x27a8] sm:$0xff]
    %v1484 = vld [vmem:[#allocation5 + $0x27b0] sm:$0xff]
    %v1485 = vld [vmem:[#allocation5 + $0x27b8] sm:$0xff]
    %v1486 = vld [vmem:[#allocation5 + $0x27c0] sm:$0xff]
    %v1487 = vld [vmem:[#allocation5 + $0x27c8] sm:$0xff]
    %v1488 = vld [vmem:[#allocation5 + $0x27d0] sm:$0xff]
    %v1489 = vld [vmem:[#allocation5 + $0x27d8] sm:$0xff]
    %v1490 = vld [vmem:[#allocation5 + $0x27e0] sm:$0xff]
    %v1491 = vld [vmem:[#allocation5 + $0x27e8] sm:$0xff]
    %v1492 = vld [vmem:[#allocation5 + $0x27f0] sm:$0xff]
    %v1493 = vld [vmem:[#allocation5 + $0x27f8] sm:$0xff]
    %v1494 = vld [vmem:[#allocation5 + $0x2800] sm:$0xff]
    %v1495 = vld [vmem:[#allocation5 + $0x2808] sm:$0xff]
    %v1496 = vld [vmem:[#allocation5 + $0x2810] sm:$0xff]
    %v1497 = vld [vmem:[#allocation5 + $0x2818] sm:$0xff]
    %v1498 = vld [vmem:[#allocation5 + $0x2820] sm:$0xff]
    %v1499 = vld [vmem:[#allocation5 + $0x2828] sm:$0xff]
    %v1500 = vld [vmem:[#allocation5 + $0x2830] sm:$0xff]
    %v1501 = vld [vmem:[#allocation5 + $0x2838] sm:$0xff]
    %v1502 = vld [vmem:[#allocation5 + $0x2840] sm:$0xff]
    %v1503 = vld [vmem:[#allocation5 + $0x2848] sm:$0xff]
    %v1504 = vld [vmem:[#allocation5 + $0x2850] sm:$0xff]
    %v1505 = vld [vmem:[#allocation5 + $0x2858] sm:$0xff]
    %v1506 = vld [vmem:[#allocation5 + $0x2860] sm:$0xff]
    %v1507 = vld [vmem:[#allocation5 + $0x2868] sm:$0xff]
    %v1508 = vld [vmem:[#allocation5 + $0x2870] sm:$0xff]
    %v1509 = vld [vmem:[#allocation5 + $0x2878] sm:$0xff]
    %v1510 = vld [vmem:[#allocation5 + $0x2880] sm:$0xff]
    %v1511 = vld [vmem:[#allocation5 + $0x2888] sm:$0xff]
    %v1512 = vld [vmem:[#allocation5 + $0x2890] sm:$0xff]
    %v1513 = vld [vmem:[#allocation5 + $0x2898] sm:$0xff]
    %v1514 = vld [vmem:[#allocation5 + $0x28a0] sm:$0xff]
    %v1515 = vld [vmem:[#allocation5 + $0x28a8] sm:$0xff]
    %v1516 = vld [vmem:[#allocation5 + $0x28b0] sm:$0xff]
    %v1517 = vld [vmem:[#allocation5 + $0x28b8] sm:$0xff]
    %v1518 = vld [vmem:[#allocation5 + $0x28c0] sm:$0xff]
    %v1519 = vld [vmem:[#allocation5 + $0x28c8] sm:$0xff]
    %v1520 = vld [vmem:[#allocation5 + $0x28d0] sm:$0xff]
    %v1521 = vld [vmem:[#allocation5 + $0x28d8] sm:$0xff]
    %v1522 = vld [vmem:[#allocation5 + $0x28e0] sm:$0xff]
    %v1523 = vld [vmem:[#allocation5 + $0x28e8] sm:$0xff]
    %v1524 = vld [vmem:[#allocation5 + $0x28f0] sm:$0xff]
    %v1525 = vld [vmem:[#allocation5 + $0x28f8] sm:$0xff]
    %v1526 = vld [vmem:[#allocation5 + $0x2900] sm:$0xff]
    %v1527 = vld [vmem:[#allocation5 + $0x2908] sm:$0xff]
    %v1528 = vld [vmem:[#allocation5 + $0x2910] sm:$0xff]
    %v1529 = vld [vmem:[#allocation5 + $0x2918] sm:$0xff]
    %v1530 = vld [vmem:[#allocation5 + $0x2920] sm:$0xff]
    %v1531 = vld [vmem:[#allocation5 + $0x2928] sm:$0xff]
    %v1532 = vld [vmem:[#allocation5 + $0x2930] sm:$0xff]
    %v1533 = vld [vmem:[#allocation5 + $0x2938] sm:$0xff]
    %v1534 = vld [vmem:[#allocation5 + $0x2940] sm:$0xff]
    %v1535 = vld [vmem:[#allocation5 + $0x2948] sm:$0xff]
    %v1536 = vld [vmem:[#allocation5 + $0x2950] sm:$0xff]
    %v1537 = vld [vmem:[#allocation5 + $0x2958] sm:$0xff]
    %v1538 = vld [vmem:[#allocation5 + $0x2960] sm:$0xff]
    %v1539 = vld [vmem:[#allocation5 + $0x2968] sm:$0xff]
    %v1540 = vld [vmem:[#allocation5 + $0x2970] sm:$0xff]
    %v1541 = vld [vmem:[#allocation5 + $0x2978] sm:$0xff]
    %v1542 = vld [vmem:[#allocation5 + $0x2980] sm:$0xff]
    %v1543 = vld [vmem:[#allocation5 + $0x2988] sm:$0xff]
    %v1544 = vld [vmem:[#allocation5 + $0x2990] sm:$0xff]
    %v1545 = vld [vmem:[#allocation5 + $0x2998] sm:$0xff]
    %v1546 = vld [vmem:[#allocation5 + $0x29a0] sm:$0xff]
    %v1547 = vld [vmem:[#allocation5 + $0x29a8] sm:$0xff]
    %v1548 = vld [vmem:[#allocation5 + $0x29b0] sm:$0xff]
    %v1549 = vld [vmem:[#allocation5 + $0x29b8] sm:$0xff]
    %v1550 = vld [vmem:[#allocation5 + $0x29c0] sm:$0xff]
    %v1551 = vld [vmem:[#allocation5 + $0x29c8] sm:$0xff]
    %v1552 = vld [vmem:[#allocation5 + $0x29d0] sm:$0xff]
    %v1553 = vld [vmem:[#allocation5 + $0x29d8] sm:$0xff]
    %v1554 = vld [vmem:[#allocation5 + $0x29e0] sm:$0xff]
    %v1555 = vld [vmem:[#allocation5 + $0x29e8] sm:$0xff]
    %v1556 = vld [vmem:[#allocation5 + $0x29f0] sm:$0xff]
    %v1557 = vld [vmem:[#allocation5 + $0x29f8] sm:$0xff]
    %v1558 = vld [vmem:[#allocation7] sm:$0xf]
    %v1560 = vlaneseq
    %v1561 = vshrl.u32 %v1560, 7
    %v1562 = vsub.s32 0, %v1561
    %v1563 = vrot.slane %v1558, %v1562
    %v1564 = vlaneseq
    %v1565 = vshrl.u32 %v1564, 7
    %v1566 = vsub.s32 1, %v1565
    %v1567 = vrot.slane %v1558, %v1566
    %v1568 = vlaneseq
    %v1569 = vshrl.u32 %v1568, 7
    %v1570 = vsub.s32 2, %v1569
    %v1571 = vrot.slane %v1558, %v1570
    %v1572 = vlaneseq
    %v1573 = vshrl.u32 %v1572, 7
    %v1574 = vsub.s32 3, %v1573
    %v1575 = vrot.slane %v1558, %v1574
    %v2924 = vunpack.c.l.b16 %v214
    %v2925 = vunpack.c.h.b16 %v214
    %v2926 = vunpack.c.l.b16 %v215
    %v2927 = vunpack.c.h.b16 %v215
    %v2928 = vunpack.c.l.b16 %v216
    %v2929 = vunpack.c.h.b16 %v216
    %v2930 = vunpack.c.l.b16 %v217
    %v2931 = vunpack.c.h.b16 %v217
    %v2932 = vunpack.c.l.b16 %v218
    %v2933 = vunpack.c.h.b16 %v218
    %v2934 = vunpack.c.l.b16 %v219
    %v2935 = vunpack.c.h.b16 %v219
    %v2936 = vunpack.c.l.b16 %v220
    %v2937 = vunpack.c.h.b16 %v220
    %v2938 = vunpack.c.l.b16 %v221
    %v2939 = vunpack.c.h.b16 %v221
    %v2940 = vunpack.c.l.b16 %v222
    %v2941 = vunpack.c.h.b16 %v222
    %v2942 = vunpack.c.l.b16 %v223
    %v2943 = vunpack.c.h.b16 %v223
    %v2944 = vunpack.c.l.b16 %v224
    %v2945 = vunpack.c.h.b16 %v224
    %v2946 = vunpack.c.l.b16 %v225
    %v2947 = vunpack.c.h.b16 %v225
    %v2948 = vunpack.c.l.b16 %v226
    %v2949 = vunpack.c.h.b16 %v226
    %v2950 = vunpack.c.l.b16 %v227
    %v2951 = vunpack.c.h.b16 %v227
    %v2952 = vunpack.c.l.b16 %v228
    %v2953 = vunpack.c.h.b16 %v228
    %v2954 = vunpack.c.l.b16 %v229
    %v2955 = vunpack.c.h.b16 %v229
    %v2956 = vunpack.c.l.b16 %v230
    %v2957 = vunpack.c.h.b16 %v230
    %v2958 = vunpack.c.l.b16 %v231
    %v2959 = vunpack.c.h.b16 %v231
    %v2960 = vunpack.c.l.b16 %v232
    %v2961 = vunpack.c.h.b16 %v232
    %v2962 = vunpack.c.l.b16 %v233
    %v2963 = vunpack.c.h.b16 %v233
    %v2964 = vunpack.c.l.b16 %v234
    %v2965 = vunpack.c.h.b16 %v234
    %v2966 = vunpack.c.l.b16 %v235
    %v2967 = vunpack.c.h.b16 %v235
    %v2968 = vunpack.c.l.b16 %v236
    %v2969 = vunpack.c.h.b16 %v236
    %v2970 = vunpack.c.l.b16 %v237
    %v2971 = vunpack.c.h.b16 %v237
    %v2972 = vunpack.c.l.b16 %v238
    %v2973 = vunpack.c.h.b16 %v238
    %v2974 = vunpack.c.l.b16 %v239
    %v2975 = vunpack.c.h.b16 %v239
    %v2976 = vunpack.c.l.b16 %v240
    %v2977 = vunpack.c.h.b16 %v240
    %v2978 = vunpack.c.l.b16 %v241
    %v2979 = vunpack.c.h.b16 %v241
    %v2980 = vunpack.c.l.b16 %v242
    %v2981 = vunpack.c.h.b16 %v242
    %v2982 = vunpack.c.l.b16 %v243
    %v2983 = vunpack.c.h.b16 %v243
    %v2984 = vunpack.c.l.b16 %v244
    %v2985 = vunpack.c.h.b16 %v244
    %v2986 = vunpack.c.l.b16 %v245
    %v2987 = vunpack.c.h.b16 %v245
    %v2988 = vunpack.c.l.b16 %v246
    %v2989 = vunpack.c.h.b16 %v246
    %v2990 = vunpack.c.l.b16 %v247
    %v2991 = vunpack.c.h.b16 %v247
    %v2992 = vunpack.c.l.b16 %v248
    %v2993 = vunpack.c.h.b16 %v248
    %v2994 = vunpack.c.l.b16 %v249
    %v2995 = vunpack.c.h.b16 %v249
    %v2996 = vunpack.c.l.b16 %v250
    %v2997 = vunpack.c.h.b16 %v250
    %v2998 = vunpack.c.l.b16 %v251
    %v2999 = vunpack.c.h.b16 %v251
    %v3000 = vunpack.c.l.b16 %v252
    %v3001 = vunpack.c.h.b16 %v252
    %v3002 = vunpack.c.l.b16 %v253
    %v3003 = vunpack.c.h.b16 %v253
    %v3004 = vunpack.c.l.b16 %v254
    %v3005 = vunpack.c.h.b16 %v254
    %v3006 = vunpack.c.l.b16 %v255
    %v3007 = vunpack.c.h.b16 %v255
    %v3008 = vunpack.c.l.b16 %v256
    %v3009 = vunpack.c.h.b16 %v256
    %v3010 = vunpack.c.l.b16 %v257
    %v3011 = vunpack.c.h.b16 %v257
    %v3012 = vunpack.c.l.b16 %v258
    %v3013 = vunpack.c.h.b16 %v258
    %v3014 = vunpack.c.l.b16 %v259
    %v3015 = vunpack.c.h.b16 %v259
    %v3016 = vunpack.c.l.b16 %v260
    %v3017 = vunpack.c.h.b16 %v260
    %v3018 = vunpack.c.l.b16 %v261
    %v3019 = vunpack.c.h.b16 %v261
    %v3020 = vunpack.c.l.b16 %v262
    %v3021 = vunpack.c.h.b16 %v262
    %v3022 = vunpack.c.l.b16 %v263
    %v3023 = vunpack.c.h.b16 %v263
    %v3024 = vunpack.c.l.b16 %v264
    %v3025 = vunpack.c.h.b16 %v264
    %v3026 = vunpack.c.l.b16 %v265
    %v3027 = vunpack.c.h.b16 %v265
    %v3028 = vunpack.c.l.b16 %v266
    %v3029 = vunpack.c.h.b16 %v266
    %v3030 = vunpack.c.l.b16 %v267
    %v3031 = vunpack.c.h.b16 %v267
    %v3032 = vunpack.c.l.b16 %v268
    %v3033 = vunpack.c.h.b16 %v268
    %v3034 = vunpack.c.l.b16 %v269
    %v3035 = vunpack.c.h.b16 %v269
    %v3036 = vunpack.c.l.b16 %v270
    %v3037 = vunpack.c.h.b16 %v270
    %v3038 = vunpack.c.l.b16 %v271
    %v3039 = vunpack.c.h.b16 %v271
    %v3040 = vunpack.c.l.b16 %v272
    %v3041 = vunpack.c.h.b16 %v272
    %v3042 = vunpack.c.l.b16 %v273
    %v3043 = vunpack.c.h.b16 %v273
    %v3044 = vunpack.c.l.b16 %v274
    %v3045 = vunpack.c.h.b16 %v274
    %v3046 = vunpack.c.l.b16 %v275
    %v3047 = vunpack.c.h.b16 %v275
    %v3048 = vunpack.c.l.b16 %v276
    %v3049 = vunpack.c.h.b16 %v276
    %v3050 = vunpack.c.l.b16 %v277
    %v3051 = vunpack.c.h.b16 %v277
    %v3052 = vunpack.c.l.b16 %v278
    %v3053 = vunpack.c.h.b16 %v278
    %v3054 = vunpack.c.l.b16 %v279
    %v3055 = vunpack.c.h.b16 %v279
    %v3056 = vunpack.c.l.b16 %v280
    %v3057 = vunpack.c.h.b16 %v280
    %v3058 = vunpack.c.l.b16 %v281
    %v3059 = vunpack.c.h.b16 %v281
    %v3060 = vunpack.c.l.b16 %v282
    %v3061 = vunpack.c.h.b16 %v282
    %v3062 = vunpack.c.l.b16 %v283
    %v3063 = vunpack.c.h.b16 %v283
    %v3064 = vunpack.c.l.b16 %v284
    %v3065 = vunpack.c.h.b16 %v284
    %v3066 = vunpack.c.l.b16 %v285
    %v3067 = vunpack.c.h.b16 %v285
    %v3068 = vunpack.c.l.b16 %v286
    %v3069 = vunpack.c.h.b16 %v286
    %v3070 = vunpack.c.l.b16 %v287
    %v3071 = vunpack.c.h.b16 %v287
    %v3072 = vunpack.c.l.b16 %v288
    %v3073 = vunpack.c.h.b16 %v288
    %v3074 = vunpack.c.l.b16 %v289
    %v3075 = vunpack.c.h.b16 %v289
    %v3076 = vunpack.c.l.b16 %v290
    %v3077 = vunpack.c.h.b16 %v290
    %v3078 = vunpack.c.l.b16 %v291
    %v3079 = vunpack.c.h.b16 %v291
    %v3080 = vunpack.c.l.b16 %v292
    %v3081 = vunpack.c.h.b16 %v292
    %v3082 = vunpack.c.l.b16 %v293
    %v3083 = vunpack.c.h.b16 %v293
    %v3084 = vunpack.c.l.b16 %v294
    %v3085 = vunpack.c.h.b16 %v294
    %v3086 = vunpack.c.l.b16 %v295
    %v3087 = vunpack.c.h.b16 %v295
    %v3088 = vunpack.c.l.b16 %v296
    %v3089 = vunpack.c.h.b16 %v296
    %v3090 = vunpack.c.l.b16 %v297
    %v3091 = vunpack.c.h.b16 %v297
    %v3092 = vunpack.c.l.b16 %v298
    %v3093 = vunpack.c.h.b16 %v298
    %v3094 = vunpack.c.l.b16 %v299
    %v3095 = vunpack.c.h.b16 %v299
    %v3096 = vunpack.c.l.b16 %v300
    %v3097 = vunpack.c.h.b16 %v300
    %v3098 = vunpack.c.l.b16 %v301
    %v3099 = vunpack.c.h.b16 %v301
    %v3100 = vunpack.c.l.b16 %v302
    %v3101 = vunpack.c.h.b16 %v302
    %v3102 = vunpack.c.l.b16 %v303
    %v3103 = vunpack.c.h.b16 %v303
    %v3104 = vunpack.c.l.b16 %v304
    %v3105 = vunpack.c.h.b16 %v304
    %v3106 = vunpack.c.l.b16 %v305
    %v3107 = vunpack.c.h.b16 %v305
    %v3108 = vunpack.c.l.b16 %v306
    %v3109 = vunpack.c.h.b16 %v306
    %v3110 = vunpack.c.l.b16 %v307
    %v3111 = vunpack.c.h.b16 %v307
    %v3112 = vunpack.c.l.b16 %v308
    %v3113 = vunpack.c.h.b16 %v308
    %v3114 = vunpack.c.l.b16 %v309
    %v3115 = vunpack.c.h.b16 %v309
    %v3116 = vunpack.c.l.b16 %v310
    %v3117 = vunpack.c.h.b16 %v310
    %v3118 = vunpack.c.l.b16 %v311
    %v3119 = vunpack.c.h.b16 %v311
    %v3120 = vunpack.c.l.b16 %v312
    %v3121 = vunpack.c.h.b16 %v312
    %v3122 = vunpack.c.l.b16 %v313
    %v3123 = vunpack.c.h.b16 %v313
    %v3124 = vunpack.c.l.b16 %v314
    %v3125 = vunpack.c.h.b16 %v314
    %v3126 = vunpack.c.l.b16 %v315
    %v3127 = vunpack.c.h.b16 %v315
    %v3128 = vunpack.c.l.b16 %v316
    %v3129 = vunpack.c.h.b16 %v316
    %v3130 = vunpack.c.l.b16 %v317
    %v3131 = vunpack.c.h.b16 %v317
    %v3132 = vunpack.c.l.b16 %v318
    %v3133 = vunpack.c.h.b16 %v318
    %v3134 = vunpack.c.l.b16 %v319
    %v3135 = vunpack.c.h.b16 %v319
    %v3136 = vunpack.c.l.b16 %v320
    %v3137 = vunpack.c.h.b16 %v320
    %v3138 = vunpack.c.l.b16 %v321
    %v3139 = vunpack.c.h.b16 %v321
    %v3140 = vunpack.c.l.b16 %v322
    %v3141 = vunpack.c.h.b16 %v322
    %v3142 = vunpack.c.l.b16 %v323
    %v3143 = vunpack.c.h.b16 %v323
    %v3144 = vunpack.c.l.b16 %v324
    %v3145 = vunpack.c.h.b16 %v324
    %v3146 = vunpack.c.l.b16 %v325
    %v3147 = vunpack.c.h.b16 %v325
    %v3148 = vunpack.c.l.b16 %v326
    %v3149 = vunpack.c.h.b16 %v326
    %v3150 = vunpack.c.l.b16 %v327
    %v3151 = vunpack.c.h.b16 %v327
    %v3152 = vunpack.c.l.b16 %v328
    %v3153 = vunpack.c.h.b16 %v328
    %v3154 = vunpack.c.l.b16 %v329
    %v3155 = vunpack.c.h.b16 %v329
    %v3156 = vunpack.c.l.b16 %v330
    %v3157 = vunpack.c.h.b16 %v330
    %v3158 = vunpack.c.l.b16 %v331
    %v3159 = vunpack.c.h.b16 %v331
    %v3160 = vunpack.c.l.b16 %v332
    %v3161 = vunpack.c.h.b16 %v332
    %v3162 = vunpack.c.l.b16 %v333
    %v3163 = vunpack.c.h.b16 %v333
    %v3164 = vunpack.c.l.b16 %v334
    %v3165 = vunpack.c.h.b16 %v334
    %v3166 = vunpack.c.l.b16 %v335
    %v3167 = vunpack.c.h.b16 %v335
    %v3168 = vunpack.c.l.b16 %v336
    %v3169 = vunpack.c.h.b16 %v336
    %v3170 = vunpack.c.l.b16 %v337
    %v3171 = vunpack.c.h.b16 %v337
    %v3172 = vunpack.c.l.b16 %v338
    %v3173 = vunpack.c.h.b16 %v338
    %v3174 = vunpack.c.l.b16 %v339
    %v3175 = vunpack.c.h.b16 %v339
    %v3176 = vunpack.c.l.b16 %v340
    %v3177 = vunpack.c.h.b16 %v340
    %v3178 = vunpack.c.l.b16 %v341
    %v3179 = vunpack.c.h.b16 %v341
    %v3180 = vunpack.c.l.b16 %v342
    %v3181 = vunpack.c.h.b16 %v342
    %v3182 = vunpack.c.l.b16 %v343
    %v3183 = vunpack.c.h.b16 %v343
    %v3184 = vunpack.c.l.b16 %v344
    %v3185 = vunpack.c.h.b16 %v344
    %v3186 = vunpack.c.l.b16 %v345
    %v3187 = vunpack.c.h.b16 %v345
    %v3188 = vunpack.c.l.b16 %v346
    %v3189 = vunpack.c.h.b16 %v346
    %v3190 = vunpack.c.l.b16 %v347
    %v3191 = vunpack.c.h.b16 %v347
    %v3192 = vunpack.c.l.b16 %v348
    %v3193 = vunpack.c.h.b16 %v348
    %v3194 = vunpack.c.l.b16 %v349
    %v3195 = vunpack.c.h.b16 %v349
    %v3196 = vunpack.c.l.b16 %v350
    %v3197 = vunpack.c.h.b16 %v350
    %v3198 = vunpack.c.l.b16 %v351
    %v3199 = vunpack.c.h.b16 %v351
    %v3200 = vunpack.c.l.b16 %v352
    %v3201 = vunpack.c.h.b16 %v352
    %v3202 = vunpack.c.l.b16 %v353
    %v3203 = vunpack.c.h.b16 %v353
    %v3204 = vunpack.c.l.b16 %v354
    %v3205 = vunpack.c.h.b16 %v354
    %v3206 = vunpack.c.l.b16 %v355
    %v3207 = vunpack.c.h.b16 %v355
    %v3208 = vunpack.c.l.b16 %v356
    %v3209 = vunpack.c.h.b16 %v356
    %v3210 = vunpack.c.l.b16 %v357
    %v3211 = vunpack.c.h.b16 %v357
    %v3212 = vunpack.c.l.b16 %v358
    %v3213 = vunpack.c.h.b16 %v358
    %v3214 = vunpack.c.l.b16 %v359
    %v3215 = vunpack.c.h.b16 %v359
    %v3216 = vunpack.c.l.b16 %v360
    %v3217 = vunpack.c.h.b16 %v360
    %v3218 = vunpack.c.l.b16 %v361
    %v3219 = vunpack.c.h.b16 %v361
    %v3220 = vunpack.c.l.b16 %v362
    %v3221 = vunpack.c.h.b16 %v362
    %v3222 = vunpack.c.l.b16 %v363
    %v3223 = vunpack.c.h.b16 %v363
    %v3224 = vunpack.c.l.b16 %v364
    %v3225 = vunpack.c.h.b16 %v364
    %v3226 = vunpack.c.l.b16 %v365
    %v3227 = vunpack.c.h.b16 %v365
    %v3228 = vunpack.c.l.b16 %v366
    %v3229 = vunpack.c.h.b16 %v366
    %v3230 = vunpack.c.l.b16 %v367
    %v3231 = vunpack.c.h.b16 %v367
    %v3232 = vunpack.c.l.b16 %v368
    %v3233 = vunpack.c.h.b16 %v368
    %v3234 = vunpack.c.l.b16 %v369
    %v3235 = vunpack.c.h.b16 %v369
    %v3236 = vunpack.c.l.b16 %v370
    %v3237 = vunpack.c.h.b16 %v370
    %v3238 = vunpack.c.l.b16 %v371
    %v3239 = vunpack.c.h.b16 %v371
    %v3240 = vunpack.c.l.b16 %v372
    %v3241 = vunpack.c.h.b16 %v372
    %v3242 = vunpack.c.l.b16 %v373
    %v3243 = vunpack.c.h.b16 %v373
    %v3244 = vunpack.c.l.b16 %v374
    %v3245 = vunpack.c.h.b16 %v374
    %v3246 = vunpack.c.l.b16 %v375
    %v3247 = vunpack.c.h.b16 %v375
    %v3248 = vunpack.c.l.b16 %v376
    %v3249 = vunpack.c.h.b16 %v376
    %v3250 = vunpack.c.l.b16 %v377
    %v3251 = vunpack.c.h.b16 %v377
    %v3252 = vunpack.c.l.b16 %v378
    %v3253 = vunpack.c.h.b16 %v378
    %v3254 = vunpack.c.l.b16 %v379
    %v3255 = vunpack.c.h.b16 %v379
    %v3256 = vunpack.c.l.b16 %v380
    %v3257 = vunpack.c.h.b16 %v380
    %v3258 = vunpack.c.l.b16 %v381
    %v3259 = vunpack.c.h.b16 %v381
    %v3260 = vunpack.c.l.b16 %v382
    %v3261 = vunpack.c.h.b16 %v382
    %v3262 = vunpack.c.l.b16 %v383
    %v3263 = vunpack.c.h.b16 %v383
    %v3264 = vunpack.c.l.b16 %v384
    %v3265 = vunpack.c.h.b16 %v384
    %v3266 = vunpack.c.l.b16 %v385
    %v3267 = vunpack.c.h.b16 %v385
    %v3268 = vunpack.c.l.b16 %v386
    %v3269 = vunpack.c.h.b16 %v386
    %v3270 = vunpack.c.l.b16 %v387
    %v3271 = vunpack.c.h.b16 %v387
    %v3272 = vunpack.c.l.b16 %v388
    %v3273 = vunpack.c.h.b16 %v388
    %v3274 = vunpack.c.l.b16 %v389
    %v3275 = vunpack.c.h.b16 %v389
    %v3276 = vunpack.c.l.b16 %v390
    %v3277 = vunpack.c.h.b16 %v390
    %v3278 = vunpack.c.l.b16 %v391
    %v3279 = vunpack.c.h.b16 %v391
    %v3280 = vunpack.c.l.b16 %v392
    %v3281 = vunpack.c.h.b16 %v392
    %v3282 = vunpack.c.l.b16 %v393
    %v3283 = vunpack.c.h.b16 %v393
    %v3284 = vunpack.c.l.b16 %v394
    %v3285 = vunpack.c.h.b16 %v394
    %v3286 = vunpack.c.l.b16 %v395
    %v3287 = vunpack.c.h.b16 %v395
    %v3288 = vunpack.c.l.b16 %v396
    %v3289 = vunpack.c.h.b16 %v396
    %v3290 = vunpack.c.l.b16 %v397
    %v3291 = vunpack.c.h.b16 %v397
    %v3292 = vunpack.c.l.b16 %v398
    %v3293 = vunpack.c.h.b16 %v398
    %v3294 = vunpack.c.l.b16 %v399
    %v3295 = vunpack.c.h.b16 %v399
    %v3296 = vunpack.c.l.b16 %v400
    %v3297 = vunpack.c.h.b16 %v400
    %v3298 = vunpack.c.l.b16 %v401
    %v3299 = vunpack.c.h.b16 %v401
    %v3300 = vunpack.c.l.b16 %v402
    %v3301 = vunpack.c.h.b16 %v402
    %v3302 = vunpack.c.l.b16 %v403
    %v3303 = vunpack.c.h.b16 %v403
    %v3304 = vunpack.c.l.b16 %v404
    %v3305 = vunpack.c.h.b16 %v404
    %v3306 = vunpack.c.l.b16 %v405
    %v3307 = vunpack.c.h.b16 %v405
    %v3308 = vunpack.c.l.b16 %v406
    %v3309 = vunpack.c.h.b16 %v406
    %v3310 = vunpack.c.l.b16 %v407
    %v3311 = vunpack.c.h.b16 %v407
    %v3312 = vunpack.c.l.b16 %v408
    %v3313 = vunpack.c.h.b16 %v408
    %v3314 = vunpack.c.l.b16 %v409
    %v3315 = vunpack.c.h.b16 %v409
    %v3316 = vunpack.c.l.b16 %v410
    %v3317 = vunpack.c.h.b16 %v410
    %v3318 = vunpack.c.l.b16 %v411
    %v3319 = vunpack.c.h.b16 %v411
    %v3320 = vunpack.c.l.b16 %v412
    %v3321 = vunpack.c.h.b16 %v412
    %v3322 = vunpack.c.l.b16 %v413
    %v3323 = vunpack.c.h.b16 %v413
    %v3324 = vunpack.c.l.b16 %v414
    %v3325 = vunpack.c.h.b16 %v414
    %v3326 = vunpack.c.l.b16 %v415
    %v3327 = vunpack.c.h.b16 %v415
    %v3328 = vunpack.c.l.b16 %v416
    %v3329 = vunpack.c.h.b16 %v416
    %v3330 = vunpack.c.l.b16 %v417
    %v3331 = vunpack.c.h.b16 %v417
    %v3332 = vunpack.c.l.b16 %v418
    %v3333 = vunpack.c.h.b16 %v418
    %v3334 = vunpack.c.l.b16 %v419
    %v3335 = vunpack.c.h.b16 %v419
    %v3336 = vunpack.c.l.b16 %v420
    %v3337 = vunpack.c.h.b16 %v420
    %v3338 = vunpack.c.l.b16 %v421
    %v3339 = vunpack.c.h.b16 %v421
    %v3340 = vunpack.c.l.b16 %v422
    %v3341 = vunpack.c.h.b16 %v422
    %v3342 = vunpack.c.l.b16 %v423
    %v3343 = vunpack.c.h.b16 %v423
    %v3344 = vunpack.c.l.b16 %v424
    %v3345 = vunpack.c.h.b16 %v424
    %v3346 = vunpack.c.l.b16 %v425
    %v3347 = vunpack.c.h.b16 %v425
    %v3348 = vunpack.c.l.b16 %v426
    %v3349 = vunpack.c.h.b16 %v426
    %v3350 = vunpack.c.l.b16 %v427
    %v3351 = vunpack.c.h.b16 %v427
    %v3352 = vunpack.c.l.b16 %v428
    %v3353 = vunpack.c.h.b16 %v428
    %v3354 = vunpack.c.l.b16 %v429
    %v3355 = vunpack.c.h.b16 %v429
    %v3356 = vunpack.c.l.b16 %v430
    %v3357 = vunpack.c.h.b16 %v430
    %v3358 = vunpack.c.l.b16 %v431
    %v3359 = vunpack.c.h.b16 %v431
    %v3360 = vunpack.c.l.b16 %v432
    %v3361 = vunpack.c.h.b16 %v432
    %v3362 = vunpack.c.l.b16 %v433
    %v3363 = vunpack.c.h.b16 %v433
    %v3364 = vunpack.c.l.b16 %v434
    %v3365 = vunpack.c.h.b16 %v434
    %v3366 = vunpack.c.l.b16 %v435
    %v3367 = vunpack.c.h.b16 %v435
    %v3368 = vunpack.c.l.b16 %v436
    %v3369 = vunpack.c.h.b16 %v436
    %v3370 = vunpack.c.l.b16 %v437
    %v3371 = vunpack.c.h.b16 %v437
    %v3372 = vunpack.c.l.b16 %v438
    %v3373 = vunpack.c.h.b16 %v438
    %v3374 = vunpack.c.l.b16 %v439
    %v3375 = vunpack.c.h.b16 %v439
    %v3376 = vunpack.c.l.b16 %v440
    %v3377 = vunpack.c.h.b16 %v440
    %v3378 = vunpack.c.l.b16 %v441
    %v3379 = vunpack.c.h.b16 %v441
    %v3380 = vunpack.c.l.b16 %v442
    %v3381 = vunpack.c.h.b16 %v442
    %v3382 = vunpack.c.l.b16 %v443
    %v3383 = vunpack.c.h.b16 %v443
    %v3384 = vunpack.c.l.b16 %v444
    %v3385 = vunpack.c.h.b16 %v444
    %v3386 = vunpack.c.l.b16 %v445
    %v3387 = vunpack.c.h.b16 %v445
    %v3388 = vunpack.c.l.b16 %v446
    %v3389 = vunpack.c.h.b16 %v446
    %v3390 = vunpack.c.l.b16 %v447
    %v3391 = vunpack.c.h.b16 %v447
    %v3392 = vunpack.c.l.b16 %v448
    %v3393 = vunpack.c.h.b16 %v448
    %v3394 = vunpack.c.l.b16 %v449
    %v3395 = vunpack.c.h.b16 %v449
    %v3396 = vunpack.c.l.b16 %v450
    %v3397 = vunpack.c.h.b16 %v450
    %v3398 = vunpack.c.l.b16 %v451
    %v3399 = vunpack.c.h.b16 %v451
    %v3400 = vunpack.c.l.b16 %v452
    %v3401 = vunpack.c.h.b16 %v452
    %v3402 = vunpack.c.l.b16 %v453
    %v3403 = vunpack.c.h.b16 %v453
    %v3404 = vunpack.c.l.b16 %v454
    %v3405 = vunpack.c.h.b16 %v454
    %v3406 = vunpack.c.l.b16 %v455
    %v3407 = vunpack.c.h.b16 %v455
    %v3408 = vunpack.c.l.b16 %v456
    %v3409 = vunpack.c.h.b16 %v456
    %v3410 = vunpack.c.l.b16 %v457
    %v3411 = vunpack.c.h.b16 %v457
    %v3412 = vunpack.c.l.b16 %v458
    %v3413 = vunpack.c.h.b16 %v458
    %v3414 = vunpack.c.l.b16 %v459
    %v3415 = vunpack.c.h.b16 %v459
    %v3416 = vunpack.c.l.b16 %v460
    %v3417 = vunpack.c.h.b16 %v460
    %v3418 = vunpack.c.l.b16 %v461
    %v3419 = vunpack.c.h.b16 %v461
    %v3420 = vunpack.c.l.b16 %v462
    %v3421 = vunpack.c.h.b16 %v462
    %v3422 = vunpack.c.l.b16 %v463
    %v3423 = vunpack.c.h.b16 %v463
    %v3424 = vunpack.c.l.b16 %v464
    %v3425 = vunpack.c.h.b16 %v464
    %v3426 = vunpack.c.l.b16 %v465
    %v3427 = vunpack.c.h.b16 %v465
    %v3428 = vunpack.c.l.b16 %v466
    %v3429 = vunpack.c.h.b16 %v466
    %v3430 = vunpack.c.l.b16 %v467
    %v3431 = vunpack.c.h.b16 %v467
    %v3432 = vunpack.c.l.b16 %v468
    %v3433 = vunpack.c.h.b16 %v468
    %v3434 = vunpack.c.l.b16 %v469
    %v3435 = vunpack.c.h.b16 %v469
    %v3436 = vunpack.c.l.b16 %v470
    %v3437 = vunpack.c.h.b16 %v470
    %v3438 = vunpack.c.l.b16 %v471
    %v3439 = vunpack.c.h.b16 %v471
    %v3440 = vunpack.c.l.b16 %v472
    %v3441 = vunpack.c.h.b16 %v472
    %v3442 = vunpack.c.l.b16 %v473
    %v3443 = vunpack.c.h.b16 %v473
    %v3444 = vunpack.c.l.b16 %v474
    %v3445 = vunpack.c.h.b16 %v474
    %v3446 = vunpack.c.l.b16 %v475
    %v3447 = vunpack.c.h.b16 %v475
    %v3448 = vunpack.c.l.b16 %v476
    %v3449 = vunpack.c.h.b16 %v476
    %v3450 = vunpack.c.l.b16 %v477
    %v3451 = vunpack.c.h.b16 %v477
    %v3452 = vunpack.c.l.b16 %v478
    %v3453 = vunpack.c.h.b16 %v478
    %v3454 = vunpack.c.l.b16 %v479
    %v3455 = vunpack.c.h.b16 %v479
    %v3456 = vunpack.c.l.b16 %v480
    %v3457 = vunpack.c.h.b16 %v480
    %v3458 = vunpack.c.l.b16 %v481
    %v3459 = vunpack.c.h.b16 %v481
    %v3460 = vunpack.c.l.b16 %v482
    %v3461 = vunpack.c.h.b16 %v482
    %v3462 = vunpack.c.l.b16 %v483
    %v3463 = vunpack.c.h.b16 %v483
    %v3464 = vunpack.c.l.b16 %v484
    %v3465 = vunpack.c.h.b16 %v484
    %v3466 = vunpack.c.l.b16 %v485
    %v3467 = vunpack.c.h.b16 %v485
    %v3468 = vunpack.c.l.b16 %v486
    %v3469 = vunpack.c.h.b16 %v486
    %v3470 = vunpack.c.l.b16 %v487
    %v3471 = vunpack.c.h.b16 %v487
    %v3472 = vunpack.c.l.b16 %v488
    %v3473 = vunpack.c.h.b16 %v488
    %v3474 = vunpack.c.l.b16 %v489
    %v3475 = vunpack.c.h.b16 %v489
    %v3476 = vunpack.c.l.b16 %v490
    %v3477 = vunpack.c.h.b16 %v490
    %v3478 = vunpack.c.l.b16 %v491
    %v3479 = vunpack.c.h.b16 %v491
    %v3480 = vunpack.c.l.b16 %v492
    %v3481 = vunpack.c.h.b16 %v492
    %v3482 = vunpack.c.l.b16 %v493
    %v3483 = vunpack.c.h.b16 %v493
    %v3484 = vunpack.c.l.b16 %v494
    %v3485 = vunpack.c.h.b16 %v494
    %v3486 = vunpack.c.l.b16 %v495
    %v3487 = vunpack.c.h.b16 %v495
    %v3488 = vunpack.c.l.b16 %v496
    %v3489 = vunpack.c.h.b16 %v496
    %v3490 = vunpack.c.l.b16 %v497
    %v3491 = vunpack.c.h.b16 %v497
    %v3492 = vunpack.c.l.b16 %v498
    %v3493 = vunpack.c.h.b16 %v498
    %v3494 = vunpack.c.l.b16 %v499
    %v3495 = vunpack.c.h.b16 %v499
    %v3496 = vunpack.c.l.b16 %v500
    %v3497 = vunpack.c.h.b16 %v500
    %v3498 = vunpack.c.l.b16 %v501
    %v3499 = vunpack.c.h.b16 %v501
    %v3500 = vunpack.c.l.b16 %v502
    %v3501 = vunpack.c.h.b16 %v502
    %v3502 = vunpack.c.l.b16 %v503
    %v3503 = vunpack.c.h.b16 %v503
    %v3504 = vunpack.c.l.b16 %v504
    %v3505 = vunpack.c.h.b16 %v504
    %v3506 = vunpack.c.l.b16 %v505
    %v3507 = vunpack.c.h.b16 %v505
    %v3508 = vunpack.c.l.b16 %v506
    %v3509 = vunpack.c.h.b16 %v506
    %v3510 = vunpack.c.l.b16 %v507
    %v3511 = vunpack.c.h.b16 %v507
    %v3512 = vunpack.c.l.b16 %v508
    %v3513 = vunpack.c.h.b16 %v508
    %v3514 = vunpack.c.l.b16 %v509
    %v3515 = vunpack.c.h.b16 %v509
    %v3516 = vunpack.c.l.b16 %v510
    %v3517 = vunpack.c.h.b16 %v510
    %v3518 = vunpack.c.l.b16 %v511
    %v3519 = vunpack.c.h.b16 %v511
    %v3520 = vunpack.c.l.b16 %v512
    %v3521 = vunpack.c.h.b16 %v512
    %v3522 = vunpack.c.l.b16 %v513
    %v3523 = vunpack.c.h.b16 %v513
    %v3524 = vunpack.c.l.b16 %v514
    %v3525 = vunpack.c.h.b16 %v514
    %v3526 = vunpack.c.l.b16 %v515
    %v3527 = vunpack.c.h.b16 %v515
    %v3528 = vunpack.c.l.b16 %v516
    %v3529 = vunpack.c.h.b16 %v516
    %v3530 = vunpack.c.l.b16 %v517
    %v3531 = vunpack.c.h.b16 %v517
    %v3532 = vunpack.c.l.b16 %v518
    %v3533 = vunpack.c.h.b16 %v518
    %v3534 = vunpack.c.l.b16 %v519
    %v3535 = vunpack.c.h.b16 %v519
    %v3536 = vunpack.c.l.b16 %v520
    %v3537 = vunpack.c.h.b16 %v520
    %v3538 = vunpack.c.l.b16 %v521
    %v3539 = vunpack.c.h.b16 %v521
    %v3540 = vunpack.c.l.b16 %v522
    %v3541 = vunpack.c.h.b16 %v522
    %v3542 = vunpack.c.l.b16 %v523
    %v3543 = vunpack.c.h.b16 %v523
    %v3544 = vunpack.c.l.b16 %v524
    %v3545 = vunpack.c.h.b16 %v524
    %v3546 = vunpack.c.l.b16 %v525
    %v3547 = vunpack.c.h.b16 %v525
    %v3548 = vunpack.c.l.b16 %v526
    %v3549 = vunpack.c.h.b16 %v526
    %v3550 = vunpack.c.l.b16 %v527
    %v3551 = vunpack.c.h.b16 %v527
    %v3552 = vunpack.c.l.b16 %v528
    %v3553 = vunpack.c.h.b16 %v528
    %v3554 = vunpack.c.l.b16 %v529
    %v3555 = vunpack.c.h.b16 %v529
    %v3556 = vunpack.c.l.b16 %v530
    %v3557 = vunpack.c.h.b16 %v530
    %v3558 = vunpack.c.l.b16 %v531
    %v3559 = vunpack.c.h.b16 %v531
    %v3560 = vunpack.c.l.b16 %v532
    %v3561 = vunpack.c.h.b16 %v532
    %v3562 = vunpack.c.l.b16 %v533
    %v3563 = vunpack.c.h.b16 %v533
    %v3564 = vunpack.c.l.b16 %v534
    %v3565 = vunpack.c.h.b16 %v534
    %v3566 = vunpack.c.l.b16 %v535
    %v3567 = vunpack.c.h.b16 %v535
    %v3568 = vunpack.c.l.b16 %v536
    %v3569 = vunpack.c.h.b16 %v536
    %v3570 = vunpack.c.l.b16 %v537
    %v3571 = vunpack.c.h.b16 %v537
    %v3572 = vunpack.c.l.b16 %v538
    %v3573 = vunpack.c.h.b16 %v538
    %v3574 = vunpack.c.l.b16 %v539
    %v3575 = vunpack.c.h.b16 %v539
    %v3576 = vunpack.c.l.b16 %v540
    %v3577 = vunpack.c.h.b16 %v540
    %v3578 = vunpack.c.l.b16 %v541
    %v3579 = vunpack.c.h.b16 %v541
    %v3580 = vunpack.c.l.b16 %v542
    %v3581 = vunpack.c.h.b16 %v542
    %v3582 = vunpack.c.l.b16 %v543
    %v3583 = vunpack.c.h.b16 %v543
    %v3584 = vunpack.c.l.b16 %v544
    %v3585 = vunpack.c.h.b16 %v544
    %v3586 = vunpack.c.l.b16 %v545
    %v3587 = vunpack.c.h.b16 %v545
    %v3588 = vunpack.c.l.b16 %v546
    %v3589 = vunpack.c.h.b16 %v546
    %v3590 = vunpack.c.l.b16 %v547
    %v3591 = vunpack.c.h.b16 %v547
    %v3592 = vunpack.c.l.b16 %v548
    %v3593 = vunpack.c.h.b16 %v548
    %v3594 = vunpack.c.l.b16 %v549
    %v3595 = vunpack.c.h.b16 %v549
    %v3596 = vunpack.c.l.b16 %v550
    %v3597 = vunpack.c.h.b16 %v550
    %v3598 = vunpack.c.l.b16 %v551
    %v3599 = vunpack.c.h.b16 %v551
    %v3600 = vunpack.c.l.b16 %v552
    %v3601 = vunpack.c.h.b16 %v552
    %v3602 = vunpack.c.l.b16 %v553
    %v3603 = vunpack.c.h.b16 %v553
    %v3604 = vunpack.c.l.b16 %v554
    %v3605 = vunpack.c.h.b16 %v554
    %v3606 = vunpack.c.l.b16 %v555
    %v3607 = vunpack.c.h.b16 %v555
    %v3608 = vunpack.c.l.b16 %v556
    %v3609 = vunpack.c.h.b16 %v556
    %v3610 = vunpack.c.l.b16 %v557
    %v3611 = vunpack.c.h.b16 %v557
    %v3612 = vunpack.c.l.b16 %v558
    %v3613 = vunpack.c.h.b16 %v558
    %v3614 = vunpack.c.l.b16 %v559
    %v3615 = vunpack.c.h.b16 %v559
    %v3616 = vunpack.c.l.b16 %v560
    %v3617 = vunpack.c.h.b16 %v560
    %v3618 = vunpack.c.l.b16 %v561
    %v3619 = vunpack.c.h.b16 %v561
    %v3620 = vunpack.c.l.b16 %v562
    %v3621 = vunpack.c.h.b16 %v562
    %v3622 = vunpack.c.l.b16 %v563
    %v3623 = vunpack.c.h.b16 %v563
    %v3624 = vunpack.c.l.b16 %v564
    %v3625 = vunpack.c.h.b16 %v564
    %v3626 = vunpack.c.l.b16 %v565
    %v3627 = vunpack.c.h.b16 %v565
    %v3628 = vunpack.c.l.b16 %v566
    %v3629 = vunpack.c.h.b16 %v566
    %v3630 = vunpack.c.l.b16 %v567
    %v3631 = vunpack.c.h.b16 %v567
    %v3632 = vunpack.c.l.b16 %v568
    %v3633 = vunpack.c.h.b16 %v568
    %v3634 = vunpack.c.l.b16 %v569
    %v3635 = vunpack.c.h.b16 %v569
    %v3636 = vunpack.c.l.b16 %v570
    %v3637 = vunpack.c.h.b16 %v570
    %v3638 = vunpack.c.l.b16 %v571
    %v3639 = vunpack.c.h.b16 %v571
    %v3640 = vunpack.c.l.b16 %v572
    %v3641 = vunpack.c.h.b16 %v572
    %v3642 = vunpack.c.l.b16 %v573
    %v3643 = vunpack.c.h.b16 %v573
    %v3644 = vunpack.c.l.b16 %v574
    %v3645 = vunpack.c.h.b16 %v574
    %v3646 = vunpack.c.l.b16 %v575
    %v3647 = vunpack.c.h.b16 %v575
    %v3648 = vunpack.c.l.b16 %v576
    %v3649 = vunpack.c.h.b16 %v576
    %v3650 = vunpack.c.l.b16 %v577
    %v3651 = vunpack.c.h.b16 %v577
    %v3652 = vunpack.c.l.b16 %v578
    %v3653 = vunpack.c.h.b16 %v578
    %v3654 = vunpack.c.l.b16 %v579
    %v3655 = vunpack.c.h.b16 %v579
    %v3656 = vunpack.c.l.b16 %v580
    %v3657 = vunpack.c.h.b16 %v580
    %v3658 = vunpack.c.l.b16 %v581
    %v3659 = vunpack.c.h.b16 %v581
    %v3660 = vunpack.c.l.b16 %v582
    %v3661 = vunpack.c.h.b16 %v582
    %v3662 = vunpack.c.l.b16 %v583
    %v3663 = vunpack.c.h.b16 %v583
    %v3664 = vunpack.c.l.b16 %v584
    %v3665 = vunpack.c.h.b16 %v584
    %v3666 = vunpack.c.l.b16 %v585
    %v3667 = vunpack.c.h.b16 %v585
    %v3668 = vunpack.c.l.b16 %v586
    %v3669 = vunpack.c.h.b16 %v586
    %v3670 = vunpack.c.l.b16 %v587
    %v3671 = vunpack.c.h.b16 %v587
    %v3672 = vunpack.c.l.b16 %v588
    %v3673 = vunpack.c.h.b16 %v588
    %v3674 = vunpack.c.l.b16 %v589
    %v3675 = vunpack.c.h.b16 %v589
    %v3676 = vunpack.c.l.b16 %v590
    %v3677 = vunpack.c.h.b16 %v590
    %v3678 = vunpack.c.l.b16 %v591
    %v3679 = vunpack.c.h.b16 %v591
    %v3680 = vunpack.c.l.b16 %v592
    %v3681 = vunpack.c.h.b16 %v592
    %v3682 = vunpack.c.l.b16 %v593
    %v3683 = vunpack.c.h.b16 %v593
    %v3684 = vunpack.c.l.b16 %v594
    %v3685 = vunpack.c.h.b16 %v594
    %v3686 = vunpack.c.l.b16 %v595
    %v3687 = vunpack.c.h.b16 %v595
    %v3688 = vunpack.c.l.b16 %v596
    %v3689 = vunpack.c.h.b16 %v596
    %v3690 = vunpack.c.l.b16 %v597
    %v3691 = vunpack.c.h.b16 %v597
    %v3692 = vunpack.c.l.b16 %v598
    %v3693 = vunpack.c.h.b16 %v598
    %v3694 = vunpack.c.l.b16 %v599
    %v3695 = vunpack.c.h.b16 %v599
    %v3696 = vunpack.c.l.b16 %v600
    %v3697 = vunpack.c.h.b16 %v600
    %v3698 = vunpack.c.l.b16 %v601
    %v3699 = vunpack.c.h.b16 %v601
    %v3700 = vunpack.c.l.b16 %v602
    %v3701 = vunpack.c.h.b16 %v602
    %v3702 = vunpack.c.l.b16 %v603
    %v3703 = vunpack.c.h.b16 %v603
    %v3704 = vunpack.c.l.b16 %v604
    %v3705 = vunpack.c.h.b16 %v604
    %v3706 = vunpack.c.l.b16 %v605
    %v3707 = vunpack.c.h.b16 %v605
    %v3708 = vunpack.c.l.b16 %v606
    %v3709 = vunpack.c.h.b16 %v606
    %v3710 = vunpack.c.l.b16 %v607
    %v3711 = vunpack.c.h.b16 %v607
    %v3712 = vunpack.c.l.b16 %v608
    %v3713 = vunpack.c.h.b16 %v608
    %v3714 = vunpack.c.l.b16 %v609
    %v3715 = vunpack.c.h.b16 %v609
    %v3716 = vunpack.c.l.b16 %v610
    %v3717 = vunpack.c.h.b16 %v610
    %v3718 = vunpack.c.l.b16 %v611
    %v3719 = vunpack.c.h.b16 %v611
    %v3720 = vunpack.c.l.b16 %v612
    %v3721 = vunpack.c.h.b16 %v612
    %v3722 = vunpack.c.l.b16 %v613
    %v3723 = vunpack.c.h.b16 %v613
    %v3724 = vunpack.c.l.b16 %v614
    %v3725 = vunpack.c.h.b16 %v614
    %v3726 = vunpack.c.l.b16 %v615
    %v3727 = vunpack.c.h.b16 %v615
    %v3728 = vunpack.c.l.b16 %v616
    %v3729 = vunpack.c.h.b16 %v616
    %v3730 = vunpack.c.l.b16 %v617
    %v3731 = vunpack.c.h.b16 %v617
    %v3732 = vunpack.c.l.b16 %v618
    %v3733 = vunpack.c.h.b16 %v618
    %v3734 = vunpack.c.l.b16 %v619
    %v3735 = vunpack.c.h.b16 %v619
    %v3736 = vunpack.c.l.b16 %v620
    %v3737 = vunpack.c.h.b16 %v620
    %v3738 = vunpack.c.l.b16 %v621
    %v3739 = vunpack.c.h.b16 %v621
    %v3740 = vunpack.c.l.b16 %v622
    %v3741 = vunpack.c.h.b16 %v622
    %v3742 = vunpack.c.l.b16 %v623
    %v3743 = vunpack.c.h.b16 %v623
    %v3744 = vunpack.c.l.b16 %v624
    %v3745 = vunpack.c.h.b16 %v624
    %v3746 = vunpack.c.l.b16 %v625
    %v3747 = vunpack.c.h.b16 %v625
    %v3748 = vunpack.c.l.b16 %v626
    %v3749 = vunpack.c.h.b16 %v626
    %v3750 = vunpack.c.l.b16 %v627
    %v3751 = vunpack.c.h.b16 %v627
    %v3752 = vunpack.c.l.b16 %v628
    %v3753 = vunpack.c.h.b16 %v628
    %v3754 = vunpack.c.l.b16 %v629
    %v3755 = vunpack.c.h.b16 %v629
    %v3756 = vunpack.c.l.b16 %v630
    %v3757 = vunpack.c.h.b16 %v630
    %v3758 = vunpack.c.l.b16 %v631
    %v3759 = vunpack.c.h.b16 %v631
    %v3760 = vunpack.c.l.b16 %v632
    %v3761 = vunpack.c.h.b16 %v632
    %v3762 = vunpack.c.l.b16 %v633
    %v3763 = vunpack.c.h.b16 %v633
    %v3764 = vunpack.c.l.b16 %v634
    %v3765 = vunpack.c.h.b16 %v634
    %v3766 = vunpack.c.l.b16 %v635
    %v3767 = vunpack.c.h.b16 %v635
    %v3768 = vunpack.c.l.b16 %v636
    %v3769 = vunpack.c.h.b16 %v636
    %v3770 = vunpack.c.l.b16 %v637
    %v3771 = vunpack.c.h.b16 %v637
    %v3772 = vunpack.c.l.b16 %v638
    %v3773 = vunpack.c.h.b16 %v638
    %v3774 = vunpack.c.l.b16 %v639
    %v3775 = vunpack.c.h.b16 %v639
    %v3776 = vunpack.c.l.b16 %v640
    %v3777 = vunpack.c.h.b16 %v640
    %v3778 = vunpack.c.l.b16 %v641
    %v3779 = vunpack.c.h.b16 %v641
    %v3780 = vunpack.c.l.b16 %v642
    %v3781 = vunpack.c.h.b16 %v642
    %v3782 = vunpack.c.l.b16 %v643
    %v3783 = vunpack.c.h.b16 %v643
    %v3784 = vunpack.c.l.b16 %v644
    %v3785 = vunpack.c.h.b16 %v644
    %v3786 = vunpack.c.l.b16 %v645
    %v3787 = vunpack.c.h.b16 %v645
    %v3788 = vunpack.c.l.b16 %v646
    %v3789 = vunpack.c.h.b16 %v646
    %v3790 = vunpack.c.l.b16 %v647
    %v3791 = vunpack.c.h.b16 %v647
    %v3792 = vunpack.c.l.b16 %v648
    %v3793 = vunpack.c.h.b16 %v648
    %v3794 = vunpack.c.l.b16 %v649
    %v3795 = vunpack.c.h.b16 %v649
    %v3796 = vunpack.c.l.b16 %v650
    %v3797 = vunpack.c.h.b16 %v650
    %v3798 = vunpack.c.l.b16 %v651
    %v3799 = vunpack.c.h.b16 %v651
    %v3800 = vunpack.c.l.b16 %v652
    %v3801 = vunpack.c.h.b16 %v652
    %v3802 = vunpack.c.l.b16 %v653
    %v3803 = vunpack.c.h.b16 %v653
    %v3804 = vunpack.c.l.b16 %v654
    %v3805 = vunpack.c.h.b16 %v654
    %v3806 = vunpack.c.l.b16 %v655
    %v3807 = vunpack.c.h.b16 %v655
    %v3808 = vunpack.c.l.b16 %v656
    %v3809 = vunpack.c.h.b16 %v656
    %v3810 = vunpack.c.l.b16 %v657
    %v3811 = vunpack.c.h.b16 %v657
    %v3812 = vunpack.c.l.b16 %v658
    %v3813 = vunpack.c.h.b16 %v658
    %v3814 = vunpack.c.l.b16 %v659
    %v3815 = vunpack.c.h.b16 %v659
    %v3816 = vunpack.c.l.b16 %v660
    %v3817 = vunpack.c.h.b16 %v660
    %v3818 = vunpack.c.l.b16 %v661
    %v3819 = vunpack.c.h.b16 %v661
    %v3820 = vunpack.c.l.b16 %v662
    %v3821 = vunpack.c.h.b16 %v662
    %v3822 = vunpack.c.l.b16 %v663
    %v3823 = vunpack.c.h.b16 %v663
    %v3824 = vunpack.c.l.b16 %v664
    %v3825 = vunpack.c.h.b16 %v664
    %v3826 = vunpack.c.l.b16 %v665
    %v3827 = vunpack.c.h.b16 %v665
    %v3828 = vunpack.c.l.b16 %v666
    %v3829 = vunpack.c.h.b16 %v666
    %v3830 = vunpack.c.l.b16 %v667
    %v3831 = vunpack.c.h.b16 %v667
    %v3832 = vunpack.c.l.b16 %v668
    %v3833 = vunpack.c.h.b16 %v668
    %v3834 = vunpack.c.l.b16 %v669
    %v3835 = vunpack.c.h.b16 %v669
    %v3836 = vunpack.c.l.b16 %v670
    %v3837 = vunpack.c.h.b16 %v670
    %v3838 = vunpack.c.l.b16 %v671
    %v3839 = vunpack.c.h.b16 %v671
    %v3840 = vunpack.c.l.b16 %v672
    %v3841 = vunpack.c.h.b16 %v672
    %v3842 = vunpack.c.l.b16 %v673
    %v3843 = vunpack.c.h.b16 %v673
    %v3844 = vunpack.c.l.b16 %v674
    %v3845 = vunpack.c.h.b16 %v674
    %v3846 = vunpack.c.l.b16 %v675
    %v3847 = vunpack.c.h.b16 %v675
    %v3848 = vunpack.c.l.b16 %v676
    %v3849 = vunpack.c.h.b16 %v676
    %v3850 = vunpack.c.l.b16 %v677
    %v3851 = vunpack.c.h.b16 %v677
    %v3852 = vunpack.c.l.b16 %v678
    %v3853 = vunpack.c.h.b16 %v678
    %v3854 = vunpack.c.l.b16 %v679
    %v3855 = vunpack.c.h.b16 %v679
    %v3856 = vunpack.c.l.b16 %v680
    %v3857 = vunpack.c.h.b16 %v680
    %v3858 = vunpack.c.l.b16 %v681
    %v3859 = vunpack.c.h.b16 %v681
    %v3860 = vunpack.c.l.b16 %v682
    %v3861 = vunpack.c.h.b16 %v682
    %v3862 = vunpack.c.l.b16 %v683
    %v3863 = vunpack.c.h.b16 %v683
    %v3864 = vunpack.c.l.b16 %v684
    %v3865 = vunpack.c.h.b16 %v684
    %v3866 = vunpack.c.l.b16 %v685
    %v3867 = vunpack.c.h.b16 %v685
    %v3868 = vunpack.c.l.b16 %v686
    %v3869 = vunpack.c.h.b16 %v686
    %v3870 = vunpack.c.l.b16 %v687
    %v3871 = vunpack.c.h.b16 %v687
    %v3872 = vunpack.c.l.b16 %v688
    %v3873 = vunpack.c.h.b16 %v688
    %v3874 = vunpack.c.l.b16 %v689
    %v3875 = vunpack.c.h.b16 %v689
    %v3876 = vunpack.c.l.b16 %v690
    %v3877 = vunpack.c.h.b16 %v690
    %v3878 = vunpack.c.l.b16 %v691
    %v3879 = vunpack.c.h.b16 %v691
    %v3880 = vunpack.c.l.b16 %v692
    %v3881 = vunpack.c.h.b16 %v692
    %v3882 = vunpack.c.l.b16 %v693
    %v3883 = vunpack.c.h.b16 %v693
    %v3884 = vunpack.c.l.b16 %v694
    %v3885 = vunpack.c.h.b16 %v694
    %v3886 = vunpack.c.l.b16 %v695
    %v3887 = vunpack.c.h.b16 %v695
    %v3888 = vunpack.c.l.b16 %v696
    %v3889 = vunpack.c.h.b16 %v696
    %v3890 = vunpack.c.l.b16 %v697
    %v3891 = vunpack.c.h.b16 %v697
    %v3892 = vunpack.c.l.b16 %v698
    %v3893 = vunpack.c.h.b16 %v698
    %v3894 = vunpack.c.l.b16 %v699
    %v3895 = vunpack.c.h.b16 %v699
    %v3896 = vunpack.c.l.b16 %v700
    %v3897 = vunpack.c.h.b16 %v700
    %v3898 = vunpack.c.l.b16 %v701
    %v3899 = vunpack.c.h.b16 %v701
    %v3900 = vunpack.c.l.b16 %v702
    %v3901 = vunpack.c.h.b16 %v702
    %v3902 = vunpack.c.l.b16 %v703
    %v3903 = vunpack.c.h.b16 %v703
    %v3904 = vunpack.c.l.b16 %v704
    %v3905 = vunpack.c.h.b16 %v704
    %v3906 = vunpack.c.l.b16 %v705
    %v3907 = vunpack.c.h.b16 %v705
    %v3908 = vunpack.c.l.b16 %v706
    %v3909 = vunpack.c.h.b16 %v706
    %v3910 = vunpack.c.l.b16 %v707
    %v3911 = vunpack.c.h.b16 %v707
    %v3912 = vunpack.c.l.b16 %v708
    %v3913 = vunpack.c.h.b16 %v708
    %v3914 = vunpack.c.l.b16 %v709
    %v3915 = vunpack.c.h.b16 %v709
    %v3916 = vunpack.c.l.b16 %v710
    %v3917 = vunpack.c.h.b16 %v710
    %v3918 = vunpack.c.l.b16 %v711
    %v3919 = vunpack.c.h.b16 %v711
    %v3920 = vunpack.c.l.b16 %v712
    %v3921 = vunpack.c.h.b16 %v712
    %v3922 = vunpack.c.l.b16 %v713
    %v3923 = vunpack.c.h.b16 %v713
    %v3924 = vunpack.c.l.b16 %v714
    %v3925 = vunpack.c.h.b16 %v714
    %v3926 = vunpack.c.l.b16 %v715
    %v3927 = vunpack.c.h.b16 %v715
    %v3928 = vunpack.c.l.b16 %v716
    %v3929 = vunpack.c.h.b16 %v716
    %v3930 = vunpack.c.l.b16 %v717
    %v3931 = vunpack.c.h.b16 %v717
    %v3932 = vunpack.c.l.b16 %v718
    %v3933 = vunpack.c.h.b16 %v718
    %v3934 = vunpack.c.l.b16 %v719
    %v3935 = vunpack.c.h.b16 %v719
    %v3936 = vunpack.c.l.b16 %v720
    %v3937 = vunpack.c.h.b16 %v720
    %v3938 = vunpack.c.l.b16 %v721
    %v3939 = vunpack.c.h.b16 %v721
    %v3940 = vunpack.c.l.b16 %v722
    %v3941 = vunpack.c.h.b16 %v722
    %v3942 = vunpack.c.l.b16 %v723
    %v3943 = vunpack.c.h.b16 %v723
    %v3944 = vunpack.c.l.b16 %v724
    %v3945 = vunpack.c.h.b16 %v724
    %v3946 = vunpack.c.l.b16 %v725
    %v3947 = vunpack.c.h.b16 %v725
    %v3948 = vunpack.c.l.b16 %v726
    %v3949 = vunpack.c.h.b16 %v726
    %v3950 = vunpack.c.l.b16 %v727
    %v3951 = vunpack.c.h.b16 %v727
    %v3952 = vunpack.c.l.b16 %v728
    %v3953 = vunpack.c.h.b16 %v728
    %v3954 = vunpack.c.l.b16 %v729
    %v3955 = vunpack.c.h.b16 %v729
    %v3956 = vunpack.c.l.b16 %v730
    %v3957 = vunpack.c.h.b16 %v730
    %v3958 = vunpack.c.l.b16 %v731
    %v3959 = vunpack.c.h.b16 %v731
    %v3960 = vunpack.c.l.b16 %v732
    %v3961 = vunpack.c.h.b16 %v732
    %v3962 = vunpack.c.l.b16 %v733
    %v3963 = vunpack.c.h.b16 %v733
    %v3964 = vunpack.c.l.b16 %v734
    %v3965 = vunpack.c.h.b16 %v734
    %v3966 = vunpack.c.l.b16 %v735
    %v3967 = vunpack.c.h.b16 %v735
    %v3968 = vunpack.c.l.b16 %v736
    %v3969 = vunpack.c.h.b16 %v736
    %v3970 = vunpack.c.l.b16 %v737
    %v3971 = vunpack.c.h.b16 %v737
    %v3972 = vunpack.c.l.b16 %v738
    %v3973 = vunpack.c.h.b16 %v738
    %v3974 = vunpack.c.l.b16 %v739
    %v3975 = vunpack.c.h.b16 %v739
    %v3976 = vunpack.c.l.b16 %v740
    %v3977 = vunpack.c.h.b16 %v740
    %v3978 = vunpack.c.l.b16 %v741
    %v3979 = vunpack.c.h.b16 %v741
    %v3980 = vunpack.c.l.b16 %v742
    %v3981 = vunpack.c.h.b16 %v742
    %v3982 = vunpack.c.l.b16 %v743
    %v3983 = vunpack.c.h.b16 %v743
    %v3984 = vunpack.c.l.b16 %v744
    %v3985 = vunpack.c.h.b16 %v744
    %v3986 = vunpack.c.l.b16 %v745
    %v3987 = vunpack.c.h.b16 %v745
    %v3988 = vunpack.c.l.b16 %v746
    %v3989 = vunpack.c.h.b16 %v746
    %v3990 = vunpack.c.l.b16 %v747
    %v3991 = vunpack.c.h.b16 %v747
    %v3992 = vunpack.c.l.b16 %v748
    %v3993 = vunpack.c.h.b16 %v748
    %v3994 = vunpack.c.l.b16 %v749
    %v3995 = vunpack.c.h.b16 %v749
    %v3996 = vunpack.c.l.b16 %v750
    %v3997 = vunpack.c.h.b16 %v750
    %v3998 = vunpack.c.l.b16 %v751
    %v3999 = vunpack.c.h.b16 %v751
    %v4000 = vunpack.c.l.b16 %v752
    %v4001 = vunpack.c.h.b16 %v752
    %v4002 = vunpack.c.l.b16 %v753
    %v4003 = vunpack.c.h.b16 %v753
    %v4004 = vunpack.c.l.b16 %v754
    %v4005 = vunpack.c.h.b16 %v754
    %v4006 = vunpack.c.l.b16 %v755
    %v4007 = vunpack.c.h.b16 %v755
    %v4008 = vunpack.c.l.b16 %v756
    %v4009 = vunpack.c.h.b16 %v756
    %v4010 = vunpack.c.l.b16 %v757
    %v4011 = vunpack.c.h.b16 %v757
    %v4012 = vunpack.c.l.b16 %v758
    %v4013 = vunpack.c.h.b16 %v758
    %v4014 = vunpack.c.l.b16 %v759
    %v4015 = vunpack.c.h.b16 %v759
    %v4016 = vunpack.c.l.b16 %v760
    %v4017 = vunpack.c.h.b16 %v760
    %v4018 = vunpack.c.l.b16 %v761
    %v4019 = vunpack.c.h.b16 %v761
    %v4020 = vunpack.c.l.b16 %v762
    %v4021 = vunpack.c.h.b16 %v762
    %v4022 = vunpack.c.l.b16 %v763
    %v4023 = vunpack.c.h.b16 %v763
    %v4024 = vunpack.c.l.b16 %v764
    %v4025 = vunpack.c.h.b16 %v764
    %v4026 = vunpack.c.l.b16 %v765
    %v4027 = vunpack.c.h.b16 %v765
    %v4028 = vunpack.c.l.b16 %v766
    %v4029 = vunpack.c.h.b16 %v766
    %v4030 = vunpack.c.l.b16 %v767
    %v4031 = vunpack.c.h.b16 %v767
    %v4032 = vunpack.c.l.b16 %v768
    %v4033 = vunpack.c.h.b16 %v768
    %v4034 = vunpack.c.l.b16 %v769
    %v4035 = vunpack.c.h.b16 %v769
    %v4036 = vunpack.c.l.b16 %v770
    %v4037 = vunpack.c.h.b16 %v770
    %v4038 = vunpack.c.l.b16 %v771
    %v4039 = vunpack.c.h.b16 %v771
    %v4040 = vunpack.c.l.b16 %v772
    %v4041 = vunpack.c.h.b16 %v772
    %v4042 = vunpack.c.l.b16 %v773
    %v4043 = vunpack.c.h.b16 %v773
    %v4044 = vunpack.c.l.b16 %v774
    %v4045 = vunpack.c.h.b16 %v774
    %v4046 = vunpack.c.l.b16 %v775
    %v4047 = vunpack.c.h.b16 %v775
    %v4048 = vunpack.c.l.b16 %v776
    %v4049 = vunpack.c.h.b16 %v776
    %v4050 = vunpack.c.l.b16 %v777
    %v4051 = vunpack.c.h.b16 %v777
    %v4052 = vunpack.c.l.b16 %v778
    %v4053 = vunpack.c.h.b16 %v778
    %v4054 = vunpack.c.l.b16 %v779
    %v4055 = vunpack.c.h.b16 %v779
    %v4056 = vunpack.c.l.b16 %v780
    %v4057 = vunpack.c.h.b16 %v780
    %v4058 = vunpack.c.l.b16 %v781
    %v4059 = vunpack.c.h.b16 %v781
    %v4060 = vunpack.c.l.b16 %v782
    %v4061 = vunpack.c.h.b16 %v782
    %v4062 = vunpack.c.l.b16 %v783
    %v4063 = vunpack.c.h.b16 %v783
    %v4064 = vunpack.c.l.b16 %v784
    %v4065 = vunpack.c.h.b16 %v784
    %v4066 = vunpack.c.l.b16 %v785
    %v4067 = vunpack.c.h.b16 %v785
    %v4068 = vunpack.c.l.b16 %v786
    %v4069 = vunpack.c.h.b16 %v786
    %v4070 = vunpack.c.l.b16 %v787
    %v4071 = vunpack.c.h.b16 %v787
    %v4072 = vunpack.c.l.b16 %v788
    %v4073 = vunpack.c.h.b16 %v788
    %v4074 = vunpack.c.l.b16 %v789
    %v4075 = vunpack.c.h.b16 %v789
    %v4076 = vunpack.c.l.b16 %v790
    %v4077 = vunpack.c.h.b16 %v790
    %v4078 = vunpack.c.l.b16 %v791
    %v4079 = vunpack.c.h.b16 %v791
    %v4080 = vunpack.c.l.b16 %v792
    %v4081 = vunpack.c.h.b16 %v792
    %v4082 = vunpack.c.l.b16 %v793
    %v4083 = vunpack.c.h.b16 %v793
    %v4084 = vunpack.c.l.b16 %v794
    %v4085 = vunpack.c.h.b16 %v794
    %v4086 = vunpack.c.l.b16 %v795
    %v4087 = vunpack.c.h.b16 %v795
    %v4088 = vunpack.c.l.b16 %v796
    %v4089 = vunpack.c.h.b16 %v796
    %v4090 = vunpack.c.l.b16 %v797
    %v4091 = vunpack.c.h.b16 %v797
    %v4092 = vunpack.c.l.b16 %v798
    %v4093 = vunpack.c.h.b16 %v798
    %v4094 = vunpack.c.l.b16 %v799
    %v4095 = vunpack.c.h.b16 %v799
    %v4096 = vunpack.c.l.b16 %v800
    %v4097 = vunpack.c.h.b16 %v800
    %v4098 = vunpack.c.l.b16 %v801
    %v4099 = vunpack.c.h.b16 %v801
    %v4100 = vunpack.c.l.b16 %v802
    %v4101 = vunpack.c.h.b16 %v802
    %v4102 = vunpack.c.l.b16 %v803
    %v4103 = vunpack.c.h.b16 %v803
    %v4104 = vunpack.c.l.b16 %v804
    %v4105 = vunpack.c.h.b16 %v804
    %v4106 = vunpack.c.l.b16 %v805
    %v4107 = vunpack.c.h.b16 %v805
    %v4108 = vunpack.c.l.b16 %v806
    %v4109 = vunpack.c.h.b16 %v806
    %v4110 = vunpack.c.l.b16 %v807
    %v4111 = vunpack.c.h.b16 %v807
    %v4112 = vunpack.c.l.b16 %v808
    %v4113 = vunpack.c.h.b16 %v808
    %v4114 = vunpack.c.l.b16 %v809
    %v4115 = vunpack.c.h.b16 %v809
    %v4116 = vunpack.c.l.b16 %v810
    %v4117 = vunpack.c.h.b16 %v810
    %v4118 = vunpack.c.l.b16 %v811
    %v4119 = vunpack.c.h.b16 %v811
    %v4120 = vunpack.c.l.b16 %v812
    %v4121 = vunpack.c.h.b16 %v812
    %v4122 = vunpack.c.l.b16 %v813
    %v4123 = vunpack.c.h.b16 %v813
    %v4124 = vunpack.c.l.b16 %v814
    %v4125 = vunpack.c.h.b16 %v814
    %v4126 = vunpack.c.l.b16 %v815
    %v4127 = vunpack.c.h.b16 %v815
    %v4128 = vunpack.c.l.b16 %v816
    %v4129 = vunpack.c.h.b16 %v816
    %v4130 = vunpack.c.l.b16 %v817
    %v4131 = vunpack.c.h.b16 %v817
    %v4132 = vunpack.c.l.b16 %v818
    %v4133 = vunpack.c.h.b16 %v818
    %v4134 = vunpack.c.l.b16 %v819
    %v4135 = vunpack.c.h.b16 %v819
    %v4136 = vunpack.c.l.b16 %v820
    %v4137 = vunpack.c.h.b16 %v820
    %v4138 = vunpack.c.l.b16 %v821
    %v4139 = vunpack.c.h.b16 %v821
    %v4140 = vunpack.c.l.b16 %v822
    %v4141 = vunpack.c.h.b16 %v822
    %v4142 = vunpack.c.l.b16 %v823
    %v4143 = vunpack.c.h.b16 %v823
    %v4144 = vunpack.c.l.b16 %v824
    %v4145 = vunpack.c.h.b16 %v824
    %v4146 = vunpack.c.l.b16 %v825
    %v4147 = vunpack.c.h.b16 %v825
    %v4148 = vunpack.c.l.b16 %v826
    %v4149 = vunpack.c.h.b16 %v826
    %v4150 = vunpack.c.l.b16 %v827
    %v4151 = vunpack.c.h.b16 %v827
    %v4152 = vunpack.c.l.b16 %v828
    %v4153 = vunpack.c.h.b16 %v828
    %v4154 = vunpack.c.l.b16 %v829
    %v4155 = vunpack.c.h.b16 %v829
    %v4156 = vunpack.c.l.b16 %v830
    %v4157 = vunpack.c.h.b16 %v830
    %v4158 = vunpack.c.l.b16 %v831
    %v4159 = vunpack.c.h.b16 %v831
    %v4160 = vunpack.c.l.b16 %v832
    %v4161 = vunpack.c.h.b16 %v832
    %v4162 = vunpack.c.l.b16 %v833
    %v4163 = vunpack.c.h.b16 %v833
    %v4164 = vunpack.c.l.b16 %v834
    %v4165 = vunpack.c.h.b16 %v834
    %v4166 = vunpack.c.l.b16 %v835
    %v4167 = vunpack.c.h.b16 %v835
    %v4168 = vunpack.c.l.b16 %v836
    %v4169 = vunpack.c.h.b16 %v836
    %v4170 = vunpack.c.l.b16 %v837
    %v4171 = vunpack.c.h.b16 %v837
    %v4172 = vunpack.c.l.b16 %v838
    %v4173 = vunpack.c.h.b16 %v838
    %v4174 = vunpack.c.l.b16 %v839
    %v4175 = vunpack.c.h.b16 %v839
    %v4176 = vunpack.c.l.b16 %v840
    %v4177 = vunpack.c.h.b16 %v840
    %v4178 = vunpack.c.l.b16 %v841
    %v4179 = vunpack.c.h.b16 %v841
    %v4180 = vunpack.c.l.b16 %v842
    %v4181 = vunpack.c.h.b16 %v842
    %v4182 = vunpack.c.l.b16 %v843
    %v4183 = vunpack.c.h.b16 %v843
    %v4184 = vunpack.c.l.b16 %v844
    %v4185 = vunpack.c.h.b16 %v844
    %v4186 = vunpack.c.l.b16 %v845
    %v4187 = vunpack.c.h.b16 %v845
    %v4188 = vunpack.c.l.b16 %v846
    %v4189 = vunpack.c.h.b16 %v846
    %v4190 = vunpack.c.l.b16 %v847
    %v4191 = vunpack.c.h.b16 %v847
    %v4192 = vunpack.c.l.b16 %v848
    %v4193 = vunpack.c.h.b16 %v848
    %v4194 = vunpack.c.l.b16 %v849
    %v4195 = vunpack.c.h.b16 %v849
    %v4196 = vunpack.c.l.b16 %v850
    %v4197 = vunpack.c.h.b16 %v850
    %v4198 = vunpack.c.l.b16 %v851
    %v4199 = vunpack.c.h.b16 %v851
    %v4200 = vunpack.c.l.b16 %v852
    %v4201 = vunpack.c.h.b16 %v852
    %v4202 = vunpack.c.l.b16 %v853
    %v4203 = vunpack.c.h.b16 %v853
    %v4204 = vunpack.c.l.b16 %v854
    %v4205 = vunpack.c.h.b16 %v854
    %v4206 = vunpack.c.l.b16 %v855
    %v4207 = vunpack.c.h.b16 %v855
    %v4208 = vunpack.c.l.b16 %v856
    %v4209 = vunpack.c.h.b16 %v856
    %v4210 = vunpack.c.l.b16 %v857
    %v4211 = vunpack.c.h.b16 %v857
    %v4212 = vunpack.c.l.b16 %v858
    %v4213 = vunpack.c.h.b16 %v858
    %v4214 = vunpack.c.l.b16 %v859
    %v4215 = vunpack.c.h.b16 %v859
    %v4216 = vunpack.c.l.b16 %v860
    %v4217 = vunpack.c.h.b16 %v860
    %v4218 = vunpack.c.l.b16 %v861
    %v4219 = vunpack.c.h.b16 %v861
    %v4220 = vunpack.c.l.b16 %v862
    %v4221 = vunpack.c.h.b16 %v862
    %v4222 = vunpack.c.l.b16 %v863
    %v4223 = vunpack.c.h.b16 %v863
    %v4224 = vunpack.c.l.b16 %v864
    %v4225 = vunpack.c.h.b16 %v864
    %v4226 = vunpack.c.l.b16 %v865
    %v4227 = vunpack.c.h.b16 %v865
    %v4228 = vunpack.c.l.b16 %v866
    %v4229 = vunpack.c.h.b16 %v866
    %v4230 = vunpack.c.l.b16 %v867
    %v4231 = vunpack.c.h.b16 %v867
    %v4232 = vunpack.c.l.b16 %v868
    %v4233 = vunpack.c.h.b16 %v868
    %v4234 = vunpack.c.l.b16 %v869
    %v4235 = vunpack.c.h.b16 %v869
    %v4236 = vunpack.c.l.b16 %v870
    %v4237 = vunpack.c.h.b16 %v870
    %v4238 = vunpack.c.l.b16 %v871
    %v4239 = vunpack.c.h.b16 %v871
    %v4240 = vunpack.c.l.b16 %v872
    %v4241 = vunpack.c.h.b16 %v872
    %v4242 = vunpack.c.l.b16 %v873
    %v4243 = vunpack.c.h.b16 %v873
    %v4244 = vunpack.c.l.b16 %v874
    %v4245 = vunpack.c.h.b16 %v874
    %v4246 = vunpack.c.l.b16 %v875
    %v4247 = vunpack.c.h.b16 %v875
    %v4248 = vunpack.c.l.b16 %v876
    %v4249 = vunpack.c.h.b16 %v876
    %v4250 = vunpack.c.l.b16 %v877
    %v4251 = vunpack.c.h.b16 %v877
    %v4252 = vunpack.c.l.b16 %v878
    %v4253 = vunpack.c.h.b16 %v878
    %v4254 = vunpack.c.l.b16 %v879
    %v4255 = vunpack.c.h.b16 %v879
    %v4256 = vunpack.c.l.b16 %v880
    %v4257 = vunpack.c.h.b16 %v880
    %v4258 = vunpack.c.l.b16 %v881
    %v4259 = vunpack.c.h.b16 %v881
    %v4260 = vunpack.c.l.b16 %v882
    %v4261 = vunpack.c.h.b16 %v882
    %v4262 = vunpack.c.l.b16 %v883
    %v4263 = vunpack.c.h.b16 %v883
    %v4264 = vunpack.c.l.b16 %v884
    %v4265 = vunpack.c.h.b16 %v884
    %v4266 = vunpack.c.l.b16 %v885
    %v4267 = vunpack.c.h.b16 %v885
    %v4268 = vunpack.c.l.b16 %v886
    %v4269 = vunpack.c.h.b16 %v886
    %v4270 = vunpack.c.l.b16 %v887
    %v4271 = vunpack.c.h.b16 %v887
    %v4272 = vunpack.c.l.b16 %v888
    %v4273 = vunpack.c.h.b16 %v888
    %v4274 = vunpack.c.l.b16 %v889
    %v4275 = vunpack.c.h.b16 %v889
    %v4276 = vunpack.c.l.b16 %v890
    %v4277 = vunpack.c.h.b16 %v890
    %v4278 = vunpack.c.l.b16 %v891
    %v4279 = vunpack.c.h.b16 %v891
    %v4280 = vunpack.c.l.b16 %v892
    %v4281 = vunpack.c.h.b16 %v892
    %v4282 = vunpack.c.l.b16 %v893
    %v4283 = vunpack.c.h.b16 %v893
    %v4284 = vunpack.c.l.b16 %v894
    %v4285 = vunpack.c.h.b16 %v894
    %v4286 = vunpack.c.l.b16 %v895
    %v4287 = vunpack.c.h.b16 %v895
    %v4288 = vunpack.c.l.b16 %v896
    %v4289 = vunpack.c.h.b16 %v896
    %v4290 = vunpack.c.l.b16 %v897
    %v4291 = vunpack.c.h.b16 %v897
    %v4292 = vunpack.c.l.b16 %v898
    %v4293 = vunpack.c.h.b16 %v898
    %v4294 = vunpack.c.l.b16 %v899
    %v4295 = vunpack.c.h.b16 %v899
    %v4296 = vunpack.c.l.b16 %v900
    %v4297 = vunpack.c.h.b16 %v900
    %v4298 = vunpack.c.l.b16 %v901
    %v4299 = vunpack.c.h.b16 %v901
    %v4300 = vunpack.c.l.b16 %v902
    %v4301 = vunpack.c.h.b16 %v902
    %v4302 = vunpack.c.l.b16 %v903
    %v4303 = vunpack.c.h.b16 %v903
    %v4304 = vunpack.c.l.b16 %v904
    %v4305 = vunpack.c.h.b16 %v904
    %v4306 = vunpack.c.l.b16 %v905
    %v4307 = vunpack.c.h.b16 %v905
    %v4308 = vunpack.c.l.b16 %v906
    %v4309 = vunpack.c.h.b16 %v906
    %v4310 = vunpack.c.l.b16 %v907
    %v4311 = vunpack.c.h.b16 %v907
    %v4312 = vunpack.c.l.b16 %v908
    %v4313 = vunpack.c.h.b16 %v908
    %v4314 = vunpack.c.l.b16 %v909
    %v4315 = vunpack.c.h.b16 %v909
    %v4316 = vunpack.c.l.b16 %v910
    %v4317 = vunpack.c.h.b16 %v910
    %v4318 = vunpack.c.l.b16 %v911
    %v4319 = vunpack.c.h.b16 %v911
    %v4320 = vunpack.c.l.b16 %v912
    %v4321 = vunpack.c.h.b16 %v912
    %v4322 = vunpack.c.l.b16 %v913
    %v4323 = vunpack.c.h.b16 %v913
    %v4324 = vunpack.c.l.b16 %v914
    %v4325 = vunpack.c.h.b16 %v914
    %v4326 = vunpack.c.l.b16 %v915
    %v4327 = vunpack.c.h.b16 %v915
    %v4328 = vunpack.c.l.b16 %v916
    %v4329 = vunpack.c.h.b16 %v916
    %v4330 = vunpack.c.l.b16 %v917
    %v4331 = vunpack.c.h.b16 %v917
    %v4332 = vunpack.c.l.b16 %v918
    %v4333 = vunpack.c.h.b16 %v918
    %v4334 = vunpack.c.l.b16 %v919
    %v4335 = vunpack.c.h.b16 %v919
    %v4336 = vunpack.c.l.b16 %v920
    %v4337 = vunpack.c.h.b16 %v920
    %v4338 = vunpack.c.l.b16 %v921
    %v4339 = vunpack.c.h.b16 %v921
    %v4340 = vunpack.c.l.b16 %v922
    %v4341 = vunpack.c.h.b16 %v922
    %v4342 = vunpack.c.l.b16 %v923
    %v4343 = vunpack.c.h.b16 %v923
    %v4344 = vunpack.c.l.b16 %v924
    %v4345 = vunpack.c.h.b16 %v924
    %v4346 = vunpack.c.l.b16 %v925
    %v4347 = vunpack.c.h.b16 %v925
    %v4348 = vunpack.c.l.b16 %v926
    %v4349 = vunpack.c.h.b16 %v926
    %v4350 = vunpack.c.l.b16 %v927
    %v4351 = vunpack.c.h.b16 %v927
    %v4352 = vunpack.c.l.b16 %v928
    %v4353 = vunpack.c.h.b16 %v928
    %v4354 = vunpack.c.l.b16 %v929
    %v4355 = vunpack.c.h.b16 %v929
    %v4356 = vunpack.c.l.b16 %v930
    %v4357 = vunpack.c.h.b16 %v930
    %v4358 = vunpack.c.l.b16 %v931
    %v4359 = vunpack.c.h.b16 %v931
    %v4360 = vunpack.c.l.b16 %v932
    %v4361 = vunpack.c.h.b16 %v932
    %v4362 = vunpack.c.l.b16 %v933
    %v4363 = vunpack.c.h.b16 %v933
    %v4364 = vunpack.c.l.b16 %v934
    %v4365 = vunpack.c.h.b16 %v934
    %v4366 = vunpack.c.l.b16 %v935
    %v4367 = vunpack.c.h.b16 %v935
    %v4368 = vunpack.c.l.b16 %v936
    %v4369 = vunpack.c.h.b16 %v936
    %v4370 = vunpack.c.l.b16 %v937
    %v4371 = vunpack.c.h.b16 %v937
    %v4372 = vunpack.c.l.b16 %v938
    %v4373 = vunpack.c.h.b16 %v938
    %v4374 = vunpack.c.l.b16 %v939
    %v4375 = vunpack.c.h.b16 %v939
    %v4376 = vunpack.c.l.b16 %v940
    %v4377 = vunpack.c.h.b16 %v940
    %v4378 = vunpack.c.l.b16 %v941
    %v4379 = vunpack.c.h.b16 %v941
    %v4380 = vunpack.c.l.b16 %v942
    %v4381 = vunpack.c.h.b16 %v942
    %v4382 = vunpack.c.l.b16 %v943
    %v4383 = vunpack.c.h.b16 %v943
    %v4384 = vunpack.c.l.b16 %v944
    %v4385 = vunpack.c.h.b16 %v944
    %v4386 = vunpack.c.l.b16 %v945
    %v4387 = vunpack.c.h.b16 %v945
    %v4388 = vunpack.c.l.b16 %v946
    %v4389 = vunpack.c.h.b16 %v946
    %v4390 = vunpack.c.l.b16 %v947
    %v4391 = vunpack.c.h.b16 %v947
    %v4392 = vunpack.c.l.b16 %v948
    %v4393 = vunpack.c.h.b16 %v948
    %v4394 = vunpack.c.l.b16 %v949
    %v4395 = vunpack.c.h.b16 %v949
    %v4396 = vunpack.c.l.b16 %v950
    %v4397 = vunpack.c.h.b16 %v950
    %v4398 = vunpack.c.l.b16 %v951
    %v4399 = vunpack.c.h.b16 %v951
    %v4400 = vunpack.c.l.b16 %v952
    %v4401 = vunpack.c.h.b16 %v952
    %v4402 = vunpack.c.l.b16 %v953
    %v4403 = vunpack.c.h.b16 %v953
    %v4404 = vunpack.c.l.b16 %v954
    %v4405 = vunpack.c.h.b16 %v954
    %v4406 = vunpack.c.l.b16 %v955
    %v4407 = vunpack.c.h.b16 %v955
    %v4408 = vunpack.c.l.b16 %v956
    %v4409 = vunpack.c.h.b16 %v956
    %v4410 = vunpack.c.l.b16 %v957
    %v4411 = vunpack.c.h.b16 %v957
    %v4412 = vunpack.c.l.b16 %v958
    %v4413 = vunpack.c.h.b16 %v958
    %v4414 = vunpack.c.l.b16 %v959
    %v4415 = vunpack.c.h.b16 %v959
    %v4416 = vunpack.c.l.b16 %v960
    %v4417 = vunpack.c.h.b16 %v960
    %v4418 = vunpack.c.l.b16 %v961
    %v4419 = vunpack.c.h.b16 %v961
    %v4420 = vunpack.c.l.b16 %v962
    %v4421 = vunpack.c.h.b16 %v962
    %v4422 = vunpack.c.l.b16 %v963
    %v4423 = vunpack.c.h.b16 %v963
    %v4424 = vunpack.c.l.b16 %v964
    %v4425 = vunpack.c.h.b16 %v964
    %v4426 = vunpack.c.l.b16 %v965
    %v4427 = vunpack.c.h.b16 %v965
    %v4428 = vunpack.c.l.b16 %v966
    %v4429 = vunpack.c.h.b16 %v966
    %v4430 = vunpack.c.l.b16 %v967
    %v4431 = vunpack.c.h.b16 %v967
    %v4432 = vunpack.c.l.b16 %v968
    %v4433 = vunpack.c.h.b16 %v968
    %v4434 = vunpack.c.l.b16 %v969
    %v4435 = vunpack.c.h.b16 %v969
    %v4436 = vunpack.c.l.b16 %v970
    %v4437 = vunpack.c.h.b16 %v970
    %v4438 = vunpack.c.l.b16 %v971
    %v4439 = vunpack.c.h.b16 %v971
    %v4440 = vunpack.c.l.b16 %v972
    %v4441 = vunpack.c.h.b16 %v972
    %v4442 = vunpack.c.l.b16 %v973
    %v4443 = vunpack.c.h.b16 %v973
    %v4444 = vunpack.c.l.b16 %v974
    %v4445 = vunpack.c.h.b16 %v974
    %v4446 = vunpack.c.l.b16 %v975
    %v4447 = vunpack.c.h.b16 %v975
    %v4448 = vunpack.c.l.b16 %v976
    %v4449 = vunpack.c.h.b16 %v976
    %v4450 = vunpack.c.l.b16 %v977
    %v4451 = vunpack.c.h.b16 %v977
    %v4452 = vunpack.c.l.b16 %v978
    %v4453 = vunpack.c.h.b16 %v978
    %v4454 = vunpack.c.l.b16 %v979
    %v4455 = vunpack.c.h.b16 %v979
    %v4456 = vunpack.c.l.b16 %v980
    %v4457 = vunpack.c.h.b16 %v980
    %v4458 = vunpack.c.l.b16 %v981
    %v4459 = vunpack.c.h.b16 %v981
    %v4460 = vunpack.c.l.b16 %v982
    %v4461 = vunpack.c.h.b16 %v982
    %v4462 = vunpack.c.l.b16 %v983
    %v4463 = vunpack.c.h.b16 %v983
    %v4464 = vunpack.c.l.b16 %v984
    %v4465 = vunpack.c.h.b16 %v984
    %v4466 = vunpack.c.l.b16 %v985
    %v4467 = vunpack.c.h.b16 %v985
    %v4468 = vunpack.c.l.b16 %v986
    %v4469 = vunpack.c.h.b16 %v986
    %v4470 = vunpack.c.l.b16 %v987
    %v4471 = vunpack.c.h.b16 %v987
    %v4472 = vunpack.c.l.b16 %v988
    %v4473 = vunpack.c.h.b16 %v988
    %v4474 = vunpack.c.l.b16 %v989
    %v4475 = vunpack.c.h.b16 %v989
    %v4476 = vunpack.c.l.b16 %v990
    %v4477 = vunpack.c.h.b16 %v990
    %v4478 = vunpack.c.l.b16 %v991
    %v4479 = vunpack.c.h.b16 %v991
    %v4480 = vunpack.c.l.b16 %v992
    %v4481 = vunpack.c.h.b16 %v992
    %v4482 = vunpack.c.l.b16 %v993
    %v4483 = vunpack.c.h.b16 %v993
    %v4484 = vunpack.c.l.b16 %v994
    %v4485 = vunpack.c.h.b16 %v994
    %v4486 = vunpack.c.l.b16 %v995
    %v4487 = vunpack.c.h.b16 %v995
    %v4488 = vunpack.c.l.b16 %v996
    %v4489 = vunpack.c.h.b16 %v996
    %v4490 = vunpack.c.l.b16 %v997
    %v4491 = vunpack.c.h.b16 %v997
    %v4492 = vunpack.c.l.b16 %v998
    %v4493 = vunpack.c.h.b16 %v998
    %v4494 = vunpack.c.l.b16 %v999
    %v4495 = vunpack.c.h.b16 %v999
    %v4496 = vunpack.c.l.b16 %v1000
    %v4497 = vunpack.c.h.b16 %v1000
    %v4498 = vunpack.c.l.b16 %v1001
    %v4499 = vunpack.c.h.b16 %v1001
    %v4500 = vunpack.c.l.b16 %v1002
    %v4501 = vunpack.c.h.b16 %v1002
    %v4502 = vunpack.c.l.b16 %v1003
    %v4503 = vunpack.c.h.b16 %v1003
    %v4504 = vunpack.c.l.b16 %v1004
    %v4505 = vunpack.c.h.b16 %v1004
    %v4506 = vunpack.c.l.b16 %v1005
    %v4507 = vunpack.c.h.b16 %v1005
    %v4508 = vunpack.c.l.b16 %v1006
    %v4509 = vunpack.c.h.b16 %v1006
    %v4510 = vunpack.c.l.b16 %v1007
    %v4511 = vunpack.c.h.b16 %v1007
    %v4512 = vunpack.c.l.b16 %v1008
    %v4513 = vunpack.c.h.b16 %v1008
    %v4514 = vunpack.c.l.b16 %v1009
    %v4515 = vunpack.c.h.b16 %v1009
    %v4516 = vunpack.c.l.b16 %v1010
    %v4517 = vunpack.c.h.b16 %v1010
    %v4518 = vunpack.c.l.b16 %v1011
    %v4519 = vunpack.c.h.b16 %v1011
    %v4520 = vunpack.c.l.b16 %v1012
    %v4521 = vunpack.c.h.b16 %v1012
    %v4522 = vunpack.c.l.b16 %v1013
    %v4523 = vunpack.c.h.b16 %v1013
    %v4524 = vunpack.c.l.b16 %v1014
    %v4525 = vunpack.c.h.b16 %v1014
    %v4526 = vunpack.c.l.b16 %v1015
    %v4527 = vunpack.c.h.b16 %v1015
    %v4528 = vunpack.c.l.b16 %v1016
    %v4529 = vunpack.c.h.b16 %v1016
    %v4530 = vunpack.c.l.b16 %v1017
    %v4531 = vunpack.c.h.b16 %v1017
    %v4532 = vunpack.c.l.b16 %v1018
    %v4533 = vunpack.c.h.b16 %v1018
    %v4534 = vunpack.c.l.b16 %v1019
    %v4535 = vunpack.c.h.b16 %v1019
    %v4536 = vunpack.c.l.b16 %v1020
    %v4537 = vunpack.c.h.b16 %v1020
    %v4538 = vunpack.c.l.b16 %v1021
    %v4539 = vunpack.c.h.b16 %v1021
    %v4540 = vunpack.c.l.b16 %v1022
    %v4541 = vunpack.c.h.b16 %v1022
    %v4542 = vunpack.c.l.b16 %v1023
    %v4543 = vunpack.c.h.b16 %v1023
    %v4544 = vunpack.c.l.b16 %v1024
    %v4545 = vunpack.c.h.b16 %v1024
    %v4546 = vunpack.c.l.b16 %v1025
    %v4547 = vunpack.c.h.b16 %v1025
    %v4548 = vunpack.c.l.b16 %v1026
    %v4549 = vunpack.c.h.b16 %v1026
    %v4550 = vunpack.c.l.b16 %v1027
    %v4551 = vunpack.c.h.b16 %v1027
    %v4552 = vunpack.c.l.b16 %v1028
    %v4553 = vunpack.c.h.b16 %v1028
    %v4554 = vunpack.c.l.b16 %v1029
    %v4555 = vunpack.c.h.b16 %v1029
    %v4556 = vunpack.c.l.b16 %v1030
    %v4557 = vunpack.c.h.b16 %v1030
    %v4558 = vunpack.c.l.b16 %v1031
    %v4559 = vunpack.c.h.b16 %v1031
    %v4560 = vunpack.c.l.b16 %v1032
    %v4561 = vunpack.c.h.b16 %v1032
    %v4562 = vunpack.c.l.b16 %v1033
    %v4563 = vunpack.c.h.b16 %v1033
    %v4564 = vunpack.c.l.b16 %v1034
    %v4565 = vunpack.c.h.b16 %v1034
    %v4566 = vunpack.c.l.b16 %v1035
    %v4567 = vunpack.c.h.b16 %v1035
    %v4568 = vunpack.c.l.b16 %v1036
    %v4569 = vunpack.c.h.b16 %v1036
    %v4570 = vunpack.c.l.b16 %v1037
    %v4571 = vunpack.c.h.b16 %v1037
    %v4572 = vunpack.c.l.b16 %v1038
    %v4573 = vunpack.c.h.b16 %v1038
    %v4574 = vunpack.c.l.b16 %v1039
    %v4575 = vunpack.c.h.b16 %v1039
    %v4576 = vunpack.c.l.b16 %v1040
    %v4577 = vunpack.c.h.b16 %v1040
    %v4578 = vunpack.c.l.b16 %v1041
    %v4579 = vunpack.c.h.b16 %v1041
    %v4580 = vunpack.c.l.b16 %v1042
    %v4581 = vunpack.c.h.b16 %v1042
    %v4582 = vunpack.c.l.b16 %v1043
    %v4583 = vunpack.c.h.b16 %v1043
    %v4584 = vunpack.c.l.b16 %v1044
    %v4585 = vunpack.c.h.b16 %v1044
    %v4586 = vunpack.c.l.b16 %v1045
    %v4587 = vunpack.c.h.b16 %v1045
    %v4588 = vunpack.c.l.b16 %v1046
    %v4589 = vunpack.c.h.b16 %v1046
    %v4590 = vunpack.c.l.b16 %v1047
    %v4591 = vunpack.c.h.b16 %v1047
    %v4592 = vunpack.c.l.b16 %v1048
    %v4593 = vunpack.c.h.b16 %v1048
    %v4594 = vunpack.c.l.b16 %v1049
    %v4595 = vunpack.c.h.b16 %v1049
    %v4596 = vunpack.c.l.b16 %v1050
    %v4597 = vunpack.c.h.b16 %v1050
    %v4598 = vunpack.c.l.b16 %v1051
    %v4599 = vunpack.c.h.b16 %v1051
    %v4600 = vunpack.c.l.b16 %v1052
    %v4601 = vunpack.c.h.b16 %v1052
    %v4602 = vunpack.c.l.b16 %v1053
    %v4603 = vunpack.c.h.b16 %v1053
    %v4604 = vunpack.c.l.b16 %v1054
    %v4605 = vunpack.c.h.b16 %v1054
    %v4606 = vunpack.c.l.b16 %v1055
    %v4607 = vunpack.c.h.b16 %v1055
    %v4608 = vunpack.c.l.b16 %v1056
    %v4609 = vunpack.c.h.b16 %v1056
    %v4610 = vunpack.c.l.b16 %v1057
    %v4611 = vunpack.c.h.b16 %v1057
    %v4612 = vunpack.c.l.b16 %v1058
    %v4613 = vunpack.c.h.b16 %v1058
    %v4614 = vunpack.c.l.b16 %v1059
    %v4615 = vunpack.c.h.b16 %v1059
    %v4616 = vunpack.c.l.b16 %v1060
    %v4617 = vunpack.c.h.b16 %v1060
    %v4618 = vunpack.c.l.b16 %v1061
    %v4619 = vunpack.c.h.b16 %v1061
    %v4620 = vunpack.c.l.b16 %v1062
    %v4621 = vunpack.c.h.b16 %v1062
    %v4622 = vunpack.c.l.b16 %v1063
    %v4623 = vunpack.c.h.b16 %v1063
    %v4624 = vunpack.c.l.b16 %v1064
    %v4625 = vunpack.c.h.b16 %v1064
    %v4626 = vunpack.c.l.b16 %v1065
    %v4627 = vunpack.c.h.b16 %v1065
    %v4628 = vunpack.c.l.b16 %v1066
    %v4629 = vunpack.c.h.b16 %v1066
    %v4630 = vunpack.c.l.b16 %v1067
    %v4631 = vunpack.c.h.b16 %v1067
    %v4632 = vunpack.c.l.b16 %v1068
    %v4633 = vunpack.c.h.b16 %v1068
    %v4634 = vunpack.c.l.b16 %v1069
    %v4635 = vunpack.c.h.b16 %v1069
    %v4636 = vunpack.c.l.b16 %v1070
    %v4637 = vunpack.c.h.b16 %v1070
    %v4638 = vunpack.c.l.b16 %v1071
    %v4639 = vunpack.c.h.b16 %v1071
    %v4640 = vunpack.c.l.b16 %v1072
    %v4641 = vunpack.c.h.b16 %v1072
    %v4642 = vunpack.c.l.b16 %v1073
    %v4643 = vunpack.c.h.b16 %v1073
    %v4644 = vunpack.c.l.b16 %v1074
    %v4645 = vunpack.c.h.b16 %v1074
    %v4646 = vunpack.c.l.b16 %v1075
    %v4647 = vunpack.c.h.b16 %v1075
    %v4648 = vunpack.c.l.b16 %v1076
    %v4649 = vunpack.c.h.b16 %v1076
    %v4650 = vunpack.c.l.b16 %v1077
    %v4651 = vunpack.c.h.b16 %v1077
    %v4652 = vunpack.c.l.b16 %v1078
    %v4653 = vunpack.c.h.b16 %v1078
    %v4654 = vunpack.c.l.b16 %v1079
    %v4655 = vunpack.c.h.b16 %v1079
    %v4656 = vunpack.c.l.b16 %v1080
    %v4657 = vunpack.c.h.b16 %v1080
    %v4658 = vunpack.c.l.b16 %v1081
    %v4659 = vunpack.c.h.b16 %v1081
    %v4660 = vunpack.c.l.b16 %v1082
    %v4661 = vunpack.c.h.b16 %v1082
    %v4662 = vunpack.c.l.b16 %v1083
    %v4663 = vunpack.c.h.b16 %v1083
    %v4664 = vunpack.c.l.b16 %v1084
    %v4665 = vunpack.c.h.b16 %v1084
    %v4666 = vunpack.c.l.b16 %v1085
    %v4667 = vunpack.c.h.b16 %v1085
    %v4668 = vunpack.c.l.b16 %v1086
    %v4669 = vunpack.c.h.b16 %v1086
    %v4670 = vunpack.c.l.b16 %v1087
    %v4671 = vunpack.c.h.b16 %v1087
    %v4672 = vunpack.c.l.b16 %v1088
    %v4673 = vunpack.c.h.b16 %v1088
    %v4674 = vunpack.c.l.b16 %v1089
    %v4675 = vunpack.c.h.b16 %v1089
    %v4676 = vunpack.c.l.b16 %v1090
    %v4677 = vunpack.c.h.b16 %v1090
    %v4678 = vunpack.c.l.b16 %v1091
    %v4679 = vunpack.c.h.b16 %v1091
    %v4680 = vunpack.c.l.b16 %v1092
    %v4681 = vunpack.c.h.b16 %v1092
    %v4682 = vunpack.c.l.b16 %v1093
    %v4683 = vunpack.c.h.b16 %v1093
    %v4684 = vunpack.c.l.b16 %v1094
    %v4685 = vunpack.c.h.b16 %v1094
    %v4686 = vunpack.c.l.b16 %v1095
    %v4687 = vunpack.c.h.b16 %v1095
    %v4688 = vunpack.c.l.b16 %v1096
    %v4689 = vunpack.c.h.b16 %v1096
    %v4690 = vunpack.c.l.b16 %v1097
    %v4691 = vunpack.c.h.b16 %v1097
    %v4692 = vunpack.c.l.b16 %v1098
    %v4693 = vunpack.c.h.b16 %v1098
    %v4694 = vunpack.c.l.b16 %v1099
    %v4695 = vunpack.c.h.b16 %v1099
    %v4696 = vunpack.c.l.b16 %v1100
    %v4697 = vunpack.c.h.b16 %v1100
    %v4698 = vunpack.c.l.b16 %v1101
    %v4699 = vunpack.c.h.b16 %v1101
    %v4700 = vunpack.c.l.b16 %v1102
    %v4701 = vunpack.c.h.b16 %v1102
    %v4702 = vunpack.c.l.b16 %v1103
    %v4703 = vunpack.c.h.b16 %v1103
    %v4704 = vunpack.c.l.b16 %v1104
    %v4705 = vunpack.c.h.b16 %v1104
    %v4706 = vunpack.c.l.b16 %v1105
    %v4707 = vunpack.c.h.b16 %v1105
    %v4708 = vunpack.c.l.b16 %v1106
    %v4709 = vunpack.c.h.b16 %v1106
    %v4710 = vunpack.c.l.b16 %v1107
    %v4711 = vunpack.c.h.b16 %v1107
    %v4712 = vunpack.c.l.b16 %v1108
    %v4713 = vunpack.c.h.b16 %v1108
    %v4714 = vunpack.c.l.b16 %v1109
    %v4715 = vunpack.c.h.b16 %v1109
    %v4716 = vunpack.c.l.b16 %v1110
    %v4717 = vunpack.c.h.b16 %v1110
    %v4718 = vunpack.c.l.b16 %v1111
    %v4719 = vunpack.c.h.b16 %v1111
    %v4720 = vunpack.c.l.b16 %v1112
    %v4721 = vunpack.c.h.b16 %v1112
    %v4722 = vunpack.c.l.b16 %v1113
    %v4723 = vunpack.c.h.b16 %v1113
    %v4724 = vunpack.c.l.b16 %v1114
    %v4725 = vunpack.c.h.b16 %v1114
    %v4726 = vunpack.c.l.b16 %v1115
    %v4727 = vunpack.c.h.b16 %v1115
    %v4728 = vunpack.c.l.b16 %v1116
    %v4729 = vunpack.c.h.b16 %v1116
    %v4730 = vunpack.c.l.b16 %v1117
    %v4731 = vunpack.c.h.b16 %v1117
    %v4732 = vunpack.c.l.b16 %v1118
    %v4733 = vunpack.c.h.b16 %v1118
    %v4734 = vunpack.c.l.b16 %v1119
    %v4735 = vunpack.c.h.b16 %v1119
    %v4736 = vunpack.c.l.b16 %v1120
    %v4737 = vunpack.c.h.b16 %v1120
    %v4738 = vunpack.c.l.b16 %v1121
    %v4739 = vunpack.c.h.b16 %v1121
    %v4740 = vunpack.c.l.b16 %v1122
    %v4741 = vunpack.c.h.b16 %v1122
    %v4742 = vunpack.c.l.b16 %v1123
    %v4743 = vunpack.c.h.b16 %v1123
    %v4744 = vunpack.c.l.b16 %v1124
    %v4745 = vunpack.c.h.b16 %v1124
    %v4746 = vunpack.c.l.b16 %v1125
    %v4747 = vunpack.c.h.b16 %v1125
    %v4748 = vunpack.c.l.b16 %v1126
    %v4749 = vunpack.c.h.b16 %v1126
    %v4750 = vunpack.c.l.b16 %v1127
    %v4751 = vunpack.c.h.b16 %v1127
    %v4752 = vunpack.c.l.b16 %v1128
    %v4753 = vunpack.c.h.b16 %v1128
    %v4754 = vunpack.c.l.b16 %v1129
    %v4755 = vunpack.c.h.b16 %v1129
    %v4756 = vunpack.c.l.b16 %v1130
    %v4757 = vunpack.c.h.b16 %v1130
    %v4758 = vunpack.c.l.b16 %v1131
    %v4759 = vunpack.c.h.b16 %v1131
    %v4760 = vunpack.c.l.b16 %v1132
    %v4761 = vunpack.c.h.b16 %v1132
    %v4762 = vunpack.c.l.b16 %v1133
    %v4763 = vunpack.c.h.b16 %v1133
    %v4764 = vunpack.c.l.b16 %v1134
    %v4765 = vunpack.c.h.b16 %v1134
    %v4766 = vunpack.c.l.b16 %v1135
    %v4767 = vunpack.c.h.b16 %v1135
    %v4768 = vunpack.c.l.b16 %v1136
    %v4769 = vunpack.c.h.b16 %v1136
    %v4770 = vunpack.c.l.b16 %v1137
    %v4771 = vunpack.c.h.b16 %v1137
    %v4772 = vunpack.c.l.b16 %v1138
    %v4773 = vunpack.c.h.b16 %v1138
    %v4774 = vunpack.c.l.b16 %v1139
    %v4775 = vunpack.c.h.b16 %v1139
    %v4776 = vunpack.c.l.b16 %v1140
    %v4777 = vunpack.c.h.b16 %v1140
    %v4778 = vunpack.c.l.b16 %v1141
    %v4779 = vunpack.c.h.b16 %v1141
    %v4780 = vunpack.c.l.b16 %v1142
    %v4781 = vunpack.c.h.b16 %v1142
    %v4782 = vunpack.c.l.b16 %v1143
    %v4783 = vunpack.c.h.b16 %v1143
    %v4784 = vunpack.c.l.b16 %v1144
    %v4785 = vunpack.c.h.b16 %v1144
    %v4786 = vunpack.c.l.b16 %v1145
    %v4787 = vunpack.c.h.b16 %v1145
    %v4788 = vunpack.c.l.b16 %v1146
    %v4789 = vunpack.c.h.b16 %v1146
    %v4790 = vunpack.c.l.b16 %v1147
    %v4791 = vunpack.c.h.b16 %v1147
    %v4792 = vunpack.c.l.b16 %v1148
    %v4793 = vunpack.c.h.b16 %v1148
    %v4794 = vunpack.c.l.b16 %v1149
    %v4795 = vunpack.c.h.b16 %v1149
    %v4796 = vunpack.c.l.b16 %v1150
    %v4797 = vunpack.c.h.b16 %v1150
    %v4798 = vunpack.c.l.b16 %v1151
    %v4799 = vunpack.c.h.b16 %v1151
    %v4800 = vunpack.c.l.b16 %v1152
    %v4801 = vunpack.c.h.b16 %v1152
    %v4802 = vunpack.c.l.b16 %v1153
    %v4803 = vunpack.c.h.b16 %v1153
    %v4804 = vunpack.c.l.b16 %v1154
    %v4805 = vunpack.c.h.b16 %v1154
    %v4806 = vunpack.c.l.b16 %v1155
    %v4807 = vunpack.c.h.b16 %v1155
    %v4808 = vunpack.c.l.b16 %v1156
    %v4809 = vunpack.c.h.b16 %v1156
    %v4810 = vunpack.c.l.b16 %v1157
    %v4811 = vunpack.c.h.b16 %v1157
    %v4812 = vunpack.c.l.b16 %v1158
    %v4813 = vunpack.c.h.b16 %v1158
    %v4814 = vunpack.c.l.b16 %v1159
    %v4815 = vunpack.c.h.b16 %v1159
    %v4816 = vunpack.c.l.b16 %v1160
    %v4817 = vunpack.c.h.b16 %v1160
    %v4818 = vunpack.c.l.b16 %v1161
    %v4819 = vunpack.c.h.b16 %v1161
    %v4820 = vunpack.c.l.b16 %v1162
    %v4821 = vunpack.c.h.b16 %v1162
    %v4822 = vunpack.c.l.b16 %v1163
    %v4823 = vunpack.c.h.b16 %v1163
    %v4824 = vunpack.c.l.b16 %v1164
    %v4825 = vunpack.c.h.b16 %v1164
    %v4826 = vunpack.c.l.b16 %v1165
    %v4827 = vunpack.c.h.b16 %v1165
    %v4828 = vunpack.c.l.b16 %v1166
    %v4829 = vunpack.c.h.b16 %v1166
    %v4830 = vunpack.c.l.b16 %v1167
    %v4831 = vunpack.c.h.b16 %v1167
    %v4832 = vunpack.c.l.b16 %v1168
    %v4833 = vunpack.c.h.b16 %v1168
    %v4834 = vunpack.c.l.b16 %v1169
    %v4835 = vunpack.c.h.b16 %v1169
    %v4836 = vunpack.c.l.b16 %v1170
    %v4837 = vunpack.c.h.b16 %v1170
    %v4838 = vunpack.c.l.b16 %v1171
    %v4839 = vunpack.c.h.b16 %v1171
    %v4840 = vunpack.c.l.b16 %v1172
    %v4841 = vunpack.c.h.b16 %v1172
    %v4842 = vunpack.c.l.b16 %v1173
    %v4843 = vunpack.c.h.b16 %v1173
    %v4844 = vunpack.c.l.b16 %v1174
    %v4845 = vunpack.c.h.b16 %v1174
    %v4846 = vunpack.c.l.b16 %v1175
    %v4847 = vunpack.c.h.b16 %v1175
    %v4848 = vunpack.c.l.b16 %v1176
    %v4849 = vunpack.c.h.b16 %v1176
    %v4850 = vunpack.c.l.b16 %v1177
    %v4851 = vunpack.c.h.b16 %v1177
    %v4852 = vunpack.c.l.b16 %v1178
    %v4853 = vunpack.c.h.b16 %v1178
    %v4854 = vunpack.c.l.b16 %v1179
    %v4855 = vunpack.c.h.b16 %v1179
    %v4856 = vunpack.c.l.b16 %v1180
    %v4857 = vunpack.c.h.b16 %v1180
    %v4858 = vunpack.c.l.b16 %v1181
    %v4859 = vunpack.c.h.b16 %v1181
    %v4860 = vunpack.c.l.b16 %v1182
    %v4861 = vunpack.c.h.b16 %v1182
    %v4862 = vunpack.c.l.b16 %v1183
    %v4863 = vunpack.c.h.b16 %v1183
    %v4864 = vunpack.c.l.b16 %v1184
    %v4865 = vunpack.c.h.b16 %v1184
    %v4866 = vunpack.c.l.b16 %v1185
    %v4867 = vunpack.c.h.b16 %v1185
    %v4868 = vunpack.c.l.b16 %v1186
    %v4869 = vunpack.c.h.b16 %v1186
    %v4870 = vunpack.c.l.b16 %v1187
    %v4871 = vunpack.c.h.b16 %v1187
    %v4872 = vunpack.c.l.b16 %v1188
    %v4873 = vunpack.c.h.b16 %v1188
    %v4874 = vunpack.c.l.b16 %v1189
    %v4875 = vunpack.c.h.b16 %v1189
    %v4876 = vunpack.c.l.b16 %v1190
    %v4877 = vunpack.c.h.b16 %v1190
    %v4878 = vunpack.c.l.b16 %v1191
    %v4879 = vunpack.c.h.b16 %v1191
    %v4880 = vunpack.c.l.b16 %v1192
    %v4881 = vunpack.c.h.b16 %v1192
    %v4882 = vunpack.c.l.b16 %v1193
    %v4883 = vunpack.c.h.b16 %v1193
    %v4884 = vunpack.c.l.b16 %v1194
    %v4885 = vunpack.c.h.b16 %v1194
    %v4886 = vunpack.c.l.b16 %v1195
    %v4887 = vunpack.c.h.b16 %v1195
    %v4888 = vunpack.c.l.b16 %v1196
    %v4889 = vunpack.c.h.b16 %v1196
    %v4890 = vunpack.c.l.b16 %v1197
    %v4891 = vunpack.c.h.b16 %v1197
    %v4892 = vunpack.c.l.b16 %v1198
    %v4893 = vunpack.c.h.b16 %v1198
    %v4894 = vunpack.c.l.b16 %v1199
    %v4895 = vunpack.c.h.b16 %v1199
    %v4896 = vunpack.c.l.b16 %v1200
    %v4897 = vunpack.c.h.b16 %v1200
    %v4898 = vunpack.c.l.b16 %v1201
    %v4899 = vunpack.c.h.b16 %v1201
    %v4900 = vunpack.c.l.b16 %v1202
    %v4901 = vunpack.c.h.b16 %v1202
    %v4902 = vunpack.c.l.b16 %v1203
    %v4903 = vunpack.c.h.b16 %v1203
    %v4904 = vunpack.c.l.b16 %v1204
    %v4905 = vunpack.c.h.b16 %v1204
    %v4906 = vunpack.c.l.b16 %v1205
    %v4907 = vunpack.c.h.b16 %v1205
    %v4908 = vunpack.c.l.b16 %v1206
    %v4909 = vunpack.c.h.b16 %v1206
    %v4910 = vunpack.c.l.b16 %v1207
    %v4911 = vunpack.c.h.b16 %v1207
    %v4912 = vunpack.c.l.b16 %v1208
    %v4913 = vunpack.c.h.b16 %v1208
    %v4914 = vunpack.c.l.b16 %v1209
    %v4915 = vunpack.c.h.b16 %v1209
    %v4916 = vunpack.c.l.b16 %v1210
    %v4917 = vunpack.c.h.b16 %v1210
    %v4918 = vunpack.c.l.b16 %v1211
    %v4919 = vunpack.c.h.b16 %v1211
    %v4920 = vunpack.c.l.b16 %v1212
    %v4921 = vunpack.c.h.b16 %v1212
    %v4922 = vunpack.c.l.b16 %v1213
    %v4923 = vunpack.c.h.b16 %v1213
    %v4924 = vunpack.c.l.b16 %v1214
    %v4925 = vunpack.c.h.b16 %v1214
    %v4926 = vunpack.c.l.b16 %v1215
    %v4927 = vunpack.c.h.b16 %v1215
    %v4928 = vunpack.c.l.b16 %v1216
    %v4929 = vunpack.c.h.b16 %v1216
    %v4930 = vunpack.c.l.b16 %v1217
    %v4931 = vunpack.c.h.b16 %v1217
    %v4932 = vunpack.c.l.b16 %v1218
    %v4933 = vunpack.c.h.b16 %v1218
    %v4934 = vunpack.c.l.b16 %v1219
    %v4935 = vunpack.c.h.b16 %v1219
    %v4936 = vunpack.c.l.b16 %v1220
    %v4937 = vunpack.c.h.b16 %v1220
    %v4938 = vunpack.c.l.b16 %v1221
    %v4939 = vunpack.c.h.b16 %v1221
    %v4940 = vunpack.c.l.b16 %v1222
    %v4941 = vunpack.c.h.b16 %v1222
    %v4942 = vunpack.c.l.b16 %v1223
    %v4943 = vunpack.c.h.b16 %v1223
    %v4944 = vunpack.c.l.b16 %v1224
    %v4945 = vunpack.c.h.b16 %v1224
    %v4946 = vunpack.c.l.b16 %v1225
    %v4947 = vunpack.c.h.b16 %v1225
    %v4948 = vunpack.c.l.b16 %v1226
    %v4949 = vunpack.c.h.b16 %v1226
    %v4950 = vunpack.c.l.b16 %v1227
    %v4951 = vunpack.c.h.b16 %v1227
    %v4952 = vunpack.c.l.b16 %v1228
    %v4953 = vunpack.c.h.b16 %v1228
    %v4954 = vunpack.c.l.b16 %v1229
    %v4955 = vunpack.c.h.b16 %v1229
    %v4956 = vunpack.c.l.b16 %v1230
    %v4957 = vunpack.c.h.b16 %v1230
    %v4958 = vunpack.c.l.b16 %v1231
    %v4959 = vunpack.c.h.b16 %v1231
    %v4960 = vunpack.c.l.b16 %v1232
    %v4961 = vunpack.c.h.b16 %v1232
    %v4962 = vunpack.c.l.b16 %v1233
    %v4963 = vunpack.c.h.b16 %v1233
    %v4964 = vunpack.c.l.b16 %v1234
    %v4965 = vunpack.c.h.b16 %v1234
    %v4966 = vunpack.c.l.b16 %v1235
    %v4967 = vunpack.c.h.b16 %v1235
    %v4968 = vunpack.c.l.b16 %v1236
    %v4969 = vunpack.c.h.b16 %v1236
    %v4970 = vunpack.c.l.b16 %v1237
    %v4971 = vunpack.c.h.b16 %v1237
    %v4972 = vunpack.c.l.b16 %v1238
    %v4973 = vunpack.c.h.b16 %v1238
    %v4974 = vunpack.c.l.b16 %v1239
    %v4975 = vunpack.c.h.b16 %v1239
    %v4976 = vunpack.c.l.b16 %v1240
    %v4977 = vunpack.c.h.b16 %v1240
    %v4978 = vunpack.c.l.b16 %v1241
    %v4979 = vunpack.c.h.b16 %v1241
    %v4980 = vunpack.c.l.b16 %v1242
    %v4981 = vunpack.c.h.b16 %v1242
    %v4982 = vunpack.c.l.b16 %v1243
    %v4983 = vunpack.c.h.b16 %v1243
    %v4984 = vunpack.c.l.b16 %v1244
    %v4985 = vunpack.c.h.b16 %v1244
    %v4986 = vunpack.c.l.b16 %v1245
    %v4987 = vunpack.c.h.b16 %v1245
    %v4988 = vunpack.c.l.b16 %v1246
    %v4989 = vunpack.c.h.b16 %v1246
    %v4990 = vunpack.c.l.b16 %v1247
    %v4991 = vunpack.c.h.b16 %v1247
    %v4992 = vunpack.c.l.b16 %v1248
    %v4993 = vunpack.c.h.b16 %v1248
    %v4994 = vunpack.c.l.b16 %v1249
    %v4995 = vunpack.c.h.b16 %v1249
    %v4996 = vunpack.c.l.b16 %v1250
    %v4997 = vunpack.c.h.b16 %v1250
    %v4998 = vunpack.c.l.b16 %v1251
    %v4999 = vunpack.c.h.b16 %v1251
    %v5000 = vunpack.c.l.b16 %v1252
    %v5001 = vunpack.c.h.b16 %v1252
    %v5002 = vunpack.c.l.b16 %v1253
    %v5003 = vunpack.c.h.b16 %v1253
    %v5004 = vunpack.c.l.b16 %v1254
    %v5005 = vunpack.c.h.b16 %v1254
    %v5006 = vunpack.c.l.b16 %v1255
    %v5007 = vunpack.c.h.b16 %v1255
    %v5008 = vunpack.c.l.b16 %v1256
    %v5009 = vunpack.c.h.b16 %v1256
    %v5010 = vunpack.c.l.b16 %v1257
    %v5011 = vunpack.c.h.b16 %v1257
    %v5012 = vunpack.c.l.b16 %v1258
    %v5013 = vunpack.c.h.b16 %v1258
    %v5014 = vunpack.c.l.b16 %v1259
    %v5015 = vunpack.c.h.b16 %v1259
    %v5016 = vunpack.c.l.b16 %v1260
    %v5017 = vunpack.c.h.b16 %v1260
    %v5018 = vunpack.c.l.b16 %v1261
    %v5019 = vunpack.c.h.b16 %v1261
    %v5020 = vunpack.c.l.b16 %v1262
    %v5021 = vunpack.c.h.b16 %v1262
    %v5022 = vunpack.c.l.b16 %v1263
    %v5023 = vunpack.c.h.b16 %v1263
    %v5024 = vunpack.c.l.b16 %v1264
    %v5025 = vunpack.c.h.b16 %v1264
    %v5026 = vunpack.c.l.b16 %v1265
    %v5027 = vunpack.c.h.b16 %v1265
    %v5028 = vunpack.c.l.b16 %v1266
    %v5029 = vunpack.c.h.b16 %v1266
    %v5030 = vunpack.c.l.b16 %v1267
    %v5031 = vunpack.c.h.b16 %v1267
    %v5032 = vunpack.c.l.b16 %v1268
    %v5033 = vunpack.c.h.b16 %v1268
    %v5034 = vunpack.c.l.b16 %v1269
    %v5035 = vunpack.c.h.b16 %v1269
    %v5036 = vunpack.c.l.b16 %v1270
    %v5037 = vunpack.c.h.b16 %v1270
    %v5038 = vunpack.c.l.b16 %v1271
    %v5039 = vunpack.c.h.b16 %v1271
    %v5040 = vunpack.c.l.b16 %v1272
    %v5041 = vunpack.c.h.b16 %v1272
    %v5042 = vunpack.c.l.b16 %v1273
    %v5043 = vunpack.c.h.b16 %v1273
    %v5044 = vunpack.c.l.b16 %v1274
    %v5045 = vunpack.c.h.b16 %v1274
    %v5046 = vunpack.c.l.b16 %v1275
    %v5047 = vunpack.c.h.b16 %v1275
    %v5048 = vunpack.c.l.b16 %v1276
    %v5049 = vunpack.c.h.b16 %v1276
    %v5050 = vunpack.c.l.b16 %v1277
    %v5051 = vunpack.c.h.b16 %v1277
    %v5052 = vunpack.c.l.b16 %v1278
    %v5053 = vunpack.c.h.b16 %v1278
    %v5054 = vunpack.c.l.b16 %v1279
    %v5055 = vunpack.c.h.b16 %v1279
    %v5056 = vunpack.c.l.b16 %v1280
    %v5057 = vunpack.c.h.b16 %v1280
    %v5058 = vunpack.c.l.b16 %v1281
    %v5059 = vunpack.c.h.b16 %v1281
    %v5060 = vunpack.c.l.b16 %v1282
    %v5061 = vunpack.c.h.b16 %v1282
    %v5062 = vunpack.c.l.b16 %v1283
    %v5063 = vunpack.c.h.b16 %v1283
    %v5064 = vunpack.c.l.b16 %v1284
    %v5065 = vunpack.c.h.b16 %v1284
    %v5066 = vunpack.c.l.b16 %v1285
    %v5067 = vunpack.c.h.b16 %v1285
    %v5068 = vunpack.c.l.b16 %v1286
    %v5069 = vunpack.c.h.b16 %v1286
    %v5070 = vunpack.c.l.b16 %v1287
    %v5071 = vunpack.c.h.b16 %v1287
    %v5072 = vunpack.c.l.b16 %v1288
    %v5073 = vunpack.c.h.b16 %v1288
    %v5074 = vunpack.c.l.b16 %v1289
    %v5075 = vunpack.c.h.b16 %v1289
    %v5076 = vunpack.c.l.b16 %v1290
    %v5077 = vunpack.c.h.b16 %v1290
    %v5078 = vunpack.c.l.b16 %v1291
    %v5079 = vunpack.c.h.b16 %v1291
    %v5080 = vunpack.c.l.b16 %v1292
    %v5081 = vunpack.c.h.b16 %v1292
    %v5082 = vunpack.c.l.b16 %v1293
    %v5083 = vunpack.c.h.b16 %v1293
    %v5084 = vunpack.c.l.b16 %v1294
    %v5085 = vunpack.c.h.b16 %v1294
    %v5086 = vunpack.c.l.b16 %v1295
    %v5087 = vunpack.c.h.b16 %v1295
    %v5088 = vunpack.c.l.b16 %v1296
    %v5089 = vunpack.c.h.b16 %v1296
    %v5090 = vunpack.c.l.b16 %v1297
    %v5091 = vunpack.c.h.b16 %v1297
    %v5092 = vunpack.c.l.b16 %v1298
    %v5093 = vunpack.c.h.b16 %v1298
    %v5094 = vunpack.c.l.b16 %v1299
    %v5095 = vunpack.c.h.b16 %v1299
    %v5096 = vunpack.c.l.b16 %v1300
    %v5097 = vunpack.c.h.b16 %v1300
    %v5098 = vunpack.c.l.b16 %v1301
    %v5099 = vunpack.c.h.b16 %v1301
    %v5100 = vunpack.c.l.b16 %v1302
    %v5101 = vunpack.c.h.b16 %v1302
    %v5102 = vunpack.c.l.b16 %v1303
    %v5103 = vunpack.c.h.b16 %v1303
    %v5104 = vunpack.c.l.b16 %v1304
    %v5105 = vunpack.c.h.b16 %v1304
    %v5106 = vunpack.c.l.b16 %v1305
    %v5107 = vunpack.c.h.b16 %v1305
    %v5108 = vunpack.c.l.b16 %v1306
    %v5109 = vunpack.c.h.b16 %v1306
    %v5110 = vunpack.c.l.b16 %v1307
    %v5111 = vunpack.c.h.b16 %v1307
    %v5112 = vunpack.c.l.b16 %v1308
    %v5113 = vunpack.c.h.b16 %v1308
    %v5114 = vunpack.c.l.b16 %v1309
    %v5115 = vunpack.c.h.b16 %v1309
    %v5116 = vunpack.c.l.b16 %v1310
    %v5117 = vunpack.c.h.b16 %v1310
    %v5118 = vunpack.c.l.b16 %v1311
    %v5119 = vunpack.c.h.b16 %v1311
    %v5120 = vunpack.c.l.b16 %v1312
    %v5121 = vunpack.c.h.b16 %v1312
    %v5122 = vunpack.c.l.b16 %v1313
    %v5123 = vunpack.c.h.b16 %v1313
    %v5124 = vunpack.c.l.b16 %v1314
    %v5125 = vunpack.c.h.b16 %v1314
    %v5126 = vunpack.c.l.b16 %v1315
    %v5127 = vunpack.c.h.b16 %v1315
    %v5128 = vunpack.c.l.b16 %v1316
    %v5129 = vunpack.c.h.b16 %v1316
    %v5130 = vunpack.c.l.b16 %v1317
    %v5131 = vunpack.c.h.b16 %v1317
    %v5132 = vunpack.c.l.b16 %v1318
    %v5133 = vunpack.c.h.b16 %v1318
    %v5134 = vunpack.c.l.b16 %v1319
    %v5135 = vunpack.c.h.b16 %v1319
    %v5136 = vunpack.c.l.b16 %v1320
    %v5137 = vunpack.c.h.b16 %v1320
    %v5138 = vunpack.c.l.b16 %v1321
    %v5139 = vunpack.c.h.b16 %v1321
    %v5140 = vunpack.c.l.b16 %v1322
    %v5141 = vunpack.c.h.b16 %v1322
    %v5142 = vunpack.c.l.b16 %v1323
    %v5143 = vunpack.c.h.b16 %v1323
    %v5144 = vunpack.c.l.b16 %v1324
    %v5145 = vunpack.c.h.b16 %v1324
    %v5146 = vunpack.c.l.b16 %v1325
    %v5147 = vunpack.c.h.b16 %v1325
    %v5148 = vunpack.c.l.b16 %v1326
    %v5149 = vunpack.c.h.b16 %v1326
    %v5150 = vunpack.c.l.b16 %v1327
    %v5151 = vunpack.c.h.b16 %v1327
    %v5152 = vunpack.c.l.b16 %v1328
    %v5153 = vunpack.c.h.b16 %v1328
    %v5154 = vunpack.c.l.b16 %v1329
    %v5155 = vunpack.c.h.b16 %v1329
    %v5156 = vunpack.c.l.b16 %v1330
    %v5157 = vunpack.c.h.b16 %v1330
    %v5158 = vunpack.c.l.b16 %v1331
    %v5159 = vunpack.c.h.b16 %v1331
    %v5160 = vunpack.c.l.b16 %v1332
    %v5161 = vunpack.c.h.b16 %v1332
    %v5162 = vunpack.c.l.b16 %v1333
    %v5163 = vunpack.c.h.b16 %v1333
    %v5164 = vunpack.c.l.b16 %v1334
    %v5165 = vunpack.c.h.b16 %v1334
    %v5166 = vunpack.c.l.b16 %v1335
    %v5167 = vunpack.c.h.b16 %v1335
    %v5168 = vunpack.c.l.b16 %v1336
    %v5169 = vunpack.c.h.b16 %v1336
    %v5170 = vunpack.c.l.b16 %v1337
    %v5171 = vunpack.c.h.b16 %v1337
    %v5172 = vunpack.c.l.b16 %v1338
    %v5173 = vunpack.c.h.b16 %v1338
    %v5174 = vunpack.c.l.b16 %v1339
    %v5175 = vunpack.c.h.b16 %v1339
    %v5176 = vunpack.c.l.b16 %v1340
    %v5177 = vunpack.c.h.b16 %v1340
    %v5178 = vunpack.c.l.b16 %v1341
    %v5179 = vunpack.c.h.b16 %v1341
    %v5180 = vunpack.c.l.b16 %v1342
    %v5181 = vunpack.c.h.b16 %v1342
    %v5182 = vunpack.c.l.b16 %v1343
    %v5183 = vunpack.c.h.b16 %v1343
    %v5184 = vunpack.c.l.b16 %v1344
    %v5185 = vunpack.c.h.b16 %v1344
    %v5186 = vunpack.c.l.b16 %v1345
    %v5187 = vunpack.c.h.b16 %v1345
    %v5188 = vunpack.c.l.b16 %v1346
    %v5189 = vunpack.c.h.b16 %v1346
    %v5190 = vunpack.c.l.b16 %v1347
    %v5191 = vunpack.c.h.b16 %v1347
    %v5192 = vunpack.c.l.b16 %v1348
    %v5193 = vunpack.c.h.b16 %v1348
    %v5194 = vunpack.c.l.b16 %v1349
    %v5195 = vunpack.c.h.b16 %v1349
    %v5196 = vunpack.c.l.b16 %v1350
    %v5197 = vunpack.c.h.b16 %v1350
    %v5198 = vunpack.c.l.b16 %v1351
    %v5199 = vunpack.c.h.b16 %v1351
    %v5200 = vunpack.c.l.b16 %v1352
    %v5201 = vunpack.c.h.b16 %v1352
    %v5202 = vunpack.c.l.b16 %v1353
    %v5203 = vunpack.c.h.b16 %v1353
    %v5204 = vunpack.c.l.b16 %v1354
    %v5205 = vunpack.c.h.b16 %v1354
    %v5206 = vunpack.c.l.b16 %v1355
    %v5207 = vunpack.c.h.b16 %v1355
    %v5208 = vunpack.c.l.b16 %v1356
    %v5209 = vunpack.c.h.b16 %v1356
    %v5210 = vunpack.c.l.b16 %v1357
    %v5211 = vunpack.c.h.b16 %v1357
    %v5212 = vunpack.c.l.b16 %v1358
    %v5213 = vunpack.c.h.b16 %v1358
    %v5214 = vunpack.c.l.b16 %v1359
    %v5215 = vunpack.c.h.b16 %v1359
    %v5216 = vunpack.c.l.b16 %v1360
    %v5217 = vunpack.c.h.b16 %v1360
    %v5218 = vunpack.c.l.b16 %v1361
    %v5219 = vunpack.c.h.b16 %v1361
    %v5220 = vunpack.c.l.b16 %v1362
    %v5221 = vunpack.c.h.b16 %v1362
    %v5222 = vunpack.c.l.b16 %v1363
    %v5223 = vunpack.c.h.b16 %v1363
    %v5224 = vunpack.c.l.b16 %v1364
    %v5225 = vunpack.c.h.b16 %v1364
    %v5226 = vunpack.c.l.b16 %v1365
    %v5227 = vunpack.c.h.b16 %v1365
    %v5228 = vunpack.c.l.b16 %v1366
    %v5229 = vunpack.c.h.b16 %v1366
    %v5230 = vunpack.c.l.b16 %v1367
    %v5231 = vunpack.c.h.b16 %v1367
    %v5232 = vunpack.c.l.b16 %v1368
    %v5233 = vunpack.c.h.b16 %v1368
    %v5234 = vunpack.c.l.b16 %v1369
    %v5235 = vunpack.c.h.b16 %v1369
    %v5236 = vunpack.c.l.b16 %v1370
    %v5237 = vunpack.c.h.b16 %v1370
    %v5238 = vunpack.c.l.b16 %v1371
    %v5239 = vunpack.c.h.b16 %v1371
    %v5240 = vunpack.c.l.b16 %v1372
    %v5241 = vunpack.c.h.b16 %v1372
    %v5242 = vunpack.c.l.b16 %v1373
    %v5243 = vunpack.c.h.b16 %v1373
    %v5244 = vunpack.c.l.b16 %v1374
    %v5245 = vunpack.c.h.b16 %v1374
    %v5246 = vunpack.c.l.b16 %v1375
    %v5247 = vunpack.c.h.b16 %v1375
    %v5248 = vunpack.c.l.b16 %v1376
    %v5249 = vunpack.c.h.b16 %v1376
    %v5250 = vunpack.c.l.b16 %v1377
    %v5251 = vunpack.c.h.b16 %v1377
    %v5252 = vunpack.c.l.b16 %v1378
    %v5253 = vunpack.c.h.b16 %v1378
    %v5254 = vunpack.c.l.b16 %v1379
    %v5255 = vunpack.c.h.b16 %v1379
    %v5256 = vunpack.c.l.b16 %v1380
    %v5257 = vunpack.c.h.b16 %v1380
    %v5258 = vunpack.c.l.b16 %v1381
    %v5259 = vunpack.c.h.b16 %v1381
    %v5260 = vunpack.c.l.b16 %v1382
    %v5261 = vunpack.c.h.b16 %v1382
    %v5262 = vunpack.c.l.b16 %v1383
    %v5263 = vunpack.c.h.b16 %v1383
    %v5264 = vunpack.c.l.b16 %v1384
    %v5265 = vunpack.c.h.b16 %v1384
    %v5266 = vunpack.c.l.b16 %v1385
    %v5267 = vunpack.c.h.b16 %v1385
    %v5268 = vunpack.c.l.b16 %v1386
    %v5269 = vunpack.c.h.b16 %v1386
    %v5270 = vunpack.c.l.b16 %v1387
    %v5271 = vunpack.c.h.b16 %v1387
    %v5272 = vunpack.c.l.b16 %v1388
    %v5273 = vunpack.c.h.b16 %v1388
    %v5274 = vunpack.c.l.b16 %v1389
    %v5275 = vunpack.c.h.b16 %v1389
    %v5276 = vunpack.c.l.b16 %v1390
    %v5277 = vunpack.c.h.b16 %v1390
    %v5278 = vunpack.c.l.b16 %v1391
    %v5279 = vunpack.c.h.b16 %v1391
    %v5280 = vunpack.c.l.b16 %v1392
    %v5281 = vunpack.c.h.b16 %v1392
    %v5282 = vunpack.c.l.b16 %v1393
    %v5283 = vunpack.c.h.b16 %v1393
    %v5284 = vunpack.c.l.b16 %v1394
    %v5285 = vunpack.c.h.b16 %v1394
    %v5286 = vunpack.c.l.b16 %v1395
    %v5287 = vunpack.c.h.b16 %v1395
    %v5288 = vunpack.c.l.b16 %v1396
    %v5289 = vunpack.c.h.b16 %v1396
    %v5290 = vunpack.c.l.b16 %v1397
    %v5291 = vunpack.c.h.b16 %v1397
    %v5292 = vunpack.c.l.b16 %v1398
    %v5293 = vunpack.c.h.b16 %v1398
    %v5294 = vunpack.c.l.b16 %v1399
    %v5295 = vunpack.c.h.b16 %v1399
    %v5296 = vunpack.c.l.b16 %v1400
    %v5297 = vunpack.c.h.b16 %v1400
    %v5298 = vunpack.c.l.b16 %v1401
    %v5299 = vunpack.c.h.b16 %v1401
    %v5300 = vunpack.c.l.b16 %v1402
    %v5301 = vunpack.c.h.b16 %v1402
    %v5302 = vunpack.c.l.b16 %v1403
    %v5303 = vunpack.c.h.b16 %v1403
    %v5304 = vunpack.c.l.b16 %v1404
    %v5305 = vunpack.c.h.b16 %v1404
    %v5306 = vunpack.c.l.b16 %v1405
    %v5307 = vunpack.c.h.b16 %v1405
    %v5308 = vunpack.c.l.b16 %v1406
    %v5309 = vunpack.c.h.b16 %v1406
    %v5310 = vunpack.c.l.b16 %v1407
    %v5311 = vunpack.c.h.b16 %v1407
    %v5312 = vunpack.c.l.b16 %v1408
    %v5313 = vunpack.c.h.b16 %v1408
    %v5314 = vunpack.c.l.b16 %v1409
    %v5315 = vunpack.c.h.b16 %v1409
    %v5316 = vunpack.c.l.b16 %v1410
    %v5317 = vunpack.c.h.b16 %v1410
    %v5318 = vunpack.c.l.b16 %v1411
    %v5319 = vunpack.c.h.b16 %v1411
    %v5320 = vunpack.c.l.b16 %v1412
    %v5321 = vunpack.c.h.b16 %v1412
    %v5322 = vunpack.c.l.b16 %v1413
    %v5323 = vunpack.c.h.b16 %v1413
    %v5324 = vunpack.c.l.b16 %v1414
    %v5325 = vunpack.c.h.b16 %v1414
    %v5326 = vunpack.c.l.b16 %v1415
    %v5327 = vunpack.c.h.b16 %v1415
    %v5328 = vunpack.c.l.b16 %v1416
    %v5329 = vunpack.c.h.b16 %v1416
    %v5330 = vunpack.c.l.b16 %v1417
    %v5331 = vunpack.c.h.b16 %v1417
    %v5332 = vunpack.c.l.b16 %v1418
    %v5333 = vunpack.c.h.b16 %v1418
    %v5334 = vunpack.c.l.b16 %v1419
    %v5335 = vunpack.c.h.b16 %v1419
    %v5336 = vunpack.c.l.b16 %v1420
    %v5337 = vunpack.c.h.b16 %v1420
    %v5338 = vunpack.c.l.b16 %v1421
    %v5339 = vunpack.c.h.b16 %v1421
    %v5340 = vunpack.c.l.b16 %v1422
    %v5341 = vunpack.c.h.b16 %v1422
    %v5342 = vunpack.c.l.b16 %v1423
    %v5343 = vunpack.c.h.b16 %v1423
    %v5344 = vunpack.c.l.b16 %v1424
    %v5345 = vunpack.c.h.b16 %v1424
    %v5346 = vunpack.c.l.b16 %v1425
    %v5347 = vunpack.c.h.b16 %v1425
    %v5348 = vunpack.c.l.b16 %v1426
    %v5349 = vunpack.c.h.b16 %v1426
    %v5350 = vunpack.c.l.b16 %v1427
    %v5351 = vunpack.c.h.b16 %v1427
    %v5352 = vunpack.c.l.b16 %v1428
    %v5353 = vunpack.c.h.b16 %v1428
    %v5354 = vunpack.c.l.b16 %v1429
    %v5355 = vunpack.c.h.b16 %v1429
    %v5356 = vunpack.c.l.b16 %v1430
    %v5357 = vunpack.c.h.b16 %v1430
    %v5358 = vunpack.c.l.b16 %v1431
    %v5359 = vunpack.c.h.b16 %v1431
    %v5360 = vunpack.c.l.b16 %v1432
    %v5361 = vunpack.c.h.b16 %v1432
    %v5362 = vunpack.c.l.b16 %v1433
    %v5363 = vunpack.c.h.b16 %v1433
    %v5364 = vunpack.c.l.b16 %v1434
    %v5365 = vunpack.c.h.b16 %v1434
    %v5366 = vunpack.c.l.b16 %v1435
    %v5367 = vunpack.c.h.b16 %v1435
    %v5368 = vunpack.c.l.b16 %v1436
    %v5369 = vunpack.c.h.b16 %v1436
    %v5370 = vunpack.c.l.b16 %v1437
    %v5371 = vunpack.c.h.b16 %v1437
    %v5372 = vunpack.c.l.b16 %v1438
    %v5373 = vunpack.c.h.b16 %v1438
    %v5374 = vunpack.c.l.b16 %v1439
    %v5375 = vunpack.c.h.b16 %v1439
    %v5376 = vunpack.c.l.b16 %v1440
    %v5377 = vunpack.c.h.b16 %v1440
    %v5378 = vunpack.c.l.b16 %v1441
    %v5379 = vunpack.c.h.b16 %v1441
    %v5380 = vunpack.c.l.b16 %v1442
    %v5381 = vunpack.c.h.b16 %v1442
    %v5382 = vunpack.c.l.b16 %v1443
    %v5383 = vunpack.c.h.b16 %v1443
    %v5384 = vunpack.c.l.b16 %v1444
    %v5385 = vunpack.c.h.b16 %v1444
    %v5386 = vunpack.c.l.b16 %v1445
    %v5387 = vunpack.c.h.b16 %v1445
    %v5388 = vunpack.c.l.b16 %v1446
    %v5389 = vunpack.c.h.b16 %v1446
    %v5390 = vunpack.c.l.b16 %v1447
    %v5391 = vunpack.c.h.b16 %v1447
    %v5392 = vunpack.c.l.b16 %v1448
    %v5393 = vunpack.c.h.b16 %v1448
    %v5394 = vunpack.c.l.b16 %v1449
    %v5395 = vunpack.c.h.b16 %v1449
    %v5396 = vunpack.c.l.b16 %v1450
    %v5397 = vunpack.c.h.b16 %v1450
    %v5398 = vunpack.c.l.b16 %v1451
    %v5399 = vunpack.c.h.b16 %v1451
    %v5400 = vunpack.c.l.b16 %v1452
    %v5401 = vunpack.c.h.b16 %v1452
    %v5402 = vunpack.c.l.b16 %v1453
    %v5403 = vunpack.c.h.b16 %v1453
    %v5404 = vunpack.c.l.b16 %v1454
    %v5405 = vunpack.c.h.b16 %v1454
    %v5406 = vunpack.c.l.b16 %v1455
    %v5407 = vunpack.c.h.b16 %v1455
    %v5408 = vunpack.c.l.b16 %v1456
    %v5409 = vunpack.c.h.b16 %v1456
    %v5410 = vunpack.c.l.b16 %v1457
    %v5411 = vunpack.c.h.b16 %v1457
    %v5412 = vunpack.c.l.b16 %v1458
    %v5413 = vunpack.c.h.b16 %v1458
    %v5414 = vunpack.c.l.b16 %v1459
    %v5415 = vunpack.c.h.b16 %v1459
    %v5416 = vunpack.c.l.b16 %v1460
    %v5417 = vunpack.c.h.b16 %v1460
    %v5418 = vunpack.c.l.b16 %v1461
    %v5419 = vunpack.c.h.b16 %v1461
    %v5420 = vunpack.c.l.b16 %v1462
    %v5421 = vunpack.c.h.b16 %v1462
    %v5422 = vunpack.c.l.b16 %v1463
    %v5423 = vunpack.c.h.b16 %v1463
    %v5424 = vunpack.c.l.b16 %v1464
    %v5425 = vunpack.c.h.b16 %v1464
    %v5426 = vunpack.c.l.b16 %v1465
    %v5427 = vunpack.c.h.b16 %v1465
    %v5428 = vunpack.c.l.b16 %v1466
    %v5429 = vunpack.c.h.b16 %v1466
    %v5430 = vunpack.c.l.b16 %v1467
    %v5431 = vunpack.c.h.b16 %v1467
    %v5432 = vunpack.c.l.b16 %v1468
    %v5433 = vunpack.c.h.b16 %v1468
    %v5434 = vunpack.c.l.b16 %v1469
    %v5435 = vunpack.c.h.b16 %v1469
    %v5436 = vunpack.c.l.b16 %v1470
    %v5437 = vunpack.c.h.b16 %v1470
    %v5438 = vunpack.c.l.b16 %v1471
    %v5439 = vunpack.c.h.b16 %v1471
    %v5440 = vunpack.c.l.b16 %v1472
    %v5441 = vunpack.c.h.b16 %v1472
    %v5442 = vunpack.c.l.b16 %v1473
    %v5443 = vunpack.c.h.b16 %v1473
    %v5444 = vunpack.c.l.b16 %v1474
    %v5445 = vunpack.c.h.b16 %v1474
    %v5446 = vunpack.c.l.b16 %v1475
    %v5447 = vunpack.c.h.b16 %v1475
    %v5448 = vunpack.c.l.b16 %v1476
    %v5449 = vunpack.c.h.b16 %v1476
    %v5450 = vunpack.c.l.b16 %v1477
    %v5451 = vunpack.c.h.b16 %v1477
    %v5452 = vunpack.c.l.b16 %v1478
    %v5453 = vunpack.c.h.b16 %v1478
    %v5454 = vunpack.c.l.b16 %v1479
    %v5455 = vunpack.c.h.b16 %v1479
    %v5456 = vunpack.c.l.b16 %v1480
    %v5457 = vunpack.c.h.b16 %v1480
    %v5458 = vunpack.c.l.b16 %v1481
    %v5459 = vunpack.c.h.b16 %v1481
    %v5460 = vunpack.c.l.b16 %v1482
    %v5461 = vunpack.c.h.b16 %v1482
    %v5462 = vunpack.c.l.b16 %v1483
    %v5463 = vunpack.c.h.b16 %v1483
    %v5464 = vunpack.c.l.b16 %v1484
    %v5465 = vunpack.c.h.b16 %v1484
    %v5466 = vunpack.c.l.b16 %v1485
    %v5467 = vunpack.c.h.b16 %v1485
    %v5468 = vunpack.c.l.b16 %v1486
    %v5469 = vunpack.c.h.b16 %v1486
    %v5470 = vunpack.c.l.b16 %v1487
    %v5471 = vunpack.c.h.b16 %v1487
    %v5472 = vunpack.c.l.b16 %v1488
    %v5473 = vunpack.c.h.b16 %v1488
    %v5474 = vunpack.c.l.b16 %v1489
    %v5475 = vunpack.c.h.b16 %v1489
    %v5476 = vunpack.c.l.b16 %v1490
    %v5477 = vunpack.c.h.b16 %v1490
    %v5478 = vunpack.c.l.b16 %v1491
    %v5479 = vunpack.c.h.b16 %v1491
    %v5480 = vunpack.c.l.b16 %v1492
    %v5481 = vunpack.c.h.b16 %v1492
    %v5482 = vunpack.c.l.b16 %v1493
    %v5483 = vunpack.c.h.b16 %v1493
    %v5484 = vunpack.c.l.b16 %v1494
    %v5485 = vunpack.c.h.b16 %v1494
    %v5486 = vunpack.c.l.b16 %v1495
    %v5487 = vunpack.c.h.b16 %v1495
    %v5488 = vunpack.c.l.b16 %v1496
    %v5489 = vunpack.c.h.b16 %v1496
    %v5490 = vunpack.c.l.b16 %v1497
    %v5491 = vunpack.c.h.b16 %v1497
    %v5492 = vunpack.c.l.b16 %v1498
    %v5493 = vunpack.c.h.b16 %v1498
    %v5494 = vunpack.c.l.b16 %v1499
    %v5495 = vunpack.c.h.b16 %v1499
    %v5496 = vunpack.c.l.b16 %v1500
    %v5497 = vunpack.c.h.b16 %v1500
    %v5498 = vunpack.c.l.b16 %v1501
    %v5499 = vunpack.c.h.b16 %v1501
    %v5500 = vunpack.c.l.b16 %v1502
    %v5501 = vunpack.c.h.b16 %v1502
    %v5502 = vunpack.c.l.b16 %v1503
    %v5503 = vunpack.c.h.b16 %v1503
    %v5504 = vunpack.c.l.b16 %v1504
    %v5505 = vunpack.c.h.b16 %v1504
    %v5506 = vunpack.c.l.b16 %v1505
    %v5507 = vunpack.c.h.b16 %v1505
    %v5508 = vunpack.c.l.b16 %v1506
    %v5509 = vunpack.c.h.b16 %v1506
    %v5510 = vunpack.c.l.b16 %v1507
    %v5511 = vunpack.c.h.b16 %v1507
    %v5512 = vunpack.c.l.b16 %v1508
    %v5513 = vunpack.c.h.b16 %v1508
    %v5514 = vunpack.c.l.b16 %v1509
    %v5515 = vunpack.c.h.b16 %v1509
    %v5516 = vunpack.c.l.b16 %v1510
    %v5517 = vunpack.c.h.b16 %v1510
    %v5518 = vunpack.c.l.b16 %v1511
    %v5519 = vunpack.c.h.b16 %v1511
    %v5520 = vunpack.c.l.b16 %v1512
    %v5521 = vunpack.c.h.b16 %v1512
    %v5522 = vunpack.c.l.b16 %v1513
    %v5523 = vunpack.c.h.b16 %v1513
    %v5524 = vunpack.c.l.b16 %v1514
    %v5525 = vunpack.c.h.b16 %v1514
    %v5526 = vunpack.c.l.b16 %v1515
    %v5527 = vunpack.c.h.b16 %v1515
    %v5528 = vunpack.c.l.b16 %v1516
    %v5529 = vunpack.c.h.b16 %v1516
    %v5530 = vunpack.c.l.b16 %v1517
    %v5531 = vunpack.c.h.b16 %v1517
    %v5532 = vunpack.c.l.b16 %v1518
    %v5533 = vunpack.c.h.b16 %v1518
    %v5534 = vunpack.c.l.b16 %v1519
    %v5535 = vunpack.c.h.b16 %v1519
    %v5536 = vunpack.c.l.b16 %v1520
    %v5537 = vunpack.c.h.b16 %v1520
    %v5538 = vunpack.c.l.b16 %v1521
    %v5539 = vunpack.c.h.b16 %v1521
    %v5540 = vunpack.c.l.b16 %v1522
    %v5541 = vunpack.c.h.b16 %v1522
    %v5542 = vunpack.c.l.b16 %v1523
    %v5543 = vunpack.c.h.b16 %v1523
    %v5544 = vunpack.c.l.b16 %v1524
    %v5545 = vunpack.c.h.b16 %v1524
    %v5546 = vunpack.c.l.b16 %v1525
    %v5547 = vunpack.c.h.b16 %v1525
    %v5548 = vunpack.c.l.b16 %v1526
    %v5549 = vunpack.c.h.b16 %v1526
    %v5550 = vunpack.c.l.b16 %v1527
    %v5551 = vunpack.c.h.b16 %v1527
    %v5552 = vunpack.c.l.b16 %v1528
    %v5553 = vunpack.c.h.b16 %v1528
    %v5554 = vunpack.c.l.b16 %v1529
    %v5555 = vunpack.c.h.b16 %v1529
    %v5556 = vunpack.c.l.b16 %v1530
    %v5557 = vunpack.c.h.b16 %v1530
    %v5558 = vunpack.c.l.b16 %v1531
    %v5559 = vunpack.c.h.b16 %v1531
    %v5560 = vunpack.c.l.b16 %v1532
    %v5561 = vunpack.c.h.b16 %v1532
    %v5562 = vunpack.c.l.b16 %v1533
    %v5563 = vunpack.c.h.b16 %v1533
    %v5564 = vunpack.c.l.b16 %v1534
    %v5565 = vunpack.c.h.b16 %v1534
    %v5566 = vunpack.c.l.b16 %v1535
    %v5567 = vunpack.c.h.b16 %v1535
    %v5568 = vunpack.c.l.b16 %v1536
    %v5569 = vunpack.c.h.b16 %v1536
    %v5570 = vunpack.c.l.b16 %v1537
    %v5571 = vunpack.c.h.b16 %v1537
    %v5572 = vunpack.c.l.b16 %v1538
    %v5573 = vunpack.c.h.b16 %v1538
    %v5574 = vunpack.c.l.b16 %v1539
    %v5575 = vunpack.c.h.b16 %v1539
    %v5576 = vunpack.c.l.b16 %v1540
    %v5577 = vunpack.c.h.b16 %v1540
    %v5578 = vunpack.c.l.b16 %v1541
    %v5579 = vunpack.c.h.b16 %v1541
    %v5580 = vunpack.c.l.b16 %v1542
    %v5581 = vunpack.c.h.b16 %v1542
    %v5582 = vunpack.c.l.b16 %v1543
    %v5583 = vunpack.c.h.b16 %v1543
    %v5584 = vunpack.c.l.b16 %v1544
    %v5585 = vunpack.c.h.b16 %v1544
    %v5586 = vunpack.c.l.b16 %v1545
    %v5587 = vunpack.c.h.b16 %v1545
    %v5588 = vunpack.c.l.b16 %v1546
    %v5589 = vunpack.c.h.b16 %v1546
    %v5590 = vunpack.c.l.b16 %v1547
    %v5591 = vunpack.c.h.b16 %v1547
    %v5592 = vunpack.c.l.b16 %v1548
    %v5593 = vunpack.c.h.b16 %v1548
    %v5594 = vunpack.c.l.b16 %v1549
    %v5595 = vunpack.c.h.b16 %v1549
    %v5596 = vunpack.c.l.b16 %v1550
    %v5597 = vunpack.c.h.b16 %v1550
    %v5598 = vunpack.c.l.b16 %v1551
    %v5599 = vunpack.c.h.b16 %v1551
    %v5600 = vunpack.c.l.b16 %v1552
    %v5601 = vunpack.c.h.b16 %v1552
    %v5602 = vunpack.c.l.b16 %v1553
    %v5603 = vunpack.c.h.b16 %v1553
    %v5604 = vunpack.c.l.b16 %v1554
    %v5605 = vunpack.c.h.b16 %v1554
    %v5606 = vunpack.c.l.b16 %v1555
    %v5607 = vunpack.c.h.b16 %v1555
    %v5608 = vunpack.c.l.b16 %v1556
    %v5609 = vunpack.c.h.b16 %v1556
    %v5610 = vunpack.c.l.b16 %v1557
    %v5611 = vunpack.c.h.b16 %v1557
    %v5612 = vpack.c.b16 %v2928, %v2924
    %v5613 = vpack.c.b16 %v2929, %v2925
    %v5614 = vpack.c.b16 %v2930, %v2926
    %v5615 = vpack.c.b16 %v2931, %v2927
    %v5616 = vpack.c.b16 %v2936, %v2932
    %v5617 = vpack.c.b16 %v2937, %v2933
    %v5618 = vpack.c.b16 %v2938, %v2934
    %v5619 = vpack.c.b16 %v2939, %v2935
    %v5620 = vpack.c.b16 %v2944, %v2940
    %v5621 = vpack.c.b16 %v2945, %v2941
    %v5622 = vpack.c.b16 %v2946, %v2942
    %v5623 = vpack.c.b16 %v2947, %v2943
    %v5624 = vpack.c.b16 %v2952, %v2948
    %v5625 = vpack.c.b16 %v2953, %v2949
    %v5626 = vpack.c.b16 %v2954, %v2950
    %v5627 = vpack.c.b16 %v2955, %v2951
    %v5628 = vpack.c.b16 %v2960, %v2956
    %v5629 = vpack.c.b16 %v2961, %v2957
    %v5630 = vpack.c.b16 %v2962, %v2958
    %v5631 = vpack.c.b16 %v2963, %v2959
    %v5632 = vpack.c.b16 %v2968, %v2964
    %v5633 = vpack.c.b16 %v2969, %v2965
    %v5634 = vpack.c.b16 %v2970, %v2966
    %v5635 = vpack.c.b16 %v2971, %v2967
    %v5636 = vpack.c.b16 %v2976, %v2972
    %v5637 = vpack.c.b16 %v2977, %v2973
    %v5638 = vpack.c.b16 %v2978, %v2974
    %v5639 = vpack.c.b16 %v2979, %v2975
    %v5640 = vpack.c.b16 %v2984, %v2980
    %v5641 = vpack.c.b16 %v2985, %v2981
    %v5642 = vpack.c.b16 %v2986, %v2982
    %v5643 = vpack.c.b16 %v2987, %v2983
    %v5644 = vpack.c.b16 %v2992, %v2988
    %v5645 = vpack.c.b16 %v2993, %v2989
    %v5646 = vpack.c.b16 %v2994, %v2990
    %v5647 = vpack.c.b16 %v2995, %v2991
    %v5648 = vpack.c.b16 %v3000, %v2996
    %v5649 = vpack.c.b16 %v3001, %v2997
    %v5650 = vpack.c.b16 %v3002, %v2998
    %v5651 = vpack.c.b16 %v3003, %v2999
    %v5652 = vpack.c.b16 %v3008, %v3004
    %v5653 = vpack.c.b16 %v3009, %v3005
    %v5654 = vpack.c.b16 %v3010, %v3006
    %v5655 = vpack.c.b16 %v3011, %v3007
    %v5656 = vpack.c.b16 %v3016, %v3012
    %v5657 = vpack.c.b16 %v3017, %v3013
    %v5658 = vpack.c.b16 %v3018, %v3014
    %v5659 = vpack.c.b16 %v3019, %v3015
    %v5660 = vpack.c.b16 %v3024, %v3020
    %v5661 = vpack.c.b16 %v3025, %v3021
    %v5662 = vpack.c.b16 %v3026, %v3022
    %v5663 = vpack.c.b16 %v3027, %v3023
    %v5664 = vpack.c.b16 %v3032, %v3028
    %v5665 = vpack.c.b16 %v3033, %v3029
    %v5666 = vpack.c.b16 %v3034, %v3030
    %v5667 = vpack.c.b16 %v3035, %v3031
    %v5668 = vpack.c.b16 %v3040, %v3036
    %v5669 = vpack.c.b16 %v3041, %v3037
    %v5670 = vpack.c.b16 %v3042, %v3038
    %v5671 = vpack.c.b16 %v3043, %v3039
    %v5672 = vpack.c.b16 %v3048, %v3044
    %v5673 = vpack.c.b16 %v3049, %v3045
    %v5674 = vpack.c.b16 %v3050, %v3046
    %v5675 = vpack.c.b16 %v3051, %v3047
    %v5676 = vpack.c.b16 %v3056, %v3052
    %v5677 = vpack.c.b16 %v3057, %v3053
    %v5678 = vpack.c.b16 %v3058, %v3054
    %v5679 = vpack.c.b16 %v3059, %v3055
    %v5680 = vpack.c.b16 %v3064, %v3060
    %v5681 = vpack.c.b16 %v3065, %v3061
    %v5682 = vpack.c.b16 %v3066, %v3062
    %v5683 = vpack.c.b16 %v3067, %v3063
    %v5684 = vpack.c.b16 %v3072, %v3068
    %v5685 = vpack.c.b16 %v3073, %v3069
    %v5686 = vpack.c.b16 %v3074, %v3070
    %v5687 = vpack.c.b16 %v3075, %v3071
    %v5688 = vpack.c.b16 %v3080, %v3076
    %v5689 = vpack.c.b16 %v3081, %v3077
    %v5690 = vpack.c.b16 %v3082, %v3078
    %v5691 = vpack.c.b16 %v3083, %v3079
    %v5692 = vpack.c.b16 %v3088, %v3084
    %v5693 = vpack.c.b16 %v3089, %v3085
    %v5694 = vpack.c.b16 %v3090, %v3086
    %v5695 = vpack.c.b16 %v3091, %v3087
    %v5696 = vpack.c.b16 %v3096, %v3092
    %v5697 = vpack.c.b16 %v3097, %v3093
    %v5698 = vpack.c.b16 %v3098, %v3094
    %v5699 = vpack.c.b16 %v3099, %v3095
    %v5700 = vpack.c.b16 %v3104, %v3100
    %v5701 = vpack.c.b16 %v3105, %v3101
    %v5702 = vpack.c.b16 %v3106, %v3102
    %v5703 = vpack.c.b16 %v3107, %v3103
    %v5704 = vpack.c.b16 %v3112, %v3108
    %v5705 = vpack.c.b16 %v3113, %v3109
    %v5706 = vpack.c.b16 %v3114, %v3110
    %v5707 = vpack.c.b16 %v3115, %v3111
    %v5708 = vpack.c.b16 %v3120, %v3116
    %v5709 = vpack.c.b16 %v3121, %v3117
    %v5710 = vpack.c.b16 %v3122, %v3118
    %v5711 = vpack.c.b16 %v3123, %v3119
    %v5712 = vpack.c.b16 %v3128, %v3124
    %v5713 = vpack.c.b16 %v3129, %v3125
    %v5714 = vpack.c.b16 %v3130, %v3126
    %v5715 = vpack.c.b16 %v3131, %v3127
    %v5716 = vpack.c.b16 %v3136, %v3132
    %v5717 = vpack.c.b16 %v3137, %v3133
    %v5718 = vpack.c.b16 %v3138, %v3134
    %v5719 = vpack.c.b16 %v3139, %v3135
    %v5720 = vpack.c.b16 %v3144, %v3140
    %v5721 = vpack.c.b16 %v3145, %v3141
    %v5722 = vpack.c.b16 %v3146, %v3142
    %v5723 = vpack.c.b16 %v3147, %v3143
    %v5724 = vpack.c.b16 %v3152, %v3148
    %v5725 = vpack.c.b16 %v3153, %v3149
    %v5726 = vpack.c.b16 %v3154, %v3150
    %v5727 = vpack.c.b16 %v3155, %v3151
    %v5728 = vpack.c.b16 %v3160, %v3156
    %v5729 = vpack.c.b16 %v3161, %v3157
    %v5730 = vpack.c.b16 %v3162, %v3158
    %v5731 = vpack.c.b16 %v3163, %v3159
    %v5732 = vpack.c.b16 %v3168, %v3164
    %v5733 = vpack.c.b16 %v3169, %v3165
    %v5734 = vpack.c.b16 %v3170, %v3166
    %v5735 = vpack.c.b16 %v3171, %v3167
    %v5736 = vpack.c.b16 %v3176, %v3172
    %v5737 = vpack.c.b16 %v3177, %v3173
    %v5738 = vpack.c.b16 %v3178, %v3174
    %v5739 = vpack.c.b16 %v3179, %v3175
    %v5740 = vpack.c.b16 %v3184, %v3180
    %v5741 = vpack.c.b16 %v3185, %v3181
    %v5742 = vpack.c.b16 %v3186, %v3182
    %v5743 = vpack.c.b16 %v3187, %v3183
    %v5744 = vpack.c.b16 %v3192, %v3188
    %v5745 = vpack.c.b16 %v3193, %v3189
    %v5746 = vpack.c.b16 %v3194, %v3190
    %v5747 = vpack.c.b16 %v3195, %v3191
    %v5748 = vpack.c.b16 %v3200, %v3196
    %v5749 = vpack.c.b16 %v3201, %v3197
    %v5750 = vpack.c.b16 %v3202, %v3198
    %v5751 = vpack.c.b16 %v3203, %v3199
    %v5752 = vpack.c.b16 %v3208, %v3204
    %v5753 = vpack.c.b16 %v3209, %v3205
    %v5754 = vpack.c.b16 %v3210, %v3206
    %v5755 = vpack.c.b16 %v3211, %v3207
    %v5756 = vpack.c.b16 %v3216, %v3212
    %v5757 = vpack.c.b16 %v3217, %v3213
    %v5758 = vpack.c.b16 %v3218, %v3214
    %v5759 = vpack.c.b16 %v3219, %v3215
    %v5760 = vpack.c.b16 %v3224, %v3220
    %v5761 = vpack.c.b16 %v3225, %v3221
    %v5762 = vpack.c.b16 %v3226, %v3222
    %v5763 = vpack.c.b16 %v3227, %v3223
    %v5764 = vpack.c.b16 %v3232, %v3228
    %v5765 = vpack.c.b16 %v3233, %v3229
    %v5766 = vpack.c.b16 %v3234, %v3230
    %v5767 = vpack.c.b16 %v3235, %v3231
    %v5768 = vpack.c.b16 %v3240, %v3236
    %v5769 = vpack.c.b16 %v3241, %v3237
    %v5770 = vpack.c.b16 %v3242, %v3238
    %v5771 = vpack.c.b16 %v3243, %v3239
    %v5772 = vpack.c.b16 %v3248, %v3244
    %v5773 = vpack.c.b16 %v3249, %v3245
    %v5774 = vpack.c.b16 %v3250, %v3246
    %v5775 = vpack.c.b16 %v3251, %v3247
    %v5776 = vpack.c.b16 %v3256, %v3252
    %v5777 = vpack.c.b16 %v3257, %v3253
    %v5778 = vpack.c.b16 %v3258, %v3254
    %v5779 = vpack.c.b16 %v3259, %v3255
    %v5780 = vpack.c.b16 %v3264, %v3260
    %v5781 = vpack.c.b16 %v3265, %v3261
    %v5782 = vpack.c.b16 %v3266, %v3262
    %v5783 = vpack.c.b16 %v3267, %v3263
    %v5784 = vpack.c.b16 %v3272, %v3268
    %v5785 = vpack.c.b16 %v3273, %v3269
    %v5786 = vpack.c.b16 %v3274, %v3270
    %v5787 = vpack.c.b16 %v3275, %v3271
    %v5788 = vpack.c.b16 %v3280, %v3276
    %v5789 = vpack.c.b16 %v3281, %v3277
    %v5790 = vpack.c.b16 %v3282, %v3278
    %v5791 = vpack.c.b16 %v3283, %v3279
    %v5792 = vpack.c.b16 %v3288, %v3284
    %v5793 = vpack.c.b16 %v3289, %v3285
    %v5794 = vpack.c.b16 %v3290, %v3286
    %v5795 = vpack.c.b16 %v3291, %v3287
    %v5796 = vpack.c.b16 %v3296, %v3292
    %v5797 = vpack.c.b16 %v3297, %v3293
    %v5798 = vpack.c.b16 %v3298, %v3294
    %v5799 = vpack.c.b16 %v3299, %v3295
    %v5800 = vpack.c.b16 %v3304, %v3300
    %v5801 = vpack.c.b16 %v3305, %v3301
    %v5802 = vpack.c.b16 %v3306, %v3302
    %v5803 = vpack.c.b16 %v3307, %v3303
    %v5804 = vpack.c.b16 %v3312, %v3308
    %v5805 = vpack.c.b16 %v3313, %v3309
    %v5806 = vpack.c.b16 %v3314, %v3310
    %v5807 = vpack.c.b16 %v3315, %v3311
    %v5808 = vpack.c.b16 %v3320, %v3316
    %v5809 = vpack.c.b16 %v3321, %v3317
    %v5810 = vpack.c.b16 %v3322, %v3318
    %v5811 = vpack.c.b16 %v3323, %v3319
    %v5812 = vpack.c.b16 %v3328, %v3324
    %v5813 = vpack.c.b16 %v3329, %v3325
    %v5814 = vpack.c.b16 %v3330, %v3326
    %v5815 = vpack.c.b16 %v3331, %v3327
    %v5816 = vpack.c.b16 %v3336, %v3332
    %v5817 = vpack.c.b16 %v3337, %v3333
    %v5818 = vpack.c.b16 %v3338, %v3334
    %v5819 = vpack.c.b16 %v3339, %v3335
    %v5820 = vpack.c.b16 %v3344, %v3340
    %v5821 = vpack.c.b16 %v3345, %v3341
    %v5822 = vpack.c.b16 %v3346, %v3342
    %v5823 = vpack.c.b16 %v3347, %v3343
    %v5824 = vpack.c.b16 %v3352, %v3348
    %v5825 = vpack.c.b16 %v3353, %v3349
    %v5826 = vpack.c.b16 %v3354, %v3350
    %v5827 = vpack.c.b16 %v3355, %v3351
    %v5828 = vpack.c.b16 %v3360, %v3356
    %v5829 = vpack.c.b16 %v3361, %v3357
    %v5830 = vpack.c.b16 %v3362, %v3358
    %v5831 = vpack.c.b16 %v3363, %v3359
    %v5832 = vpack.c.b16 %v3368, %v3364
    %v5833 = vpack.c.b16 %v3369, %v3365
    %v5834 = vpack.c.b16 %v3370, %v3366
    %v5835 = vpack.c.b16 %v3371, %v3367
    %v5836 = vpack.c.b16 %v3376, %v3372
    %v5837 = vpack.c.b16 %v3377, %v3373
    %v5838 = vpack.c.b16 %v3378, %v3374
    %v5839 = vpack.c.b16 %v3379, %v3375
    %v5840 = vpack.c.b16 %v3384, %v3380
    %v5841 = vpack.c.b16 %v3385, %v3381
    %v5842 = vpack.c.b16 %v3386, %v3382
    %v5843 = vpack.c.b16 %v3387, %v3383
    %v5844 = vpack.c.b16 %v3392, %v3388
    %v5845 = vpack.c.b16 %v3393, %v3389
    %v5846 = vpack.c.b16 %v3394, %v3390
    %v5847 = vpack.c.b16 %v3395, %v3391
    %v5848 = vpack.c.b16 %v3400, %v3396
    %v5849 = vpack.c.b16 %v3401, %v3397
    %v5850 = vpack.c.b16 %v3402, %v3398
    %v5851 = vpack.c.b16 %v3403, %v3399
    %v5852 = vpack.c.b16 %v3408, %v3404
    %v5853 = vpack.c.b16 %v3409, %v3405
    %v5854 = vpack.c.b16 %v3410, %v3406
    %v5855 = vpack.c.b16 %v3411, %v3407
    %v5856 = vpack.c.b16 %v3416, %v3412
    %v5857 = vpack.c.b16 %v3417, %v3413
    %v5858 = vpack.c.b16 %v3418, %v3414
    %v5859 = vpack.c.b16 %v3419, %v3415
    %v5860 = vpack.c.b16 %v3424, %v3420
    %v5861 = vpack.c.b16 %v3425, %v3421
    %v5862 = vpack.c.b16 %v3426, %v3422
    %v5863 = vpack.c.b16 %v3427, %v3423
    %v5864 = vpack.c.b16 %v3432, %v3428
    %v5865 = vpack.c.b16 %v3433, %v3429
    %v5866 = vpack.c.b16 %v3434, %v3430
    %v5867 = vpack.c.b16 %v3435, %v3431
    %v5868 = vpack.c.b16 %v3440, %v3436
    %v5869 = vpack.c.b16 %v3441, %v3437
    %v5870 = vpack.c.b16 %v3442, %v3438
    %v5871 = vpack.c.b16 %v3443, %v3439
    %v5872 = vpack.c.b16 %v3448, %v3444
    %v5873 = vpack.c.b16 %v3449, %v3445
    %v5874 = vpack.c.b16 %v3450, %v3446
    %v5875 = vpack.c.b16 %v3451, %v3447
    %v5876 = vpack.c.b16 %v3456, %v3452
    %v5877 = vpack.c.b16 %v3457, %v3453
    %v5878 = vpack.c.b16 %v3458, %v3454
    %v5879 = vpack.c.b16 %v3459, %v3455
    %v5880 = vpack.c.b16 %v3464, %v3460
    %v5881 = vpack.c.b16 %v3465, %v3461
    %v5882 = vpack.c.b16 %v3466, %v3462
    %v5883 = vpack.c.b16 %v3467, %v3463
    %v5884 = vpack.c.b16 %v3472, %v3468
    %v5885 = vpack.c.b16 %v3473, %v3469
    %v5886 = vpack.c.b16 %v3474, %v3470
    %v5887 = vpack.c.b16 %v3475, %v3471
    %v5888 = vpack.c.b16 %v3480, %v3476
    %v5889 = vpack.c.b16 %v3481, %v3477
    %v5890 = vpack.c.b16 %v3482, %v3478
    %v5891 = vpack.c.b16 %v3483, %v3479
    %v5892 = vpack.c.b16 %v3488, %v3484
    %v5893 = vpack.c.b16 %v3489, %v3485
    %v5894 = vpack.c.b16 %v3490, %v3486
    %v5895 = vpack.c.b16 %v3491, %v3487
    %v5896 = vpack.c.b16 %v3496, %v3492
    %v5897 = vpack.c.b16 %v3497, %v3493
    %v5898 = vpack.c.b16 %v3498, %v3494
    %v5899 = vpack.c.b16 %v3499, %v3495
    %v5900 = vpack.c.b16 %v3504, %v3500
    %v5901 = vpack.c.b16 %v3505, %v3501
    %v5902 = vpack.c.b16 %v3506, %v3502
    %v5903 = vpack.c.b16 %v3507, %v3503
    %v5904 = vpack.c.b16 %v3512, %v3508
    %v5905 = vpack.c.b16 %v3513, %v3509
    %v5906 = vpack.c.b16 %v3514, %v3510
    %v5907 = vpack.c.b16 %v3515, %v3511
    %v5908 = vpack.c.b16 %v3520, %v3516
    %v5909 = vpack.c.b16 %v3521, %v3517
    %v5910 = vpack.c.b16 %v3522, %v3518
    %v5911 = vpack.c.b16 %v3523, %v3519
    %v5912 = vpack.c.b16 %v3528, %v3524
    %v5913 = vpack.c.b16 %v3529, %v3525
    %v5914 = vpack.c.b16 %v3530, %v3526
    %v5915 = vpack.c.b16 %v3531, %v3527
    %v5916 = vpack.c.b16 %v3536, %v3532
    %v5917 = vpack.c.b16 %v3537, %v3533
    %v5918 = vpack.c.b16 %v3538, %v3534
    %v5919 = vpack.c.b16 %v3539, %v3535
    %v5920 = vpack.c.b16 %v3544, %v3540
    %v5921 = vpack.c.b16 %v3545, %v3541
    %v5922 = vpack.c.b16 %v3546, %v3542
    %v5923 = vpack.c.b16 %v3547, %v3543
    %v5924 = vpack.c.b16 %v3552, %v3548
    %v5925 = vpack.c.b16 %v3553, %v3549
    %v5926 = vpack.c.b16 %v3554, %v3550
    %v5927 = vpack.c.b16 %v3555, %v3551
    %v5928 = vpack.c.b16 %v3560, %v3556
    %v5929 = vpack.c.b16 %v3561, %v3557
    %v5930 = vpack.c.b16 %v3562, %v3558
    %v5931 = vpack.c.b16 %v3563, %v3559
    %v5932 = vpack.c.b16 %v3568, %v3564
    %v5933 = vpack.c.b16 %v3569, %v3565
    %v5934 = vpack.c.b16 %v3570, %v3566
    %v5935 = vpack.c.b16 %v3571, %v3567
    %v5936 = vpack.c.b16 %v3576, %v3572
    %v5937 = vpack.c.b16 %v3577, %v3573
    %v5938 = vpack.c.b16 %v3578, %v3574
    %v5939 = vpack.c.b16 %v3579, %v3575
    %v5940 = vpack.c.b16 %v3584, %v3580
    %v5941 = vpack.c.b16 %v3585, %v3581
    %v5942 = vpack.c.b16 %v3586, %v3582
    %v5943 = vpack.c.b16 %v3587, %v3583
    %v5944 = vpack.c.b16 %v3592, %v3588
    %v5945 = vpack.c.b16 %v3593, %v3589
    %v5946 = vpack.c.b16 %v3594, %v3590
    %v5947 = vpack.c.b16 %v3595, %v3591
    %v5948 = vpack.c.b16 %v3600, %v3596
    %v5949 = vpack.c.b16 %v3601, %v3597
    %v5950 = vpack.c.b16 %v3602, %v3598
    %v5951 = vpack.c.b16 %v3603, %v3599
    %v5952 = vpack.c.b16 %v3608, %v3604
    %v5953 = vpack.c.b16 %v3609, %v3605
    %v5954 = vpack.c.b16 %v3610, %v3606
    %v5955 = vpack.c.b16 %v3611, %v3607
    %v5956 = vpack.c.b16 %v3616, %v3612
    %v5957 = vpack.c.b16 %v3617, %v3613
    %v5958 = vpack.c.b16 %v3618, %v3614
    %v5959 = vpack.c.b16 %v3619, %v3615
    %v5960 = vpack.c.b16 %v3624, %v3620
    %v5961 = vpack.c.b16 %v3625, %v3621
    %v5962 = vpack.c.b16 %v3626, %v3622
    %v5963 = vpack.c.b16 %v3627, %v3623
    %v5964 = vpack.c.b16 %v3632, %v3628
    %v5965 = vpack.c.b16 %v3633, %v3629
    %v5966 = vpack.c.b16 %v3634, %v3630
    %v5967 = vpack.c.b16 %v3635, %v3631
    %v5968 = vpack.c.b16 %v3640, %v3636
    %v5969 = vpack.c.b16 %v3641, %v3637
    %v5970 = vpack.c.b16 %v3642, %v3638
    %v5971 = vpack.c.b16 %v3643, %v3639
    %v5972 = vpack.c.b16 %v3648, %v3644
    %v5973 = vpack.c.b16 %v3649, %v3645
    %v5974 = vpack.c.b16 %v3650, %v3646
    %v5975 = vpack.c.b16 %v3651, %v3647
    %v5976 = vpack.c.b16 %v3656, %v3652
    %v5977 = vpack.c.b16 %v3657, %v3653
    %v5978 = vpack.c.b16 %v3658, %v3654
    %v5979 = vpack.c.b16 %v3659, %v3655
    %v5980 = vpack.c.b16 %v3664, %v3660
    %v5981 = vpack.c.b16 %v3665, %v3661
    %v5982 = vpack.c.b16 %v3666, %v3662
    %v5983 = vpack.c.b16 %v3667, %v3663
    %v5984 = vpack.c.b16 %v3672, %v3668
    %v5985 = vpack.c.b16 %v3673, %v3669
    %v5986 = vpack.c.b16 %v3674, %v3670
    %v5987 = vpack.c.b16 %v3675, %v3671
    %v5988 = vpack.c.b16 %v3680, %v3676
    %v5989 = vpack.c.b16 %v3681, %v3677
    %v5990 = vpack.c.b16 %v3682, %v3678
    %v5991 = vpack.c.b16 %v3683, %v3679
    %v5992 = vpack.c.b16 %v3688, %v3684
    %v5993 = vpack.c.b16 %v3689, %v3685
    %v5994 = vpack.c.b16 %v3690, %v3686
    %v5995 = vpack.c.b16 %v3691, %v3687
    %v5996 = vpack.c.b16 %v3696, %v3692
    %v5997 = vpack.c.b16 %v3697, %v3693
    %v5998 = vpack.c.b16 %v3698, %v3694
    %v5999 = vpack.c.b16 %v3699, %v3695
    %v6000 = vpack.c.b16 %v3704, %v3700
    %v6001 = vpack.c.b16 %v3705, %v3701
    %v6002 = vpack.c.b16 %v3706, %v3702
    %v6003 = vpack.c.b16 %v3707, %v3703
    %v6004 = vpack.c.b16 %v3712, %v3708
    %v6005 = vpack.c.b16 %v3713, %v3709
    %v6006 = vpack.c.b16 %v3714, %v3710
    %v6007 = vpack.c.b16 %v3715, %v3711
    %v6008 = vpack.c.b16 %v3720, %v3716
    %v6009 = vpack.c.b16 %v3721, %v3717
    %v6010 = vpack.c.b16 %v3722, %v3718
    %v6011 = vpack.c.b16 %v3723, %v3719
    %v6012 = vpack.c.b16 %v3728, %v3724
    %v6013 = vpack.c.b16 %v3729, %v3725
    %v6014 = vpack.c.b16 %v3730, %v3726
    %v6015 = vpack.c.b16 %v3731, %v3727
    %v6016 = vpack.c.b16 %v3736, %v3732
    %v6017 = vpack.c.b16 %v3737, %v3733
    %v6018 = vpack.c.b16 %v3738, %v3734
    %v6019 = vpack.c.b16 %v3739, %v3735
    %v6020 = vpack.c.b16 %v3744, %v3740
    %v6021 = vpack.c.b16 %v3745, %v3741
    %v6022 = vpack.c.b16 %v3746, %v3742
    %v6023 = vpack.c.b16 %v3747, %v3743
    %v6024 = vpack.c.b16 %v3752, %v3748
    %v6025 = vpack.c.b16 %v3753, %v3749
    %v6026 = vpack.c.b16 %v3754, %v3750
    %v6027 = vpack.c.b16 %v3755, %v3751
    %v6028 = vpack.c.b16 %v3760, %v3756
    %v6029 = vpack.c.b16 %v3761, %v3757
    %v6030 = vpack.c.b16 %v3762, %v3758
    %v6031 = vpack.c.b16 %v3763, %v3759
    %v6032 = vpack.c.b16 %v3768, %v3764
    %v6033 = vpack.c.b16 %v3769, %v3765
    %v6034 = vpack.c.b16 %v3770, %v3766
    %v6035 = vpack.c.b16 %v3771, %v3767
    %v6036 = vpack.c.b16 %v3776, %v3772
    %v6037 = vpack.c.b16 %v3777, %v3773
    %v6038 = vpack.c.b16 %v3778, %v3774
    %v6039 = vpack.c.b16 %v3779, %v3775
    %v6040 = vpack.c.b16 %v3784, %v3780
    %v6041 = vpack.c.b16 %v3785, %v3781
    %v6042 = vpack.c.b16 %v3786, %v3782
    %v6043 = vpack.c.b16 %v3787, %v3783
    %v6044 = vpack.c.b16 %v3792, %v3788
    %v6045 = vpack.c.b16 %v3793, %v3789
    %v6046 = vpack.c.b16 %v3794, %v3790
    %v6047 = vpack.c.b16 %v3795, %v3791
    %v6048 = vpack.c.b16 %v3800, %v3796
    %v6049 = vpack.c.b16 %v3801, %v3797
    %v6050 = vpack.c.b16 %v3802, %v3798
    %v6051 = vpack.c.b16 %v3803, %v3799
    %v6052 = vpack.c.b16 %v3808, %v3804
    %v6053 = vpack.c.b16 %v3809, %v3805
    %v6054 = vpack.c.b16 %v3810, %v3806
    %v6055 = vpack.c.b16 %v3811, %v3807
    %v6056 = vpack.c.b16 %v3816, %v3812
    %v6057 = vpack.c.b16 %v3817, %v3813
    %v6058 = vpack.c.b16 %v3818, %v3814
    %v6059 = vpack.c.b16 %v3819, %v3815
    %v6060 = vpack.c.b16 %v3824, %v3820
    %v6061 = vpack.c.b16 %v3825, %v3821
    %v6062 = vpack.c.b16 %v3826, %v3822
    %v6063 = vpack.c.b16 %v3827, %v3823
    %v6064 = vpack.c.b16 %v3832, %v3828
    %v6065 = vpack.c.b16 %v3833, %v3829
    %v6066 = vpack.c.b16 %v3834, %v3830
    %v6067 = vpack.c.b16 %v3835, %v3831
    %v6068 = vpack.c.b16 %v3840, %v3836
    %v6069 = vpack.c.b16 %v3841, %v3837
    %v6070 = vpack.c.b16 %v3842, %v3838
    %v6071 = vpack.c.b16 %v3843, %v3839
    %v6072 = vpack.c.b16 %v3848, %v3844
    %v6073 = vpack.c.b16 %v3849, %v3845
    %v6074 = vpack.c.b16 %v3850, %v3846
    %v6075 = vpack.c.b16 %v3851, %v3847
    %v6076 = vpack.c.b16 %v3856, %v3852
    %v6077 = vpack.c.b16 %v3857, %v3853
    %v6078 = vpack.c.b16 %v3858, %v3854
    %v6079 = vpack.c.b16 %v3859, %v3855
    %v6080 = vpack.c.b16 %v3864, %v3860
    %v6081 = vpack.c.b16 %v3865, %v3861
    %v6082 = vpack.c.b16 %v3866, %v3862
    %v6083 = vpack.c.b16 %v3867, %v3863
    %v6084 = vpack.c.b16 %v3872, %v3868
    %v6085 = vpack.c.b16 %v3873, %v3869
    %v6086 = vpack.c.b16 %v3874, %v3870
    %v6087 = vpack.c.b16 %v3875, %v3871
    %v6088 = vpack.c.b16 %v3880, %v3876
    %v6089 = vpack.c.b16 %v3881, %v3877
    %v6090 = vpack.c.b16 %v3882, %v3878
    %v6091 = vpack.c.b16 %v3883, %v3879
    %v6092 = vpack.c.b16 %v3888, %v3884
    %v6093 = vpack.c.b16 %v3889, %v3885
    %v6094 = vpack.c.b16 %v3890, %v3886
    %v6095 = vpack.c.b16 %v3891, %v3887
    %v6096 = vpack.c.b16 %v3896, %v3892
    %v6097 = vpack.c.b16 %v3897, %v3893
    %v6098 = vpack.c.b16 %v3898, %v3894
    %v6099 = vpack.c.b16 %v3899, %v3895
    %v6100 = vpack.c.b16 %v3904, %v3900
    %v6101 = vpack.c.b16 %v3905, %v3901
    %v6102 = vpack.c.b16 %v3906, %v3902
    %v6103 = vpack.c.b16 %v3907, %v3903
    %v6104 = vpack.c.b16 %v3912, %v3908
    %v6105 = vpack.c.b16 %v3913, %v3909
    %v6106 = vpack.c.b16 %v3914, %v3910
    %v6107 = vpack.c.b16 %v3915, %v3911
    %v6108 = vpack.c.b16 %v3920, %v3916
    %v6109 = vpack.c.b16 %v3921, %v3917
    %v6110 = vpack.c.b16 %v3922, %v3918
    %v6111 = vpack.c.b16 %v3923, %v3919
    %v6112 = vpack.c.b16 %v3928, %v3924
    %v6113 = vpack.c.b16 %v3929, %v3925
    %v6114 = vpack.c.b16 %v3930, %v3926
    %v6115 = vpack.c.b16 %v3931, %v3927
    %v6116 = vpack.c.b16 %v3936, %v3932
    %v6117 = vpack.c.b16 %v3937, %v3933
    %v6118 = vpack.c.b16 %v3938, %v3934
    %v6119 = vpack.c.b16 %v3939, %v3935
    %v6120 = vpack.c.b16 %v3944, %v3940
    %v6121 = vpack.c.b16 %v3945, %v3941
    %v6122 = vpack.c.b16 %v3946, %v3942
    %v6123 = vpack.c.b16 %v3947, %v3943
    %v6124 = vpack.c.b16 %v3952, %v3948
    %v6125 = vpack.c.b16 %v3953, %v3949
    %v6126 = vpack.c.b16 %v3954, %v3950
    %v6127 = vpack.c.b16 %v3955, %v3951
    %v6128 = vpack.c.b16 %v3960, %v3956
    %v6129 = vpack.c.b16 %v3961, %v3957
    %v6130 = vpack.c.b16 %v3962, %v3958
    %v6131 = vpack.c.b16 %v3963, %v3959
    %v6132 = vpack.c.b16 %v3968, %v3964
    %v6133 = vpack.c.b16 %v3969, %v3965
    %v6134 = vpack.c.b16 %v3970, %v3966
    %v6135 = vpack.c.b16 %v3971, %v3967
    %v6136 = vpack.c.b16 %v3976, %v3972
    %v6137 = vpack.c.b16 %v3977, %v3973
    %v6138 = vpack.c.b16 %v3978, %v3974
    %v6139 = vpack.c.b16 %v3979, %v3975
    %v6140 = vpack.c.b16 %v3984, %v3980
    %v6141 = vpack.c.b16 %v3985, %v3981
    %v6142 = vpack.c.b16 %v3986, %v3982
    %v6143 = vpack.c.b16 %v3987, %v3983
    %v6144 = vpack.c.b16 %v3992, %v3988
    %v6145 = vpack.c.b16 %v3993, %v3989
    %v6146 = vpack.c.b16 %v3994, %v3990
    %v6147 = vpack.c.b16 %v3995, %v3991
    %v6148 = vpack.c.b16 %v4000, %v3996
    %v6149 = vpack.c.b16 %v4001, %v3997
    %v6150 = vpack.c.b16 %v4002, %v3998
    %v6151 = vpack.c.b16 %v4003, %v3999
    %v6152 = vpack.c.b16 %v4008, %v4004
    %v6153 = vpack.c.b16 %v4009, %v4005
    %v6154 = vpack.c.b16 %v4010, %v4006
    %v6155 = vpack.c.b16 %v4011, %v4007
    %v6156 = vpack.c.b16 %v4016, %v4012
    %v6157 = vpack.c.b16 %v4017, %v4013
    %v6158 = vpack.c.b16 %v4018, %v4014
    %v6159 = vpack.c.b16 %v4019, %v4015
    %v6160 = vpack.c.b16 %v4024, %v4020
    %v6161 = vpack.c.b16 %v4025, %v4021
    %v6162 = vpack.c.b16 %v4026, %v4022
    %v6163 = vpack.c.b16 %v4027, %v4023
    %v6164 = vpack.c.b16 %v4032, %v4028
    %v6165 = vpack.c.b16 %v4033, %v4029
    %v6166 = vpack.c.b16 %v4034, %v4030
    %v6167 = vpack.c.b16 %v4035, %v4031
    %v6168 = vpack.c.b16 %v4040, %v4036
    %v6169 = vpack.c.b16 %v4041, %v4037
    %v6170 = vpack.c.b16 %v4042, %v4038
    %v6171 = vpack.c.b16 %v4043, %v4039
    %v6172 = vpack.c.b16 %v4048, %v4044
    %v6173 = vpack.c.b16 %v4049, %v4045
    %v6174 = vpack.c.b16 %v4050, %v4046
    %v6175 = vpack.c.b16 %v4051, %v4047
    %v6176 = vpack.c.b16 %v4056, %v4052
    %v6177 = vpack.c.b16 %v4057, %v4053
    %v6178 = vpack.c.b16 %v4058, %v4054
    %v6179 = vpack.c.b16 %v4059, %v4055
    %v6180 = vpack.c.b16 %v4064, %v4060
    %v6181 = vpack.c.b16 %v4065, %v4061
    %v6182 = vpack.c.b16 %v4066, %v4062
    %v6183 = vpack.c.b16 %v4067, %v4063
    %v6184 = vpack.c.b16 %v4072, %v4068
    %v6185 = vpack.c.b16 %v4073, %v4069
    %v6186 = vpack.c.b16 %v4074, %v4070
    %v6187 = vpack.c.b16 %v4075, %v4071
    %v6188 = vpack.c.b16 %v4080, %v4076
    %v6189 = vpack.c.b16 %v4081, %v4077
    %v6190 = vpack.c.b16 %v4082, %v4078
    %v6191 = vpack.c.b16 %v4083, %v4079
    %v6192 = vpack.c.b16 %v4088, %v4084
    %v6193 = vpack.c.b16 %v4089, %v4085
    %v6194 = vpack.c.b16 %v4090, %v4086
    %v6195 = vpack.c.b16 %v4091, %v4087
    %v6196 = vpack.c.b16 %v4096, %v4092
    %v6197 = vpack.c.b16 %v4097, %v4093
    %v6198 = vpack.c.b16 %v4098, %v4094
    %v6199 = vpack.c.b16 %v4099, %v4095
    %v6200 = vpack.c.b16 %v4104, %v4100
    %v6201 = vpack.c.b16 %v4105, %v4101
    %v6202 = vpack.c.b16 %v4106, %v4102
    %v6203 = vpack.c.b16 %v4107, %v4103
    %v6204 = vpack.c.b16 %v4112, %v4108
    %v6205 = vpack.c.b16 %v4113, %v4109
    %v6206 = vpack.c.b16 %v4114, %v4110
    %v6207 = vpack.c.b16 %v4115, %v4111
    %v6208 = vpack.c.b16 %v4120, %v4116
    %v6209 = vpack.c.b16 %v4121, %v4117
    %v6210 = vpack.c.b16 %v4122, %v4118
    %v6211 = vpack.c.b16 %v4123, %v4119
    %v6212 = vpack.c.b16 %v4128, %v4124
    %v6213 = vpack.c.b16 %v4129, %v4125
    %v6214 = vpack.c.b16 %v4130, %v4126
    %v6215 = vpack.c.b16 %v4131, %v4127
    %v6216 = vpack.c.b16 %v4136, %v4132
    %v6217 = vpack.c.b16 %v4137, %v4133
    %v6218 = vpack.c.b16 %v4138, %v4134
    %v6219 = vpack.c.b16 %v4139, %v4135
    %v6220 = vpack.c.b16 %v4144, %v4140
    %v6221 = vpack.c.b16 %v4145, %v4141
    %v6222 = vpack.c.b16 %v4146, %v4142
    %v6223 = vpack.c.b16 %v4147, %v4143
    %v6224 = vpack.c.b16 %v4152, %v4148
    %v6225 = vpack.c.b16 %v4153, %v4149
    %v6226 = vpack.c.b16 %v4154, %v4150
    %v6227 = vpack.c.b16 %v4155, %v4151
    %v6228 = vpack.c.b16 %v4160, %v4156
    %v6229 = vpack.c.b16 %v4161, %v4157
    %v6230 = vpack.c.b16 %v4162, %v4158
    %v6231 = vpack.c.b16 %v4163, %v4159
    %v6232 = vpack.c.b16 %v4168, %v4164
    %v6233 = vpack.c.b16 %v4169, %v4165
    %v6234 = vpack.c.b16 %v4170, %v4166
    %v6235 = vpack.c.b16 %v4171, %v4167
    %v6236 = vpack.c.b16 %v4176, %v4172
    %v6237 = vpack.c.b16 %v4177, %v4173
    %v6238 = vpack.c.b16 %v4178, %v4174
    %v6239 = vpack.c.b16 %v4179, %v4175
    %v6240 = vpack.c.b16 %v4184, %v4180
    %v6241 = vpack.c.b16 %v4185, %v4181
    %v6242 = vpack.c.b16 %v4186, %v4182
    %v6243 = vpack.c.b16 %v4187, %v4183
    %v6244 = vpack.c.b16 %v4192, %v4188
    %v6245 = vpack.c.b16 %v4193, %v4189
    %v6246 = vpack.c.b16 %v4194, %v4190
    %v6247 = vpack.c.b16 %v4195, %v4191
    %v6248 = vpack.c.b16 %v4200, %v4196
    %v6249 = vpack.c.b16 %v4201, %v4197
    %v6250 = vpack.c.b16 %v4202, %v4198
    %v6251 = vpack.c.b16 %v4203, %v4199
    %v6252 = vpack.c.b16 %v4208, %v4204
    %v6253 = vpack.c.b16 %v4209, %v4205
    %v6254 = vpack.c.b16 %v4210, %v4206
    %v6255 = vpack.c.b16 %v4211, %v4207
    %v6256 = vpack.c.b16 %v4216, %v4212
    %v6257 = vpack.c.b16 %v4217, %v4213
    %v6258 = vpack.c.b16 %v4218, %v4214
    %v6259 = vpack.c.b16 %v4219, %v4215
    %v6260 = vpack.c.b16 %v4224, %v4220
    %v6261 = vpack.c.b16 %v4225, %v4221
    %v6262 = vpack.c.b16 %v4226, %v4222
    %v6263 = vpack.c.b16 %v4227, %v4223
    %v6264 = vpack.c.b16 %v4232, %v4228
    %v6265 = vpack.c.b16 %v4233, %v4229
    %v6266 = vpack.c.b16 %v4234, %v4230
    %v6267 = vpack.c.b16 %v4235, %v4231
    %v6268 = vpack.c.b16 %v4240, %v4236
    %v6269 = vpack.c.b16 %v4241, %v4237
    %v6270 = vpack.c.b16 %v4242, %v4238
    %v6271 = vpack.c.b16 %v4243, %v4239
    %v6272 = vpack.c.b16 %v4248, %v4244
    %v6273 = vpack.c.b16 %v4249, %v4245
    %v6274 = vpack.c.b16 %v4250, %v4246
    %v6275 = vpack.c.b16 %v4251, %v4247
    %v6276 = vpack.c.b16 %v4256, %v4252
    %v6277 = vpack.c.b16 %v4257, %v4253
    %v6278 = vpack.c.b16 %v4258, %v4254
    %v6279 = vpack.c.b16 %v4259, %v4255
    %v6280 = vpack.c.b16 %v4264, %v4260
    %v6281 = vpack.c.b16 %v4265, %v4261
    %v6282 = vpack.c.b16 %v4266, %v4262
    %v6283 = vpack.c.b16 %v4267, %v4263
    %v6284 = vpack.c.b16 %v4272, %v4268
    %v6285 = vpack.c.b16 %v4273, %v4269
    %v6286 = vpack.c.b16 %v4274, %v4270
    %v6287 = vpack.c.b16 %v4275, %v4271
    %v6288 = vpack.c.b16 %v4280, %v4276
    %v6289 = vpack.c.b16 %v4281, %v4277
    %v6290 = vpack.c.b16 %v4282, %v4278
    %v6291 = vpack.c.b16 %v4283, %v4279
    %v6292 = vpack.c.b16 %v4288, %v4284
    %v6293 = vpack.c.b16 %v4289, %v4285
    %v6294 = vpack.c.b16 %v4290, %v4286
    %v6295 = vpack.c.b16 %v4291, %v4287
    %v6296 = vpack.c.b16 %v4296, %v4292
    %v6297 = vpack.c.b16 %v4297, %v4293
    %v6298 = vpack.c.b16 %v4298, %v4294
    %v6299 = vpack.c.b16 %v4299, %v4295
    %v6300 = vpack.c.b16 %v4304, %v4300
    %v6301 = vpack.c.b16 %v4305, %v4301
    %v6302 = vpack.c.b16 %v4306, %v4302
    %v6303 = vpack.c.b16 %v4307, %v4303
    %v6304 = vpack.c.b16 %v4312, %v4308
    %v6305 = vpack.c.b16 %v4313, %v4309
    %v6306 = vpack.c.b16 %v4314, %v4310
    %v6307 = vpack.c.b16 %v4315, %v4311
    %v6308 = vpack.c.b16 %v4320, %v4316
    %v6309 = vpack.c.b16 %v4321, %v4317
    %v6310 = vpack.c.b16 %v4322, %v4318
    %v6311 = vpack.c.b16 %v4323, %v4319
    %v6312 = vpack.c.b16 %v4328, %v4324
    %v6313 = vpack.c.b16 %v4329, %v4325
    %v6314 = vpack.c.b16 %v4330, %v4326
    %v6315 = vpack.c.b16 %v4331, %v4327
    %v6316 = vpack.c.b16 %v4336, %v4332
    %v6317 = vpack.c.b16 %v4337, %v4333
    %v6318 = vpack.c.b16 %v4338, %v4334
    %v6319 = vpack.c.b16 %v4339, %v4335
    %v6320 = vpack.c.b16 %v4344, %v4340
    %v6321 = vpack.c.b16 %v4345, %v4341
    %v6322 = vpack.c.b16 %v4346, %v4342
    %v6323 = vpack.c.b16 %v4347, %v4343
    %v6324 = vpack.c.b16 %v4352, %v4348
    %v6325 = vpack.c.b16 %v4353, %v4349
    %v6326 = vpack.c.b16 %v4354, %v4350
    %v6327 = vpack.c.b16 %v4355, %v4351
    %v6328 = vpack.c.b16 %v4360, %v4356
    %v6329 = vpack.c.b16 %v4361, %v4357
    %v6330 = vpack.c.b16 %v4362, %v4358
    %v6331 = vpack.c.b16 %v4363, %v4359
    %v6332 = vpack.c.b16 %v4368, %v4364
    %v6333 = vpack.c.b16 %v4369, %v4365
    %v6334 = vpack.c.b16 %v4370, %v4366
    %v6335 = vpack.c.b16 %v4371, %v4367
    %v6336 = vpack.c.b16 %v4376, %v4372
    %v6337 = vpack.c.b16 %v4377, %v4373
    %v6338 = vpack.c.b16 %v4378, %v4374
    %v6339 = vpack.c.b16 %v4379, %v4375
    %v6340 = vpack.c.b16 %v4384, %v4380
    %v6341 = vpack.c.b16 %v4385, %v4381
    %v6342 = vpack.c.b16 %v4386, %v4382
    %v6343 = vpack.c.b16 %v4387, %v4383
    %v6344 = vpack.c.b16 %v4392, %v4388
    %v6345 = vpack.c.b16 %v4393, %v4389
    %v6346 = vpack.c.b16 %v4394, %v4390
    %v6347 = vpack.c.b16 %v4395, %v4391
    %v6348 = vpack.c.b16 %v4400, %v4396
    %v6349 = vpack.c.b16 %v4401, %v4397
    %v6350 = vpack.c.b16 %v4402, %v4398
    %v6351 = vpack.c.b16 %v4403, %v4399
    %v6352 = vpack.c.b16 %v4408, %v4404
    %v6353 = vpack.c.b16 %v4409, %v4405
    %v6354 = vpack.c.b16 %v4410, %v4406
    %v6355 = vpack.c.b16 %v4411, %v4407
    %v6356 = vpack.c.b16 %v4416, %v4412
    %v6357 = vpack.c.b16 %v4417, %v4413
    %v6358 = vpack.c.b16 %v4418, %v4414
    %v6359 = vpack.c.b16 %v4419, %v4415
    %v6360 = vpack.c.b16 %v4424, %v4420
    %v6361 = vpack.c.b16 %v4425, %v4421
    %v6362 = vpack.c.b16 %v4426, %v4422
    %v6363 = vpack.c.b16 %v4427, %v4423
    %v6364 = vpack.c.b16 %v4432, %v4428
    %v6365 = vpack.c.b16 %v4433, %v4429
    %v6366 = vpack.c.b16 %v4434, %v4430
    %v6367 = vpack.c.b16 %v4435, %v4431
    %v6368 = vpack.c.b16 %v4440, %v4436
    %v6369 = vpack.c.b16 %v4441, %v4437
    %v6370 = vpack.c.b16 %v4442, %v4438
    %v6371 = vpack.c.b16 %v4443, %v4439
    %v6372 = vpack.c.b16 %v4448, %v4444
    %v6373 = vpack.c.b16 %v4449, %v4445
    %v6374 = vpack.c.b16 %v4450, %v4446
    %v6375 = vpack.c.b16 %v4451, %v4447
    %v6376 = vpack.c.b16 %v4456, %v4452
    %v6377 = vpack.c.b16 %v4457, %v4453
    %v6378 = vpack.c.b16 %v4458, %v4454
    %v6379 = vpack.c.b16 %v4459, %v4455
    %v6380 = vpack.c.b16 %v4464, %v4460
    %v6381 = vpack.c.b16 %v4465, %v4461
    %v6382 = vpack.c.b16 %v4466, %v4462
    %v6383 = vpack.c.b16 %v4467, %v4463
    %v6384 = vpack.c.b16 %v4472, %v4468
    %v6385 = vpack.c.b16 %v4473, %v4469
    %v6386 = vpack.c.b16 %v4474, %v4470
    %v6387 = vpack.c.b16 %v4475, %v4471
    %v6388 = vpack.c.b16 %v4480, %v4476
    %v6389 = vpack.c.b16 %v4481, %v4477
    %v6390 = vpack.c.b16 %v4482, %v4478
    %v6391 = vpack.c.b16 %v4483, %v4479
    %v6392 = vpack.c.b16 %v4488, %v4484
    %v6393 = vpack.c.b16 %v4489, %v4485
    %v6394 = vpack.c.b16 %v4490, %v4486
    %v6395 = vpack.c.b16 %v4491, %v4487
    %v6396 = vpack.c.b16 %v4496, %v4492
    %v6397 = vpack.c.b16 %v4497, %v4493
    %v6398 = vpack.c.b16 %v4498, %v4494
    %v6399 = vpack.c.b16 %v4499, %v4495
    %v6400 = vpack.c.b16 %v4504, %v4500
    %v6401 = vpack.c.b16 %v4505, %v4501
    %v6402 = vpack.c.b16 %v4506, %v4502
    %v6403 = vpack.c.b16 %v4507, %v4503
    %v6404 = vpack.c.b16 %v4512, %v4508
    %v6405 = vpack.c.b16 %v4513, %v4509
    %v6406 = vpack.c.b16 %v4514, %v4510
    %v6407 = vpack.c.b16 %v4515, %v4511
    %v6408 = vpack.c.b16 %v4520, %v4516
    %v6409 = vpack.c.b16 %v4521, %v4517
    %v6410 = vpack.c.b16 %v4522, %v4518
    %v6411 = vpack.c.b16 %v4523, %v4519
    %v6412 = vpack.c.b16 %v4528, %v4524
    %v6413 = vpack.c.b16 %v4529, %v4525
    %v6414 = vpack.c.b16 %v4530, %v4526
    %v6415 = vpack.c.b16 %v4531, %v4527
    %v6416 = vpack.c.b16 %v4536, %v4532
    %v6417 = vpack.c.b16 %v4537, %v4533
    %v6418 = vpack.c.b16 %v4538, %v4534
    %v6419 = vpack.c.b16 %v4539, %v4535
    %v6420 = vpack.c.b16 %v4544, %v4540
    %v6421 = vpack.c.b16 %v4545, %v4541
    %v6422 = vpack.c.b16 %v4546, %v4542
    %v6423 = vpack.c.b16 %v4547, %v4543
    %v6424 = vpack.c.b16 %v4552, %v4548
    %v6425 = vpack.c.b16 %v4553, %v4549
    %v6426 = vpack.c.b16 %v4554, %v4550
    %v6427 = vpack.c.b16 %v4555, %v4551
    %v6428 = vpack.c.b16 %v4560, %v4556
    %v6429 = vpack.c.b16 %v4561, %v4557
    %v6430 = vpack.c.b16 %v4562, %v4558
    %v6431 = vpack.c.b16 %v4563, %v4559
    %v6432 = vpack.c.b16 %v4568, %v4564
    %v6433 = vpack.c.b16 %v4569, %v4565
    %v6434 = vpack.c.b16 %v4570, %v4566
    %v6435 = vpack.c.b16 %v4571, %v4567
    %v6436 = vpack.c.b16 %v4576, %v4572
    %v6437 = vpack.c.b16 %v4577, %v4573
    %v6438 = vpack.c.b16 %v4578, %v4574
    %v6439 = vpack.c.b16 %v4579, %v4575
    %v6440 = vpack.c.b16 %v4584, %v4580
    %v6441 = vpack.c.b16 %v4585, %v4581
    %v6442 = vpack.c.b16 %v4586, %v4582
    %v6443 = vpack.c.b16 %v4587, %v4583
    %v6444 = vpack.c.b16 %v4592, %v4588
    %v6445 = vpack.c.b16 %v4593, %v4589
    %v6446 = vpack.c.b16 %v4594, %v4590
    %v6447 = vpack.c.b16 %v4595, %v4591
    %v6448 = vpack.c.b16 %v4600, %v4596
    %v6449 = vpack.c.b16 %v4601, %v4597
    %v6450 = vpack.c.b16 %v4602, %v4598
    %v6451 = vpack.c.b16 %v4603, %v4599
    %v6452 = vpack.c.b16 %v4608, %v4604
    %v6453 = vpack.c.b16 %v4609, %v4605
    %v6454 = vpack.c.b16 %v4610, %v4606
    %v6455 = vpack.c.b16 %v4611, %v4607
    %v6456 = vpack.c.b16 %v4616, %v4612
    %v6457 = vpack.c.b16 %v4617, %v4613
    %v6458 = vpack.c.b16 %v4618, %v4614
    %v6459 = vpack.c.b16 %v4619, %v4615
    %v6460 = vpack.c.b16 %v4624, %v4620
    %v6461 = vpack.c.b16 %v4625, %v4621
    %v6462 = vpack.c.b16 %v4626, %v4622
    %v6463 = vpack.c.b16 %v4627, %v4623
    %v6464 = vpack.c.b16 %v4632, %v4628
    %v6465 = vpack.c.b16 %v4633, %v4629
    %v6466 = vpack.c.b16 %v4634, %v4630
    %v6467 = vpack.c.b16 %v4635, %v4631
    %v6468 = vpack.c.b16 %v4640, %v4636
    %v6469 = vpack.c.b16 %v4641, %v4637
    %v6470 = vpack.c.b16 %v4642, %v4638
    %v6471 = vpack.c.b16 %v4643, %v4639
    %v6472 = vpack.c.b16 %v4648, %v4644
    %v6473 = vpack.c.b16 %v4649, %v4645
    %v6474 = vpack.c.b16 %v4650, %v4646
    %v6475 = vpack.c.b16 %v4651, %v4647
    %v6476 = vpack.c.b16 %v4656, %v4652
    %v6477 = vpack.c.b16 %v4657, %v4653
    %v6478 = vpack.c.b16 %v4658, %v4654
    %v6479 = vpack.c.b16 %v4659, %v4655
    %v6480 = vpack.c.b16 %v4664, %v4660
    %v6481 = vpack.c.b16 %v4665, %v4661
    %v6482 = vpack.c.b16 %v4666, %v4662
    %v6483 = vpack.c.b16 %v4667, %v4663
    %v6484 = vpack.c.b16 %v4672, %v4668
    %v6485 = vpack.c.b16 %v4673, %v4669
    %v6486 = vpack.c.b16 %v4674, %v4670
    %v6487 = vpack.c.b16 %v4675, %v4671
    %v6488 = vpack.c.b16 %v4680, %v4676
    %v6489 = vpack.c.b16 %v4681, %v4677
    %v6490 = vpack.c.b16 %v4682, %v4678
    %v6491 = vpack.c.b16 %v4683, %v4679
    %v6492 = vpack.c.b16 %v4688, %v4684
    %v6493 = vpack.c.b16 %v4689, %v4685
    %v6494 = vpack.c.b16 %v4690, %v4686
    %v6495 = vpack.c.b16 %v4691, %v4687
    %v6496 = vpack.c.b16 %v4696, %v4692
    %v6497 = vpack.c.b16 %v4697, %v4693
    %v6498 = vpack.c.b16 %v4698, %v4694
    %v6499 = vpack.c.b16 %v4699, %v4695
    %v6500 = vpack.c.b16 %v4704, %v4700
    %v6501 = vpack.c.b16 %v4705, %v4701
    %v6502 = vpack.c.b16 %v4706, %v4702
    %v6503 = vpack.c.b16 %v4707, %v4703
    %v6504 = vpack.c.b16 %v4712, %v4708
    %v6505 = vpack.c.b16 %v4713, %v4709
    %v6506 = vpack.c.b16 %v4714, %v4710
    %v6507 = vpack.c.b16 %v4715, %v4711
    %v6508 = vpack.c.b16 %v4720, %v4716
    %v6509 = vpack.c.b16 %v4721, %v4717
    %v6510 = vpack.c.b16 %v4722, %v4718
    %v6511 = vpack.c.b16 %v4723, %v4719
    %v6512 = vpack.c.b16 %v4728, %v4724
    %v6513 = vpack.c.b16 %v4729, %v4725
    %v6514 = vpack.c.b16 %v4730, %v4726
    %v6515 = vpack.c.b16 %v4731, %v4727
    %v6516 = vpack.c.b16 %v4736, %v4732
    %v6517 = vpack.c.b16 %v4737, %v4733
    %v6518 = vpack.c.b16 %v4738, %v4734
    %v6519 = vpack.c.b16 %v4739, %v4735
    %v6520 = vpack.c.b16 %v4744, %v4740
    %v6521 = vpack.c.b16 %v4745, %v4741
    %v6522 = vpack.c.b16 %v4746, %v4742
    %v6523 = vpack.c.b16 %v4747, %v4743
    %v6524 = vpack.c.b16 %v4752, %v4748
    %v6525 = vpack.c.b16 %v4753, %v4749
    %v6526 = vpack.c.b16 %v4754, %v4750
    %v6527 = vpack.c.b16 %v4755, %v4751
    %v6528 = vpack.c.b16 %v4760, %v4756
    %v6529 = vpack.c.b16 %v4761, %v4757
    %v6530 = vpack.c.b16 %v4762, %v4758
    %v6531 = vpack.c.b16 %v4763, %v4759
    %v6532 = vpack.c.b16 %v4768, %v4764
    %v6533 = vpack.c.b16 %v4769, %v4765
    %v6534 = vpack.c.b16 %v4770, %v4766
    %v6535 = vpack.c.b16 %v4771, %v4767
    %v6536 = vpack.c.b16 %v4776, %v4772
    %v6537 = vpack.c.b16 %v4777, %v4773
    %v6538 = vpack.c.b16 %v4778, %v4774
    %v6539 = vpack.c.b16 %v4779, %v4775
    %v6540 = vpack.c.b16 %v4784, %v4780
    %v6541 = vpack.c.b16 %v4785, %v4781
    %v6542 = vpack.c.b16 %v4786, %v4782
    %v6543 = vpack.c.b16 %v4787, %v4783
    %v6544 = vpack.c.b16 %v4792, %v4788
    %v6545 = vpack.c.b16 %v4793, %v4789
    %v6546 = vpack.c.b16 %v4794, %v4790
    %v6547 = vpack.c.b16 %v4795, %v4791
    %v6548 = vpack.c.b16 %v4800, %v4796
    %v6549 = vpack.c.b16 %v4801, %v4797
    %v6550 = vpack.c.b16 %v4802, %v4798
    %v6551 = vpack.c.b16 %v4803, %v4799
    %v6552 = vpack.c.b16 %v4808, %v4804
    %v6553 = vpack.c.b16 %v4809, %v4805
    %v6554 = vpack.c.b16 %v4810, %v4806
    %v6555 = vpack.c.b16 %v4811, %v4807
    %v6556 = vpack.c.b16 %v4816, %v4812
    %v6557 = vpack.c.b16 %v4817, %v4813
    %v6558 = vpack.c.b16 %v4818, %v4814
    %v6559 = vpack.c.b16 %v4819, %v4815
    %v6560 = vpack.c.b16 %v4824, %v4820
    %v6561 = vpack.c.b16 %v4825, %v4821
    %v6562 = vpack.c.b16 %v4826, %v4822
    %v6563 = vpack.c.b16 %v4827, %v4823
    %v6564 = vpack.c.b16 %v4832, %v4828
    %v6565 = vpack.c.b16 %v4833, %v4829
    %v6566 = vpack.c.b16 %v4834, %v4830
    %v6567 = vpack.c.b16 %v4835, %v4831
    %v6568 = vpack.c.b16 %v4840, %v4836
    %v6569 = vpack.c.b16 %v4841, %v4837
    %v6570 = vpack.c.b16 %v4842, %v4838
    %v6571 = vpack.c.b16 %v4843, %v4839
    %v6572 = vpack.c.b16 %v4848, %v4844
    %v6573 = vpack.c.b16 %v4849, %v4845
    %v6574 = vpack.c.b16 %v4850, %v4846
    %v6575 = vpack.c.b16 %v4851, %v4847
    %v6576 = vpack.c.b16 %v4856, %v4852
    %v6577 = vpack.c.b16 %v4857, %v4853
    %v6578 = vpack.c.b16 %v4858, %v4854
    %v6579 = vpack.c.b16 %v4859, %v4855
    %v6580 = vpack.c.b16 %v4864, %v4860
    %v6581 = vpack.c.b16 %v4865, %v4861
    %v6582 = vpack.c.b16 %v4866, %v4862
    %v6583 = vpack.c.b16 %v4867, %v4863
    %v6584 = vpack.c.b16 %v4872, %v4868
    %v6585 = vpack.c.b16 %v4873, %v4869
    %v6586 = vpack.c.b16 %v4874, %v4870
    %v6587 = vpack.c.b16 %v4875, %v4871
    %v6588 = vpack.c.b16 %v4880, %v4876
    %v6589 = vpack.c.b16 %v4881, %v4877
    %v6590 = vpack.c.b16 %v4882, %v4878
    %v6591 = vpack.c.b16 %v4883, %v4879
    %v6592 = vpack.c.b16 %v4888, %v4884
    %v6593 = vpack.c.b16 %v4889, %v4885
    %v6594 = vpack.c.b16 %v4890, %v4886
    %v6595 = vpack.c.b16 %v4891, %v4887
    %v6596 = vpack.c.b16 %v4896, %v4892
    %v6597 = vpack.c.b16 %v4897, %v4893
    %v6598 = vpack.c.b16 %v4898, %v4894
    %v6599 = vpack.c.b16 %v4899, %v4895
    %v6600 = vpack.c.b16 %v4904, %v4900
    %v6601 = vpack.c.b16 %v4905, %v4901
    %v6602 = vpack.c.b16 %v4906, %v4902
    %v6603 = vpack.c.b16 %v4907, %v4903
    %v6604 = vpack.c.b16 %v4912, %v4908
    %v6605 = vpack.c.b16 %v4913, %v4909
    %v6606 = vpack.c.b16 %v4914, %v4910
    %v6607 = vpack.c.b16 %v4915, %v4911
    %v6608 = vpack.c.b16 %v4920, %v4916
    %v6609 = vpack.c.b16 %v4921, %v4917
    %v6610 = vpack.c.b16 %v4922, %v4918
    %v6611 = vpack.c.b16 %v4923, %v4919
    %v6612 = vpack.c.b16 %v4928, %v4924
    %v6613 = vpack.c.b16 %v4929, %v4925
    %v6614 = vpack.c.b16 %v4930, %v4926
    %v6615 = vpack.c.b16 %v4931, %v4927
    %v6616 = vpack.c.b16 %v4936, %v4932
    %v6617 = vpack.c.b16 %v4937, %v4933
    %v6618 = vpack.c.b16 %v4938, %v4934
    %v6619 = vpack.c.b16 %v4939, %v4935
    %v6620 = vpack.c.b16 %v4944, %v4940
    %v6621 = vpack.c.b16 %v4945, %v4941
    %v6622 = vpack.c.b16 %v4946, %v4942
    %v6623 = vpack.c.b16 %v4947, %v4943
    %v6624 = vpack.c.b16 %v4952, %v4948
    %v6625 = vpack.c.b16 %v4953, %v4949
    %v6626 = vpack.c.b16 %v4954, %v4950
    %v6627 = vpack.c.b16 %v4955, %v4951
    %v6628 = vpack.c.b16 %v4960, %v4956
    %v6629 = vpack.c.b16 %v4961, %v4957
    %v6630 = vpack.c.b16 %v4962, %v4958
    %v6631 = vpack.c.b16 %v4963, %v4959
    %v6632 = vpack.c.b16 %v4968, %v4964
    %v6633 = vpack.c.b16 %v4969, %v4965
    %v6634 = vpack.c.b16 %v4970, %v4966
    %v6635 = vpack.c.b16 %v4971, %v4967
    %v6636 = vpack.c.b16 %v4976, %v4972
    %v6637 = vpack.c.b16 %v4977, %v4973
    %v6638 = vpack.c.b16 %v4978, %v4974
    %v6639 = vpack.c.b16 %v4979, %v4975
    %v6640 = vpack.c.b16 %v4984, %v4980
    %v6641 = vpack.c.b16 %v4985, %v4981
    %v6642 = vpack.c.b16 %v4986, %v4982
    %v6643 = vpack.c.b16 %v4987, %v4983
    %v6644 = vpack.c.b16 %v4992, %v4988
    %v6645 = vpack.c.b16 %v4993, %v4989
    %v6646 = vpack.c.b16 %v4994, %v4990
    %v6647 = vpack.c.b16 %v4995, %v4991
    %v6648 = vpack.c.b16 %v5000, %v4996
    %v6649 = vpack.c.b16 %v5001, %v4997
    %v6650 = vpack.c.b16 %v5002, %v4998
    %v6651 = vpack.c.b16 %v5003, %v4999
    %v6652 = vpack.c.b16 %v5008, %v5004
    %v6653 = vpack.c.b16 %v5009, %v5005
    %v6654 = vpack.c.b16 %v5010, %v5006
    %v6655 = vpack.c.b16 %v5011, %v5007
    %v6656 = vpack.c.b16 %v5016, %v5012
    %v6657 = vpack.c.b16 %v5017, %v5013
    %v6658 = vpack.c.b16 %v5018, %v5014
    %v6659 = vpack.c.b16 %v5019, %v5015
    %v6660 = vpack.c.b16 %v5024, %v5020
    %v6661 = vpack.c.b16 %v5025, %v5021
    %v6662 = vpack.c.b16 %v5026, %v5022
    %v6663 = vpack.c.b16 %v5027, %v5023
    %v6664 = vpack.c.b16 %v5032, %v5028
    %v6665 = vpack.c.b16 %v5033, %v5029
    %v6666 = vpack.c.b16 %v5034, %v5030
    %v6667 = vpack.c.b16 %v5035, %v5031
    %v6668 = vpack.c.b16 %v5040, %v5036
    %v6669 = vpack.c.b16 %v5041, %v5037
    %v6670 = vpack.c.b16 %v5042, %v5038
    %v6671 = vpack.c.b16 %v5043, %v5039
    %v6672 = vpack.c.b16 %v5048, %v5044
    %v6673 = vpack.c.b16 %v5049, %v5045
    %v6674 = vpack.c.b16 %v5050, %v5046
    %v6675 = vpack.c.b16 %v5051, %v5047
    %v6676 = vpack.c.b16 %v5056, %v5052
    %v6677 = vpack.c.b16 %v5057, %v5053
    %v6678 = vpack.c.b16 %v5058, %v5054
    %v6679 = vpack.c.b16 %v5059, %v5055
    %v6680 = vpack.c.b16 %v5064, %v5060
    %v6681 = vpack.c.b16 %v5065, %v5061
    %v6682 = vpack.c.b16 %v5066, %v5062
    %v6683 = vpack.c.b16 %v5067, %v5063
    %v6684 = vpack.c.b16 %v5072, %v5068
    %v6685 = vpack.c.b16 %v5073, %v5069
    %v6686 = vpack.c.b16 %v5074, %v5070
    %v6687 = vpack.c.b16 %v5075, %v5071
    %v6688 = vpack.c.b16 %v5080, %v5076
    %v6689 = vpack.c.b16 %v5081, %v5077
    %v6690 = vpack.c.b16 %v5082, %v5078
    %v6691 = vpack.c.b16 %v5083, %v5079
    %v6692 = vpack.c.b16 %v5088, %v5084
    %v6693 = vpack.c.b16 %v5089, %v5085
    %v6694 = vpack.c.b16 %v5090, %v5086
    %v6695 = vpack.c.b16 %v5091, %v5087
    %v6696 = vpack.c.b16 %v5096, %v5092
    %v6697 = vpack.c.b16 %v5097, %v5093
    %v6698 = vpack.c.b16 %v5098, %v5094
    %v6699 = vpack.c.b16 %v5099, %v5095
    %v6700 = vpack.c.b16 %v5104, %v5100
    %v6701 = vpack.c.b16 %v5105, %v5101
    %v6702 = vpack.c.b16 %v5106, %v5102
    %v6703 = vpack.c.b16 %v5107, %v5103
    %v6704 = vpack.c.b16 %v5112, %v5108
    %v6705 = vpack.c.b16 %v5113, %v5109
    %v6706 = vpack.c.b16 %v5114, %v5110
    %v6707 = vpack.c.b16 %v5115, %v5111
    %v6708 = vpack.c.b16 %v5120, %v5116
    %v6709 = vpack.c.b16 %v5121, %v5117
    %v6710 = vpack.c.b16 %v5122, %v5118
    %v6711 = vpack.c.b16 %v5123, %v5119
    %v6712 = vpack.c.b16 %v5128, %v5124
    %v6713 = vpack.c.b16 %v5129, %v5125
    %v6714 = vpack.c.b16 %v5130, %v5126
    %v6715 = vpack.c.b16 %v5131, %v5127
    %v6716 = vpack.c.b16 %v5136, %v5132
    %v6717 = vpack.c.b16 %v5137, %v5133
    %v6718 = vpack.c.b16 %v5138, %v5134
    %v6719 = vpack.c.b16 %v5139, %v5135
    %v6720 = vpack.c.b16 %v5144, %v5140
    %v6721 = vpack.c.b16 %v5145, %v5141
    %v6722 = vpack.c.b16 %v5146, %v5142
    %v6723 = vpack.c.b16 %v5147, %v5143
    %v6724 = vpack.c.b16 %v5152, %v5148
    %v6725 = vpack.c.b16 %v5153, %v5149
    %v6726 = vpack.c.b16 %v5154, %v5150
    %v6727 = vpack.c.b16 %v5155, %v5151
    %v6728 = vpack.c.b16 %v5160, %v5156
    %v6729 = vpack.c.b16 %v5161, %v5157
    %v6730 = vpack.c.b16 %v5162, %v5158
    %v6731 = vpack.c.b16 %v5163, %v5159
    %v6732 = vpack.c.b16 %v5168, %v5164
    %v6733 = vpack.c.b16 %v5169, %v5165
    %v6734 = vpack.c.b16 %v5170, %v5166
    %v6735 = vpack.c.b16 %v5171, %v5167
    %v6736 = vpack.c.b16 %v5176, %v5172
    %v6737 = vpack.c.b16 %v5177, %v5173
    %v6738 = vpack.c.b16 %v5178, %v5174
    %v6739 = vpack.c.b16 %v5179, %v5175
    %v6740 = vpack.c.b16 %v5184, %v5180
    %v6741 = vpack.c.b16 %v5185, %v5181
    %v6742 = vpack.c.b16 %v5186, %v5182
    %v6743 = vpack.c.b16 %v5187, %v5183
    %v6744 = vpack.c.b16 %v5192, %v5188
    %v6745 = vpack.c.b16 %v5193, %v5189
    %v6746 = vpack.c.b16 %v5194, %v5190
    %v6747 = vpack.c.b16 %v5195, %v5191
    %v6748 = vpack.c.b16 %v5200, %v5196
    %v6749 = vpack.c.b16 %v5201, %v5197
    %v6750 = vpack.c.b16 %v5202, %v5198
    %v6751 = vpack.c.b16 %v5203, %v5199
    %v6752 = vpack.c.b16 %v5208, %v5204
    %v6753 = vpack.c.b16 %v5209, %v5205
    %v6754 = vpack.c.b16 %v5210, %v5206
    %v6755 = vpack.c.b16 %v5211, %v5207
    %v6756 = vpack.c.b16 %v5216, %v5212
    %v6757 = vpack.c.b16 %v5217, %v5213
    %v6758 = vpack.c.b16 %v5218, %v5214
    %v6759 = vpack.c.b16 %v5219, %v5215
    %v6760 = vpack.c.b16 %v5224, %v5220
    %v6761 = vpack.c.b16 %v5225, %v5221
    %v6762 = vpack.c.b16 %v5226, %v5222
    %v6763 = vpack.c.b16 %v5227, %v5223
    %v6764 = vpack.c.b16 %v5232, %v5228
    %v6765 = vpack.c.b16 %v5233, %v5229
    %v6766 = vpack.c.b16 %v5234, %v5230
    %v6767 = vpack.c.b16 %v5235, %v5231
    %v6768 = vpack.c.b16 %v5240, %v5236
    %v6769 = vpack.c.b16 %v5241, %v5237
    %v6770 = vpack.c.b16 %v5242, %v5238
    %v6771 = vpack.c.b16 %v5243, %v5239
    %v6772 = vpack.c.b16 %v5248, %v5244
    %v6773 = vpack.c.b16 %v5249, %v5245
    %v6774 = vpack.c.b16 %v5250, %v5246
    %v6775 = vpack.c.b16 %v5251, %v5247
    %v6776 = vpack.c.b16 %v5256, %v5252
    %v6777 = vpack.c.b16 %v5257, %v5253
    %v6778 = vpack.c.b16 %v5258, %v5254
    %v6779 = vpack.c.b16 %v5259, %v5255
    %v6780 = vpack.c.b16 %v5264, %v5260
    %v6781 = vpack.c.b16 %v5265, %v5261
    %v6782 = vpack.c.b16 %v5266, %v5262
    %v6783 = vpack.c.b16 %v5267, %v5263
    %v6784 = vpack.c.b16 %v5272, %v5268
    %v6785 = vpack.c.b16 %v5273, %v5269
    %v6786 = vpack.c.b16 %v5274, %v5270
    %v6787 = vpack.c.b16 %v5275, %v5271
    %v6788 = vpack.c.b16 %v5280, %v5276
    %v6789 = vpack.c.b16 %v5281, %v5277
    %v6790 = vpack.c.b16 %v5282, %v5278
    %v6791 = vpack.c.b16 %v5283, %v5279
    %v6792 = vpack.c.b16 %v5288, %v5284
    %v6793 = vpack.c.b16 %v5289, %v5285
    %v6794 = vpack.c.b16 %v5290, %v5286
    %v6795 = vpack.c.b16 %v5291, %v5287
    %v6796 = vpack.c.b16 %v5296, %v5292
    %v6797 = vpack.c.b16 %v5297, %v5293
    %v6798 = vpack.c.b16 %v5298, %v5294
    %v6799 = vpack.c.b16 %v5299, %v5295
    %v6800 = vpack.c.b16 %v5304, %v5300
    %v6801 = vpack.c.b16 %v5305, %v5301
    %v6802 = vpack.c.b16 %v5306, %v5302
    %v6803 = vpack.c.b16 %v5307, %v5303
    %v6804 = vpack.c.b16 %v5312, %v5308
    %v6805 = vpack.c.b16 %v5313, %v5309
    %v6806 = vpack.c.b16 %v5314, %v5310
    %v6807 = vpack.c.b16 %v5315, %v5311
    %v6808 = vpack.c.b16 %v5320, %v5316
    %v6809 = vpack.c.b16 %v5321, %v5317
    %v6810 = vpack.c.b16 %v5322, %v5318
    %v6811 = vpack.c.b16 %v5323, %v5319
    %v6812 = vpack.c.b16 %v5328, %v5324
    %v6813 = vpack.c.b16 %v5329, %v5325
    %v6814 = vpack.c.b16 %v5330, %v5326
    %v6815 = vpack.c.b16 %v5331, %v5327
    %v6816 = vpack.c.b16 %v5336, %v5332
    %v6817 = vpack.c.b16 %v5337, %v5333
    %v6818 = vpack.c.b16 %v5338, %v5334
    %v6819 = vpack.c.b16 %v5339, %v5335
    %v6820 = vpack.c.b16 %v5344, %v5340
    %v6821 = vpack.c.b16 %v5345, %v5341
    %v6822 = vpack.c.b16 %v5346, %v5342
    %v6823 = vpack.c.b16 %v5347, %v5343
    %v6824 = vpack.c.b16 %v5352, %v5348
    %v6825 = vpack.c.b16 %v5353, %v5349
    %v6826 = vpack.c.b16 %v5354, %v5350
    %v6827 = vpack.c.b16 %v5355, %v5351
    %v6828 = vpack.c.b16 %v5360, %v5356
    %v6829 = vpack.c.b16 %v5361, %v5357
    %v6830 = vpack.c.b16 %v5362, %v5358
    %v6831 = vpack.c.b16 %v5363, %v5359
    %v6832 = vpack.c.b16 %v5368, %v5364
    %v6833 = vpack.c.b16 %v5369, %v5365
    %v6834 = vpack.c.b16 %v5370, %v5366
    %v6835 = vpack.c.b16 %v5371, %v5367
    %v6836 = vpack.c.b16 %v5376, %v5372
    %v6837 = vpack.c.b16 %v5377, %v5373
    %v6838 = vpack.c.b16 %v5378, %v5374
    %v6839 = vpack.c.b16 %v5379, %v5375
    %v6840 = vpack.c.b16 %v5384, %v5380
    %v6841 = vpack.c.b16 %v5385, %v5381
    %v6842 = vpack.c.b16 %v5386, %v5382
    %v6843 = vpack.c.b16 %v5387, %v5383
    %v6844 = vpack.c.b16 %v5392, %v5388
    %v6845 = vpack.c.b16 %v5393, %v5389
    %v6846 = vpack.c.b16 %v5394, %v5390
    %v6847 = vpack.c.b16 %v5395, %v5391
    %v6848 = vpack.c.b16 %v5400, %v5396
    %v6849 = vpack.c.b16 %v5401, %v5397
    %v6850 = vpack.c.b16 %v5402, %v5398
    %v6851 = vpack.c.b16 %v5403, %v5399
    %v6852 = vpack.c.b16 %v5408, %v5404
    %v6853 = vpack.c.b16 %v5409, %v5405
    %v6854 = vpack.c.b16 %v5410, %v5406
    %v6855 = vpack.c.b16 %v5411, %v5407
    %v6856 = vpack.c.b16 %v5416, %v5412
    %v6857 = vpack.c.b16 %v5417, %v5413
    %v6858 = vpack.c.b16 %v5418, %v5414
    %v6859 = vpack.c.b16 %v5419, %v5415
    %v6860 = vpack.c.b16 %v5424, %v5420
    %v6861 = vpack.c.b16 %v5425, %v5421
    %v6862 = vpack.c.b16 %v5426, %v5422
    %v6863 = vpack.c.b16 %v5427, %v5423
    %v6864 = vpack.c.b16 %v5432, %v5428
    %v6865 = vpack.c.b16 %v5433, %v5429
    %v6866 = vpack.c.b16 %v5434, %v5430
    %v6867 = vpack.c.b16 %v5435, %v5431
    %v6868 = vpack.c.b16 %v5440, %v5436
    %v6869 = vpack.c.b16 %v5441, %v5437
    %v6870 = vpack.c.b16 %v5442, %v5438
    %v6871 = vpack.c.b16 %v5443, %v5439
    %v6872 = vpack.c.b16 %v5448, %v5444
    %v6873 = vpack.c.b16 %v5449, %v5445
    %v6874 = vpack.c.b16 %v5450, %v5446
    %v6875 = vpack.c.b16 %v5451, %v5447
    %v6876 = vpack.c.b16 %v5456, %v5452
    %v6877 = vpack.c.b16 %v5457, %v5453
    %v6878 = vpack.c.b16 %v5458, %v5454
    %v6879 = vpack.c.b16 %v5459, %v5455
    %v6880 = vpack.c.b16 %v5464, %v5460
    %v6881 = vpack.c.b16 %v5465, %v5461
    %v6882 = vpack.c.b16 %v5466, %v5462
    %v6883 = vpack.c.b16 %v5467, %v5463
    %v6884 = vpack.c.b16 %v5472, %v5468
    %v6885 = vpack.c.b16 %v5473, %v5469
    %v6886 = vpack.c.b16 %v5474, %v5470
    %v6887 = vpack.c.b16 %v5475, %v5471
    %v6888 = vpack.c.b16 %v5480, %v5476
    %v6889 = vpack.c.b16 %v5481, %v5477
    %v6890 = vpack.c.b16 %v5482, %v5478
    %v6891 = vpack.c.b16 %v5483, %v5479
    %v6892 = vpack.c.b16 %v5488, %v5484
    %v6893 = vpack.c.b16 %v5489, %v5485
    %v6894 = vpack.c.b16 %v5490, %v5486
    %v6895 = vpack.c.b16 %v5491, %v5487
    %v6896 = vpack.c.b16 %v5496, %v5492
    %v6897 = vpack.c.b16 %v5497, %v5493
    %v6898 = vpack.c.b16 %v5498, %v5494
    %v6899 = vpack.c.b16 %v5499, %v5495
    %v6900 = vpack.c.b16 %v5504, %v5500
    %v6901 = vpack.c.b16 %v5505, %v5501
    %v6902 = vpack.c.b16 %v5506, %v5502
    %v6903 = vpack.c.b16 %v5507, %v5503
    %v6904 = vpack.c.b16 %v5512, %v5508
    %v6905 = vpack.c.b16 %v5513, %v5509
    %v6906 = vpack.c.b16 %v5514, %v5510
    %v6907 = vpack.c.b16 %v5515, %v5511
    %v6908 = vpack.c.b16 %v5520, %v5516
    %v6909 = vpack.c.b16 %v5521, %v5517
    %v6910 = vpack.c.b16 %v5522, %v5518
    %v6911 = vpack.c.b16 %v5523, %v5519
    %v6912 = vpack.c.b16 %v5528, %v5524
    %v6913 = vpack.c.b16 %v5529, %v5525
    %v6914 = vpack.c.b16 %v5530, %v5526
    %v6915 = vpack.c.b16 %v5531, %v5527
    %v6916 = vpack.c.b16 %v5536, %v5532
    %v6917 = vpack.c.b16 %v5537, %v5533
    %v6918 = vpack.c.b16 %v5538, %v5534
    %v6919 = vpack.c.b16 %v5539, %v5535
    %v6920 = vpack.c.b16 %v5544, %v5540
    %v6921 = vpack.c.b16 %v5545, %v5541
    %v6922 = vpack.c.b16 %v5546, %v5542
    %v6923 = vpack.c.b16 %v5547, %v5543
    %v6924 = vpack.c.b16 %v5552, %v5548
    %v6925 = vpack.c.b16 %v5553, %v5549
    %v6926 = vpack.c.b16 %v5554, %v5550
    %v6927 = vpack.c.b16 %v5555, %v5551
    %v6928 = vpack.c.b16 %v5560, %v5556
    %v6929 = vpack.c.b16 %v5561, %v5557
    %v6930 = vpack.c.b16 %v5562, %v5558
    %v6931 = vpack.c.b16 %v5563, %v5559
    %v6932 = vpack.c.b16 %v5568, %v5564
    %v6933 = vpack.c.b16 %v5569, %v5565
    %v6934 = vpack.c.b16 %v5570, %v5566
    %v6935 = vpack.c.b16 %v5571, %v5567
    %v6936 = vpack.c.b16 %v5576, %v5572
    %v6937 = vpack.c.b16 %v5577, %v5573
    %v6938 = vpack.c.b16 %v5578, %v5574
    %v6939 = vpack.c.b16 %v5579, %v5575
    %v6940 = vpack.c.b16 %v5584, %v5580
    %v6941 = vpack.c.b16 %v5585, %v5581
    %v6942 = vpack.c.b16 %v5586, %v5582
    %v6943 = vpack.c.b16 %v5587, %v5583
    %v6944 = vpack.c.b16 %v5592, %v5588
    %v6945 = vpack.c.b16 %v5593, %v5589
    %v6946 = vpack.c.b16 %v5594, %v5590
    %v6947 = vpack.c.b16 %v5595, %v5591
    %v6948 = vpack.c.b16 %v5600, %v5596
    %v6949 = vpack.c.b16 %v5601, %v5597
    %v6950 = vpack.c.b16 %v5602, %v5598
    %v6951 = vpack.c.b16 %v5603, %v5599
    %v6952 = vpack.c.b16 %v5608, %v5604
    %v6953 = vpack.c.b16 %v5609, %v5605
    %v6954 = vpack.c.b16 %v5610, %v5606
    %v6955 = vpack.c.b16 %v5611, %v5607
    %8300 = vmatprep.subr.bf16.mxu0 %v5641
    %8301 = vmatpush1.bf16.msra.mxu0 %v5640
    %8302 = vmatprep.subr.bf16.mxu0 %v5637
    %8303 = vmatpush1.bf16.msra.mxu0 %v5636
    %8304 = vmatprep.subr.bf16.mxu0 %v5633
    %8305 = vmatpush1.bf16.msra.mxu0 %v5632
    %8306 = vmatprep.subr.bf16.mxu0 %v5629
    %8307 = vmatpush1.bf16.msra.mxu0 %v5628
    %8308 = vmatprep.subr.bf16.mxu0 %v5625
    %8309 = vmatpush1.bf16.msra.mxu0 %v5624
    %8310 = vmatprep.subr.bf16.mxu0 %v5621
    %8311 = vmatpush1.bf16.msra.mxu0 %v5620
    %8312 = vmatprep.subr.bf16.mxu0 %v5617
    %8313 = vmatpush1.bf16.msra.mxu0 %v5616
    %8314 = vmatprep.subr.bf16.mxu0 %v5613
    %8315 = vmatpush1.bf16.msra.mxu0 %v5612
    %8316 = vmatprep.subr.bf16.mxu0 %v5673
    %8317 = vmatpush2.bf16.msra.mxu0 %v5672
    %8318 = vmatprep.subr.bf16.mxu0 %v5669
    %8319 = vmatpush2.bf16.msra.mxu0 %v5668
    %8320 = vmatprep.subr.bf16.mxu0 %v5665
    %8321 = vmatpush2.bf16.msra.mxu0 %v5664
    %8322 = vmatprep.subr.bf16.mxu0 %v5661
    %8323 = vmatpush2.bf16.msra.mxu0 %v5660
    %8324 = vmatprep.subr.bf16.mxu0 %v5657
    %8325 = vmatpush2.bf16.msra.mxu0 %v5656
    %8326 = vmatprep.subr.bf16.mxu0 %v5653
    %8327 = vmatpush2.bf16.msra.mxu0 %v5652
    %8328 = vmatprep.subr.bf16.mxu0 %v5649
    %8329 = vmatpush2.bf16.msra.mxu0 %v5648
    %8330 = vmatprep.subr.bf16.mxu0 %v5645
    %8331 = vmatpush2.bf16.msra.mxu0 %v5644
    %8332 = vmatprep.mubr.bf16.mxu0 %v173
    %8333 = vmatmul.mubr.bf16.gmra.mxu0 %v172
    %v8334 = vpop.f32.mrf.mxu0
    %v8335 = vadd.f32 %v1563, %v8334
    %v8336 = vpop.f32.mrf.mxu0
    %v8337 = vadd.f32 %v1567, %v8336
    %v8338 = vpop.f32.mrf.mxu0
    %v8339 = vpop.f32.mrf.mxu0
    %8340 = vdwg.mxu0
    %8341 = vmatprep.subr.bf16.mxu0 %v5705
    %8342 = vmatpush1.bf16.msra.mxu0 %v5704
    %8343 = vmatprep.subr.bf16.mxu0 %v5701
    %8344 = vmatpush1.bf16.msra.mxu0 %v5700
    %8345 = vmatprep.subr.bf16.mxu0 %v5697
    %8346 = vmatpush1.bf16.msra.mxu0 %v5696
    %8347 = vmatprep.subr.bf16.mxu0 %v5693
    %8348 = vmatpush1.bf16.msra.mxu0 %v5692
    %8349 = vmatprep.subr.bf16.mxu0 %v5689
    %8350 = vmatpush1.bf16.msra.mxu0 %v5688
    %8351 = vmatprep.subr.bf16.mxu0 %v5685
    %8352 = vmatpush1.bf16.msra.mxu0 %v5684
    %8353 = vmatprep.subr.bf16.mxu0 %v5681
    %8354 = vmatpush1.bf16.msra.mxu0 %v5680
    %8355 = vmatprep.subr.bf16.mxu0 %v5677
    %8356 = vmatpush1.bf16.msra.mxu0 %v5676
    %8357 = vmatprep.subr.bf16.mxu0 %v5737
    %8358 = vmatpush2.bf16.msra.mxu0 %v5736
    %8359 = vmatprep.subr.bf16.mxu0 %v5733
    %8360 = vmatpush2.bf16.msra.mxu0 %v5732
    %8361 = vmatprep.subr.bf16.mxu0 %v5729
    %8362 = vmatpush2.bf16.msra.mxu0 %v5728
    %8363 = vmatprep.subr.bf16.mxu0 %v5725
    %8364 = vmatpush2.bf16.msra.mxu0 %v5724
    %8365 = vmatprep.subr.bf16.mxu0 %v5721
    %8366 = vmatpush2.bf16.msra.mxu0 %v5720
    %8367 = vmatprep.subr.bf16.mxu0 %v5717
    %8368 = vmatpush2.bf16.msra.mxu0 %v5716
    %8369 = vmatprep.subr.bf16.mxu0 %v5713
    %8370 = vmatpush2.bf16.msra.mxu0 %v5712
    %8371 = vmatprep.subr.bf16.mxu0 %v5709
    %8372 = vmatpush2.bf16.msra.mxu0 %v5708
    %8373 = vmatprep.mubr.bf16.mxu0 %v175
    %8374 = vmatmul.mubr.bf16.gmra.mxu0 %v174
    %v8375 = vpop.f32.mrf.mxu0
    %v8376 = vadd.f32 %v8335, %v8375
    %v8377 = vpop.f32.mrf.mxu0
    %v8378 = vadd.f32 %v8337, %v8377
    %v8379 = vpop.f32.mrf.mxu0
    %v8380 = vpop.f32.mrf.mxu0
    %8381 = vdwg.mxu0
    %8382 = vmatprep.subr.bf16.mxu0 %v5769
    %8383 = vmatpush1.bf16.msra.mxu0 %v5768
    %8384 = vmatprep.subr.bf16.mxu0 %v5765
    %8385 = vmatpush1.bf16.msra.mxu0 %v5764
    %8386 = vmatprep.subr.bf16.mxu0 %v5761
    %8387 = vmatpush1.bf16.msra.mxu0 %v5760
    %8388 = vmatprep.subr.bf16.mxu0 %v5757
    %8389 = vmatpush1.bf16.msra.mxu0 %v5756
    %8390 = vmatprep.subr.bf16.mxu0 %v5753
    %8391 = vmatpush1.bf16.msra.mxu0 %v5752
    %8392 = vmatprep.subr.bf16.mxu0 %v5749
    %8393 = vmatpush1.bf16.msra.mxu0 %v5748
    %8394 = vmatprep.subr.bf16.mxu0 %v5745
    %8395 = vmatpush1.bf16.msra.mxu0 %v5744
    %8396 = vmatprep.subr.bf16.mxu0 %v5741
    %8397 = vmatpush1.bf16.msra.mxu0 %v5740
    %8398 = vmatprep.subr.bf16.mxu0 %v5801
    %8399 = vmatpush2.bf16.msra.mxu0 %v5800
    %8400 = vmatprep.subr.bf16.mxu0 %v5797
    %8401 = vmatpush2.bf16.msra.mxu0 %v5796
    %8402 = vmatprep.subr.bf16.mxu0 %v5793
    %8403 = vmatpush2.bf16.msra.mxu0 %v5792
    %8404 = vmatprep.subr.bf16.mxu0 %v5789
    %8405 = vmatpush2.bf16.msra.mxu0 %v5788
    %8406 = vmatprep.subr.bf16.mxu0 %v5785
    %8407 = vmatpush2.bf16.msra.mxu0 %v5784
    %8408 = vmatprep.subr.bf16.mxu0 %v5781
    %8409 = vmatpush2.bf16.msra.mxu0 %v5780
    %8410 = vmatprep.subr.bf16.mxu0 %v5777
    %8411 = vmatpush2.bf16.msra.mxu0 %v5776
    %8412 = vmatprep.subr.bf16.mxu0 %v5773
    %8413 = vmatpush2.bf16.msra.mxu0 %v5772
    %8414 = vmatprep.mubr.bf16.mxu0 %v177
    %8415 = vmatmul.mubr.bf16.gmra.mxu0 %v176
    %v8416 = vpop.f32.mrf.mxu0
    %v8417 = vadd.f32 %v8376, %v8416
    %v8418 = vpop.f32.mrf.mxu0
    %v8419 = vadd.f32 %v8378, %v8418
    %v8420 = vpop.f32.mrf.mxu0
    %v8421 = vpop.f32.mrf.mxu0
    %8422 = vdwg.mxu0
    %8423 = vmatprep.subr.bf16.mxu0 %v5833
    %8424 = vmatpush1.bf16.msra.mxu0 %v5832
    %8425 = vmatprep.subr.bf16.mxu0 %v5829
    %8426 = vmatpush1.bf16.msra.mxu0 %v5828
    %8427 = vmatprep.subr.bf16.mxu0 %v5825
    %8428 = vmatpush1.bf16.msra.mxu0 %v5824
    %8429 = vmatprep.subr.bf16.mxu0 %v5821
    %8430 = vmatpush1.bf16.msra.mxu0 %v5820
    %8431 = vmatprep.subr.bf16.mxu0 %v5817
    %8432 = vmatpush1.bf16.msra.mxu0 %v5816
    %8433 = vmatprep.subr.bf16.mxu0 %v5813
    %8434 = vmatpush1.bf16.msra.mxu0 %v5812
    %8435 = vmatprep.subr.bf16.mxu0 %v5809
    %8436 = vmatpush1.bf16.msra.mxu0 %v5808
    %8437 = vmatprep.subr.bf16.mxu0 %v5805
    %8438 = vmatpush1.bf16.msra.mxu0 %v5804
    %8439 = vmatprep.subr.bf16.mxu0 %v5865
    %8440 = vmatpush2.bf16.msra.mxu0 %v5864
    %8441 = vmatprep.subr.bf16.mxu0 %v5861
    %8442 = vmatpush2.bf16.msra.mxu0 %v5860
    %8443 = vmatprep.subr.bf16.mxu0 %v5857
    %8444 = vmatpush2.bf16.msra.mxu0 %v5856
    %8445 = vmatprep.subr.bf16.mxu0 %v5853
    %8446 = vmatpush2.bf16.msra.mxu0 %v5852
    %8447 = vmatprep.subr.bf16.mxu0 %v5849
    %8448 = vmatpush2.bf16.msra.mxu0 %v5848
    %8449 = vmatprep.subr.bf16.mxu0 %v5845
    %8450 = vmatpush2.bf16.msra.mxu0 %v5844
    %8451 = vmatprep.subr.bf16.mxu0 %v5841
    %8452 = vmatpush2.bf16.msra.mxu0 %v5840
    %8453 = vmatprep.subr.bf16.mxu0 %v5837
    %8454 = vmatpush2.bf16.msra.mxu0 %v5836
    %8455 = vmatprep.mubr.bf16.mxu0 %v179
    %8456 = vmatmul.mubr.bf16.gmra.mxu0 %v178
    %v8457 = vpop.f32.mrf.mxu0
    %v8458 = vadd.f32 %v8417, %v8457
    %v8459 = vpop.f32.mrf.mxu0
    %v8460 = vadd.f32 %v8419, %v8459
    %v8461 = vpop.f32.mrf.mxu0
    %v8462 = vpop.f32.mrf.mxu0
    %8463 = vdwg.mxu0
    %8464 = vmatprep.subr.bf16.mxu0 %v5897
    %8465 = vmatpush1.bf16.msra.mxu0 %v5896
    %8466 = vmatprep.subr.bf16.mxu0 %v5893
    %8467 = vmatpush1.bf16.msra.mxu0 %v5892
    %8468 = vmatprep.subr.bf16.mxu0 %v5889
    %8469 = vmatpush1.bf16.msra.mxu0 %v5888
    %8470 = vmatprep.subr.bf16.mxu0 %v5885
    %8471 = vmatpush1.bf16.msra.mxu0 %v5884
    %8472 = vmatprep.subr.bf16.mxu0 %v5881
    %8473 = vmatpush1.bf16.msra.mxu0 %v5880
    %8474 = vmatprep.subr.bf16.mxu0 %v5877
    %8475 = vmatpush1.bf16.msra.mxu0 %v5876
    %8476 = vmatprep.subr.bf16.mxu0 %v5873
    %8477 = vmatpush1.bf16.msra.mxu0 %v5872
    %8478 = vmatprep.subr.bf16.mxu0 %v5869
    %8479 = vmatpush1.bf16.msra.mxu0 %v5868
    %8480 = vmatprep.subr.bf16.mxu0 %v5929
    %8481 = vmatpush2.bf16.msra.mxu0 %v5928
    %8482 = vmatprep.subr.bf16.mxu0 %v5925
    %8483 = vmatpush2.bf16.msra.mxu0 %v5924
    %8484 = vmatprep.subr.bf16.mxu0 %v5921
    %8485 = vmatpush2.bf16.msra.mxu0 %v5920
    %8486 = vmatprep.subr.bf16.mxu0 %v5917
    %8487 = vmatpush2.bf16.msra.mxu0 %v5916
    %8488 = vmatprep.subr.bf16.mxu0 %v5913
    %8489 = vmatpush2.bf16.msra.mxu0 %v5912
    %8490 = vmatprep.subr.bf16.mxu0 %v5909
    %8491 = vmatpush2.bf16.msra.mxu0 %v5908
    %8492 = vmatprep.subr.bf16.mxu0 %v5905
    %8493 = vmatpush2.bf16.msra.mxu0 %v5904
    %8494 = vmatprep.subr.bf16.mxu0 %v5901
    %8495 = vmatpush2.bf16.msra.mxu0 %v5900
    %8496 = vmatprep.mubr.bf16.mxu0 %v181
    %8497 = vmatmul.mubr.bf16.gmra.mxu0 %v180
    %v8498 = vpop.f32.mrf.mxu0
    %v8499 = vadd.f32 %v8458, %v8498
    %v8500 = vpop.f32.mrf.mxu0
    %v8501 = vadd.f32 %v8460, %v8500
    %v8502 = vpop.f32.mrf.mxu0
    %v8503 = vpop.f32.mrf.mxu0
    %8504 = vdwg.mxu0
    %8505 = vmatprep.subr.bf16.mxu0 %v5961
    %8506 = vmatpush1.bf16.msra.mxu0 %v5960
    %8507 = vmatprep.subr.bf16.mxu0 %v5957
    %8508 = vmatpush1.bf16.msra.mxu0 %v5956
    %8509 = vmatprep.subr.bf16.mxu0 %v5953
    %8510 = vmatpush1.bf16.msra.mxu0 %v5952
    %8511 = vmatprep.subr.bf16.mxu0 %v5949
    %8512 = vmatpush1.bf16.msra.mxu0 %v5948
    %8513 = vmatprep.subr.bf16.mxu0 %v5945
    %8514 = vmatpush1.bf16.msra.mxu0 %v5944
    %8515 = vmatprep.subr.bf16.mxu0 %v5941
    %8516 = vmatpush1.bf16.msra.mxu0 %v5940
    %8517 = vmatprep.subr.bf16.mxu0 %v5937
    %8518 = vmatpush1.bf16.msra.mxu0 %v5936
    %8519 = vmatprep.subr.bf16.mxu0 %v5933
    %8520 = vmatpush1.bf16.msra.mxu0 %v5932
    %8521 = vmatprep.subr.bf16.mxu0 %v5993
    %8522 = vmatpush2.bf16.msra.mxu0 %v5992
    %8523 = vmatprep.subr.bf16.mxu0 %v5989
    %8524 = vmatpush2.bf16.msra.mxu0 %v5988
    %8525 = vmatprep.subr.bf16.mxu0 %v5985
    %8526 = vmatpush2.bf16.msra.mxu0 %v5984
    %8527 = vmatprep.subr.bf16.mxu0 %v5981
    %8528 = vmatpush2.bf16.msra.mxu0 %v5980
    %8529 = vmatprep.subr.bf16.mxu0 %v5977
    %8530 = vmatpush2.bf16.msra.mxu0 %v5976
    %8531 = vmatprep.subr.bf16.mxu0 %v5973
    %8532 = vmatpush2.bf16.msra.mxu0 %v5972
    %8533 = vmatprep.subr.bf16.mxu0 %v5969
    %8534 = vmatpush2.bf16.msra.mxu0 %v5968
    %8535 = vmatprep.subr.bf16.mxu0 %v5965
    %8536 = vmatpush2.bf16.msra.mxu0 %v5964
    %8537 = vmatprep.mubr.bf16.mxu0 %v183
    %8538 = vmatmul.mubr.bf16.gmra.mxu0 %v182
    %v8539 = vpop.f32.mrf.mxu0
    %v8540 = vadd.f32 %v8499, %v8539
    %v8541 = vpop.f32.mrf.mxu0
    %v8542 = vadd.f32 %v8501, %v8541
    %v8543 = vpop.f32.mrf.mxu0
    %v8544 = vpop.f32.mrf.mxu0
    %8545 = vdwg.mxu0
    %8546 = vmatprep.subr.bf16.mxu0 %v6025
    %8547 = vmatpush1.bf16.msra.mxu0 %v6024
    %8548 = vmatprep.subr.bf16.mxu0 %v6021
    %8549 = vmatpush1.bf16.msra.mxu0 %v6020
    %8550 = vmatprep.subr.bf16.mxu0 %v6017
    %8551 = vmatpush1.bf16.msra.mxu0 %v6016
    %8552 = vmatprep.subr.bf16.mxu0 %v6013
    %8553 = vmatpush1.bf16.msra.mxu0 %v6012
    %8554 = vmatprep.subr.bf16.mxu0 %v6009
    %8555 = vmatpush1.bf16.msra.mxu0 %v6008
    %8556 = vmatprep.subr.bf16.mxu0 %v6005
    %8557 = vmatpush1.bf16.msra.mxu0 %v6004
    %8558 = vmatprep.subr.bf16.mxu0 %v6001
    %8559 = vmatpush1.bf16.msra.mxu0 %v6000
    %8560 = vmatprep.subr.bf16.mxu0 %v5997
    %8561 = vmatpush1.bf16.msra.mxu0 %v5996
    %8562 = vmatprep.subr.bf16.mxu0 %v6057
    %8563 = vmatpush2.bf16.msra.mxu0 %v6056
    %8564 = vmatprep.subr.bf16.mxu0 %v6053
    %8565 = vmatpush2.bf16.msra.mxu0 %v6052
    %8566 = vmatprep.subr.bf16.mxu0 %v6049
    %8567 = vmatpush2.bf16.msra.mxu0 %v6048
    %8568 = vmatprep.subr.bf16.mxu0 %v6045
    %8569 = vmatpush2.bf16.msra.mxu0 %v6044
    %8570 = vmatprep.subr.bf16.mxu0 %v6041
    %8571 = vmatpush2.bf16.msra.mxu0 %v6040
    %8572 = vmatprep.subr.bf16.mxu0 %v6037
    %8573 = vmatpush2.bf16.msra.mxu0 %v6036
    %8574 = vmatprep.subr.bf16.mxu0 %v6033
    %8575 = vmatpush2.bf16.msra.mxu0 %v6032
    %8576 = vmatprep.subr.bf16.mxu0 %v6029
    %8577 = vmatpush2.bf16.msra.mxu0 %v6028
    %8578 = vmatprep.mubr.bf16.mxu0 %v185
    %8579 = vmatmul.mubr.bf16.gmra.mxu0 %v184
    %v8580 = vpop.f32.mrf.mxu0
    %v8581 = vadd.f32 %v8540, %v8580
    %v8582 = vpop.f32.mrf.mxu0
    %v8583 = vadd.f32 %v8542, %v8582
    %v8584 = vpop.f32.mrf.mxu0
    %v8585 = vpop.f32.mrf.mxu0
    %8586 = vdwg.mxu0
    %8587 = vmatprep.subr.bf16.mxu0 %v6089
    %8588 = vmatpush1.bf16.msra.mxu0 %v6088
    %8589 = vmatprep.subr.bf16.mxu0 %v6085
    %8590 = vmatpush1.bf16.msra.mxu0 %v6084
    %8591 = vmatprep.subr.bf16.mxu0 %v6081
    %8592 = vmatpush1.bf16.msra.mxu0 %v6080
    %8593 = vmatprep.subr.bf16.mxu0 %v6077
    %8594 = vmatpush1.bf16.msra.mxu0 %v6076
    %8595 = vmatprep.subr.bf16.mxu0 %v6073
    %8596 = vmatpush1.bf16.msra.mxu0 %v6072
    %8597 = vmatprep.subr.bf16.mxu0 %v6069
    %8598 = vmatpush1.bf16.msra.mxu0 %v6068
    %8599 = vmatprep.subr.bf16.mxu0 %v6065
    %8600 = vmatpush1.bf16.msra.mxu0 %v6064
    %8601 = vmatprep.subr.bf16.mxu0 %v6061
    %8602 = vmatpush1.bf16.msra.mxu0 %v6060
    %8603 = vmatprep.subr.bf16.mxu0 %v6121
    %8604 = vmatpush2.bf16.msra.mxu0 %v6120
    %8605 = vmatprep.subr.bf16.mxu0 %v6117
    %8606 = vmatpush2.bf16.msra.mxu0 %v6116
    %8607 = vmatprep.subr.bf16.mxu0 %v6113
    %8608 = vmatpush2.bf16.msra.mxu0 %v6112
    %8609 = vmatprep.subr.bf16.mxu0 %v6109
    %8610 = vmatpush2.bf16.msra.mxu0 %v6108
    %8611 = vmatprep.subr.bf16.mxu0 %v6105
    %8612 = vmatpush2.bf16.msra.mxu0 %v6104
    %8613 = vmatprep.subr.bf16.mxu0 %v6101
    %8614 = vmatpush2.bf16.msra.mxu0 %v6100
    %8615 = vmatprep.subr.bf16.mxu0 %v6097
    %8616 = vmatpush2.bf16.msra.mxu0 %v6096
    %8617 = vmatprep.subr.bf16.mxu0 %v6093
    %8618 = vmatpush2.bf16.msra.mxu0 %v6092
    %8619 = vmatprep.mubr.bf16.mxu0 %v187
    %8620 = vmatmul.mubr.bf16.gmra.mxu0 %v186
    %v8621 = vpop.f32.mrf.mxu0
    %v8622 = vadd.f32 %v8581, %v8621
    %v8623 = vpop.f32.mrf.mxu0
    %v8624 = vadd.f32 %v8583, %v8623
    %v8625 = vpop.f32.mrf.mxu0
    %v8626 = vpop.f32.mrf.mxu0
    %8627 = vdwg.mxu0
    %8628 = vmatprep.subr.bf16.mxu0 %v6153
    %8629 = vmatpush1.bf16.msra.mxu0 %v6152
    %8630 = vmatprep.subr.bf16.mxu0 %v6149
    %8631 = vmatpush1.bf16.msra.mxu0 %v6148
    %8632 = vmatprep.subr.bf16.mxu0 %v6145
    %8633 = vmatpush1.bf16.msra.mxu0 %v6144
    %8634 = vmatprep.subr.bf16.mxu0 %v6141
    %8635 = vmatpush1.bf16.msra.mxu0 %v6140
    %8636 = vmatprep.subr.bf16.mxu0 %v6137
    %8637 = vmatpush1.bf16.msra.mxu0 %v6136
    %8638 = vmatprep.subr.bf16.mxu0 %v6133
    %8639 = vmatpush1.bf16.msra.mxu0 %v6132
    %8640 = vmatprep.subr.bf16.mxu0 %v6129
    %8641 = vmatpush1.bf16.msra.mxu0 %v6128
    %8642 = vmatprep.subr.bf16.mxu0 %v6125
    %8643 = vmatpush1.bf16.msra.mxu0 %v6124
    %8644 = vmatprep.subr.bf16.mxu0 %v6185
    %8645 = vmatpush2.bf16.msra.mxu0 %v6184
    %8646 = vmatprep.subr.bf16.mxu0 %v6181
    %8647 = vmatpush2.bf16.msra.mxu0 %v6180
    %8648 = vmatprep.subr.bf16.mxu0 %v6177
    %8649 = vmatpush2.bf16.msra.mxu0 %v6176
    %8650 = vmatprep.subr.bf16.mxu0 %v6173
    %8651 = vmatpush2.bf16.msra.mxu0 %v6172
    %8652 = vmatprep.subr.bf16.mxu0 %v6169
    %8653 = vmatpush2.bf16.msra.mxu0 %v6168
    %8654 = vmatprep.subr.bf16.mxu0 %v6165
    %8655 = vmatpush2.bf16.msra.mxu0 %v6164
    %8656 = vmatprep.subr.bf16.mxu0 %v6161
    %8657 = vmatpush2.bf16.msra.mxu0 %v6160
    %8658 = vmatprep.subr.bf16.mxu0 %v6157
    %8659 = vmatpush2.bf16.msra.mxu0 %v6156
    %8660 = vmatprep.mubr.bf16.mxu0 %v189
    %8661 = vmatmul.mubr.bf16.gmra.mxu0 %v188
    %v8662 = vpop.f32.mrf.mxu0
    %v8663 = vadd.f32 %v8622, %v8662
    %v8664 = vpop.f32.mrf.mxu0
    %v8665 = vadd.f32 %v8624, %v8664
    %v8666 = vpop.f32.mrf.mxu0
    %v8667 = vpop.f32.mrf.mxu0
    %8668 = vdwg.mxu0
    %8669 = vmatprep.subr.bf16.mxu0 %v6217
    %8670 = vmatpush1.bf16.msra.mxu0 %v6216
    %8671 = vmatprep.subr.bf16.mxu0 %v6213
    %8672 = vmatpush1.bf16.msra.mxu0 %v6212
    %8673 = vmatprep.subr.bf16.mxu0 %v6209
    %8674 = vmatpush1.bf16.msra.mxu0 %v6208
    %8675 = vmatprep.subr.bf16.mxu0 %v6205
    %8676 = vmatpush1.bf16.msra.mxu0 %v6204
    %8677 = vmatprep.subr.bf16.mxu0 %v6201
    %8678 = vmatpush1.bf16.msra.mxu0 %v6200
    %8679 = vmatprep.subr.bf16.mxu0 %v6197
    %8680 = vmatpush1.bf16.msra.mxu0 %v6196
    %8681 = vmatprep.subr.bf16.mxu0 %v6193
    %8682 = vmatpush1.bf16.msra.mxu0 %v6192
    %8683 = vmatprep.subr.bf16.mxu0 %v6189
    %8684 = vmatpush1.bf16.msra.mxu0 %v6188
    %8685 = vmatprep.subr.bf16.mxu0 %v6249
    %8686 = vmatpush2.bf16.msra.mxu0 %v6248
    %8687 = vmatprep.subr.bf16.mxu0 %v6245
    %8688 = vmatpush2.bf16.msra.mxu0 %v6244
    %8689 = vmatprep.subr.bf16.mxu0 %v6241
    %8690 = vmatpush2.bf16.msra.mxu0 %v6240
    %8691 = vmatprep.subr.bf16.mxu0 %v6237
    %8692 = vmatpush2.bf16.msra.mxu0 %v6236
    %8693 = vmatprep.subr.bf16.mxu0 %v6233
    %8694 = vmatpush2.bf16.msra.mxu0 %v6232
    %8695 = vmatprep.subr.bf16.mxu0 %v6229
    %8696 = vmatpush2.bf16.msra.mxu0 %v6228
    %8697 = vmatprep.subr.bf16.mxu0 %v6225
    %8698 = vmatpush2.bf16.msra.mxu0 %v6224
    %8699 = vmatprep.subr.bf16.mxu0 %v6221
    %8700 = vmatpush2.bf16.msra.mxu0 %v6220
    %8701 = vmatprep.mubr.bf16.mxu0 %v191
    %8702 = vmatmul.mubr.bf16.gmra.mxu0 %v190
    %v8703 = vpop.f32.mrf.mxu0
    %v8704 = vadd.f32 %v8663, %v8703
    %v8705 = vpop.f32.mrf.mxu0
    %v8706 = vadd.f32 %v8665, %v8705
    %v8707 = vpop.f32.mrf.mxu0
    %v8708 = vpop.f32.mrf.mxu0
    %8709 = vdwg.mxu0
    %8710 = vmatprep.subr.bf16.mxu0 %v6281
    %8711 = vmatpush1.bf16.msra.mxu0 %v6280
    %8712 = vmatprep.subr.bf16.mxu0 %v6277
    %8713 = vmatpush1.bf16.msra.mxu0 %v6276
    %8714 = vmatprep.subr.bf16.mxu0 %v6273
    %8715 = vmatpush1.bf16.msra.mxu0 %v6272
    %8716 = vmatprep.subr.bf16.mxu0 %v6269
    %8717 = vmatpush1.bf16.msra.mxu0 %v6268
    %8718 = vmatprep.subr.bf16.mxu0 %v6265
    %8719 = vmatpush1.bf16.msra.mxu0 %v6264
    %8720 = vmatprep.subr.bf16.mxu0 %v6261
    %8721 = vmatpush1.bf16.msra.mxu0 %v6260
    %8722 = vmatprep.subr.bf16.mxu0 %v6257
    %8723 = vmatpush1.bf16.msra.mxu0 %v6256
    %8724 = vmatprep.subr.bf16.mxu0 %v6253
    %8725 = vmatpush1.bf16.msra.mxu0 %v6252
    %8726 = vmatprep.subr.bf16.mxu0 %v6313
    %8727 = vmatpush2.bf16.msra.mxu0 %v6312
    %8728 = vmatprep.subr.bf16.mxu0 %v6309
    %8729 = vmatpush2.bf16.msra.mxu0 %v6308
    %8730 = vmatprep.subr.bf16.mxu0 %v6305
    %8731 = vmatpush2.bf16.msra.mxu0 %v6304
    %8732 = vmatprep.subr.bf16.mxu0 %v6301
    %8733 = vmatpush2.bf16.msra.mxu0 %v6300
    %8734 = vmatprep.subr.bf16.mxu0 %v6297
    %8735 = vmatpush2.bf16.msra.mxu0 %v6296
    %8736 = vmatprep.subr.bf16.mxu0 %v6293
    %8737 = vmatpush2.bf16.msra.mxu0 %v6292
    %8738 = vmatprep.subr.bf16.mxu0 %v6289
    %8739 = vmatpush2.bf16.msra.mxu0 %v6288
    %8740 = vmatprep.subr.bf16.mxu0 %v6285
    %8741 = vmatpush2.bf16.msra.mxu0 %v6284
    %8742 = vmatprep.mubr.bf16.mxu0 %v193
    %8743 = vmatmul.mubr.bf16.gmra.mxu0 %v192
    %v8744 = vpop.f32.mrf.mxu0
    %v8745 = vadd.f32 %v8704, %v8744
    %v8746 = vpop.f32.mrf.mxu0
    %v8747 = vadd.f32 %v8706, %v8746
    %v8748 = vpop.f32.mrf.mxu0
    %v8749 = vpop.f32.mrf.mxu0
    %8750 = vdwg.mxu0
    %8751 = vmatprep.subr.bf16.mxu0 %v6345
    %8752 = vmatpush1.bf16.msra.mxu0 %v6344
    %8753 = vmatprep.subr.bf16.mxu0 %v6341
    %8754 = vmatpush1.bf16.msra.mxu0 %v6340
    %8755 = vmatprep.subr.bf16.mxu0 %v6337
    %8756 = vmatpush1.bf16.msra.mxu0 %v6336
    %8757 = vmatprep.subr.bf16.mxu0 %v6333
    %8758 = vmatpush1.bf16.msra.mxu0 %v6332
    %8759 = vmatprep.subr.bf16.mxu0 %v6329
    %8760 = vmatpush1.bf16.msra.mxu0 %v6328
    %8761 = vmatprep.subr.bf16.mxu0 %v6325
    %8762 = vmatpush1.bf16.msra.mxu0 %v6324
    %8763 = vmatprep.subr.bf16.mxu0 %v6321
    %8764 = vmatpush1.bf16.msra.mxu0 %v6320
    %8765 = vmatprep.subr.bf16.mxu0 %v6317
    %8766 = vmatpush1.bf16.msra.mxu0 %v6316
    %8767 = vmatprep.subr.bf16.mxu0 %v6377
    %8768 = vmatpush2.bf16.msra.mxu0 %v6376
    %8769 = vmatprep.subr.bf16.mxu0 %v6373
    %8770 = vmatpush2.bf16.msra.mxu0 %v6372
    %8771 = vmatprep.subr.bf16.mxu0 %v6369
    %8772 = vmatpush2.bf16.msra.mxu0 %v6368
    %8773 = vmatprep.subr.bf16.mxu0 %v6365
    %8774 = vmatpush2.bf16.msra.mxu0 %v6364
    %8775 = vmatprep.subr.bf16.mxu0 %v6361
    %8776 = vmatpush2.bf16.msra.mxu0 %v6360
    %8777 = vmatprep.subr.bf16.mxu0 %v6357
    %8778 = vmatpush2.bf16.msra.mxu0 %v6356
    %8779 = vmatprep.subr.bf16.mxu0 %v6353
    %8780 = vmatpush2.bf16.msra.mxu0 %v6352
    %8781 = vmatprep.subr.bf16.mxu0 %v6349
    %8782 = vmatpush2.bf16.msra.mxu0 %v6348
    %8783 = vmatprep.mubr.bf16.mxu0 %v195
    %8784 = vmatmul.mubr.bf16.gmra.mxu0 %v194
    %v8785 = vpop.f32.mrf.mxu0
    %v8786 = vadd.f32 %v8745, %v8785
    %v8787 = vpop.f32.mrf.mxu0
    %v8788 = vadd.f32 %v8747, %v8787
    %v8789 = vpop.f32.mrf.mxu0
    %v8790 = vpop.f32.mrf.mxu0
    %8791 = vdwg.mxu0
    %8792 = vmatprep.subr.bf16.mxu0 %v6409
    %8793 = vmatpush1.bf16.msra.mxu0 %v6408
    %8794 = vmatprep.subr.bf16.mxu0 %v6405
    %8795 = vmatpush1.bf16.msra.mxu0 %v6404
    %8796 = vmatprep.subr.bf16.mxu0 %v6401
    %8797 = vmatpush1.bf16.msra.mxu0 %v6400
    %8798 = vmatprep.subr.bf16.mxu0 %v6397
    %8799 = vmatpush1.bf16.msra.mxu0 %v6396
    %8800 = vmatprep.subr.bf16.mxu0 %v6393
    %8801 = vmatpush1.bf16.msra.mxu0 %v6392
    %8802 = vmatprep.subr.bf16.mxu0 %v6389
    %8803 = vmatpush1.bf16.msra.mxu0 %v6388
    %8804 = vmatprep.subr.bf16.mxu0 %v6385
    %8805 = vmatpush1.bf16.msra.mxu0 %v6384
    %8806 = vmatprep.subr.bf16.mxu0 %v6381
    %8807 = vmatpush1.bf16.msra.mxu0 %v6380
    %8808 = vmatprep.subr.bf16.mxu0 %v6441
    %8809 = vmatpush2.bf16.msra.mxu0 %v6440
    %8810 = vmatprep.subr.bf16.mxu0 %v6437
    %8811 = vmatpush2.bf16.msra.mxu0 %v6436
    %8812 = vmatprep.subr.bf16.mxu0 %v6433
    %8813 = vmatpush2.bf16.msra.mxu0 %v6432
    %8814 = vmatprep.subr.bf16.mxu0 %v6429
    %8815 = vmatpush2.bf16.msra.mxu0 %v6428
    %8816 = vmatprep.subr.bf16.mxu0 %v6425
    %8817 = vmatpush2.bf16.msra.mxu0 %v6424
    %8818 = vmatprep.subr.bf16.mxu0 %v6421
    %8819 = vmatpush2.bf16.msra.mxu0 %v6420
    %8820 = vmatprep.subr.bf16.mxu0 %v6417
    %8821 = vmatpush2.bf16.msra.mxu0 %v6416
    %8822 = vmatprep.subr.bf16.mxu0 %v6413
    %8823 = vmatpush2.bf16.msra.mxu0 %v6412
    %8824 = vmatprep.mubr.bf16.mxu0 %v197
    %8825 = vmatmul.mubr.bf16.gmra.mxu0 %v196
    %v8826 = vpop.f32.mrf.mxu0
    %v8827 = vadd.f32 %v8786, %v8826
    %v8828 = vpop.f32.mrf.mxu0
    %v8829 = vadd.f32 %v8788, %v8828
    %v8830 = vpop.f32.mrf.mxu0
    %v8831 = vpop.f32.mrf.mxu0
    %8832 = vdwg.mxu0
    %8833 = vmatprep.subr.bf16.mxu0 %v6473
    %8834 = vmatpush1.bf16.msra.mxu0 %v6472
    %8835 = vmatprep.subr.bf16.mxu0 %v6469
    %8836 = vmatpush1.bf16.msra.mxu0 %v6468
    %8837 = vmatprep.subr.bf16.mxu0 %v6465
    %8838 = vmatpush1.bf16.msra.mxu0 %v6464
    %8839 = vmatprep.subr.bf16.mxu0 %v6461
    %8840 = vmatpush1.bf16.msra.mxu0 %v6460
    %8841 = vmatprep.subr.bf16.mxu0 %v6457
    %8842 = vmatpush1.bf16.msra.mxu0 %v6456
    %8843 = vmatprep.subr.bf16.mxu0 %v6453
    %8844 = vmatpush1.bf16.msra.mxu0 %v6452
    %8845 = vmatprep.subr.bf16.mxu0 %v6449
    %8846 = vmatpush1.bf16.msra.mxu0 %v6448
    %8847 = vmatprep.subr.bf16.mxu0 %v6445
    %8848 = vmatpush1.bf16.msra.mxu0 %v6444
    %8849 = vmatprep.subr.bf16.mxu0 %v6505
    %8850 = vmatpush2.bf16.msra.mxu0 %v6504
    %8851 = vmatprep.subr.bf16.mxu0 %v6501
    %8852 = vmatpush2.bf16.msra.mxu0 %v6500
    %8853 = vmatprep.subr.bf16.mxu0 %v6497
    %8854 = vmatpush2.bf16.msra.mxu0 %v6496
    %8855 = vmatprep.subr.bf16.mxu0 %v6493
    %8856 = vmatpush2.bf16.msra.mxu0 %v6492
    %8857 = vmatprep.subr.bf16.mxu0 %v6489
    %8858 = vmatpush2.bf16.msra.mxu0 %v6488
    %8859 = vmatprep.subr.bf16.mxu0 %v6485
    %8860 = vmatpush2.bf16.msra.mxu0 %v6484
    %8861 = vmatprep.subr.bf16.mxu0 %v6481
    %8862 = vmatpush2.bf16.msra.mxu0 %v6480
    %8863 = vmatprep.subr.bf16.mxu0 %v6477
    %8864 = vmatpush2.bf16.msra.mxu0 %v6476
    %8865 = vmatprep.mubr.bf16.mxu0 %v199
    %8866 = vmatmul.mubr.bf16.gmra.mxu0 %v198
    %v8867 = vpop.f32.mrf.mxu0
    %v8868 = vadd.f32 %v8827, %v8867
    %v8869 = vpop.f32.mrf.mxu0
    %v8870 = vadd.f32 %v8829, %v8869
    %v8871 = vpop.f32.mrf.mxu0
    %v8872 = vpop.f32.mrf.mxu0
    %8873 = vdwg.mxu0
    %8874 = vmatprep.subr.bf16.mxu0 %v6537
    %8875 = vmatpush1.bf16.msra.mxu0 %v6536
    %8876 = vmatprep.subr.bf16.mxu0 %v6533
    %8877 = vmatpush1.bf16.msra.mxu0 %v6532
    %8878 = vmatprep.subr.bf16.mxu0 %v6529
    %8879 = vmatpush1.bf16.msra.mxu0 %v6528
    %8880 = vmatprep.subr.bf16.mxu0 %v6525
    %8881 = vmatpush1.bf16.msra.mxu0 %v6524
    %8882 = vmatprep.subr.bf16.mxu0 %v6521
    %8883 = vmatpush1.bf16.msra.mxu0 %v6520
    %8884 = vmatprep.subr.bf16.mxu0 %v6517
    %8885 = vmatpush1.bf16.msra.mxu0 %v6516
    %8886 = vmatprep.subr.bf16.mxu0 %v6513
    %8887 = vmatpush1.bf16.msra.mxu0 %v6512
    %8888 = vmatprep.subr.bf16.mxu0 %v6509
    %8889 = vmatpush1.bf16.msra.mxu0 %v6508
    %8890 = vmatprep.subr.bf16.mxu0 %v6569
    %8891 = vmatpush2.bf16.msra.mxu0 %v6568
    %8892 = vmatprep.subr.bf16.mxu0 %v6565
    %8893 = vmatpush2.bf16.msra.mxu0 %v6564
    %8894 = vmatprep.subr.bf16.mxu0 %v6561
    %8895 = vmatpush2.bf16.msra.mxu0 %v6560
    %8896 = vmatprep.subr.bf16.mxu0 %v6557
    %8897 = vmatpush2.bf16.msra.mxu0 %v6556
    %8898 = vmatprep.subr.bf16.mxu0 %v6553
    %8899 = vmatpush2.bf16.msra.mxu0 %v6552
    %8900 = vmatprep.subr.bf16.mxu0 %v6549
    %8901 = vmatpush2.bf16.msra.mxu0 %v6548
    %8902 = vmatprep.subr.bf16.mxu0 %v6545
    %8903 = vmatpush2.bf16.msra.mxu0 %v6544
    %8904 = vmatprep.subr.bf16.mxu0 %v6541
    %8905 = vmatpush2.bf16.msra.mxu0 %v6540
    %8906 = vmatprep.mubr.bf16.mxu0 %v201
    %8907 = vmatmul.mubr.bf16.gmra.mxu0 %v200
    %v8908 = vpop.f32.mrf.mxu0
    %v8909 = vadd.f32 %v8868, %v8908
    %v8910 = vpop.f32.mrf.mxu0
    %v8911 = vadd.f32 %v8870, %v8910
    %v8912 = vpop.f32.mrf.mxu0
    %v8913 = vpop.f32.mrf.mxu0
    %8914 = vdwg.mxu0
    %8915 = vmatprep.subr.bf16.mxu0 %v6601
    %8916 = vmatpush1.bf16.msra.mxu0 %v6600
    %8917 = vmatprep.subr.bf16.mxu0 %v6597
    %8918 = vmatpush1.bf16.msra.mxu0 %v6596
    %8919 = vmatprep.subr.bf16.mxu0 %v6593
    %8920 = vmatpush1.bf16.msra.mxu0 %v6592
    %8921 = vmatprep.subr.bf16.mxu0 %v6589
    %8922 = vmatpush1.bf16.msra.mxu0 %v6588
    %8923 = vmatprep.subr.bf16.mxu0 %v6585
    %8924 = vmatpush1.bf16.msra.mxu0 %v6584
    %8925 = vmatprep.subr.bf16.mxu0 %v6581
    %8926 = vmatpush1.bf16.msra.mxu0 %v6580
    %8927 = vmatprep.subr.bf16.mxu0 %v6577
    %8928 = vmatpush1.bf16.msra.mxu0 %v6576
    %8929 = vmatprep.subr.bf16.mxu0 %v6573
    %8930 = vmatpush1.bf16.msra.mxu0 %v6572
    %8931 = vmatprep.subr.bf16.mxu0 %v6633
    %8932 = vmatpush2.bf16.msra.mxu0 %v6632
    %8933 = vmatprep.subr.bf16.mxu0 %v6629
    %8934 = vmatpush2.bf16.msra.mxu0 %v6628
    %8935 = vmatprep.subr.bf16.mxu0 %v6625
    %8936 = vmatpush2.bf16.msra.mxu0 %v6624
    %8937 = vmatprep.subr.bf16.mxu0 %v6621
    %8938 = vmatpush2.bf16.msra.mxu0 %v6620
    %8939 = vmatprep.subr.bf16.mxu0 %v6617
    %8940 = vmatpush2.bf16.msra.mxu0 %v6616
    %8941 = vmatprep.subr.bf16.mxu0 %v6613
    %8942 = vmatpush2.bf16.msra.mxu0 %v6612
    %8943 = vmatprep.subr.bf16.mxu0 %v6609
    %8944 = vmatpush2.bf16.msra.mxu0 %v6608
    %8945 = vmatprep.subr.bf16.mxu0 %v6605
    %8946 = vmatpush2.bf16.msra.mxu0 %v6604
    %8947 = vmatprep.mubr.bf16.mxu0 %v203
    %8948 = vmatmul.mubr.bf16.gmra.mxu0 %v202
    %v8949 = vpop.f32.mrf.mxu0
    %v8950 = vadd.f32 %v8909, %v8949
    %v8951 = vpop.f32.mrf.mxu0
    %v8952 = vadd.f32 %v8911, %v8951
    %v8953 = vpop.f32.mrf.mxu0
    %v8954 = vpop.f32.mrf.mxu0
    %8955 = vdwg.mxu0
    %8956 = vmatprep.subr.bf16.mxu0 %v6665
    %8957 = vmatpush1.bf16.msra.mxu0 %v6664
    %8958 = vmatprep.subr.bf16.mxu0 %v6661
    %8959 = vmatpush1.bf16.msra.mxu0 %v6660
    %8960 = vmatprep.subr.bf16.mxu0 %v6657
    %8961 = vmatpush1.bf16.msra.mxu0 %v6656
    %8962 = vmatprep.subr.bf16.mxu0 %v6653
    %8963 = vmatpush1.bf16.msra.mxu0 %v6652
    %8964 = vmatprep.subr.bf16.mxu0 %v6649
    %8965 = vmatpush1.bf16.msra.mxu0 %v6648
    %8966 = vmatprep.subr.bf16.mxu0 %v6645
    %8967 = vmatpush1.bf16.msra.mxu0 %v6644
    %8968 = vmatprep.subr.bf16.mxu0 %v6641
    %8969 = vmatpush1.bf16.msra.mxu0 %v6640
    %8970 = vmatprep.subr.bf16.mxu0 %v6637
    %8971 = vmatpush1.bf16.msra.mxu0 %v6636
    %8972 = vmatprep.subr.bf16.mxu0 %v6697
    %8973 = vmatpush2.bf16.msra.mxu0 %v6696
    %8974 = vmatprep.subr.bf16.mxu0 %v6693
    %8975 = vmatpush2.bf16.msra.mxu0 %v6692
    %8976 = vmatprep.subr.bf16.mxu0 %v6689
    %8977 = vmatpush2.bf16.msra.mxu0 %v6688
    %8978 = vmatprep.subr.bf16.mxu0 %v6685
    %8979 = vmatpush2.bf16.msra.mxu0 %v6684
    %8980 = vmatprep.subr.bf16.mxu0 %v6681
    %8981 = vmatpush2.bf16.msra.mxu0 %v6680
    %8982 = vmatprep.subr.bf16.mxu0 %v6677
    %8983 = vmatpush2.bf16.msra.mxu0 %v6676
    %8984 = vmatprep.subr.bf16.mxu0 %v6673
    %8985 = vmatpush2.bf16.msra.mxu0 %v6672
    %8986 = vmatprep.subr.bf16.mxu0 %v6669
    %8987 = vmatpush2.bf16.msra.mxu0 %v6668
    %8988 = vmatprep.mubr.bf16.mxu0 %v205
    %8989 = vmatmul.mubr.bf16.gmra.mxu0 %v204
    %v8990 = vpop.f32.mrf.mxu0
    %v8991 = vadd.f32 %v8950, %v8990
    %v8992 = vpop.f32.mrf.mxu0
    %v8993 = vadd.f32 %v8952, %v8992
    %v8994 = vpop.f32.mrf.mxu0
    %v8995 = vpop.f32.mrf.mxu0
    %8996 = vdwg.mxu0
    %8997 = vmatprep.subr.bf16.mxu0 %v6729
    %8998 = vmatpush1.bf16.msra.mxu0 %v6728
    %8999 = vmatprep.subr.bf16.mxu0 %v6725
    %9000 = vmatpush1.bf16.msra.mxu0 %v6724
    %9001 = vmatprep.subr.bf16.mxu0 %v6721
    %9002 = vmatpush1.bf16.msra.mxu0 %v6720
    %9003 = vmatprep.subr.bf16.mxu0 %v6717
    %9004 = vmatpush1.bf16.msra.mxu0 %v6716
    %9005 = vmatprep.subr.bf16.mxu0 %v6713
    %9006 = vmatpush1.bf16.msra.mxu0 %v6712
    %9007 = vmatprep.subr.bf16.mxu0 %v6709
    %9008 = vmatpush1.bf16.msra.mxu0 %v6708
    %9009 = vmatprep.subr.bf16.mxu0 %v6705
    %9010 = vmatpush1.bf16.msra.mxu0 %v6704
    %9011 = vmatprep.subr.bf16.mxu0 %v6701
    %9012 = vmatpush1.bf16.msra.mxu0 %v6700
    %9013 = vmatprep.subr.bf16.mxu0 %v6761
    %9014 = vmatpush2.bf16.msra.mxu0 %v6760
    %9015 = vmatprep.subr.bf16.mxu0 %v6757
    %9016 = vmatpush2.bf16.msra.mxu0 %v6756
    %9017 = vmatprep.subr.bf16.mxu0 %v6753
    %9018 = vmatpush2.bf16.msra.mxu0 %v6752
    %9019 = vmatprep.subr.bf16.mxu0 %v6749
    %9020 = vmatpush2.bf16.msra.mxu0 %v6748
    %9021 = vmatprep.subr.bf16.mxu0 %v6745
    %9022 = vmatpush2.bf16.msra.mxu0 %v6744
    %9023 = vmatprep.subr.bf16.mxu0 %v6741
    %9024 = vmatpush2.bf16.msra.mxu0 %v6740
    %9025 = vmatprep.subr.bf16.mxu0 %v6737
    %9026 = vmatpush2.bf16.msra.mxu0 %v6736
    %9027 = vmatprep.subr.bf16.mxu0 %v6733
    %9028 = vmatpush2.bf16.msra.mxu0 %v6732
    %9029 = vmatprep.mubr.bf16.mxu0 %v207
    %9030 = vmatmul.mubr.bf16.gmra.mxu0 %v206
    %v9031 = vpop.f32.mrf.mxu0
    %v9032 = vadd.f32 %v8991, %v9031
    %v9033 = vpop.f32.mrf.mxu0
    %v9034 = vadd.f32 %v8993, %v9033
    %v9035 = vpop.f32.mrf.mxu0
    %v9036 = vpop.f32.mrf.mxu0
    %9037 = vdwg.mxu0
    %9038 = vmatprep.subr.bf16.mxu0 %v6793
    %9039 = vmatpush1.bf16.msra.mxu0 %v6792
    %9040 = vmatprep.subr.bf16.mxu0 %v6789
    %9041 = vmatpush1.bf16.msra.mxu0 %v6788
    %9042 = vmatprep.subr.bf16.mxu0 %v6785
    %9043 = vmatpush1.bf16.msra.mxu0 %v6784
    %9044 = vmatprep.subr.bf16.mxu0 %v6781
    %9045 = vmatpush1.bf16.msra.mxu0 %v6780
    %9046 = vmatprep.subr.bf16.mxu0 %v6777
    %9047 = vmatpush1.bf16.msra.mxu0 %v6776
    %9048 = vmatprep.subr.bf16.mxu0 %v6773
    %9049 = vmatpush1.bf16.msra.mxu0 %v6772
    %9050 = vmatprep.subr.bf16.mxu0 %v6769
    %9051 = vmatpush1.bf16.msra.mxu0 %v6768
    %9052 = vmatprep.subr.bf16.mxu0 %v6765
    %9053 = vmatpush1.bf16.msra.mxu0 %v6764
    %9054 = vmatprep.subr.bf16.mxu0 %v6825
    %9055 = vmatpush2.bf16.msra.mxu0 %v6824
    %9056 = vmatprep.subr.bf16.mxu0 %v6821
    %9057 = vmatpush2.bf16.msra.mxu0 %v6820
    %9058 = vmatprep.subr.bf16.mxu0 %v6817
    %9059 = vmatpush2.bf16.msra.mxu0 %v6816
    %9060 = vmatprep.subr.bf16.mxu0 %v6813
    %9061 = vmatpush2.bf16.msra.mxu0 %v6812
    %9062 = vmatprep.subr.bf16.mxu0 %v6809
    %9063 = vmatpush2.bf16.msra.mxu0 %v6808
    %9064 = vmatprep.subr.bf16.mxu0 %v6805
    %9065 = vmatpush2.bf16.msra.mxu0 %v6804
    %9066 = vmatprep.subr.bf16.mxu0 %v6801
    %9067 = vmatpush2.bf16.msra.mxu0 %v6800
    %9068 = vmatprep.subr.bf16.mxu0 %v6797
    %9069 = vmatpush2.bf16.msra.mxu0 %v6796
    %9070 = vmatprep.mubr.bf16.mxu0 %v209
    %9071 = vmatmul.mubr.bf16.gmra.mxu0 %v208
    %v9072 = vpop.f32.mrf.mxu0
    %v9073 = vadd.f32 %v9032, %v9072
    %v9074 = vpop.f32.mrf.mxu0
    %v9075 = vadd.f32 %v9034, %v9074
    %v9076 = vpop.f32.mrf.mxu0
    %v9077 = vpop.f32.mrf.mxu0
    %9078 = vdwg.mxu0
    %9079 = vmatprep.subr.bf16.mxu0 %v6857
    %9080 = vmatpush1.bf16.msra.mxu0 %v6856
    %9081 = vmatprep.subr.bf16.mxu0 %v6853
    %9082 = vmatpush1.bf16.msra.mxu0 %v6852
    %9083 = vmatprep.subr.bf16.mxu0 %v6849
    %9084 = vmatpush1.bf16.msra.mxu0 %v6848
    %9085 = vmatprep.subr.bf16.mxu0 %v6845
    %9086 = vmatpush1.bf16.msra.mxu0 %v6844
    %9087 = vmatprep.subr.bf16.mxu0 %v6841
    %9088 = vmatpush1.bf16.msra.mxu0 %v6840
    %9089 = vmatprep.subr.bf16.mxu0 %v6837
    %9090 = vmatpush1.bf16.msra.mxu0 %v6836
    %9091 = vmatprep.subr.bf16.mxu0 %v6833
    %9092 = vmatpush1.bf16.msra.mxu0 %v6832
    %9093 = vmatprep.subr.bf16.mxu0 %v6829
    %9094 = vmatpush1.bf16.msra.mxu0 %v6828
    %9095 = vmatprep.subr.bf16.mxu0 %v6889
    %9096 = vmatpush2.bf16.msra.mxu0 %v6888
    %9097 = vmatprep.subr.bf16.mxu0 %v6885
    %9098 = vmatpush2.bf16.msra.mxu0 %v6884
    %9099 = vmatprep.subr.bf16.mxu0 %v6881
    %9100 = vmatpush2.bf16.msra.mxu0 %v6880
    %9101 = vmatprep.subr.bf16.mxu0 %v6877
    %9102 = vmatpush2.bf16.msra.mxu0 %v6876
    %9103 = vmatprep.subr.bf16.mxu0 %v6873
    %9104 = vmatpush2.bf16.msra.mxu0 %v6872
    %9105 = vmatprep.subr.bf16.mxu0 %v6869
    %9106 = vmatpush2.bf16.msra.mxu0 %v6868
    %9107 = vmatprep.subr.bf16.mxu0 %v6865
    %9108 = vmatpush2.bf16.msra.mxu0 %v6864
    %9109 = vmatprep.subr.bf16.mxu0 %v6861
    %9110 = vmatpush2.bf16.msra.mxu0 %v6860
    %9111 = vmatprep.mubr.bf16.mxu0 %v211
    %9112 = vmatmul.mubr.bf16.gmra.mxu0 %v210
    %v9113 = vpop.f32.mrf.mxu0
    %v9114 = vadd.f32 %v9073, %v9113
    %v9115 = vpop.f32.mrf.mxu0
    %v9116 = vadd.f32 %v9075, %v9115
    %v9117 = vpop.f32.mrf.mxu0
    %v9118 = vpop.f32.mrf.mxu0
    %9119 = vdwg.mxu0
    %9120 = vmatprep.subr.bf16.mxu0 %v6921
    %9121 = vmatpush1.bf16.msra.mxu0 %v6920
    %9122 = vmatprep.subr.bf16.mxu0 %v6917
    %9123 = vmatpush1.bf16.msra.mxu0 %v6916
    %9124 = vmatprep.subr.bf16.mxu0 %v6913
    %9125 = vmatpush1.bf16.msra.mxu0 %v6912
    %9126 = vmatprep.subr.bf16.mxu0 %v6909
    %9127 = vmatpush1.bf16.msra.mxu0 %v6908
    %9128 = vmatprep.subr.bf16.mxu0 %v6905
    %9129 = vmatpush1.bf16.msra.mxu0 %v6904
    %9130 = vmatprep.subr.bf16.mxu0 %v6901
    %9131 = vmatpush1.bf16.msra.mxu0 %v6900
    %9132 = vmatprep.subr.bf16.mxu0 %v6897
    %9133 = vmatpush1.bf16.msra.mxu0 %v6896
    %9134 = vmatprep.subr.bf16.mxu0 %v6893
    %9135 = vmatpush1.bf16.msra.mxu0 %v6892
    %9136 = vmatprep.subr.bf16.mxu0 %v6953
    %9137 = vmatpush2.bf16.msra.mxu0 %v6952
    %9138 = vmatprep.subr.bf16.mxu0 %v6949
    %9139 = vmatpush2.bf16.msra.mxu0 %v6948
    %9140 = vmatprep.subr.bf16.mxu0 %v6945
    %9141 = vmatpush2.bf16.msra.mxu0 %v6944
    %9142 = vmatprep.subr.bf16.mxu0 %v6941
    %9143 = vmatpush2.bf16.msra.mxu0 %v6940
    %9144 = vmatprep.subr.bf16.mxu0 %v6937
    %9145 = vmatpush2.bf16.msra.mxu0 %v6936
    %9146 = vmatprep.subr.bf16.mxu0 %v6933
    %9147 = vmatpush2.bf16.msra.mxu0 %v6932
    %9148 = vmatprep.subr.bf16.mxu0 %v6929
    %9149 = vmatpush2.bf16.msra.mxu0 %v6928
    %9150 = vmatprep.subr.bf16.mxu0 %v6925
    %9151 = vmatpush2.bf16.msra.mxu0 %v6924
    %9152 = vmatprep.mubr.bf16.mxu0 %v213
    %9153 = vmatmul.mubr.bf16.gmra.mxu0 %v212
    %v9154 = vpop.f32.mrf.mxu0
    %v9155 = vadd.f32 %v9114, %v9154
    %v9156 = vpop.f32.mrf.mxu0
    %v9157 = vadd.f32 %v9116, %v9156
    %v9158 = vpop.f32.mrf.mxu0
    %v9159 = vpop.f32.mrf.mxu0
    %9160 = vdwg.mxu0
    %9161 = vmatprep.subr.bf16.mxu0 %v5643
    %9162 = vmatpush1.bf16.msra.mxu0 %v5642
    %9163 = vmatprep.subr.bf16.mxu0 %v5639
    %9164 = vmatpush1.bf16.msra.mxu0 %v5638
    %9165 = vmatprep.subr.bf16.mxu0 %v5635
    %9166 = vmatpush1.bf16.msra.mxu0 %v5634
    %9167 = vmatprep.subr.bf16.mxu0 %v5631
    %9168 = vmatpush1.bf16.msra.mxu0 %v5630
    %9169 = vmatprep.subr.bf16.mxu0 %v5627
    %9170 = vmatpush1.bf16.msra.mxu0 %v5626
    %9171 = vmatprep.subr.bf16.mxu0 %v5623
    %9172 = vmatpush1.bf16.msra.mxu0 %v5622
    %9173 = vmatprep.subr.bf16.mxu0 %v5619
    %9174 = vmatpush1.bf16.msra.mxu0 %v5618
    %9175 = vmatprep.subr.bf16.mxu0 %v5615
    %9176 = vmatpush1.bf16.msra.mxu0 %v5614
    %9177 = vmatprep.subr.bf16.mxu0 %v5675
    %9178 = vmatpush2.bf16.msra.mxu0 %v5674
    %9179 = vmatprep.subr.bf16.mxu0 %v5671
    %9180 = vmatpush2.bf16.msra.mxu0 %v5670
    %9181 = vmatprep.subr.bf16.mxu0 %v5667
    %9182 = vmatpush2.bf16.msra.mxu0 %v5666
    %9183 = vmatprep.subr.bf16.mxu0 %v5663
    %9184 = vmatpush2.bf16.msra.mxu0 %v5662
    %9185 = vmatprep.subr.bf16.mxu0 %v5659
    %9186 = vmatpush2.bf16.msra.mxu0 %v5658
    %9187 = vmatprep.subr.bf16.mxu0 %v5655
    %9188 = vmatpush2.bf16.msra.mxu0 %v5654
    %9189 = vmatprep.subr.bf16.mxu0 %v5651
    %9190 = vmatpush2.bf16.msra.mxu0 %v5650
    %9191 = vmatprep.subr.bf16.mxu0 %v5647
    %9192 = vmatpush2.bf16.msra.mxu0 %v5646
    %9193 = vmatprep.mubr.bf16.mxu0 %v173
    %9194 = vmatmul.mubr.bf16.gmra.mxu0 %v172
    %v9195 = vpop.f32.mrf.mxu0
    %v9196 = vadd.f32 %v1571, %v9195
    %v9197 = vpop.f32.mrf.mxu0
    %v9198 = vadd.f32 %v1575, %v9197
    %v9199 = vpop.f32.mrf.mxu0
    %v9200 = vpop.f32.mrf.mxu0
    %9201 = vdwg.mxu0
    %9202 = vmatprep.subr.bf16.mxu0 %v5707
    %9203 = vmatpush1.bf16.msra.mxu0 %v5706
    %9204 = vmatprep.subr.bf16.mxu0 %v5703
    %9205 = vmatpush1.bf16.msra.mxu0 %v5702
    %9206 = vmatprep.subr.bf16.mxu0 %v5699
    %9207 = vmatpush1.bf16.msra.mxu0 %v5698
    %9208 = vmatprep.subr.bf16.mxu0 %v5695
    %9209 = vmatpush1.bf16.msra.mxu0 %v5694
    %9210 = vmatprep.subr.bf16.mxu0 %v5691
    %9211 = vmatpush1.bf16.msra.mxu0 %v5690
    %9212 = vmatprep.subr.bf16.mxu0 %v5687
    %9213 = vmatpush1.bf16.msra.mxu0 %v5686
    %9214 = vmatprep.subr.bf16.mxu0 %v5683
    %9215 = vmatpush1.bf16.msra.mxu0 %v5682
    %9216 = vmatprep.subr.bf16.mxu0 %v5679
    %9217 = vmatpush1.bf16.msra.mxu0 %v5678
    %9218 = vmatprep.subr.bf16.mxu0 %v5739
    %9219 = vmatpush2.bf16.msra.mxu0 %v5738
    %9220 = vmatprep.subr.bf16.mxu0 %v5735
    %9221 = vmatpush2.bf16.msra.mxu0 %v5734
    %9222 = vmatprep.subr.bf16.mxu0 %v5731
    %9223 = vmatpush2.bf16.msra.mxu0 %v5730
    %9224 = vmatprep.subr.bf16.mxu0 %v5727
    %9225 = vmatpush2.bf16.msra.mxu0 %v5726
    %9226 = vmatprep.subr.bf16.mxu0 %v5723
    %9227 = vmatpush2.bf16.msra.mxu0 %v5722
    %9228 = vmatprep.subr.bf16.mxu0 %v5719
    %9229 = vmatpush2.bf16.msra.mxu0 %v5718
    %9230 = vmatprep.subr.bf16.mxu0 %v5715
    %9231 = vmatpush2.bf16.msra.mxu0 %v5714
    %9232 = vmatprep.subr.bf16.mxu0 %v5711
    %9233 = vmatpush2.bf16.msra.mxu0 %v5710
    %9234 = vmatprep.mubr.bf16.mxu0 %v175
    %9235 = vmatmul.mubr.bf16.gmra.mxu0 %v174
    %v9236 = vpop.f32.mrf.mxu0
    %v9237 = vadd.f32 %v9196, %v9236
    %v9238 = vpop.f32.mrf.mxu0
    %v9239 = vadd.f32 %v9198, %v9238
    %v9240 = vpop.f32.mrf.mxu0
    %v9241 = vpop.f32.mrf.mxu0
    %9242 = vdwg.mxu0
    %9243 = vmatprep.subr.bf16.mxu0 %v5771
    %9244 = vmatpush1.bf16.msra.mxu0 %v5770
    %9245 = vmatprep.subr.bf16.mxu0 %v5767
    %9246 = vmatpush1.bf16.msra.mxu0 %v5766
    %9247 = vmatprep.subr.bf16.mxu0 %v5763
    %9248 = vmatpush1.bf16.msra.mxu0 %v5762
    %9249 = vmatprep.subr.bf16.mxu0 %v5759
    %9250 = vmatpush1.bf16.msra.mxu0 %v5758
    %9251 = vmatprep.subr.bf16.mxu0 %v5755
    %9252 = vmatpush1.bf16.msra.mxu0 %v5754
    %9253 = vmatprep.subr.bf16.mxu0 %v5751
    %9254 = vmatpush1.bf16.msra.mxu0 %v5750
    %9255 = vmatprep.subr.bf16.mxu0 %v5747
    %9256 = vmatpush1.bf16.msra.mxu0 %v5746
    %9257 = vmatprep.subr.bf16.mxu0 %v5743
    %9258 = vmatpush1.bf16.msra.mxu0 %v5742
    %9259 = vmatprep.subr.bf16.mxu0 %v5803
    %9260 = vmatpush2.bf16.msra.mxu0 %v5802
    %9261 = vmatprep.subr.bf16.mxu0 %v5799
    %9262 = vmatpush2.bf16.msra.mxu0 %v5798
    %9263 = vmatprep.subr.bf16.mxu0 %v5795
    %9264 = vmatpush2.bf16.msra.mxu0 %v5794
    %9265 = vmatprep.subr.bf16.mxu0 %v5791
    %9266 = vmatpush2.bf16.msra.mxu0 %v5790
    %9267 = vmatprep.subr.bf16.mxu0 %v5787
    %9268 = vmatpush2.bf16.msra.mxu0 %v5786
    %9269 = vmatprep.subr.bf16.mxu0 %v5783
    %9270 = vmatpush2.bf16.msra.mxu0 %v5782
    %9271 = vmatprep.subr.bf16.mxu0 %v5779
    %9272 = vmatpush2.bf16.msra.mxu0 %v5778
    %9273 = vmatprep.subr.bf16.mxu0 %v5775
    %9274 = vmatpush2.bf16.msra.mxu0 %v5774
    %9275 = vmatprep.mubr.bf16.mxu0 %v177
    %9276 = vmatmul.mubr.bf16.gmra.mxu0 %v176
    %v9277 = vpop.f32.mrf.mxu0
    %v9278 = vadd.f32 %v9237, %v9277
    %v9279 = vpop.f32.mrf.mxu0
    %v9280 = vadd.f32 %v9239, %v9279
    %v9281 = vpop.f32.mrf.mxu0
    %v9282 = vpop.f32.mrf.mxu0
    %9283 = vdwg.mxu0
    %9284 = vmatprep.subr.bf16.mxu0 %v5835
    %9285 = vmatpush1.bf16.msra.mxu0 %v5834
    %9286 = vmatprep.subr.bf16.mxu0 %v5831
    %9287 = vmatpush1.bf16.msra.mxu0 %v5830
    %9288 = vmatprep.subr.bf16.mxu0 %v5827
    %9289 = vmatpush1.bf16.msra.mxu0 %v5826
    %9290 = vmatprep.subr.bf16.mxu0 %v5823
    %9291 = vmatpush1.bf16.msra.mxu0 %v5822
    %9292 = vmatprep.subr.bf16.mxu0 %v5819
    %9293 = vmatpush1.bf16.msra.mxu0 %v5818
    %9294 = vmatprep.subr.bf16.mxu0 %v5815
    %9295 = vmatpush1.bf16.msra.mxu0 %v5814
    %9296 = vmatprep.subr.bf16.mxu0 %v5811
    %9297 = vmatpush1.bf16.msra.mxu0 %v5810
    %9298 = vmatprep.subr.bf16.mxu0 %v5807
    %9299 = vmatpush1.bf16.msra.mxu0 %v5806
    %9300 = vmatprep.subr.bf16.mxu0 %v5867
    %9301 = vmatpush2.bf16.msra.mxu0 %v5866
    %9302 = vmatprep.subr.bf16.mxu0 %v5863
    %9303 = vmatpush2.bf16.msra.mxu0 %v5862
    %9304 = vmatprep.subr.bf16.mxu0 %v5859
    %9305 = vmatpush2.bf16.msra.mxu0 %v5858
    %9306 = vmatprep.subr.bf16.mxu0 %v5855
    %9307 = vmatpush2.bf16.msra.mxu0 %v5854
    %9308 = vmatprep.subr.bf16.mxu0 %v5851
    %9309 = vmatpush2.bf16.msra.mxu0 %v5850
    %9310 = vmatprep.subr.bf16.mxu0 %v5847
    %9311 = vmatpush2.bf16.msra.mxu0 %v5846
    %9312 = vmatprep.subr.bf16.mxu0 %v5843
    %9313 = vmatpush2.bf16.msra.mxu0 %v5842
    %9314 = vmatprep.subr.bf16.mxu0 %v5839
    %9315 = vmatpush2.bf16.msra.mxu0 %v5838
    %9316 = vmatprep.mubr.bf16.mxu0 %v179
    %9317 = vmatmul.mubr.bf16.gmra.mxu0 %v178
    %v9318 = vpop.f32.mrf.mxu0
    %v9319 = vadd.f32 %v9278, %v9318
    %v9320 = vpop.f32.mrf.mxu0
    %v9321 = vadd.f32 %v9280, %v9320
    %v9322 = vpop.f32.mrf.mxu0
    %v9323 = vpop.f32.mrf.mxu0
    %9324 = vdwg.mxu0
    %9325 = vmatprep.subr.bf16.mxu0 %v5899
    %9326 = vmatpush1.bf16.msra.mxu0 %v5898
    %9327 = vmatprep.subr.bf16.mxu0 %v5895
    %9328 = vmatpush1.bf16.msra.mxu0 %v5894
    %9329 = vmatprep.subr.bf16.mxu0 %v5891
    %9330 = vmatpush1.bf16.msra.mxu0 %v5890
    %9331 = vmatprep.subr.bf16.mxu0 %v5887
    %9332 = vmatpush1.bf16.msra.mxu0 %v5886
    %9333 = vmatprep.subr.bf16.mxu0 %v5883
    %9334 = vmatpush1.bf16.msra.mxu0 %v5882
    %9335 = vmatprep.subr.bf16.mxu0 %v5879
    %9336 = vmatpush1.bf16.msra.mxu0 %v5878
    %9337 = vmatprep.subr.bf16.mxu0 %v5875
    %9338 = vmatpush1.bf16.msra.mxu0 %v5874
    %9339 = vmatprep.subr.bf16.mxu0 %v5871
    %9340 = vmatpush1.bf16.msra.mxu0 %v5870
    %9341 = vmatprep.subr.bf16.mxu0 %v5931
    %9342 = vmatpush2.bf16.msra.mxu0 %v5930
    %9343 = vmatprep.subr.bf16.mxu0 %v5927
    %9344 = vmatpush2.bf16.msra.mxu0 %v5926
    %9345 = vmatprep.subr.bf16.mxu0 %v5923
    %9346 = vmatpush2.bf16.msra.mxu0 %v5922
    %9347 = vmatprep.subr.bf16.mxu0 %v5919
    %9348 = vmatpush2.bf16.msra.mxu0 %v5918
    %9349 = vmatprep.subr.bf16.mxu0 %v5915
    %9350 = vmatpush2.bf16.msra.mxu0 %v5914
    %9351 = vmatprep.subr.bf16.mxu0 %v5911
    %9352 = vmatpush2.bf16.msra.mxu0 %v5910
    %9353 = vmatprep.subr.bf16.mxu0 %v5907
    %9354 = vmatpush2.bf16.msra.mxu0 %v5906
    %9355 = vmatprep.subr.bf16.mxu0 %v5903
    %9356 = vmatpush2.bf16.msra.mxu0 %v5902
    %9357 = vmatprep.mubr.bf16.mxu0 %v181
    %9358 = vmatmul.mubr.bf16.gmra.mxu0 %v180
    %v9359 = vpop.f32.mrf.mxu0
    %v9360 = vadd.f32 %v9319, %v9359
    %v9361 = vpop.f32.mrf.mxu0
    %v9362 = vadd.f32 %v9321, %v9361
    %v9363 = vpop.f32.mrf.mxu0
    %v9364 = vpop.f32.mrf.mxu0
    %9365 = vdwg.mxu0
    %9366 = vmatprep.subr.bf16.mxu0 %v5963
    %9367 = vmatpush1.bf16.msra.mxu0 %v5962
    %9368 = vmatprep.subr.bf16.mxu0 %v5959
    %9369 = vmatpush1.bf16.msra.mxu0 %v5958
    %9370 = vmatprep.subr.bf16.mxu0 %v5955
    %9371 = vmatpush1.bf16.msra.mxu0 %v5954
    %9372 = vmatprep.subr.bf16.mxu0 %v5951
    %9373 = vmatpush1.bf16.msra.mxu0 %v5950
    %9374 = vmatprep.subr.bf16.mxu0 %v5947
    %9375 = vmatpush1.bf16.msra.mxu0 %v5946
    %9376 = vmatprep.subr.bf16.mxu0 %v5943
    %9377 = vmatpush1.bf16.msra.mxu0 %v5942
    %9378 = vmatprep.subr.bf16.mxu0 %v5939
    %9379 = vmatpush1.bf16.msra.mxu0 %v5938
    %9380 = vmatprep.subr.bf16.mxu0 %v5935
    %9381 = vmatpush1.bf16.msra.mxu0 %v5934
    %9382 = vmatprep.subr.bf16.mxu0 %v5995
    %9383 = vmatpush2.bf16.msra.mxu0 %v5994
    %9384 = vmatprep.subr.bf16.mxu0 %v5991
    %9385 = vmatpush2.bf16.msra.mxu0 %v5990
    %9386 = vmatprep.subr.bf16.mxu0 %v5987
    %9387 = vmatpush2.bf16.msra.mxu0 %v5986
    %9388 = vmatprep.subr.bf16.mxu0 %v5983
    %9389 = vmatpush2.bf16.msra.mxu0 %v5982
    %9390 = vmatprep.subr.bf16.mxu0 %v5979
    %9391 = vmatpush2.bf16.msra.mxu0 %v5978
    %9392 = vmatprep.subr.bf16.mxu0 %v5975
    %9393 = vmatpush2.bf16.msra.mxu0 %v5974
    %9394 = vmatprep.subr.bf16.mxu0 %v5971
    %9395 = vmatpush2.bf16.msra.mxu0 %v5970
    %9396 = vmatprep.subr.bf16.mxu0 %v5967
    %9397 = vmatpush2.bf16.msra.mxu0 %v5966
    %9398 = vmatprep.mubr.bf16.mxu0 %v183
    %9399 = vmatmul.mubr.bf16.gmra.mxu0 %v182
    %v9400 = vpop.f32.mrf.mxu0
    %v9401 = vadd.f32 %v9360, %v9400
    %v9402 = vpop.f32.mrf.mxu0
    %v9403 = vadd.f32 %v9362, %v9402
    %v9404 = vpop.f32.mrf.mxu0
    %v9405 = vpop.f32.mrf.mxu0
    %9406 = vdwg.mxu0
    %9407 = vmatprep.subr.bf16.mxu0 %v6027
    %9408 = vmatpush1.bf16.msra.mxu0 %v6026
    %9409 = vmatprep.subr.bf16.mxu0 %v6023
    %9410 = vmatpush1.bf16.msra.mxu0 %v6022
    %9411 = vmatprep.subr.bf16.mxu0 %v6019
    %9412 = vmatpush1.bf16.msra.mxu0 %v6018
    %9413 = vmatprep.subr.bf16.mxu0 %v6015
    %9414 = vmatpush1.bf16.msra.mxu0 %v6014
    %9415 = vmatprep.subr.bf16.mxu0 %v6011
    %9416 = vmatpush1.bf16.msra.mxu0 %v6010
    %9417 = vmatprep.subr.bf16.mxu0 %v6007
    %9418 = vmatpush1.bf16.msra.mxu0 %v6006
    %9419 = vmatprep.subr.bf16.mxu0 %v6003
    %9420 = vmatpush1.bf16.msra.mxu0 %v6002
    %9421 = vmatprep.subr.bf16.mxu0 %v5999
    %9422 = vmatpush1.bf16.msra.mxu0 %v5998
    %9423 = vmatprep.subr.bf16.mxu0 %v6059
    %9424 = vmatpush2.bf16.msra.mxu0 %v6058
    %9425 = vmatprep.subr.bf16.mxu0 %v6055
    %9426 = vmatpush2.bf16.msra.mxu0 %v6054
    %9427 = vmatprep.subr.bf16.mxu0 %v6051
    %9428 = vmatpush2.bf16.msra.mxu0 %v6050
    %9429 = vmatprep.subr.bf16.mxu0 %v6047
    %9430 = vmatpush2.bf16.msra.mxu0 %v6046
    %9431 = vmatprep.subr.bf16.mxu0 %v6043
    %9432 = vmatpush2.bf16.msra.mxu0 %v6042
    %9433 = vmatprep.subr.bf16.mxu0 %v6039
    %9434 = vmatpush2.bf16.msra.mxu0 %v6038
    %9435 = vmatprep.subr.bf16.mxu0 %v6035
    %9436 = vmatpush2.bf16.msra.mxu0 %v6034
    %9437 = vmatprep.subr.bf16.mxu0 %v6031
    %9438 = vmatpush2.bf16.msra.mxu0 %v6030
    %9439 = vmatprep.mubr.bf16.mxu0 %v185
    %9440 = vmatmul.mubr.bf16.gmra.mxu0 %v184
    %v9441 = vpop.f32.mrf.mxu0
    %v9442 = vadd.f32 %v9401, %v9441
    %v9443 = vpop.f32.mrf.mxu0
    %v9444 = vadd.f32 %v9403, %v9443
    %v9445 = vpop.f32.mrf.mxu0
    %v9446 = vpop.f32.mrf.mxu0
    %9447 = vdwg.mxu0
    %9448 = vmatprep.subr.bf16.mxu0 %v6091
    %9449 = vmatpush1.bf16.msra.mxu0 %v6090
    %9450 = vmatprep.subr.bf16.mxu0 %v6087
    %9451 = vmatpush1.bf16.msra.mxu0 %v6086
    %9452 = vmatprep.subr.bf16.mxu0 %v6083
    %9453 = vmatpush1.bf16.msra.mxu0 %v6082
    %9454 = vmatprep.subr.bf16.mxu0 %v6079
    %9455 = vmatpush1.bf16.msra.mxu0 %v6078
    %9456 = vmatprep.subr.bf16.mxu0 %v6075
    %9457 = vmatpush1.bf16.msra.mxu0 %v6074
    %9458 = vmatprep.subr.bf16.mxu0 %v6071
    %9459 = vmatpush1.bf16.msra.mxu0 %v6070
    %9460 = vmatprep.subr.bf16.mxu0 %v6067
    %9461 = vmatpush1.bf16.msra.mxu0 %v6066
    %9462 = vmatprep.subr.bf16.mxu0 %v6063
    %9463 = vmatpush1.bf16.msra.mxu0 %v6062
    %9464 = vmatprep.subr.bf16.mxu0 %v6123
    %9465 = vmatpush2.bf16.msra.mxu0 %v6122
    %9466 = vmatprep.subr.bf16.mxu0 %v6119
    %9467 = vmatpush2.bf16.msra.mxu0 %v6118
    %9468 = vmatprep.subr.bf16.mxu0 %v6115
    %9469 = vmatpush2.bf16.msra.mxu0 %v6114
    %9470 = vmatprep.subr.bf16.mxu0 %v6111
    %9471 = vmatpush2.bf16.msra.mxu0 %v6110
    %9472 = vmatprep.subr.bf16.mxu0 %v6107
    %9473 = vmatpush2.bf16.msra.mxu0 %v6106
    %9474 = vmatprep.subr.bf16.mxu0 %v6103
    %9475 = vmatpush2.bf16.msra.mxu0 %v6102
    %9476 = vmatprep.subr.bf16.mxu0 %v6099
    %9477 = vmatpush2.bf16.msra.mxu0 %v6098
    %9478 = vmatprep.subr.bf16.mxu0 %v6095
    %9479 = vmatpush2.bf16.msra.mxu0 %v6094
    %9480 = vmatprep.mubr.bf16.mxu0 %v187
    %9481 = vmatmul.mubr.bf16.gmra.mxu0 %v186
    %v9482 = vpop.f32.mrf.mxu0
    %v9483 = vadd.f32 %v9442, %v9482
    %v9484 = vpop.f32.mrf.mxu0
    %v9485 = vadd.f32 %v9444, %v9484
    %v9486 = vpop.f32.mrf.mxu0
    %v9487 = vpop.f32.mrf.mxu0
    %9488 = vdwg.mxu0
    %9489 = vmatprep.subr.bf16.mxu0 %v6155
    %9490 = vmatpush1.bf16.msra.mxu0 %v6154
    %9491 = vmatprep.subr.bf16.mxu0 %v6151
    %9492 = vmatpush1.bf16.msra.mxu0 %v6150
    %9493 = vmatprep.subr.bf16.mxu0 %v6147
    %9494 = vmatpush1.bf16.msra.mxu0 %v6146
    %9495 = vmatprep.subr.bf16.mxu0 %v6143
    %9496 = vmatpush1.bf16.msra.mxu0 %v6142
    %9497 = vmatprep.subr.bf16.mxu0 %v6139
    %9498 = vmatpush1.bf16.msra.mxu0 %v6138
    %9499 = vmatprep.subr.bf16.mxu0 %v6135
    %9500 = vmatpush1.bf16.msra.mxu0 %v6134
    %9501 = vmatprep.subr.bf16.mxu0 %v6131
    %9502 = vmatpush1.bf16.msra.mxu0 %v6130
    %9503 = vmatprep.subr.bf16.mxu0 %v6127
    %9504 = vmatpush1.bf16.msra.mxu0 %v6126
    %9505 = vmatprep.subr.bf16.mxu0 %v6187
    %9506 = vmatpush2.bf16.msra.mxu0 %v6186
    %9507 = vmatprep.subr.bf16.mxu0 %v6183
    %9508 = vmatpush2.bf16.msra.mxu0 %v6182
    %9509 = vmatprep.subr.bf16.mxu0 %v6179
    %9510 = vmatpush2.bf16.msra.mxu0 %v6178
    %9511 = vmatprep.subr.bf16.mxu0 %v6175
    %9512 = vmatpush2.bf16.msra.mxu0 %v6174
    %9513 = vmatprep.subr.bf16.mxu0 %v6171
    %9514 = vmatpush2.bf16.msra.mxu0 %v6170
    %9515 = vmatprep.subr.bf16.mxu0 %v6167
    %9516 = vmatpush2.bf16.msra.mxu0 %v6166
    %9517 = vmatprep.subr.bf16.mxu0 %v6163
    %9518 = vmatpush2.bf16.msra.mxu0 %v6162
    %9519 = vmatprep.subr.bf16.mxu0 %v6159
    %9520 = vmatpush2.bf16.msra.mxu0 %v6158
    %9521 = vmatprep.mubr.bf16.mxu0 %v189
    %9522 = vmatmul.mubr.bf16.gmra.mxu0 %v188
    %v9523 = vpop.f32.mrf.mxu0
    %v9524 = vadd.f32 %v9483, %v9523
    %v9525 = vpop.f32.mrf.mxu0
    %v9526 = vadd.f32 %v9485, %v9525
    %v9527 = vpop.f32.mrf.mxu0
    %v9528 = vpop.f32.mrf.mxu0
    %9529 = vdwg.mxu0
    %9530 = vmatprep.subr.bf16.mxu0 %v6219
    %9531 = vmatpush1.bf16.msra.mxu0 %v6218
    %9532 = vmatprep.subr.bf16.mxu0 %v6215
    %9533 = vmatpush1.bf16.msra.mxu0 %v6214
    %9534 = vmatprep.subr.bf16.mxu0 %v6211
    %9535 = vmatpush1.bf16.msra.mxu0 %v6210
    %9536 = vmatprep.subr.bf16.mxu0 %v6207
    %9537 = vmatpush1.bf16.msra.mxu0 %v6206
    %9538 = vmatprep.subr.bf16.mxu0 %v6203
    %9539 = vmatpush1.bf16.msra.mxu0 %v6202
    %9540 = vmatprep.subr.bf16.mxu0 %v6199
    %9541 = vmatpush1.bf16.msra.mxu0 %v6198
    %9542 = vmatprep.subr.bf16.mxu0 %v6195
    %9543 = vmatpush1.bf16.msra.mxu0 %v6194
    %9544 = vmatprep.subr.bf16.mxu0 %v6191
    %9545 = vmatpush1.bf16.msra.mxu0 %v6190
    %9546 = vmatprep.subr.bf16.mxu0 %v6251
    %9547 = vmatpush2.bf16.msra.mxu0 %v6250
    %9548 = vmatprep.subr.bf16.mxu0 %v6247
    %9549 = vmatpush2.bf16.msra.mxu0 %v6246
    %9550 = vmatprep.subr.bf16.mxu0 %v6243
    %9551 = vmatpush2.bf16.msra.mxu0 %v6242
    %9552 = vmatprep.subr.bf16.mxu0 %v6239
    %9553 = vmatpush2.bf16.msra.mxu0 %v6238
    %9554 = vmatprep.subr.bf16.mxu0 %v6235
    %9555 = vmatpush2.bf16.msra.mxu0 %v6234
    %9556 = vmatprep.subr.bf16.mxu0 %v6231
    %9557 = vmatpush2.bf16.msra.mxu0 %v6230
    %9558 = vmatprep.subr.bf16.mxu0 %v6227
    %9559 = vmatpush2.bf16.msra.mxu0 %v6226
    %9560 = vmatprep.subr.bf16.mxu0 %v6223
    %9561 = vmatpush2.bf16.msra.mxu0 %v6222
    %9562 = vmatprep.mubr.bf16.mxu0 %v191
    %9563 = vmatmul.mubr.bf16.gmra.mxu0 %v190
    %v9564 = vpop.f32.mrf.mxu0
    %v9565 = vadd.f32 %v9524, %v9564
    %v9566 = vpop.f32.mrf.mxu0
    %v9567 = vadd.f32 %v9526, %v9566
    %v9568 = vpop.f32.mrf.mxu0
    %v9569 = vpop.f32.mrf.mxu0
    %9570 = vdwg.mxu0
    %9571 = vmatprep.subr.bf16.mxu0 %v6283
    %9572 = vmatpush1.bf16.msra.mxu0 %v6282
    %9573 = vmatprep.subr.bf16.mxu0 %v6279
    %9574 = vmatpush1.bf16.msra.mxu0 %v6278
    %9575 = vmatprep.subr.bf16.mxu0 %v6275
    %9576 = vmatpush1.bf16.msra.mxu0 %v6274
    %9577 = vmatprep.subr.bf16.mxu0 %v6271
    %9578 = vmatpush1.bf16.msra.mxu0 %v6270
    %9579 = vmatprep.subr.bf16.mxu0 %v6267
    %9580 = vmatpush1.bf16.msra.mxu0 %v6266
    %9581 = vmatprep.subr.bf16.mxu0 %v6263
    %9582 = vmatpush1.bf16.msra.mxu0 %v6262
    %9583 = vmatprep.subr.bf16.mxu0 %v6259
    %9584 = vmatpush1.bf16.msra.mxu0 %v6258
    %9585 = vmatprep.subr.bf16.mxu0 %v6255
    %9586 = vmatpush1.bf16.msra.mxu0 %v6254
    %9587 = vmatprep.subr.bf16.mxu0 %v6315
    %9588 = vmatpush2.bf16.msra.mxu0 %v6314
    %9589 = vmatprep.subr.bf16.mxu0 %v6311
    %9590 = vmatpush2.bf16.msra.mxu0 %v6310
    %9591 = vmatprep.subr.bf16.mxu0 %v6307
    %9592 = vmatpush2.bf16.msra.mxu0 %v6306
    %9593 = vmatprep.subr.bf16.mxu0 %v6303
    %9594 = vmatpush2.bf16.msra.mxu0 %v6302
    %9595 = vmatprep.subr.bf16.mxu0 %v6299
    %9596 = vmatpush2.bf16.msra.mxu0 %v6298
    %9597 = vmatprep.subr.bf16.mxu0 %v6295
    %9598 = vmatpush2.bf16.msra.mxu0 %v6294
    %9599 = vmatprep.subr.bf16.mxu0 %v6291
    %9600 = vmatpush2.bf16.msra.mxu0 %v6290
    %9601 = vmatprep.subr.bf16.mxu0 %v6287
    %9602 = vmatpush2.bf16.msra.mxu0 %v6286
    %9603 = vmatprep.mubr.bf16.mxu0 %v193
    %9604 = vmatmul.mubr.bf16.gmra.mxu0 %v192
    %v9605 = vpop.f32.mrf.mxu0
    %v9606 = vadd.f32 %v9565, %v9605
    %v9607 = vpop.f32.mrf.mxu0
    %v9608 = vadd.f32 %v9567, %v9607
    %v9609 = vpop.f32.mrf.mxu0
    %v9610 = vpop.f32.mrf.mxu0
    %9611 = vdwg.mxu0
    %9612 = vmatprep.subr.bf16.mxu0 %v6347
    %9613 = vmatpush1.bf16.msra.mxu0 %v6346
    %9614 = vmatprep.subr.bf16.mxu0 %v6343
    %9615 = vmatpush1.bf16.msra.mxu0 %v6342
    %9616 = vmatprep.subr.bf16.mxu0 %v6339
    %9617 = vmatpush1.bf16.msra.mxu0 %v6338
    %9618 = vmatprep.subr.bf16.mxu0 %v6335
    %9619 = vmatpush1.bf16.msra.mxu0 %v6334
    %9620 = vmatprep.subr.bf16.mxu0 %v6331
    %9621 = vmatpush1.bf16.msra.mxu0 %v6330
    %9622 = vmatprep.subr.bf16.mxu0 %v6327
    %9623 = vmatpush1.bf16.msra.mxu0 %v6326
    %9624 = vmatprep.subr.bf16.mxu0 %v6323
    %9625 = vmatpush1.bf16.msra.mxu0 %v6322
    %9626 = vmatprep.subr.bf16.mxu0 %v6319
    %9627 = vmatpush1.bf16.msra.mxu0 %v6318
    %9628 = vmatprep.subr.bf16.mxu0 %v6379
    %9629 = vmatpush2.bf16.msra.mxu0 %v6378
    %9630 = vmatprep.subr.bf16.mxu0 %v6375
    %9631 = vmatpush2.bf16.msra.mxu0 %v6374
    %9632 = vmatprep.subr.bf16.mxu0 %v6371
    %9633 = vmatpush2.bf16.msra.mxu0 %v6370
    %9634 = vmatprep.subr.bf16.mxu0 %v6367
    %9635 = vmatpush2.bf16.msra.mxu0 %v6366
    %9636 = vmatprep.subr.bf16.mxu0 %v6363
    %9637 = vmatpush2.bf16.msra.mxu0 %v6362
    %9638 = vmatprep.subr.bf16.mxu0 %v6359
    %9639 = vmatpush2.bf16.msra.mxu0 %v6358
    %9640 = vmatprep.subr.bf16.mxu0 %v6355
    %9641 = vmatpush2.bf16.msra.mxu0 %v6354
    %9642 = vmatprep.subr.bf16.mxu0 %v6351
    %9643 = vmatpush2.bf16.msra.mxu0 %v6350
    %9644 = vmatprep.mubr.bf16.mxu0 %v195
    %9645 = vmatmul.mubr.bf16.gmra.mxu0 %v194
    %v9646 = vpop.f32.mrf.mxu0
    %v9647 = vadd.f32 %v9606, %v9646
    %v9648 = vpop.f32.mrf.mxu0
    %v9649 = vadd.f32 %v9608, %v9648
    %v9650 = vpop.f32.mrf.mxu0
    %v9651 = vpop.f32.mrf.mxu0
    %9652 = vdwg.mxu0
    %9653 = vmatprep.subr.bf16.mxu0 %v6411
    %9654 = vmatpush1.bf16.msra.mxu0 %v6410
    %9655 = vmatprep.subr.bf16.mxu0 %v6407
    %9656 = vmatpush1.bf16.msra.mxu0 %v6406
    %9657 = vmatprep.subr.bf16.mxu0 %v6403
    %9658 = vmatpush1.bf16.msra.mxu0 %v6402
    %9659 = vmatprep.subr.bf16.mxu0 %v6399
    %9660 = vmatpush1.bf16.msra.mxu0 %v6398
    %9661 = vmatprep.subr.bf16.mxu0 %v6395
    %9662 = vmatpush1.bf16.msra.mxu0 %v6394
    %9663 = vmatprep.subr.bf16.mxu0 %v6391
    %9664 = vmatpush1.bf16.msra.mxu0 %v6390
    %9665 = vmatprep.subr.bf16.mxu0 %v6387
    %9666 = vmatpush1.bf16.msra.mxu0 %v6386
    %9667 = vmatprep.subr.bf16.mxu0 %v6383
    %9668 = vmatpush1.bf16.msra.mxu0 %v6382
    %9669 = vmatprep.subr.bf16.mxu0 %v6443
    %9670 = vmatpush2.bf16.msra.mxu0 %v6442
    %9671 = vmatprep.subr.bf16.mxu0 %v6439
    %9672 = vmatpush2.bf16.msra.mxu0 %v6438
    %9673 = vmatprep.subr.bf16.mxu0 %v6435
    %9674 = vmatpush2.bf16.msra.mxu0 %v6434
    %9675 = vmatprep.subr.bf16.mxu0 %v6431
    %9676 = vmatpush2.bf16.msra.mxu0 %v6430
    %9677 = vmatprep.subr.bf16.mxu0 %v6427
    %9678 = vmatpush2.bf16.msra.mxu0 %v6426
    %9679 = vmatprep.subr.bf16.mxu0 %v6423
    %9680 = vmatpush2.bf16.msra.mxu0 %v6422
    %9681 = vmatprep.subr.bf16.mxu0 %v6419
    %9682 = vmatpush2.bf16.msra.mxu0 %v6418
    %9683 = vmatprep.subr.bf16.mxu0 %v6415
    %9684 = vmatpush2.bf16.msra.mxu0 %v6414
    %9685 = vmatprep.mubr.bf16.mxu0 %v197
    %9686 = vmatmul.mubr.bf16.gmra.mxu0 %v196
    %v9687 = vpop.f32.mrf.mxu0
    %v9688 = vadd.f32 %v9647, %v9687
    %v9689 = vpop.f32.mrf.mxu0
    %v9690 = vadd.f32 %v9649, %v9689
    %v9691 = vpop.f32.mrf.mxu0
    %v9692 = vpop.f32.mrf.mxu0
    %9693 = vdwg.mxu0
    %9694 = vmatprep.subr.bf16.mxu0 %v6475
    %9695 = vmatpush1.bf16.msra.mxu0 %v6474
    %9696 = vmatprep.subr.bf16.mxu0 %v6471
    %9697 = vmatpush1.bf16.msra.mxu0 %v6470
    %9698 = vmatprep.subr.bf16.mxu0 %v6467
    %9699 = vmatpush1.bf16.msra.mxu0 %v6466
    %9700 = vmatprep.subr.bf16.mxu0 %v6463
    %9701 = vmatpush1.bf16.msra.mxu0 %v6462
    %9702 = vmatprep.subr.bf16.mxu0 %v6459
    %9703 = vmatpush1.bf16.msra.mxu0 %v6458
    %9704 = vmatprep.subr.bf16.mxu0 %v6455
    %9705 = vmatpush1.bf16.msra.mxu0 %v6454
    %9706 = vmatprep.subr.bf16.mxu0 %v6451
    %9707 = vmatpush1.bf16.msra.mxu0 %v6450
    %9708 = vmatprep.subr.bf16.mxu0 %v6447
    %9709 = vmatpush1.bf16.msra.mxu0 %v6446
    %9710 = vmatprep.subr.bf16.mxu0 %v6507
    %9711 = vmatpush2.bf16.msra.mxu0 %v6506
    %9712 = vmatprep.subr.bf16.mxu0 %v6503
    %9713 = vmatpush2.bf16.msra.mxu0 %v6502
    %9714 = vmatprep.subr.bf16.mxu0 %v6499
    %9715 = vmatpush2.bf16.msra.mxu0 %v6498
    %9716 = vmatprep.subr.bf16.mxu0 %v6495
    %9717 = vmatpush2.bf16.msra.mxu0 %v6494
    %9718 = vmatprep.subr.bf16.mxu0 %v6491
    %9719 = vmatpush2.bf16.msra.mxu0 %v6490
    %9720 = vmatprep.subr.bf16.mxu0 %v6487
    %9721 = vmatpush2.bf16.msra.mxu0 %v6486
    %9722 = vmatprep.subr.bf16.mxu0 %v6483
    %9723 = vmatpush2.bf16.msra.mxu0 %v6482
    %9724 = vmatprep.subr.bf16.mxu0 %v6479
    %9725 = vmatpush2.bf16.msra.mxu0 %v6478
    %9726 = vmatprep.mubr.bf16.mxu0 %v199
    %9727 = vmatmul.mubr.bf16.gmra.mxu0 %v198
    %v9728 = vpop.f32.mrf.mxu0
    %v9729 = vadd.f32 %v9688, %v9728
    %v9730 = vpop.f32.mrf.mxu0
    %v9731 = vadd.f32 %v9690, %v9730
    %v9732 = vpop.f32.mrf.mxu0
    %v9733 = vpop.f32.mrf.mxu0
    %9734 = vdwg.mxu0
    %9735 = vmatprep.subr.bf16.mxu0 %v6539
    %9736 = vmatpush1.bf16.msra.mxu0 %v6538
    %9737 = vmatprep.subr.bf16.mxu0 %v6535
    %9738 = vmatpush1.bf16.msra.mxu0 %v6534
    %9739 = vmatprep.subr.bf16.mxu0 %v6531
    %9740 = vmatpush1.bf16.msra.mxu0 %v6530
    %9741 = vmatprep.subr.bf16.mxu0 %v6527
    %9742 = vmatpush1.bf16.msra.mxu0 %v6526
    %9743 = vmatprep.subr.bf16.mxu0 %v6523
    %9744 = vmatpush1.bf16.msra.mxu0 %v6522
    %9745 = vmatprep.subr.bf16.mxu0 %v6519
    %9746 = vmatpush1.bf16.msra.mxu0 %v6518
    %9747 = vmatprep.subr.bf16.mxu0 %v6515
    %9748 = vmatpush1.bf16.msra.mxu0 %v6514
    %9749 = vmatprep.subr.bf16.mxu0 %v6511
    %9750 = vmatpush1.bf16.msra.mxu0 %v6510
    %9751 = vmatprep.subr.bf16.mxu0 %v6571
    %9752 = vmatpush2.bf16.msra.mxu0 %v6570
    %9753 = vmatprep.subr.bf16.mxu0 %v6567
    %9754 = vmatpush2.bf16.msra.mxu0 %v6566
    %9755 = vmatprep.subr.bf16.mxu0 %v6563
    %9756 = vmatpush2.bf16.msra.mxu0 %v6562
    %9757 = vmatprep.subr.bf16.mxu0 %v6559
    %9758 = vmatpush2.bf16.msra.mxu0 %v6558
    %9759 = vmatprep.subr.bf16.mxu0 %v6555
    %9760 = vmatpush2.bf16.msra.mxu0 %v6554
    %9761 = vmatprep.subr.bf16.mxu0 %v6551
    %9762 = vmatpush2.bf16.msra.mxu0 %v6550
    %9763 = vmatprep.subr.bf16.mxu0 %v6547
    %9764 = vmatpush2.bf16.msra.mxu0 %v6546
    %9765 = vmatprep.subr.bf16.mxu0 %v6543
    %9766 = vmatpush2.bf16.msra.mxu0 %v6542
    %9767 = vmatprep.mubr.bf16.mxu0 %v201
    %9768 = vmatmul.mubr.bf16.gmra.mxu0 %v200
    %v9769 = vpop.f32.mrf.mxu0
    %v9770 = vadd.f32 %v9729, %v9769
    %v9771 = vpop.f32.mrf.mxu0
    %v9772 = vadd.f32 %v9731, %v9771
    %v9773 = vpop.f32.mrf.mxu0
    %v9774 = vpop.f32.mrf.mxu0
    %9775 = vdwg.mxu0
    %9776 = vmatprep.subr.bf16.mxu0 %v6603
    %9777 = vmatpush1.bf16.msra.mxu0 %v6602
    %9778 = vmatprep.subr.bf16.mxu0 %v6599
    %9779 = vmatpush1.bf16.msra.mxu0 %v6598
    %9780 = vmatprep.subr.bf16.mxu0 %v6595
    %9781 = vmatpush1.bf16.msra.mxu0 %v6594
    %9782 = vmatprep.subr.bf16.mxu0 %v6591
    %9783 = vmatpush1.bf16.msra.mxu0 %v6590
    %9784 = vmatprep.subr.bf16.mxu0 %v6587
    %9785 = vmatpush1.bf16.msra.mxu0 %v6586
    %9786 = vmatprep.subr.bf16.mxu0 %v6583
    %9787 = vmatpush1.bf16.msra.mxu0 %v6582
    %9788 = vmatprep.subr.bf16.mxu0 %v6579
    %9789 = vmatpush1.bf16.msra.mxu0 %v6578
    %9790 = vmatprep.subr.bf16.mxu0 %v6575
    %9791 = vmatpush1.bf16.msra.mxu0 %v6574
    %9792 = vmatprep.subr.bf16.mxu0 %v6635
    %9793 = vmatpush2.bf16.msra.mxu0 %v6634
    %9794 = vmatprep.subr.bf16.mxu0 %v6631
    %9795 = vmatpush2.bf16.msra.mxu0 %v6630
    %9796 = vmatprep.subr.bf16.mxu0 %v6627
    %9797 = vmatpush2.bf16.msra.mxu0 %v6626
    %9798 = vmatprep.subr.bf16.mxu0 %v6623
    %9799 = vmatpush2.bf16.msra.mxu0 %v6622
    %9800 = vmatprep.subr.bf16.mxu0 %v6619
    %9801 = vmatpush2.bf16.msra.mxu0 %v6618
    %9802 = vmatprep.subr.bf16.mxu0 %v6615
    %9803 = vmatpush2.bf16.msra.mxu0 %v6614
    %9804 = vmatprep.subr.bf16.mxu0 %v6611
    %9805 = vmatpush2.bf16.msra.mxu0 %v6610
    %9806 = vmatprep.subr.bf16.mxu0 %v6607
    %9807 = vmatpush2.bf16.msra.mxu0 %v6606
    %9808 = vmatprep.mubr.bf16.mxu0 %v203
    %9809 = vmatmul.mubr.bf16.gmra.mxu0 %v202
    %v9810 = vpop.f32.mrf.mxu0
    %v9811 = vadd.f32 %v9770, %v9810
    %v9812 = vpop.f32.mrf.mxu0
    %v9813 = vadd.f32 %v9772, %v9812
    %v9814 = vpop.f32.mrf.mxu0
    %v9815 = vpop.f32.mrf.mxu0
    %9816 = vdwg.mxu0
    %9817 = vmatprep.subr.bf16.mxu0 %v6667
    %9818 = vmatpush1.bf16.msra.mxu0 %v6666
    %9819 = vmatprep.subr.bf16.mxu0 %v6663
    %9820 = vmatpush1.bf16.msra.mxu0 %v6662
    %9821 = vmatprep.subr.bf16.mxu0 %v6659
    %9822 = vmatpush1.bf16.msra.mxu0 %v6658
    %9823 = vmatprep.subr.bf16.mxu0 %v6655
    %9824 = vmatpush1.bf16.msra.mxu0 %v6654
    %9825 = vmatprep.subr.bf16.mxu0 %v6651
    %9826 = vmatpush1.bf16.msra.mxu0 %v6650
    %9827 = vmatprep.subr.bf16.mxu0 %v6647
    %9828 = vmatpush1.bf16.msra.mxu0 %v6646
    %9829 = vmatprep.subr.bf16.mxu0 %v6643
    %9830 = vmatpush1.bf16.msra.mxu0 %v6642
    %9831 = vmatprep.subr.bf16.mxu0 %v6639
    %9832 = vmatpush1.bf16.msra.mxu0 %v6638
    %9833 = vmatprep.subr.bf16.mxu0 %v6699
    %9834 = vmatpush2.bf16.msra.mxu0 %v6698
    %9835 = vmatprep.subr.bf16.mxu0 %v6695
    %9836 = vmatpush2.bf16.msra.mxu0 %v6694
    %9837 = vmatprep.subr.bf16.mxu0 %v6691
    %9838 = vmatpush2.bf16.msra.mxu0 %v6690
    %9839 = vmatprep.subr.bf16.mxu0 %v6687
    %9840 = vmatpush2.bf16.msra.mxu0 %v6686
    %9841 = vmatprep.subr.bf16.mxu0 %v6683
    %9842 = vmatpush2.bf16.msra.mxu0 %v6682
    %9843 = vmatprep.subr.bf16.mxu0 %v6679
    %9844 = vmatpush2.bf16.msra.mxu0 %v6678
    %9845 = vmatprep.subr.bf16.mxu0 %v6675
    %9846 = vmatpush2.bf16.msra.mxu0 %v6674
    %9847 = vmatprep.subr.bf16.mxu0 %v6671
    %9848 = vmatpush2.bf16.msra.mxu0 %v6670
    %9849 = vmatprep.mubr.bf16.mxu0 %v205
    %9850 = vmatmul.mubr.bf16.gmra.mxu0 %v204
    %v9851 = vpop.f32.mrf.mxu0
    %v9852 = vadd.f32 %v9811, %v9851
    %v9853 = vpop.f32.mrf.mxu0
    %v9854 = vadd.f32 %v9813, %v9853
    %v9855 = vpop.f32.mrf.mxu0
    %v9856 = vpop.f32.mrf.mxu0
    %9857 = vdwg.mxu0
    %9858 = vmatprep.subr.bf16.mxu0 %v6731
    %9859 = vmatpush1.bf16.msra.mxu0 %v6730
    %9860 = vmatprep.subr.bf16.mxu0 %v6727
    %9861 = vmatpush1.bf16.msra.mxu0 %v6726
    %9862 = vmatprep.subr.bf16.mxu0 %v6723
    %9863 = vmatpush1.bf16.msra.mxu0 %v6722
    %9864 = vmatprep.subr.bf16.mxu0 %v6719
    %9865 = vmatpush1.bf16.msra.mxu0 %v6718
    %9866 = vmatprep.subr.bf16.mxu0 %v6715
    %9867 = vmatpush1.bf16.msra.mxu0 %v6714
    %9868 = vmatprep.subr.bf16.mxu0 %v6711
    %9869 = vmatpush1.bf16.msra.mxu0 %v6710
    %9870 = vmatprep.subr.bf16.mxu0 %v6707
    %9871 = vmatpush1.bf16.msra.mxu0 %v6706
    %9872 = vmatprep.subr.bf16.mxu0 %v6703
    %9873 = vmatpush1.bf16.msra.mxu0 %v6702
    %9874 = vmatprep.subr.bf16.mxu0 %v6763
    %9875 = vmatpush2.bf16.msra.mxu0 %v6762
    %9876 = vmatprep.subr.bf16.mxu0 %v6759
    %9877 = vmatpush2.bf16.msra.mxu0 %v6758
    %9878 = vmatprep.subr.bf16.mxu0 %v6755
    %9879 = vmatpush2.bf16.msra.mxu0 %v6754
    %9880 = vmatprep.subr.bf16.mxu0 %v6751
    %9881 = vmatpush2.bf16.msra.mxu0 %v6750
    %9882 = vmatprep.subr.bf16.mxu0 %v6747
    %9883 = vmatpush2.bf16.msra.mxu0 %v6746
    %9884 = vmatprep.subr.bf16.mxu0 %v6743
    %9885 = vmatpush2.bf16.msra.mxu0 %v6742
    %9886 = vmatprep.subr.bf16.mxu0 %v6739
    %9887 = vmatpush2.bf16.msra.mxu0 %v6738
    %9888 = vmatprep.subr.bf16.mxu0 %v6735
    %9889 = vmatpush2.bf16.msra.mxu0 %v6734
    %9890 = vmatprep.mubr.bf16.mxu0 %v207
    %9891 = vmatmul.mubr.bf16.gmra.mxu0 %v206
    %v9892 = vpop.f32.mrf.mxu0
    %v9893 = vadd.f32 %v9852, %v9892
    %v9894 = vpop.f32.mrf.mxu0
    %v9895 = vadd.f32 %v9854, %v9894
    %v9896 = vpop.f32.mrf.mxu0
    %v9897 = vpop.f32.mrf.mxu0
    %9898 = vdwg.mxu0
    %9899 = vmatprep.subr.bf16.mxu0 %v6795
    %9900 = vmatpush1.bf16.msra.mxu0 %v6794
    %9901 = vmatprep.subr.bf16.mxu0 %v6791
    %9902 = vmatpush1.bf16.msra.mxu0 %v6790
    %9903 = vmatprep.subr.bf16.mxu0 %v6787
    %9904 = vmatpush1.bf16.msra.mxu0 %v6786
    %9905 = vmatprep.subr.bf16.mxu0 %v6783
    %9906 = vmatpush1.bf16.msra.mxu0 %v6782
    %9907 = vmatprep.subr.bf16.mxu0 %v6779
    %9908 = vmatpush1.bf16.msra.mxu0 %v6778
    %9909 = vmatprep.subr.bf16.mxu0 %v6775
    %9910 = vmatpush1.bf16.msra.mxu0 %v6774
    %9911 = vmatprep.subr.bf16.mxu0 %v6771
    %9912 = vmatpush1.bf16.msra.mxu0 %v6770
    %9913 = vmatprep.subr.bf16.mxu0 %v6767
    %9914 = vmatpush1.bf16.msra.mxu0 %v6766
    %9915 = vmatprep.subr.bf16.mxu0 %v6827
    %9916 = vmatpush2.bf16.msra.mxu0 %v6826
    %9917 = vmatprep.subr.bf16.mxu0 %v6823
    %9918 = vmatpush2.bf16.msra.mxu0 %v6822
    %9919 = vmatprep.subr.bf16.mxu0 %v6819
    %9920 = vmatpush2.bf16.msra.mxu0 %v6818
    %9921 = vmatprep.subr.bf16.mxu0 %v6815
    %9922 = vmatpush2.bf16.msra.mxu0 %v6814
    %9923 = vmatprep.subr.bf16.mxu0 %v6811
    %9924 = vmatpush2.bf16.msra.mxu0 %v6810
    %9925 = vmatprep.subr.bf16.mxu0 %v6807
    %9926 = vmatpush2.bf16.msra.mxu0 %v6806
    %9927 = vmatprep.subr.bf16.mxu0 %v6803
    %9928 = vmatpush2.bf16.msra.mxu0 %v6802
    %9929 = vmatprep.subr.bf16.mxu0 %v6799
    %9930 = vmatpush2.bf16.msra.mxu0 %v6798
    %9931 = vmatprep.mubr.bf16.mxu0 %v209
    %9932 = vmatmul.mubr.bf16.gmra.mxu0 %v208
    %v9933 = vpop.f32.mrf.mxu0
    %v9934 = vadd.f32 %v9893, %v9933
    %v9935 = vpop.f32.mrf.mxu0
    %v9936 = vadd.f32 %v9895, %v9935
    %v9937 = vpop.f32.mrf.mxu0
    %v9938 = vpop.f32.mrf.mxu0
    %9939 = vdwg.mxu0
    %9940 = vmatprep.subr.bf16.mxu0 %v6859
    %9941 = vmatpush1.bf16.msra.mxu0 %v6858
    %9942 = vmatprep.subr.bf16.mxu0 %v6855
    %9943 = vmatpush1.bf16.msra.mxu0 %v6854
    %9944 = vmatprep.subr.bf16.mxu0 %v6851
    %9945 = vmatpush1.bf16.msra.mxu0 %v6850
    %9946 = vmatprep.subr.bf16.mxu0 %v6847
    %9947 = vmatpush1.bf16.msra.mxu0 %v6846
    %9948 = vmatprep.subr.bf16.mxu0 %v6843
    %9949 = vmatpush1.bf16.msra.mxu0 %v6842
    %9950 = vmatprep.subr.bf16.mxu0 %v6839
    %9951 = vmatpush1.bf16.msra.mxu0 %v6838
    %9952 = vmatprep.subr.bf16.mxu0 %v6835
    %9953 = vmatpush1.bf16.msra.mxu0 %v6834
    %9954 = vmatprep.subr.bf16.mxu0 %v6831
    %9955 = vmatpush1.bf16.msra.mxu0 %v6830
    %9956 = vmatprep.subr.bf16.mxu0 %v6891
    %9957 = vmatpush2.bf16.msra.mxu0 %v6890
    %9958 = vmatprep.subr.bf16.mxu0 %v6887
    %9959 = vmatpush2.bf16.msra.mxu0 %v6886
    %9960 = vmatprep.subr.bf16.mxu0 %v6883
    %9961 = vmatpush2.bf16.msra.mxu0 %v6882
    %9962 = vmatprep.subr.bf16.mxu0 %v6879
    %9963 = vmatpush2.bf16.msra.mxu0 %v6878
    %9964 = vmatprep.subr.bf16.mxu0 %v6875
    %9965 = vmatpush2.bf16.msra.mxu0 %v6874
    %9966 = vmatprep.subr.bf16.mxu0 %v6871
    %9967 = vmatpush2.bf16.msra.mxu0 %v6870
    %9968 = vmatprep.subr.bf16.mxu0 %v6867
    %9969 = vmatpush2.bf16.msra.mxu0 %v6866
    %9970 = vmatprep.subr.bf16.mxu0 %v6863
    %9971 = vmatpush2.bf16.msra.mxu0 %v6862
    %9972 = vmatprep.mubr.bf16.mxu0 %v211
    %9973 = vmatmul.mubr.bf16.gmra.mxu0 %v210
    %v9974 = vpop.f32.mrf.mxu0
    %v9975 = vadd.f32 %v9934, %v9974
    %v9976 = vpop.f32.mrf.mxu0
    %v9977 = vadd.f32 %v9936, %v9976
    %v9978 = vpop.f32.mrf.mxu0
    %v9979 = vpop.f32.mrf.mxu0
    %9980 = vdwg.mxu0
    %9981 = vmatprep.subr.bf16.mxu0 %v6923
    %9982 = vmatpush1.bf16.msra.mxu0 %v6922
    %9983 = vmatprep.subr.bf16.mxu0 %v6919
    %9984 = vmatpush1.bf16.msra.mxu0 %v6918
    %9985 = vmatprep.subr.bf16.mxu0 %v6915
    %9986 = vmatpush1.bf16.msra.mxu0 %v6914
    %9987 = vmatprep.subr.bf16.mxu0 %v6911
    %9988 = vmatpush1.bf16.msra.mxu0 %v6910
    %9989 = vmatprep.subr.bf16.mxu0 %v6907
    %9990 = vmatpush1.bf16.msra.mxu0 %v6906
    %9991 = vmatprep.subr.bf16.mxu0 %v6903
    %9992 = vmatpush1.bf16.msra.mxu0 %v6902
    %9993 = vmatprep.subr.bf16.mxu0 %v6899
    %9994 = vmatpush1.bf16.msra.mxu0 %v6898
    %9995 = vmatprep.subr.bf16.mxu0 %v6895
    %9996 = vmatpush1.bf16.msra.mxu0 %v6894
    %9997 = vmatprep.subr.bf16.mxu0 %v6955
    %9998 = vmatpush2.bf16.msra.mxu0 %v6954
    %9999 = vmatprep.subr.bf16.mxu0 %v6951
    %10000 = vmatpush2.bf16.msra.mxu0 %v6950
    %10001 = vmatprep.subr.bf16.mxu0 %v6947
    %10002 = vmatpush2.bf16.msra.mxu0 %v6946
    %10003 = vmatprep.subr.bf16.mxu0 %v6943
    %10004 = vmatpush2.bf16.msra.mxu0 %v6942
    %10005 = vmatprep.subr.bf16.mxu0 %v6939
    %10006 = vmatpush2.bf16.msra.mxu0 %v6938
    %10007 = vmatprep.subr.bf16.mxu0 %v6935
    %10008 = vmatpush2.bf16.msra.mxu0 %v6934
    %10009 = vmatprep.subr.bf16.mxu0 %v6931
    %10010 = vmatpush2.bf16.msra.mxu0 %v6930
    %10011 = vmatprep.subr.bf16.mxu0 %v6927
    %10012 = vmatpush2.bf16.msra.mxu0 %v6926
    %10013 = vmatprep.mubr.bf16.mxu0 %v213
    %10014 = vmatmul.mubr.bf16.gmra.mxu0 %v212
    %v10015 = vpop.f32.mrf.mxu0
    %v10016 = vadd.f32 %v9975, %v10015
    %v10017 = vpop.f32.mrf.mxu0
    %v10018 = vadd.f32 %v9977, %v10017
    %v10019 = vpop.f32.mrf.mxu0
    %v10020 = vpop.f32.mrf.mxu0
    %10021 = vdwg.mxu0
    %v10022 = vmax.f32 %v9155, 0.0
    %v10023 = vmax.f32 %v9157, 0.0
    %v10024 = vmax.f32 %v10016, 0.0
    %v10025 = vmax.f32 %v10018, 0.0
    %v10026 = vld [vmem:[%s3] sm:$0xff]
    %v10027 = vld [vmem:[%s3 + $0x8] sm:$0xff]
    %v10028 = vld [vmem:[%s3 + $0x10] sm:$0xff]
    %v10029 = vld [vmem:[%s3 + $0x18] sm:$0xff]
    %v10030 = vld [vmem:[%s3 + $0x20] sm:$0xff]
    %v10031 = vld [vmem:[%s3 + $0x28] sm:$0xff]
    %v10032 = vld [vmem:[%s3 + $0x30] sm:$0xff]
    %v10033 = vld [vmem:[%s3 + $0x38] sm:$0xff]
    %v10034 = vld [vmem:[%s3 + $0x40] sm:$0xff]
    %v10035 = vld [vmem:[%s3 + $0x48] sm:$0xff]
    %v10036 = vld [vmem:[%s3 + $0x50] sm:$0xff]
    %v10037 = vld [vmem:[%s3 + $0x58] sm:$0xff]
    %v10038 = vld [vmem:[%s3 + $0x60] sm:$0xff]
    %v10039 = vld [vmem:[%s3 + $0x68] sm:$0xff]
    %v10040 = vld [vmem:[%s3 + $0x70] sm:$0xff]
    %v10041 = vld [vmem:[%s3 + $0x78] sm:$0xff]
    %v10042 = vld [vmem:[%s3 + $0x80] sm:$0xff]
    %v10043 = vld [vmem:[%s3 + $0x88] sm:$0xff]
    %v10044 = vld [vmem:[%s3 + $0x90] sm:$0xff]
    %v10045 = vld [vmem:[%s3 + $0x98] sm:$0xff]
    %v10046 = vld [vmem:[%s3 + $0xa0] sm:$0xff]
    %v10047 = vld [vmem:[%s3 + $0xa8] sm:$0xff]
    %v10048 = vld [vmem:[%s3 + $0xb0] sm:$0xff]
    %v10049 = vld [vmem:[%s3 + $0xb8] sm:$0xff]
    %v10050 = vld [vmem:[%s3 + $0xc0] sm:$0xff]
    %v10051 = vld [vmem:[%s3 + $0xc8] sm:$0xff]
    %v10052 = vld [vmem:[%s3 + $0xd0] sm:$0xff]
    %v10053 = vld [vmem:[%s3 + $0xd8] sm:$0xff]
    %v10054 = vld [vmem:[%s3 + $0xe0] sm:$0xff]
    %v10055 = vld [vmem:[%s3 + $0xe8] sm:$0xff]
    %v10056 = vld [vmem:[%s3 + $0xf0] sm:$0xff]
    %v10057 = vld [vmem:[%s3 + $0xf8] sm:$0xff]
    %v10058 = vld [vmem:[%s3 + $0x100] sm:$0xff]
    %v10059 = vld [vmem:[%s3 + $0x108] sm:$0xff]
    %v10060 = vld [vmem:[%s3 + $0x110] sm:$0xff]
    %v10061 = vld [vmem:[%s3 + $0x118] sm:$0xff]
    %v10062 = vld [vmem:[%s3 + $0x120] sm:$0xff]
    %v10063 = vld [vmem:[%s3 + $0x128] sm:$0xff]
    %v10064 = vld [vmem:[%s3 + $0x130] sm:$0xff]
    %v10065 = vld [vmem:[%s3 + $0x138] sm:$0xff]
    %v10066 = vld [vmem:[%s3 + $0x140] sm:$0xff]
    %v10067 = vld [vmem:[%s3 + $0x148] sm:$0xff]
    %v10068 = vld [vmem:[%s3 + $0x150] sm:$0xff]
    %v10069 = vld [vmem:[%s3 + $0x158] sm:$0xff]
    %v10070 = vld [vmem:[%s3 + $0x160] sm:$0xff]
    %v10071 = vld [vmem:[%s3 + $0x168] sm:$0xff]
    %v10072 = vld [vmem:[%s3 + $0x170] sm:$0xff]
    %v10073 = vld [vmem:[%s3 + $0x178] sm:$0xff]
    %v10074 = vld [vmem:[%s3 + $0x180] sm:$0xff]
    %v10075 = vld [vmem:[%s3 + $0x188] sm:$0xff]
    %v10076 = vld [vmem:[%s3 + $0x190] sm:$0xff]
    %v10077 = vld [vmem:[%s3 + $0x198] sm:$0xff]
    %v10078 = vld [vmem:[%s3 + $0x1a0] sm:$0xff]
    %v10079 = vld [vmem:[%s3 + $0x1a8] sm:$0xff]
    %v10080 = vld [vmem:[%s3 + $0x1b0] sm:$0xff]
    %v10081 = vld [vmem:[%s3 + $0x1b8] sm:$0xff]
    %v10082 = vld [vmem:[%s3 + $0x1c0] sm:$0xff]
    %v10083 = vld [vmem:[%s3 + $0x1c8] sm:$0xff]
    %v10084 = vld [vmem:[%s3 + $0x1d0] sm:$0xff]
    %v10085 = vld [vmem:[%s3 + $0x1d8] sm:$0xff]
    %v10086 = vld [vmem:[%s3 + $0x1e0] sm:$0xff]
    %v10087 = vld [vmem:[%s3 + $0x1e8] sm:$0xff]
    %v10088 = vld [vmem:[%s3 + $0x1f0] sm:$0xff]
    %v10089 = vld [vmem:[%s3 + $0x1f8] sm:$0xff]
    %v10090 = vld [vmem:[#allocation8] sm:$0x1]
    %v10092 = vlaneseq
    %v10093 = vshrl.u32 %v10092, 7
    %v10094 = vsub.s32 0, %v10093
    %v10095 = vrot.slane %v10090, %v10094
    %10097 = vmatprep.subr.mxu0 0.0
    %10098 = vmatpush1.msra.mxu0 %v10041
    %10099 = vmatprep.subr.mxu0 0.0
    %10100 = vmatpush1.msra.mxu0 %v10040
    %10101 = vmatprep.subr.mxu0 0.0
    %10102 = vmatpush1.msra.mxu0 %v10039
    %10103 = vmatprep.subr.mxu0 0.0
    %10104 = vmatpush1.msra.mxu0 %v10038
    %10105 = vmatprep.subr.mxu0 0.0
    %10106 = vmatpush1.msra.mxu0 %v10037
    %10107 = vmatprep.subr.mxu0 0.0
    %10108 = vmatpush1.msra.mxu0 %v10036
    %10109 = vmatprep.subr.mxu0 0.0
    %10110 = vmatpush1.msra.mxu0 %v10035
    %10111 = vmatprep.subr.mxu0 0.0
    %10112 = vmatpush1.msra.mxu0 %v10034
    %10113 = vmatprep.subr.mxu0 0.0
    %10114 = vmatpush1.msra.mxu0 %v10033
    %10115 = vmatprep.subr.mxu0 0.0
    %10116 = vmatpush1.msra.mxu0 %v10032
    %10117 = vmatprep.subr.mxu0 0.0
    %10118 = vmatpush1.msra.mxu0 %v10031
    %10119 = vmatprep.subr.mxu0 0.0
    %10120 = vmatpush1.msra.mxu0 %v10030
    %10121 = vmatprep.subr.mxu0 0.0
    %10122 = vmatpush1.msra.mxu0 %v10029
    %10123 = vmatprep.subr.mxu0 0.0
    %10124 = vmatpush1.msra.mxu0 %v10028
    %10125 = vmatprep.subr.mxu0 0.0
    %10126 = vmatpush1.msra.mxu0 %v10027
    %10127 = vmatprep.subr.mxu0 0.0
    %10128 = vmatpush1.msra.mxu0 %v10026
    %10129 = vmatprep.subr.mxu0 0.0
    %10130 = vmatpush2.msra.mxu0 %v10057
    %10131 = vmatprep.subr.mxu0 0.0
    %10132 = vmatpush2.msra.mxu0 %v10056
    %10133 = vmatprep.subr.mxu0 0.0
    %10134 = vmatpush2.msra.mxu0 %v10055
    %10135 = vmatprep.subr.mxu0 0.0
    %10136 = vmatpush2.msra.mxu0 %v10054
    %10137 = vmatprep.subr.mxu0 0.0
    %10138 = vmatpush2.msra.mxu0 %v10053
    %10139 = vmatprep.subr.mxu0 0.0
    %10140 = vmatpush2.msra.mxu0 %v10052
    %10141 = vmatprep.subr.mxu0 0.0
    %10142 = vmatpush2.msra.mxu0 %v10051
    %10143 = vmatprep.subr.mxu0 0.0
    %10144 = vmatpush2.msra.mxu0 %v10050
    %10145 = vmatprep.subr.mxu0 0.0
    %10146 = vmatpush2.msra.mxu0 %v10049
    %10147 = vmatprep.subr.mxu0 0.0
    %10148 = vmatpush2.msra.mxu0 %v10048
    %10149 = vmatprep.subr.mxu0 0.0
    %10150 = vmatpush2.msra.mxu0 %v10047
    %10151 = vmatprep.subr.mxu0 0.0
    %10152 = vmatpush2.msra.mxu0 %v10046
    %10153 = vmatprep.subr.mxu0 0.0
    %10154 = vmatpush2.msra.mxu0 %v10045
    %10155 = vmatprep.subr.mxu0 0.0
    %10156 = vmatpush2.msra.mxu0 %v10044
    %10157 = vmatprep.subr.mxu0 0.0
    %10158 = vmatpush2.msra.mxu0 %v10043
    %10159 = vmatprep.subr.mxu0 0.0
    %10160 = vmatpush2.msra.mxu0 %v10042
    %10161 = vmatprep.mubr.f32.mxu0 %v10023
    %10162 = vmatmul.mubr.f32.gmra.mxu0 %v10022
    %v10163 = vpop.f32.mrf.mxu0
    %v10164 = vadd.f32 %v10095, %v10163
    %v10165 = vpop.f32.mrf.mxu0
    %10166 = vdwg.mxu0
    %10167 = vmatprep.subr.mxu0 0.0
    %10168 = vmatpush1.msra.mxu0 %v10073
    %10169 = vmatprep.subr.mxu0 0.0
    %10170 = vmatpush1.msra.mxu0 %v10072
    %10171 = vmatprep.subr.mxu0 0.0
    %10172 = vmatpush1.msra.mxu0 %v10071
    %10173 = vmatprep.subr.mxu0 0.0
    %10174 = vmatpush1.msra.mxu0 %v10070
    %10175 = vmatprep.subr.mxu0 0.0
    %10176 = vmatpush1.msra.mxu0 %v10069
    %10177 = vmatprep.subr.mxu0 0.0
    %10178 = vmatpush1.msra.mxu0 %v10068
    %10179 = vmatprep.subr.mxu0 0.0
    %10180 = vmatpush1.msra.mxu0 %v10067
    %10181 = vmatprep.subr.mxu0 0.0
    %10182 = vmatpush1.msra.mxu0 %v10066
    %10183 = vmatprep.subr.mxu0 0.0
    %10184 = vmatpush1.msra.mxu0 %v10065
    %10185 = vmatprep.subr.mxu0 0.0
    %10186 = vmatpush1.msra.mxu0 %v10064
    %10187 = vmatprep.subr.mxu0 0.0
    %10188 = vmatpush1.msra.mxu0 %v10063
    %10189 = vmatprep.subr.mxu0 0.0
    %10190 = vmatpush1.msra.mxu0 %v10062
    %10191 = vmatprep.subr.mxu0 0.0
    %10192 = vmatpush1.msra.mxu0 %v10061
    %10193 = vmatprep.subr.mxu0 0.0
    %10194 = vmatpush1.msra.mxu0 %v10060
    %10195 = vmatprep.subr.mxu0 0.0
    %10196 = vmatpush1.msra.mxu0 %v10059
    %10197 = vmatprep.subr.mxu0 0.0
    %10198 = vmatpush1.msra.mxu0 %v10058
    %10199 = vmatprep.subr.mxu0 0.0
    %10200 = vmatpush2.msra.mxu0 %v10089
    %10201 = vmatprep.subr.mxu0 0.0
    %10202 = vmatpush2.msra.mxu0 %v10088
    %10203 = vmatprep.subr.mxu0 0.0
    %10204 = vmatpush2.msra.mxu0 %v10087
    %10205 = vmatprep.subr.mxu0 0.0
    %10206 = vmatpush2.msra.mxu0 %v10086
    %10207 = vmatprep.subr.mxu0 0.0
    %10208 = vmatpush2.msra.mxu0 %v10085
    %10209 = vmatprep.subr.mxu0 0.0
    %10210 = vmatpush2.msra.mxu0 %v10084
    %10211 = vmatprep.subr.mxu0 0.0
    %10212 = vmatpush2.msra.mxu0 %v10083
    %10213 = vmatprep.subr.mxu0 0.0
    %10214 = vmatpush2.msra.mxu0 %v10082
    %10215 = vmatprep.subr.mxu0 0.0
    %10216 = vmatpush2.msra.mxu0 %v10081
    %10217 = vmatprep.subr.mxu0 0.0
    %10218 = vmatpush2.msra.mxu0 %v10080
    %10219 = vmatprep.subr.mxu0 0.0
    %10220 = vmatpush2.msra.mxu0 %v10079
    %10221 = vmatprep.subr.mxu0 0.0
    %10222 = vmatpush2.msra.mxu0 %v10078
    %10223 = vmatprep.subr.mxu0 0.0
    %10224 = vmatpush2.msra.mxu0 %v10077
    %10225 = vmatprep.subr.mxu0 0.0
    %10226 = vmatpush2.msra.mxu0 %v10076
    %10227 = vmatprep.subr.mxu0 0.0
    %10228 = vmatpush2.msra.mxu0 %v10075
    %10229 = vmatprep.subr.mxu0 0.0
    %10230 = vmatpush2.msra.mxu0 %v10074
    %10231 = vmatprep.mubr.f32.mxu0 %v10025
    %10232 = vmatmul.mubr.f32.gmra.mxu0 %v10024
    %v10233 = vpop.f32.mrf.mxu0
    %v10234 = vadd.f32 %v10164, %v10233
    %v10235 = vpop.f32.mrf.mxu0
    %10236 = vdwg.mxu0
    %v10237 = vmax.f32 %v10234, 0.0
    %v10238 = vld [vmem:[#allocation10] sm:$0x1]
    %v10240 = vlaneseq
    %v10241 = vshrl.u32 %v10240, 7
    %v10242 = vsub.s32 0, %v10241
    %v10243 = vrot.slane %v10238, %v10242
    %v10245 = vmul.f32 %v10237, %v10243
    %vm10246 = vcmask 520192
    %v10247 = vsel %vm10246, %v10245, 0.0
    %10248 = vadd.xlane.f32.xlu0 %v10247
    %v10249 = vpop.xlane.xlu0 %10248
    %v10250 = vld [vmem:[#allocation2] sm:$0x1]
    %v10252 = vlaneseq
    %v10253 = vshrl.u32 %v10252, 7
    %v10254 = vsub.s32 0, %v10253
    %v10255 = vrot.slane %v10250, %v10254
    %v10257 = vadd.f32 %v10249, %v10255
    %v10258 = vxor.u32 %v10257, 2147483648
    %v10259 = vmul.f32 %v10258, 1.442695
    %v10260 = vpow.pop %v10259
    %v10261 = vadd.f32 %v10260, 1.0
    %v10262 = vrcp.pop %v10261
    %v10263 = vmul.f32 1.0, %v10262
    %vm10264 = vcmask 4096
    %10265 = vst.msk [vmem:[%s7] sm:$0x1f] %vm10264, %v10263
    // Predicated region
    $region50: #{tpu_custom_call.1} parent=1 // pred_check
      _
    $region51: #{tpu_custom_call.1} parent=1 // pred_check_branch
      %10267 = sbr.rel (0) target = $region53
    $region52: #{tpu_custom_call.1} parent=1 // pred_region
      _
    $region53: #{tpu_custom_call.1} parent=1 // pred_fallthru
      _
    // Predicated region
    $region54: #{tpu_custom_call.1} parent=1 // pred_check
      _
    $region55: #{tpu_custom_call.1} parent=1 // pred_check_branch
      %10269 = sbr.rel (0) target = $region57
    $region56: #{tpu_custom_call.1} parent=1 // pred_region
      _
    $region57: #{tpu_custom_call.1} parent=1 // pred_fallthru
      _
    %10270 = vsyncpa [#allocation4], 1
    %10271 = vsyncpa [#allocation6], 1
    %10272 = vsyncpa [#allocation9], 1

</llo_original>
